<compile_context>
chip_gen: v6e
topology: v6e:2x2x1
jax: 0.10.0
libtpu: 0.0.40
codegen_flags: <defaults>
</compile_context>

<pallas_src>
import jax
import jax.numpy as jnp
from jax.experimental import pallas as pl
from jax.experimental.pallas import tpu as pltpu

PAD = 0

# ----------------------------- config (small) --------------------------------
EMBED = 32          # config.embed_size  (input_size)
HIDDEN = 32         # config.hidden_size
BATCH = 2
SRC_LEN = 8
TGT_LEN = 8
N_SRC_VOCAB = 23
N_REL_VOCAB = 7
N_TGT_VOCAB = 29
PARAM_INIT = 0.1    # final nn.init.uniform_(p, -param_init, param_init)


# ----------------------------- shared in-kernel math -------------------------
def _gru_gates(gi, gh, h):
    """nn.GRUCell-style update, gates ordered (r, z, n). gi/gh: (rows, 3H), h: (rows, H)."""
    hd = HIDDEN
    r = jax.nn.sigmoid(gi[:, :hd] + gh[:, :hd])
    z = jax.nn.sigmoid(gi[:, hd:2 * hd] + gh[:, hd:2 * hd])
    n = jnp.tanh(gi[:, 2 * hd:] + r * gh[:, 2 * hd:])
    return (1.0 - z) * n + z * h


# ----------------------------- the fused kernel ------------------------------
def dl4mt_kernel(seq_ref, emby_ref, nopad_div_ref, att_bias_ref,
                 wi_tree_ref, bi_tree_ref, whb_tree_ref, bhb_tree_ref,
                 transform_w_ref, transform_b_ref,
                 wi_enc_ref, bi_enc_ref, whb_enc_ref, bhb_enc_ref,
                 bridge_w_ref, bridge_b_ref, cache_w_ref, cache_b_ref,
                 att_wh_ref, att_v_ref,
                 wi1_ref, bi1_ref, wh1_ref, bh1_ref,
                 w2_blk_ref, b2_blk_ref,
                 w_log_ref, b_log_ref,
                 logits_ref,
                 tree_scr, ctx_scr, dec_scr):
    """Whole forward pass (both batch rows) in one invocation.

    Layouts (time-major flattening, row = t * B + b):
      seq_ref   : (S*B, 2E)   source [word ; rel] embeddings
      emby_ref  : (T*B, E)    target embeddings
      nopad_div : (B, S*B)    masked-mean selector (already divided by valid count)
      att_bias  : (B, S*B)    0 on own-batch non-PAD columns, -1e9 elsewhere
      logits_ref: (T*B, E)
    """
    H = HIDDEN
    H3 = 3 * H
    E = EMBED
    B = nopad_div_ref.shape[0]
    SB = seq_ref.shape[0]
    S = SB // B
    TB = emby_ref.shape[0]
    T = TB // B

    def mm(a, w_ref):
        # MXU operands in bf16, f32 accumulation; elementwise math stays f32.
        return jnp.dot(a.astype(jnp.bfloat16), w_ref[...],
                       preferred_element_type=jnp.float32)

    # ---------------- encoder layer 1: tree-approx GRUs (dt fwd / td bwd) ----------------
    gi_tree = mm(seq_ref[...], wi_tree_ref) + bi_tree_ref[...]            # (S*B, 6H)
    h_dt = jnp.zeros((B, H), jnp.float32)
    h_td = jnp.zeros((B, H), jnp.float32)
    for t in range(S):                                  # static trip count -> unrolled
        rf, rb = t * B, (S - 1 - t) * B
        gh = (mm(jnp.concatenate([h_dt, h_td], axis=1), whb_tree_ref)
              + bhb_tree_ref[...])                                         # (B, 6H)
        h_dt = _gru_gates(gi_tree[rf:rf + B, :H3], gh[:, :H3], h_dt)
        h_td = _gru_gates(gi_tree[rb:rb + B, H3:], gh[:, H3:], h_td)
        tree_scr[rf:rf + B, :H] = h_dt
        tree_scr[rb:rb + B, H:] = h_td

    tree_hid = mm(tree_scr[...], transform_w_ref) + transform_b_ref[...]   # (S*B, H)

    # ---------------- encoder layer 2: bidirectional GRU ----------------
    gi_enc = mm(tree_hid, wi_enc_ref) + bi_enc_ref[...]                    # (S*B, 6H)
    h_f = jnp.zeros((B, H), jnp.float32)
    h_b = jnp.zeros((B, H), jnp.float32)
    for t in range(S):
        rf, rb = t * B, (S - 1 - t) * B
        gh = (mm(jnp.concatenate([h_f, h_b], axis=1), whb_enc_ref)
              + bhb_enc_ref[...])                                          # (B, 6H)
        h_f = _gru_gates(gi_enc[rf:rf + B, :H3], gh[:, :H3], h_f)
        h_b = _gru_gates(gi_enc[rb:rb + B, H3:], gh[:, H3:], h_b)
        ctx_scr[rf:rf + B, :H] = h_f
        ctx_scr[rb:rb + B, H:] = h_b

    ctx = ctx_scr[...]                                                     # (S*B, 2H)
    ctx_bf = ctx.astype(jnp.bfloat16)

    # ---------------- decoder init: masked mean + bridge + attention cache ----------------
    ctx_mean = jnp.dot(nopad_div_ref[...].astype(jnp.bfloat16), ctx_bf,
                       preferred_element_type=jnp.float32)                 # (B, 2H)
    hidden = jnp.tanh(mm(ctx_mean, bridge_w_ref) + bridge_b_ref[...])      # (B, H)
    cache = mm(ctx, cache_w_ref) + cache_b_ref[...]                        # (S*B, H)

    emb_y = emby_ref[...]                                                  # (T*B, E)
    dec_scr[:, :E] = emb_y
    gi1_all = mm(emb_y, wi1_ref) + bi1_ref[...]                            # (T*B, 3H)

    att_v = att_v_ref[...]                                                 # (1, H) bf16
    att_bias = att_bias_ref[...]                                           # (B, S*B)

    # ---------------- decoder CGRU time loop ----------------
    for t in range(T):                                  # static trip count -> unrolled
        r = t * B
        gh1 = mm(hidden, wh1_ref) + bh1_ref[...]                           # (B, 3H)
        h1 = _gru_gates(gi1_all[r:r + B, :], gh1, hidden)                  # (B, H)

        # Bahdanau attention; the padding AND cross-batch masking is fused into att_bias,
        # so one row-softmax over (B, S*B) handles both sentences at once.
        proj = mm(h1, att_wh_ref)                                          # (B, H)
        e = jnp.tanh(cache + jnp.concatenate([proj] * S, axis=0))          # (S*B, H)
        scores = jax.lax.dot_general(att_v, e.astype(jnp.bfloat16),
                                     (((1,), (1,)), ((), ())),
                                     preferred_element_type=jnp.float32)   # (1, S*B)
        sc = scores + att_bias                                             # (B, S*B)
        m = jnp.max(sc, axis=-1, keepdims=True)
        p = jnp.exp(sc - m)
        alpha = p * pl.reciprocal(jnp.sum(p, axis=-1, keepdims=True), approx=True)
        attn_t = jnp.dot(alpha.astype(jnp.bfloat16), ctx_bf,
                         preferred_element_type=jnp.float32)               # (B, 2H)

        # second GRU: gi2 / gh2 in ONE block-diagonal matmul
        gih = (mm(jnp.concatenate([attn_t, h1], axis=1), w2_blk_ref)
               + b2_blk_ref[...])                                          # (B, 6H)
        hidden = _gru_gates(gih[:, :H3], gih[:, H3:], h1)                  # (B, H)

        dec_scr[r:r + B, E:E + H] = hidden
        dec_scr[r:r + B, E + H:] = attn_t

    # ---------------- fused output projection: tanh([emb ; out ; attn] @ W + b) -----------
    logits_ref[...] = jnp.tanh(mm(dec_scr[...], w_log_ref) + b_log_ref[...])   # (T*B, E)


# ----------------------------- pallas_call wrapper ----------------------------
def _whole2(shape):
    """Whole-array 2-D block (everything stays resident in VMEM for the single grid step)."""
    return pl.BlockSpec(tuple(shape), lambda i: (0, 0))


def pallas_dl4mt(kp, seq_flat, emby_flat, nopad_div, att_bias):
    """Single fused pallas_call: encoder + init_decoder + CGRU loop + logits."""
    SB = seq_flat.shape[0]
    TB, E = emby_flat.shape
    ins = (seq_flat, emby_flat, nopad_div, att_bias,
           kp["wi_tree"], kp["bi_tree"], kp["whb_tree"], kp["bhb_tree"],
           kp["transform_w"], kp["transform_b"],
           kp["wi_enc"], kp["bi_enc"], kp["whb_enc"], kp["bhb_enc"],
           kp["bridge_w"], kp["bridge_b"], kp["cache_w"], kp["cache_b"],
           kp["att_wh"], kp["att_v"],
           kp["wi1"], kp["bi1"], kp["wh1"], kp["bh1"],
           kp["w2_blk"], kp["b2_blk"],
           kp["w_log"], kp["b_log"])
    return pl.pallas_call(
        dl4mt_kernel,
        grid=(1,),
        out_shape=jax.ShapeDtypeStruct((TB, E), jnp.float32),
        in_specs=[_whole2(a.shape) for a in ins],
        out_specs=_whole2((TB, E)),
        scratch_shapes=[
            pltpu.VMEM((SB, 2 * HIDDEN), jnp.float32),          # tree layer outputs
            pltpu.VMEM((SB, 2 * HIDDEN), jnp.float32),          # encoder ctx
            pltpu.VMEM((TB, EMBED + 3 * HIDDEN), jnp.float32),  # [emb | out | attn] slab
        ],
    )(*ins)


# ----------------------------- parameter init --------------------------------
def _uni(key, shape):
    return jax.random.uniform(key, shape, jnp.float32, -PARAM_INIT, PARAM_INIT)


def _gru_params(key, in_dim, hid):
    k1, k2, k3, k4 = jax.random.split(key, 4)
    return {
        "wi": _uni(k1, (3 * hid, in_dim)),
        "wh": _uni(k2, (3 * hid, hid)),
        "bi": _uni(k3, (3 * hid,)),
        "bh": _uni(k4, (3 * hid,)),
    }


def init_params(key):
    """Parameters in PyTorch layout ((out, in) weights), uniform(-param_init, param_init)."""
    E, H = EMBED, HIDDEN
    keys = iter(jax.random.split(key, 32))
    p = {}
    # Encoder
    p["src_embed"] = _uni(next(keys), (N_SRC_VOCAB, E))
    p["rel_embed"] = _uni(next(keys), (N_REL_VOCAB, E))
    p["dt_gru"] = _gru_params(next(keys), 2 * E, H)
    p["td_gru"] = _gru_params(next(keys), 2 * E, H)
    p["transform_w"] = _uni(next(keys), (H, 2 * H))
    p["transform_b"] = _uni(next(keys), (H,))
    p["enc_gru_fwd"] = _gru_params(next(keys), H, H)
    p["enc_gru_bwd"] = _gru_params(next(keys), H, H)
    # Decoder
    p["tgt_embed"] = _uni(next(keys), (N_TGT_VOCAB, E))
    p["bridge_w"] = _uni(next(keys), (H, 2 * H))
    p["bridge_b"] = _uni(next(keys), (H,))
    p["cache_w"] = _uni(next(keys), (H, 2 * H))        # CGRU attention key projection
    p["cache_b"] = _uni(next(keys), (H,))
    p["att_wh"] = _uni(next(keys), (H, H))
    p["att_v"] = _uni(next(keys), (H,))
    p["dec_gru1"] = _gru_params(next(keys), E, H)
    p["dec_gru2"] = _gru_params(next(keys), 2 * H, H)
    p["lin_input_w"] = _uni(next(keys), (E, E))
    p["lin_input_b"] = _uni(next(keys), (E,))
    p["lin_hidden_w"] = _uni(next(keys), (E, H))
    p["lin_hidden_b"] = _uni(next(keys), (E,))
    p["lin_ctx_w"] = _uni(next(keys), (E, 2 * H))
    p["lin_ctx_b"] = _uni(next(keys), (E,))
    return p


def prepare_kernel_params(p):
    """Host-side weight prep: transpose to (K, N), stack / block-diag fuse, cast MXU operands
    to bf16 (biases stay f32 and are added after the f32-accumulated matmul)."""
    def t(w):
        return jnp.asarray(w).T

    def tb(w):
        return jnp.asarray(w).T.astype(jnp.bfloat16)

    def row(b):
        return jnp.asarray(b).reshape(1, -1)

    def bdiag(a, b):
        r1, c1 = a.shape
        r2, c2 = b.shape
        top = jnp.concatenate([a, jnp.zeros((r1, c2), a.dtype)], axis=1)
        bot = jnp.concatenate([jnp.zeros((r2, c1), b.dtype), b], axis=1)
        return jnp.concatenate([top, bot], axis=0)

    kp = {}
    # embeddings (lookup tables used with jnp gathers in the wrapper)
    kp["src_embed"] = p["src_embed"]
    kp["rel_embed"] = p["rel_embed"]
    kp["tgt_embed"] = p["tgt_embed"]
    # encoder layer 1: stacked dt/td input projections; block-diag recurrent weights
    kp["wi_tree"] = jnp.concatenate([t(p["dt_gru"]["wi"]), t(p["td_gru"]["wi"])],
                                    axis=1).astype(jnp.bfloat16)                 # (2E, 6H)
    kp["bi_tree"] = jnp.concatenate([row(p["dt_gru"]["bi"]), row(p["td_gru"]["bi"])], axis=1)
    kp["whb_tree"] = bdiag(t(p["dt_gru"]["wh"]), t(p["td_gru"]["wh"])).astype(jnp.bfloat16)
    kp["bhb_tree"] = jnp.concatenate([row(p["dt_gru"]["bh"]), row(p["td_gru"]["bh"])], axis=1)
    kp["transform_w"] = tb(p["transform_w"])
    kp["transform_b"] = row(p["transform_b"])
    # encoder layer 2: bidirectional GRU, same fusion
    kp["wi_enc"] = jnp.concatenate([t(p["enc_gru_fwd"]["wi"]), t(p["enc_gru_bwd"]["wi"])],
                                   axis=1).astype(jnp.bfloat16)                  # (H, 6H)
    kp["bi_enc"] = jnp.concatenate([row(p["enc_gru_fwd"]["bi"]), row(p["enc_gru_bwd"]["bi"])], axis=1)
    kp["whb_enc"] = bdiag(t(p["enc_gru_fwd"]["wh"]), t(p["enc_gru_bwd"]["wh"])).astype(jnp.bfloat16)
    kp["bhb_enc"] = jnp.concatenate([row(p["enc_gru_fwd"]["bh"]), row(p["enc_gru_bwd"]["bh"])], axis=1)
    # decoder
    kp["bridge_w"] = tb(p["bridge_w"]); kp["bridge_b"] = row(p["bridge_b"])
    kp["cache_w"] = tb(p["cache_w"]); kp["cache_b"] = row(p["cache_b"])
    kp["att_wh"] = tb(p["att_wh"]); kp["att_v"] = row(p["att_v"]).astype(jnp.bfloat16)
    kp["wi1"] = tb(p["dec_gru1"]["wi"]); kp["bi1"] = row(p["dec_gru1"]["bi"])
    kp["wh1"] = tb(p["dec_gru1"]["wh"]); kp["bh1"] = row(p["dec_gru1"]["bh"])
    # GRU2: [attn | h1] @ blockdiag(Wi2^T, Wh2^T) -> [gi2 | gh2]
    kp["w2_blk"] = bdiag(t(p["dec_gru2"]["wi"]), t(p["dec_gru2"]["wh"])).astype(jnp.bfloat16)
    kp["b2_blk"] = jnp.concatenate([row(p["dec_gru2"]["bi"]), row(p["dec_gru2"]["bh"])], axis=1)
    # fused output projection: [emb ; out ; attn] @ W_log + (bi + bh + bc)
    kp["w_log"] = jnp.concatenate(
        [t(p["lin_input_w"]), t(p["lin_hidden_w"]), t(p["lin_ctx_w"])],
        axis=0).astype(jnp.bfloat16)                                             # (E+H+2H, E)
    kp["b_log"] = row(p["lin_input_b"] + p["lin_hidden_b"] + p["lin_ctx_b"])
    return kp


# ----------------------------- model forward ---------------------------------
@jax.jit
def dl4mt_train_forward(kp, src_seq, src_rel, tgt_seq):
    """mode='train' path: encoder -> init_decoder -> force_teaching. Returns (B, T, E) logits."""
    B, S = src_seq.shape
    T = tgt_seq.shape[1]

    # --- embeddings (wrapper-side gathers), flattened time-major for the kernel ---
    emb = kp["src_embed"][src_seq]                              # (B, S, E)
    rel_emb = kp["rel_embed"][src_rel]                          # (B, S, E)
    seq = jnp.concatenate([emb, rel_emb], axis=2)               # (B, S, 2E)
    seq_flat = seq.transpose(1, 0, 2).reshape(S * B, 2 * EMBED)     # row = s*B + b
    emb_y = kp["tgt_embed"][tgt_seq]                            # (B, T, E)
    emby_flat = emb_y.transpose(1, 0, 2).reshape(T * B, EMBED)      # row = t*B + b

    # --- masked-mean selector and attention bias over the flattened (B, S*B) layout ---
    cols = jnp.arange(S * B)
    sel = (cols % B)[None, :] == jnp.arange(B)[:, None]         # (B, S*B) own-batch columns
    s_of_c = cols // B
    no_pad = (src_seq != PAD).astype(jnp.float32)               # (B, S)
    counts = jnp.maximum(jnp.sum(no_pad, axis=-1, keepdims=True), 1.0)
    vals = no_pad / counts
    nopad_div = jnp.where(sel, vals[:, s_of_c], 0.0).astype(jnp.float32)
    pad_g = (src_seq == PAD)[:, s_of_c]                         # (B, S*B)
    att_bias = jnp.where(sel & (~pad_g), 0.0, -1e9).astype(jnp.float32)

    # --- fused encoder + decoder kernel; dropout_rate == 0.0 -> identity ---
    logits_flat = pallas_dl4mt(kp, seq_flat, emby_flat, nopad_div, att_bias)  # (T*B, E)
    return logits_flat.reshape(T, B, EMBED).transpose(1, 0, 2)  # == logits.transpose(1,0)


# ----------------------------------- main -------------------------------------
if __name__ == "__main__":
    key = jax.random.PRNGKey(0)
    kp_, kx, kr, kh, ky = jax.random.split(key, 5)

    params = init_params(kp_)
    kparams = prepare_kernel_params(params)

    # Source tokens with trailing PAD (=0) for the second sentence.
    lengths = jnp.array([SRC_LEN, SRC_LEN - 2], dtype=jnp.int32)
    pos = jnp.arange(SRC_LEN)[None, :]
    valid = pos < lengths[:, None]
    src_seq = jnp.where(
        valid, jax.random.randint(kx, (BATCH, SRC_LEN), 1, N_SRC_VOCAB), PAD
    ).astype(jnp.int32)
    src_rel = jnp.where(
        valid, jax.random.randint(kr, (BATCH, SRC_LEN), 1, N_REL_VOCAB), PAD
    ).astype(jnp.int32)
    # src_head is only consumed by the (untranslatable) tree construction; unused here.
    src_head = jax.random.randint(kh, (BATCH, SRC_LEN), 0, SRC_LEN).astype(jnp.int32)

    tgt_seq = jax.random.randint(ky, (BATCH, TGT_LEN), 1, N_TGT_VOCAB).astype(jnp.int32)

    logits = dl4mt_train_forward(kparams, src_seq, src_rel, tgt_seq)
    jax.block_until_ready(logits)

    assert logits.shape == (BATCH, TGT_LEN, EMBED), logits.shape
    assert logits.dtype == jnp.float32
    assert bool(jnp.isfinite(logits).all())
    print("KERNEL_OK")
</pallas_src>

<mosaic_0001>
module attributes {stable_mosaic.version = 11 : i64} {
  func.func @dl4mt_kernel(%arg0: i32, %arg1: memref<16x64xf32, #tpu.memory_space<vmem>>, %arg2: memref<16x32xf32, #tpu.memory_space<vmem>>, %arg3: memref<2x16xf32, #tpu.memory_space<vmem>>, %arg4: memref<2x16xf32, #tpu.memory_space<vmem>>, %arg5: memref<64x192xbf16, #tpu.memory_space<vmem>>, %arg6: memref<1x192xf32, #tpu.memory_space<vmem>>, %arg7: memref<64x192xbf16, #tpu.memory_space<vmem>>, %arg8: memref<1x192xf32, #tpu.memory_space<vmem>>, %arg9: memref<64x32xbf16, #tpu.memory_space<vmem>>, %arg10: memref<1x32xf32, #tpu.memory_space<vmem>>, %arg11: memref<32x192xbf16, #tpu.memory_space<vmem>>, %arg12: memref<1x192xf32, #tpu.memory_space<vmem>>, %arg13: memref<64x192xbf16, #tpu.memory_space<vmem>>, %arg14: memref<1x192xf32, #tpu.memory_space<vmem>>, %arg15: memref<64x32xbf16, #tpu.memory_space<vmem>>, %arg16: memref<1x32xf32, #tpu.memory_space<vmem>>, %arg17: memref<64x32xbf16, #tpu.memory_space<vmem>>, %arg18: memref<1x32xf32, #tpu.memory_space<vmem>>, %arg19: memref<32x32xbf16, #tpu.memory_space<vmem>>, %arg20: memref<1x32xbf16, #tpu.memory_space<vmem>>, %arg21: memref<32x96xbf16, #tpu.memory_space<vmem>>, %arg22: memref<1x96xf32, #tpu.memory_space<vmem>>, %arg23: memref<32x96xbf16, #tpu.memory_space<vmem>>, %arg24: memref<1x96xf32, #tpu.memory_space<vmem>>, %arg25: memref<96x192xbf16, #tpu.memory_space<vmem>>, %arg26: memref<1x192xf32, #tpu.memory_space<vmem>>, %arg27: memref<128x32xbf16, #tpu.memory_space<vmem>>, %arg28: memref<1x32xf32, #tpu.memory_space<vmem>>, %arg29: memref<16x32xf32, #tpu.memory_space<vmem>>, %arg30: memref<16x64xf32, #tpu.memory_space<vmem>>, %arg31: memref<16x64xf32, #tpu.memory_space<vmem>>, %arg32: memref<16x128xf32, #tpu.memory_space<vmem>>) attributes {dimension_semantics = [#tpu.dimension_semantics<arbitrary>], iteration_bounds = array<i64: 1>, scalar_prefetch = 0 : i64, scratch_operands = 3 : i64, tpu.core_type = #tpu.core_type<tc>, window_params = [{pipeline_mode = #tpu.pipeline_mode<synchronous>, transform_indices = @transform_0, window_bounds = array<i64: 16, 64>}, {pipeline_mode = #tpu.pipeline_mode<synchronous>, transform_indices = @transform_1, window_bounds = array<i64: 16, 32>}, {pipeline_mode = #tpu.pipeline_mode<synchronous>, transform_indices = @transform_2, window_bounds = array<i64: 2, 16>}, {pipeline_mode = #tpu.pipeline_mode<synchronous>, transform_indices = @transform_3, window_bounds = array<i64: 2, 16>}, {pipeline_mode = #tpu.pipeline_mode<synchronous>, transform_indices = @transform_4, window_bounds = array<i64: 64, 192>}, {pipeline_mode = #tpu.pipeline_mode<synchronous>, transform_indices = @transform_5, window_bounds = array<i64: 1, 192>}, {pipeline_mode = #tpu.pipeline_mode<synchronous>, transform_indices = @transform_6, window_bounds = array<i64: 64, 192>}, {pipeline_mode = #tpu.pipeline_mode<synchronous>, transform_indices = @transform_7, window_bounds = array<i64: 1, 192>}, {pipeline_mode = #tpu.pipeline_mode<synchronous>, transform_indices = @transform_8, window_bounds = array<i64: 64, 32>}, {pipeline_mode = #tpu.pipeline_mode<synchronous>, transform_indices = @transform_9, window_bounds = array<i64: 1, 32>}, {pipeline_mode = #tpu.pipeline_mode<synchronous>, transform_indices = @transform_10, window_bounds = array<i64: 32, 192>}, {pipeline_mode = #tpu.pipeline_mode<synchronous>, transform_indices = @transform_11, window_bounds = array<i64: 1, 192>}, {pipeline_mode = #tpu.pipeline_mode<synchronous>, transform_indices = @transform_12, window_bounds = array<i64: 64, 192>}, {pipeline_mode = #tpu.pipeline_mode<synchronous>, transform_indices = @transform_13, window_bounds = array<i64: 1, 192>}, {pipeline_mode = #tpu.pipeline_mode<synchronous>, transform_indices = @transform_14, window_bounds = array<i64: 64, 32>}, {pipeline_mode = #tpu.pipeline_mode<synchronous>, transform_indices = @transform_15, window_bounds = array<i64: 1, 32>}, {pipeline_mode = #tpu.pipeline_mode<synchronous>, transform_indices = @transform_16, window_bounds = array<i64: 64, 32>}, {pipeline_mode = #tpu.pipeline_mode<synchronous>, transform_indices = @transform_17, window_bounds = array<i64: 1, 32>}, {pipeline_mode = #tpu.pipeline_mode<synchronous>, transform_indices = @transform_18, window_bounds = array<i64: 32, 32>}, {pipeline_mode = #tpu.pipeline_mode<synchronous>, transform_indices = @transform_19, window_bounds = array<i64: 1, 32>}, {pipeline_mode = #tpu.pipeline_mode<synchronous>, transform_indices = @transform_20, window_bounds = array<i64: 32, 96>}, {pipeline_mode = #tpu.pipeline_mode<synchronous>, transform_indices = @transform_21, window_bounds = array<i64: 1, 96>}, {pipeline_mode = #tpu.pipeline_mode<synchronous>, transform_indices = @transform_22, window_bounds = array<i64: 32, 96>}, {pipeline_mode = #tpu.pipeline_mode<synchronous>, transform_indices = @transform_23, window_bounds = array<i64: 1, 96>}, {pipeline_mode = #tpu.pipeline_mode<synchronous>, transform_indices = @transform_24, window_bounds = array<i64: 96, 192>}, {pipeline_mode = #tpu.pipeline_mode<synchronous>, transform_indices = @transform_25, window_bounds = array<i64: 1, 192>}, {pipeline_mode = #tpu.pipeline_mode<synchronous>, transform_indices = @transform_26, window_bounds = array<i64: 128, 32>}, {pipeline_mode = #tpu.pipeline_mode<synchronous>, transform_indices = @transform_27, window_bounds = array<i64: 1, 32>}, {pipeline_mode = #tpu.pipeline_mode<synchronous>, transform_indices = @transform_28, window_bounds = array<i64: 16, 32>}]} {
    %c0 = arith.constant 0 : index
    %c0_0 = arith.constant 0 : index
    %0 = vector.load %arg1[%c0, %c0_0] : memref<16x64xf32, #tpu.memory_space<vmem>>, vector<16x64xf32>
    %1 = arith.truncf %0 : vector<16x64xf32> to vector<16x64xbf16>
    %c0_1 = arith.constant 0 : index
    %c0_2 = arith.constant 0 : index
    %2 = vector.load %arg5[%c0_1, %c0_2] : memref<64x192xbf16, #tpu.memory_space<vmem>>, vector<64x192xbf16>
    %cst = arith.constant dense<0.000000e+00> : vector<16x192xf32>
    %3 = tpu.matmul %1, %2, %cst {dimension_numbers = #tpu.dot_dimension_numbers<[1], [0], [0], [1], [0, 0, 1, 1], [], []>} : vector<16x64xbf16>, vector<64x192xbf16>, vector<16x192xf32> -> vector<16x192xf32>
    %c0_3 = arith.constant 0 : index
    %c0_4 = arith.constant 0 : index
    %4 = vector.load %arg6[%c0_3, %c0_4] : memref<1x192xf32, #tpu.memory_space<vmem>>, vector<1x192xf32>
    %5 = vector.broadcast %4 : vector<1x192xf32> to vector<16x192xf32>
    %6 = arith.addf %3, %5 : vector<16x192xf32>
    %cst_5 = arith.constant 0.000000e+00 : f32
    %7 = vector.broadcast %cst_5 : f32 to vector<2x32xf32>
    %cst_6 = arith.constant 0.000000e+00 : f32
    %8 = vector.broadcast %cst_6 : f32 to vector<2x32xf32>
    %9 = tpu.concatenate %7, %8 in 1 : vector<2x32xf32>, vector<2x32xf32> -> vector<2x64xf32>
    %10 = arith.truncf %9 : vector<2x64xf32> to vector<2x64xbf16>
    %c0_7 = arith.constant 0 : index
    %c0_8 = arith.constant 0 : index
    %11 = vector.load %arg7[%c0_7, %c0_8] : memref<64x192xbf16, #tpu.memory_space<vmem>>, vector<64x192xbf16>
    %cst_9 = arith.constant dense<0.000000e+00> : vector<2x192xf32>
    %12 = tpu.matmul %10, %11, %cst_9 {dimension_numbers = #tpu.dot_dimension_numbers<[1], [0], [0], [1], [0, 0, 1, 1], [], []>} : vector<2x64xbf16>, vector<64x192xbf16>, vector<2x192xf32> -> vector<2x192xf32>
    %c0_10 = arith.constant 0 : index
    %c0_11 = arith.constant 0 : index
    %13 = vector.load %arg8[%c0_10, %c0_11] : memref<1x192xf32, #tpu.memory_space<vmem>>, vector<1x192xf32>
    %14 = vector.broadcast %13 : vector<1x192xf32> to vector<2x192xf32>
    %15 = arith.addf %12, %14 : vector<2x192xf32>
    %16 = vector.extract_strided_slice %6 {offsets = [0, 0], sizes = [2, 96], strides = [1, 1]} : vector<16x192xf32> to vector<2x96xf32>
    %17 = vector.extract_strided_slice %15 {offsets = [0, 0], sizes = [2, 96], strides = [1, 1]} : vector<2x192xf32> to vector<2x96xf32>
    %18 = vector.extract_strided_slice %16 {offsets = [0, 0], sizes = [2, 32], strides = [1, 1]} : vector<2x96xf32> to vector<2x32xf32>
    %19 = vector.extract_strided_slice %17 {offsets = [0, 0], sizes = [2, 32], strides = [1, 1]} : vector<2x96xf32> to vector<2x32xf32>
    %20 = arith.addf %18, %19 : vector<2x32xf32>
    %21 = arith.negf %20 : vector<2x32xf32>
    %22 = math.exp %21 : vector<2x32xf32>
    %cst_12 = arith.constant 1.000000e+00 : f32
    %23 = vector.broadcast %cst_12 : f32 to vector<2x32xf32>
    %24 = arith.addf %23, %22 : vector<2x32xf32>
    %25 = arith.divf %23, %24 : vector<2x32xf32>
    %26 = vector.extract_strided_slice %16 {offsets = [0, 32], sizes = [2, 32], strides = [1, 1]} : vector<2x96xf32> to vector<2x32xf32>
    %27 = vector.extract_strided_slice %17 {offsets = [0, 32], sizes = [2, 32], strides = [1, 1]} : vector<2x96xf32> to vector<2x32xf32>
    %28 = arith.addf %26, %27 : vector<2x32xf32>
    %29 = arith.negf %28 : vector<2x32xf32>
    %30 = math.exp %29 : vector<2x32xf32>
    %cst_13 = arith.constant 1.000000e+00 : f32
    %31 = vector.broadcast %cst_13 : f32 to vector<2x32xf32>
    %32 = arith.addf %31, %30 : vector<2x32xf32>
    %33 = arith.divf %31, %32 : vector<2x32xf32>
    %34 = vector.extract_strided_slice %16 {offsets = [0, 64], sizes = [2, 32], strides = [1, 1]} : vector<2x96xf32> to vector<2x32xf32>
    %35 = vector.extract_strided_slice %17 {offsets = [0, 64], sizes = [2, 32], strides = [1, 1]} : vector<2x96xf32> to vector<2x32xf32>
    %36 = arith.mulf %25, %35 : vector<2x32xf32>
    %37 = arith.addf %34, %36 : vector<2x32xf32>
    %38 = math.tanh %37 : vector<2x32xf32>
    %cst_14 = arith.constant 1.000000e+00 : f32
    %39 = vector.broadcast %cst_14 : f32 to vector<2x32xf32>
    %40 = arith.subf %39, %33 : vector<2x32xf32>
    %41 = arith.mulf %40, %38 : vector<2x32xf32>
    %42 = arith.mulf %33, %7 : vector<2x32xf32>
    %43 = arith.addf %41, %42 : vector<2x32xf32>
    %44 = vector.extract_strided_slice %6 {offsets = [14, 96], sizes = [2, 96], strides = [1, 1]} : vector<16x192xf32> to vector<2x96xf32>
    %45 = vector.extract_strided_slice %15 {offsets = [0, 96], sizes = [2, 96], strides = [1, 1]} : vector<2x192xf32> to vector<2x96xf32>
    %46 = vector.extract_strided_slice %44 {offsets = [0, 0], sizes = [2, 32], strides = [1, 1]} : vector<2x96xf32> to vector<2x32xf32>
    %47 = vector.extract_strided_slice %45 {offsets = [0, 0], sizes = [2, 32], strides = [1, 1]} : vector<2x96xf32> to vector<2x32xf32>
    %48 = arith.addf %46, %47 : vector<2x32xf32>
    %49 = arith.negf %48 : vector<2x32xf32>
    %50 = math.exp %49 : vector<2x32xf32>
    %cst_15 = arith.constant 1.000000e+00 : f32
    %51 = vector.broadcast %cst_15 : f32 to vector<2x32xf32>
    %52 = arith.addf %51, %50 : vector<2x32xf32>
    %53 = arith.divf %51, %52 : vector<2x32xf32>
    %54 = vector.extract_strided_slice %44 {offsets = [0, 32], sizes = [2, 32], strides = [1, 1]} : vector<2x96xf32> to vector<2x32xf32>
    %55 = vector.extract_strided_slice %45 {offsets = [0, 32], sizes = [2, 32], strides = [1, 1]} : vector<2x96xf32> to vector<2x32xf32>
    %56 = arith.addf %54, %55 : vector<2x32xf32>
    %57 = arith.negf %56 : vector<2x32xf32>
    %58 = math.exp %57 : vector<2x32xf32>
    %cst_16 = arith.constant 1.000000e+00 : f32
    %59 = vector.broadcast %cst_16 : f32 to vector<2x32xf32>
    %60 = arith.addf %59, %58 : vector<2x32xf32>
    %61 = arith.divf %59, %60 : vector<2x32xf32>
    %62 = vector.extract_strided_slice %44 {offsets = [0, 64], sizes = [2, 32], strides = [1, 1]} : vector<2x96xf32> to vector<2x32xf32>
    %63 = vector.extract_strided_slice %45 {offsets = [0, 64], sizes = [2, 32], strides = [1, 1]} : vector<2x96xf32> to vector<2x32xf32>
    %64 = arith.mulf %53, %63 : vector<2x32xf32>
    %65 = arith.addf %62, %64 : vector<2x32xf32>
    %66 = math.tanh %65 : vector<2x32xf32>
    %cst_17 = arith.constant 1.000000e+00 : f32
    %67 = vector.broadcast %cst_17 : f32 to vector<2x32xf32>
    %68 = arith.subf %67, %61 : vector<2x32xf32>
    %69 = arith.mulf %68, %66 : vector<2x32xf32>
    %70 = arith.mulf %61, %8 : vector<2x32xf32>
    %71 = arith.addf %69, %70 : vector<2x32xf32>
    %c0_18 = arith.constant 0 : index
    %c0_19 = arith.constant 0 : index
    %72 = vector.load %arg30[%c0_18, %c0_19] : memref<16x64xf32, #tpu.memory_space<vmem>>, vector<2x32xf32>
    tpu.vector_store %arg30[%c0_18, %c0_19], %43 {strides = array<i32>} : memref<16x64xf32, #tpu.memory_space<vmem>>, vector<2x32xf32>,
    %c14 = arith.constant 14 : index
    %c32 = arith.constant 32 : index
    %73 = vector.load %arg30[%c14, %c32] : memref<16x64xf32, #tpu.memory_space<vmem>>, vector<2x32xf32>
    tpu.vector_store %arg30[%c14, %c32], %71 {strides = array<i32>} : memref<16x64xf32, #tpu.memory_space<vmem>>, vector<2x32xf32>,
    %74 = tpu.concatenate %43, %71 in 1 : vector<2x32xf32>, vector<2x32xf32> -> vector<2x64xf32>
    %75 = arith.truncf %74 : vector<2x64xf32> to vector<2x64xbf16>
    %c0_20 = arith.constant 0 : index
    %c0_21 = arith.constant 0 : index
    %76 = vector.load %arg7[%c0_20, %c0_21] : memref<64x192xbf16, #tpu.memory_space<vmem>>, vector<64x192xbf16>
    %cst_22 = arith.constant dense<0.000000e+00> : vector<2x192xf32>
    %77 = tpu.matmul %75, %76, %cst_22 {dimension_numbers = #tpu.dot_dimension_numbers<[1], [0], [0], [1], [0, 0, 1, 1], [], []>} : vector<2x64xbf16>, vector<64x192xbf16>, vector<2x192xf32> -> vector<2x192xf32>
    %c0_23 = arith.constant 0 : index
    %c0_24 = arith.constant 0 : index
    %78 = vector.load %arg8[%c0_23, %c0_24] : memref<1x192xf32, #tpu.memory_space<vmem>>, vector<1x192xf32>
    %79 = vector.broadcast %78 : vector<1x192xf32> to vector<2x192xf32>
    %80 = arith.addf %77, %79 : vector<2x192xf32>
    %81 = vector.extract_strided_slice %6 {offsets = [2, 0], sizes = [2, 96], strides = [1, 1]} : vector<16x192xf32> to vector<2x96xf32>
    %82 = vector.extract_strided_slice %80 {offsets = [0, 0], sizes = [2, 96], strides = [1, 1]} : vector<2x192xf32> to vector<2x96xf32>
    %83 = vector.extract_strided_slice %81 {offsets = [0, 0], sizes = [2, 32], strides = [1, 1]} : vector<2x96xf32> to vector<2x32xf32>
    %84 = vector.extract_strided_slice %82 {offsets = [0, 0], sizes = [2, 32], strides = [1, 1]} : vector<2x96xf32> to vector<2x32xf32>
    %85 = arith.addf %83, %84 : vector<2x32xf32>
    %86 = arith.negf %85 : vector<2x32xf32>
    %87 = math.exp %86 : vector<2x32xf32>
    %cst_25 = arith.constant 1.000000e+00 : f32
    %88 = vector.broadcast %cst_25 : f32 to vector<2x32xf32>
    %89 = arith.addf %88, %87 : vector<2x32xf32>
    %90 = arith.divf %88, %89 : vector<2x32xf32>
    %91 = vector.extract_strided_slice %81 {offsets = [0, 32], sizes = [2, 32], strides = [1, 1]} : vector<2x96xf32> to vector<2x32xf32>
    %92 = vector.extract_strided_slice %82 {offsets = [0, 32], sizes = [2, 32], strides = [1, 1]} : vector<2x96xf32> to vector<2x32xf32>
    %93 = arith.addf %91, %92 : vector<2x32xf32>
    %94 = arith.negf %93 : vector<2x32xf32>
    %95 = math.exp %94 : vector<2x32xf32>
    %cst_26 = arith.constant 1.000000e+00 : f32
    %96 = vector.broadcast %cst_26 : f32 to vector<2x32xf32>
    %97 = arith.addf %96, %95 : vector<2x32xf32>
    %98 = arith.divf %96, %97 : vector<2x32xf32>
    %99 = vector.extract_strided_slice %81 {offsets = [0, 64], sizes = [2, 32], strides = [1, 1]} : vector<2x96xf32> to vector<2x32xf32>
    %100 = vector.extract_strided_slice %82 {offsets = [0, 64], sizes = [2, 32], strides = [1, 1]} : vector<2x96xf32> to vector<2x32xf32>
    %101 = arith.mulf %90, %100 : vector<2x32xf32>
    %102 = arith.addf %99, %101 : vector<2x32xf32>
    %103 = math.tanh %102 : vector<2x32xf32>
    %cst_27 = arith.constant 1.000000e+00 : f32
    %104 = vector.broadcast %cst_27 : f32 to vector<2x32xf32>
    %105 = arith.subf %104, %98 : vector<2x32xf32>
    %106 = arith.mulf %105, %103 : vector<2x32xf32>
    %107 = arith.mulf %98, %43 : vector<2x32xf32>
    %108 = arith.addf %106, %107 : vector<2x32xf32>
    %109 = vector.extract_strided_slice %6 {offsets = [12, 96], sizes = [2, 96], strides = [1, 1]} : vector<16x192xf32> to vector<2x96xf32>
    %110 = vector.extract_strided_slice %80 {offsets = [0, 96], sizes = [2, 96], strides = [1, 1]} : vector<2x192xf32> to vector<2x96xf32>
    %111 = vector.extract_strided_slice %109 {offsets = [0, 0], sizes = [2, 32], strides = [1, 1]} : vector<2x96xf32> to vector<2x32xf32>
    %112 = vector.extract_strided_slice %110 {offsets = [0, 0], sizes = [2, 32], strides = [1, 1]} : vector<2x96xf32> to vector<2x32xf32>
    %113 = arith.addf %111, %112 : vector<2x32xf32>
    %114 = arith.negf %113 : vector<2x32xf32>
    %115 = math.exp %114 : vector<2x32xf32>
    %cst_28 = arith.constant 1.000000e+00 : f32
    %116 = vector.broadcast %cst_28 : f32 to vector<2x32xf32>
    %117 = arith.addf %116, %115 : vector<2x32xf32>
    %118 = arith.divf %116, %117 : vector<2x32xf32>
    %119 = vector.extract_strided_slice %109 {offsets = [0, 32], sizes = [2, 32], strides = [1, 1]} : vector<2x96xf32> to vector<2x32xf32>
    %120 = vector.extract_strided_slice %110 {offsets = [0, 32], sizes = [2, 32], strides = [1, 1]} : vector<2x96xf32> to vector<2x32xf32>
    %121 = arith.addf %119, %120 : vector<2x32xf32>
    %122 = arith.negf %121 : vector<2x32xf32>
    %123 = math.exp %122 : vector<2x32xf32>
    %cst_29 = arith.constant 1.000000e+00 : f32
    %124 = vector.broadcast %cst_29 : f32 to vector<2x32xf32>
    %125 = arith.addf %124, %123 : vector<2x32xf32>
    %126 = arith.divf %124, %125 : vector<2x32xf32>
    %127 = vector.extract_strided_slice %109 {offsets = [0, 64], sizes = [2, 32], strides = [1, 1]} : vector<2x96xf32> to vector<2x32xf32>
    %128 = vector.extract_strided_slice %110 {offsets = [0, 64], sizes = [2, 32], strides = [1, 1]} : vector<2x96xf32> to vector<2x32xf32>
    %129 = arith.mulf %118, %128 : vector<2x32xf32>
    %130 = arith.addf %127, %129 : vector<2x32xf32>
    %131 = math.tanh %130 : vector<2x32xf32>
    %cst_30 = arith.constant 1.000000e+00 : f32
    %132 = vector.broadcast %cst_30 : f32 to vector<2x32xf32>
    %133 = arith.subf %132, %126 : vector<2x32xf32>
    %134 = arith.mulf %133, %131 : vector<2x32xf32>
    %135 = arith.mulf %126, %71 : vector<2x32xf32>
    %136 = arith.addf %134, %135 : vector<2x32xf32>
    %c2 = arith.constant 2 : index
    %c0_31 = arith.constant 0 : index
    %137 = vector.load %arg30[%c2, %c0_31] : memref<16x64xf32, #tpu.memory_space<vmem>>, vector<2x32xf32>
    tpu.vector_store %arg30[%c2, %c0_31], %108 {strides = array<i32>} : memref<16x64xf32, #tpu.memory_space<vmem>>, vector<2x32xf32>,
    %c12 = arith.constant 12 : index
    %c32_32 = arith.constant 32 : index
    %138 = vector.load %arg30[%c12, %c32_32] : memref<16x64xf32, #tpu.memory_space<vmem>>, vector<2x32xf32>
    tpu.vector_store %arg30[%c12, %c32_32], %136 {strides = array<i32>} : memref<16x64xf32, #tpu.memory_space<vmem>>, vector<2x32xf32>,
    %139 = tpu.concatenate %108, %136 in 1 : vector<2x32xf32>, vector<2x32xf32> -> vector<2x64xf32>
    %140 = arith.truncf %139 : vector<2x64xf32> to vector<2x64xbf16>
    %c0_33 = arith.constant 0 : index
    %c0_34 = arith.constant 0 : index
    %141 = vector.load %arg7[%c0_33, %c0_34] : memref<64x192xbf16, #tpu.memory_space<vmem>>, vector<64x192xbf16>
    %cst_35 = arith.constant dense<0.000000e+00> : vector<2x192xf32>
    %142 = tpu.matmul %140, %141, %cst_35 {dimension_numbers = #tpu.dot_dimension_numbers<[1], [0], [0], [1], [0, 0, 1, 1], [], []>} : vector<2x64xbf16>, vector<64x192xbf16>, vector<2x192xf32> -> vector<2x192xf32>
    %c0_36 = arith.constant 0 : index
    %c0_37 = arith.constant 0 : index
    %143 = vector.load %arg8[%c0_36, %c0_37] : memref<1x192xf32, #tpu.memory_space<vmem>>, vector<1x192xf32>
    %144 = vector.broadcast %143 : vector<1x192xf32> to vector<2x192xf32>
    %145 = arith.addf %142, %144 : vector<2x192xf32>
    %146 = vector.extract_strided_slice %6 {offsets = [4, 0], sizes = [2, 96], strides = [1, 1]} : vector<16x192xf32> to vector<2x96xf32>
    %147 = vector.extract_strided_slice %145 {offsets = [0, 0], sizes = [2, 96], strides = [1, 1]} : vector<2x192xf32> to vector<2x96xf32>
    %148 = vector.extract_strided_slice %146 {offsets = [0, 0], sizes = [2, 32], strides = [1, 1]} : vector<2x96xf32> to vector<2x32xf32>
    %149 = vector.extract_strided_slice %147 {offsets = [0, 0], sizes = [2, 32], strides = [1, 1]} : vector<2x96xf32> to vector<2x32xf32>
    %150 = arith.addf %148, %149 : vector<2x32xf32>
    %151 = arith.negf %150 : vector<2x32xf32>
    %152 = math.exp %151 : vector<2x32xf32>
    %cst_38 = arith.constant 1.000000e+00 : f32
    %153 = vector.broadcast %cst_38 : f32 to vector<2x32xf32>
    %154 = arith.addf %153, %152 : vector<2x32xf32>
    %155 = arith.divf %153, %154 : vector<2x32xf32>
    %156 = vector.extract_strided_slice %146 {offsets = [0, 32], sizes = [2, 32], strides = [1, 1]} : vector<2x96xf32> to vector<2x32xf32>
    %157 = vector.extract_strided_slice %147 {offsets = [0, 32], sizes = [2, 32], strides = [1, 1]} : vector<2x96xf32> to vector<2x32xf32>
    %158 = arith.addf %156, %157 : vector<2x32xf32>
    %159 = arith.negf %158 : vector<2x32xf32>
    %160 = math.exp %159 : vector<2x32xf32>
    %cst_39 = arith.constant 1.000000e+00 : f32
    %161 = vector.broadcast %cst_39 : f32 to vector<2x32xf32>
    %162 = arith.addf %161, %160 : vector<2x32xf32>
    %163 = arith.divf %161, %162 : vector<2x32xf32>
    %164 = vector.extract_strided_slice %146 {offsets = [0, 64], sizes = [2, 32], strides = [1, 1]} : vector<2x96xf32> to vector<2x32xf32>
    %165 = vector.extract_strided_slice %147 {offsets = [0, 64], sizes = [2, 32], strides = [1, 1]} : vector<2x96xf32> to vector<2x32xf32>
    %166 = arith.mulf %155, %165 : vector<2x32xf32>
    %167 = arith.addf %164, %166 : vector<2x32xf32>
    %168 = math.tanh %167 : vector<2x32xf32>
    %cst_40 = arith.constant 1.000000e+00 : f32
    %169 = vector.broadcast %cst_40 : f32 to vector<2x32xf32>
    %170 = arith.subf %169, %163 : vector<2x32xf32>
    %171 = arith.mulf %170, %168 : vector<2x32xf32>
    %172 = arith.mulf %163, %108 : vector<2x32xf32>
    %173 = arith.addf %171, %172 : vector<2x32xf32>
    %174 = vector.extract_strided_slice %6 {offsets = [10, 96], sizes = [2, 96], strides = [1, 1]} : vector<16x192xf32> to vector<2x96xf32>
    %175 = vector.extract_strided_slice %145 {offsets = [0, 96], sizes = [2, 96], strides = [1, 1]} : vector<2x192xf32> to vector<2x96xf32>
    %176 = vector.extract_strided_slice %174 {offsets = [0, 0], sizes = [2, 32], strides = [1, 1]} : vector<2x96xf32> to vector<2x32xf32>
    %177 = vector.extract_strided_slice %175 {offsets = [0, 0], sizes = [2, 32], strides = [1, 1]} : vector<2x96xf32> to vector<2x32xf32>
    %178 = arith.addf %176, %177 : vector<2x32xf32>
    %179 = arith.negf %178 : vector<2x32xf32>
    %180 = math.exp %179 : vector<2x32xf32>
    %cst_41 = arith.constant 1.000000e+00 : f32
    %181 = vector.broadcast %cst_41 : f32 to vector<2x32xf32>
    %182 = arith.addf %181, %180 : vector<2x32xf32>
    %183 = arith.divf %181, %182 : vector<2x32xf32>
    %184 = vector.extract_strided_slice %174 {offsets = [0, 32], sizes = [2, 32], strides = [1, 1]} : vector<2x96xf32> to vector<2x32xf32>
    %185 = vector.extract_strided_slice %175 {offsets = [0, 32], sizes = [2, 32], strides = [1, 1]} : vector<2x96xf32> to vector<2x32xf32>
    %186 = arith.addf %184, %185 : vector<2x32xf32>
    %187 = arith.negf %186 : vector<2x32xf32>
    %188 = math.exp %187 : vector<2x32xf32>
    %cst_42 = arith.constant 1.000000e+00 : f32
    %189 = vector.broadcast %cst_42 : f32 to vector<2x32xf32>
    %190 = arith.addf %189, %188 : vector<2x32xf32>
    %191 = arith.divf %189, %190 : vector<2x32xf32>
    %192 = vector.extract_strided_slice %174 {offsets = [0, 64], sizes = [2, 32], strides = [1, 1]} : vector<2x96xf32> to vector<2x32xf32>
    %193 = vector.extract_strided_slice %175 {offsets = [0, 64], sizes = [2, 32], strides = [1, 1]} : vector<2x96xf32> to vector<2x32xf32>
    %194 = arith.mulf %183, %193 : vector<2x32xf32>
    %195 = arith.addf %192, %194 : vector<2x32xf32>
    %196 = math.tanh %195 : vector<2x32xf32>
    %cst_43 = arith.constant 1.000000e+00 : f32
    %197 = vector.broadcast %cst_43 : f32 to vector<2x32xf32>
    %198 = arith.subf %197, %191 : vector<2x32xf32>
    %199 = arith.mulf %198, %196 : vector<2x32xf32>
    %200 = arith.mulf %191, %136 : vector<2x32xf32>
    %201 = arith.addf %199, %200 : vector<2x32xf32>
    %c4 = arith.constant 4 : index
    %c0_44 = arith.constant 0 : index
    %202 = vector.load %arg30[%c4, %c0_44] : memref<16x64xf32, #tpu.memory_space<vmem>>, vector<2x32xf32>
    tpu.vector_store %arg30[%c4, %c0_44], %173 {strides = array<i32>} : memref<16x64xf32, #tpu.memory_space<vmem>>, vector<2x32xf32>,
    %c10 = arith.constant 10 : index
    %c32_45 = arith.constant 32 : index
    %203 = vector.load %arg30[%c10, %c32_45] : memref<16x64xf32, #tpu.memory_space<vmem>>, vector<2x32xf32>
    tpu.vector_store %arg30[%c10, %c32_45], %201 {strides = array<i32>} : memref<16x64xf32, #tpu.memory_space<vmem>>, vector<2x32xf32>,
    %204 = tpu.concatenate %173, %201 in 1 : vector<2x32xf32>, vector<2x32xf32> -> vector<2x64xf32>
    %205 = arith.truncf %204 : vector<2x64xf32> to vector<2x64xbf16>
    %c0_46 = arith.constant 0 : index
    %c0_47 = arith.constant 0 : index
    %206 = vector.load %arg7[%c0_46, %c0_47] : memref<64x192xbf16, #tpu.memory_space<vmem>>, vector<64x192xbf16>
    %cst_48 = arith.constant dense<0.000000e+00> : vector<2x192xf32>
    %207 = tpu.matmul %205, %206, %cst_48 {dimension_numbers = #tpu.dot_dimension_numbers<[1], [0], [0], [1], [0, 0, 1, 1], [], []>} : vector<2x64xbf16>, vector<64x192xbf16>, vector<2x192xf32> -> vector<2x192xf32>
    %c0_49 = arith.constant 0 : index
    %c0_50 = arith.constant 0 : index
    %208 = vector.load %arg8[%c0_49, %c0_50] : memref<1x192xf32, #tpu.memory_space<vmem>>, vector<1x192xf32>
    %209 = vector.broadcast %208 : vector<1x192xf32> to vector<2x192xf32>
    %210 = arith.addf %207, %209 : vector<2x192xf32>
    %211 = vector.extract_strided_slice %6 {offsets = [6, 0], sizes = [2, 96], strides = [1, 1]} : vector<16x192xf32> to vector<2x96xf32>
    %212 = vector.extract_strided_slice %210 {offsets = [0, 0], sizes = [2, 96], strides = [1, 1]} : vector<2x192xf32> to vector<2x96xf32>
    %213 = vector.extract_strided_slice %211 {offsets = [0, 0], sizes = [2, 32], strides = [1, 1]} : vector<2x96xf32> to vector<2x32xf32>
    %214 = vector.extract_strided_slice %212 {offsets = [0, 0], sizes = [2, 32], strides = [1, 1]} : vector<2x96xf32> to vector<2x32xf32>
    %215 = arith.addf %213, %214 : vector<2x32xf32>
    %216 = arith.negf %215 : vector<2x32xf32>
    %217 = math.exp %216 : vector<2x32xf32>
    %cst_51 = arith.constant 1.000000e+00 : f32
    %218 = vector.broadcast %cst_51 : f32 to vector<2x32xf32>
    %219 = arith.addf %218, %217 : vector<2x32xf32>
    %220 = arith.divf %218, %219 : vector<2x32xf32>
    %221 = vector.extract_strided_slice %211 {offsets = [0, 32], sizes = [2, 32], strides = [1, 1]} : vector<2x96xf32> to vector<2x32xf32>
    %222 = vector.extract_strided_slice %212 {offsets = [0, 32], sizes = [2, 32], strides = [1, 1]} : vector<2x96xf32> to vector<2x32xf32>
    %223 = arith.addf %221, %222 : vector<2x32xf32>
    %224 = arith.negf %223 : vector<2x32xf32>
    %225 = math.exp %224 : vector<2x32xf32>
    %cst_52 = arith.constant 1.000000e+00 : f32
    %226 = vector.broadcast %cst_52 : f32 to vector<2x32xf32>
    %227 = arith.addf %226, %225 : vector<2x32xf32>
    %228 = arith.divf %226, %227 : vector<2x32xf32>
    %229 = vector.extract_strided_slice %211 {offsets = [0, 64], sizes = [2, 32], strides = [1, 1]} : vector<2x96xf32> to vector<2x32xf32>
    %230 = vector.extract_strided_slice %212 {offsets = [0, 64], sizes = [2, 32], strides = [1, 1]} : vector<2x96xf32> to vector<2x32xf32>
    %231 = arith.mulf %220, %230 : vector<2x32xf32>
    %232 = arith.addf %229, %231 : vector<2x32xf32>
    %233 = math.tanh %232 : vector<2x32xf32>
    %cst_53 = arith.constant 1.000000e+00 : f32
    %234 = vector.broadcast %cst_53 : f32 to vector<2x32xf32>
    %235 = arith.subf %234, %228 : vector<2x32xf32>
    %236 = arith.mulf %235, %233 : vector<2x32xf32>
    %237 = arith.mulf %228, %173 : vector<2x32xf32>
    %238 = arith.addf %236, %237 : vector<2x32xf32>
    %239 = vector.extract_strided_slice %6 {offsets = [8, 96], sizes = [2, 96], strides = [1, 1]} : vector<16x192xf32> to vector<2x96xf32>
    %240 = vector.extract_strided_slice %210 {offsets = [0, 96], sizes = [2, 96], strides = [1, 1]} : vector<2x192xf32> to vector<2x96xf32>
    %241 = vector.extract_strided_slice %239 {offsets = [0, 0], sizes = [2, 32], strides = [1, 1]} : vector<2x96xf32> to vector<2x32xf32>
    %242 = vector.extract_strided_slice %240 {offsets = [0, 0], sizes = [2, 32], strides = [1, 1]} : vector<2x96xf32> to vector<2x32xf32>
    %243 = arith.addf %241, %242 : vector<2x32xf32>
    %244 = arith.negf %243 : vector<2x32xf32>
    %245 = math.exp %244 : vector<2x32xf32>
    %cst_54 = arith.constant 1.000000e+00 : f32
    %246 = vector.broadcast %cst_54 : f32 to vector<2x32xf32>
    %247 = arith.addf %246, %245 : vector<2x32xf32>
    %248 = arith.divf %246, %247 : vector<2x32xf32>
    %249 = vector.extract_strided_slice %239 {offsets = [0, 32], sizes = [2, 32], strides = [1, 1]} : vector<2x96xf32> to vector<2x32xf32>
    %250 = vector.extract_strided_slice %240 {offsets = [0, 32], sizes = [2, 32], strides = [1, 1]} : vector<2x96xf32> to vector<2x32xf32>
    %251 = arith.addf %249, %250 : vector<2x32xf32>
    %252 = arith.negf %251 : vector<2x32xf32>
    %253 = math.exp %252 : vector<2x32xf32>
    %cst_55 = arith.constant 1.000000e+00 : f32
    %254 = vector.broadcast %cst_55 : f32 to vector<2x32xf32>
    %255 = arith.addf %254, %253 : vector<2x32xf32>
    %256 = arith.divf %254, %255 : vector<2x32xf32>
    %257 = vector.extract_strided_slice %239 {offsets = [0, 64], sizes = [2, 32], strides = [1, 1]} : vector<2x96xf32> to vector<2x32xf32>
    %258 = vector.extract_strided_slice %240 {offsets = [0, 64], sizes = [2, 32], strides = [1, 1]} : vector<2x96xf32> to vector<2x32xf32>
    %259 = arith.mulf %248, %258 : vector<2x32xf32>
    %260 = arith.addf %257, %259 : vector<2x32xf32>
    %261 = math.tanh %260 : vector<2x32xf32>
    %cst_56 = arith.constant 1.000000e+00 : f32
    %262 = vector.broadcast %cst_56 : f32 to vector<2x32xf32>
    %263 = arith.subf %262, %256 : vector<2x32xf32>
    %264 = arith.mulf %263, %261 : vector<2x32xf32>
    %265 = arith.mulf %256, %201 : vector<2x32xf32>
    %266 = arith.addf %264, %265 : vector<2x32xf32>
    %c6 = arith.constant 6 : index
    %c0_57 = arith.constant 0 : index
    %267 = vector.load %arg30[%c6, %c0_57] : memref<16x64xf32, #tpu.memory_space<vmem>>, vector<2x32xf32>
    tpu.vector_store %arg30[%c6, %c0_57], %238 {strides = array<i32>} : memref<16x64xf32, #tpu.memory_space<vmem>>, vector<2x32xf32>,
    %c8 = arith.constant 8 : index
    %c32_58 = arith.constant 32 : index
    %268 = vector.load %arg30[%c8, %c32_58] : memref<16x64xf32, #tpu.memory_space<vmem>>, vector<2x32xf32>
    tpu.vector_store %arg30[%c8, %c32_58], %266 {strides = array<i32>} : memref<16x64xf32, #tpu.memory_space<vmem>>, vector<2x32xf32>,
    %269 = tpu.concatenate %238, %266 in 1 : vector<2x32xf32>, vector<2x32xf32> -> vector<2x64xf32>
    %270 = arith.truncf %269 : vector<2x64xf32> to vector<2x64xbf16>
    %c0_59 = arith.constant 0 : index
    %c0_60 = arith.constant 0 : index
    %271 = vector.load %arg7[%c0_59, %c0_60] : memref<64x192xbf16, #tpu.memory_space<vmem>>, vector<64x192xbf16>
    %cst_61 = arith.constant dense<0.000000e+00> : vector<2x192xf32>
    %272 = tpu.matmul %270, %271, %cst_61 {dimension_numbers = #tpu.dot_dimension_numbers<[1], [0], [0], [1], [0, 0, 1, 1], [], []>} : vector<2x64xbf16>, vector<64x192xbf16>, vector<2x192xf32> -> vector<2x192xf32>
    %c0_62 = arith.constant 0 : index
    %c0_63 = arith.constant 0 : index
    %273 = vector.load %arg8[%c0_62, %c0_63] : memref<1x192xf32, #tpu.memory_space<vmem>>, vector<1x192xf32>
    %274 = vector.broadcast %273 : vector<1x192xf32> to vector<2x192xf32>
    %275 = arith.addf %272, %274 : vector<2x192xf32>
    %276 = vector.extract_strided_slice %6 {offsets = [8, 0], sizes = [2, 96], strides = [1, 1]} : vector<16x192xf32> to vector<2x96xf32>
    %277 = vector.extract_strided_slice %275 {offsets = [0, 0], sizes = [2, 96], strides = [1, 1]} : vector<2x192xf32> to vector<2x96xf32>
    %278 = vector.extract_strided_slice %276 {offsets = [0, 0], sizes = [2, 32], strides = [1, 1]} : vector<2x96xf32> to vector<2x32xf32>
    %279 = vector.extract_strided_slice %277 {offsets = [0, 0], sizes = [2, 32], strides = [1, 1]} : vector<2x96xf32> to vector<2x32xf32>
    %280 = arith.addf %278, %279 : vector<2x32xf32>
    %281 = arith.negf %280 : vector<2x32xf32>
    %282 = math.exp %281 : vector<2x32xf32>
    %cst_64 = arith.constant 1.000000e+00 : f32
    %283 = vector.broadcast %cst_64 : f32 to vector<2x32xf32>
    %284 = arith.addf %283, %282 : vector<2x32xf32>
    %285 = arith.divf %283, %284 : vector<2x32xf32>
    %286 = vector.extract_strided_slice %276 {offsets = [0, 32], sizes = [2, 32], strides = [1, 1]} : vector<2x96xf32> to vector<2x32xf32>
    %287 = vector.extract_strided_slice %277 {offsets = [0, 32], sizes = [2, 32], strides = [1, 1]} : vector<2x96xf32> to vector<2x32xf32>
    %288 = arith.addf %286, %287 : vector<2x32xf32>
    %289 = arith.negf %288 : vector<2x32xf32>
    %290 = math.exp %289 : vector<2x32xf32>
    %cst_65 = arith.constant 1.000000e+00 : f32
    %291 = vector.broadcast %cst_65 : f32 to vector<2x32xf32>
    %292 = arith.addf %291, %290 : vector<2x32xf32>
    %293 = arith.divf %291, %292 : vector<2x32xf32>
    %294 = vector.extract_strided_slice %276 {offsets = [0, 64], sizes = [2, 32], strides = [1, 1]} : vector<2x96xf32> to vector<2x32xf32>
    %295 = vector.extract_strided_slice %277 {offsets = [0, 64], sizes = [2, 32], strides = [1, 1]} : vector<2x96xf32> to vector<2x32xf32>
    %296 = arith.mulf %285, %295 : vector<2x32xf32>
    %297 = arith.addf %294, %296 : vector<2x32xf32>
    %298 = math.tanh %297 : vector<2x32xf32>
    %cst_66 = arith.constant 1.000000e+00 : f32
    %299 = vector.broadcast %cst_66 : f32 to vector<2x32xf32>
    %300 = arith.subf %299, %293 : vector<2x32xf32>
    %301 = arith.mulf %300, %298 : vector<2x32xf32>
    %302 = arith.mulf %293, %238 : vector<2x32xf32>
    %303 = arith.addf %301, %302 : vector<2x32xf32>
    %304 = vector.extract_strided_slice %6 {offsets = [6, 96], sizes = [2, 96], strides = [1, 1]} : vector<16x192xf32> to vector<2x96xf32>
    %305 = vector.extract_strided_slice %275 {offsets = [0, 96], sizes = [2, 96], strides = [1, 1]} : vector<2x192xf32> to vector<2x96xf32>
    %306 = vector.extract_strided_slice %304 {offsets = [0, 0], sizes = [2, 32], strides = [1, 1]} : vector<2x96xf32> to vector<2x32xf32>
    %307 = vector.extract_strided_slice %305 {offsets = [0, 0], sizes = [2, 32], strides = [1, 1]} : vector<2x96xf32> to vector<2x32xf32>
    %308 = arith.addf %306, %307 : vector<2x32xf32>
    %309 = arith.negf %308 : vector<2x32xf32>
    %310 = math.exp %309 : vector<2x32xf32>
    %cst_67 = arith.constant 1.000000e+00 : f32
    %311 = vector.broadcast %cst_67 : f32 to vector<2x32xf32>
    %312 = arith.addf %311, %310 : vector<2x32xf32>
    %313 = arith.divf %311, %312 : vector<2x32xf32>
    %314 = vector.extract_strided_slice %304 {offsets = [0, 32], sizes = [2, 32], strides = [1, 1]} : vector<2x96xf32> to vector<2x32xf32>
    %315 = vector.extract_strided_slice %305 {offsets = [0, 32], sizes = [2, 32], strides = [1, 1]} : vector<2x96xf32> to vector<2x32xf32>
    %316 = arith.addf %314, %315 : vector<2x32xf32>
    %317 = arith.negf %316 : vector<2x32xf32>
    %318 = math.exp %317 : vector<2x32xf32>
    %cst_68 = arith.constant 1.000000e+00 : f32
    %319 = vector.broadcast %cst_68 : f32 to vector<2x32xf32>
    %320 = arith.addf %319, %318 : vector<2x32xf32>
    %321 = arith.divf %319, %320 : vector<2x32xf32>
    %322 = vector.extract_strided_slice %304 {offsets = [0, 64], sizes = [2, 32], strides = [1, 1]} : vector<2x96xf32> to vector<2x32xf32>
    %323 = vector.extract_strided_slice %305 {offsets = [0, 64], sizes = [2, 32], strides = [1, 1]} : vector<2x96xf32> to vector<2x32xf32>
    %324 = arith.mulf %313, %323 : vector<2x32xf32>
    %325 = arith.addf %322, %324 : vector<2x32xf32>
    %326 = math.tanh %325 : vector<2x32xf32>
    %cst_69 = arith.constant 1.000000e+00 : f32
    %327 = vector.broadcast %cst_69 : f32 to vector<2x32xf32>
    %328 = arith.subf %327, %321 : vector<2x32xf32>
    %329 = arith.mulf %328, %326 : vector<2x32xf32>
    %330 = arith.mulf %321, %266 : vector<2x32xf32>
    %331 = arith.addf %329, %330 : vector<2x32xf32>
    %c8_70 = arith.constant 8 : index
    %c0_71 = arith.constant 0 : index
    %332 = vector.load %arg30[%c8_70, %c0_71] : memref<16x64xf32, #tpu.memory_space<vmem>>, vector<2x32xf32>
    tpu.vector_store %arg30[%c8_70, %c0_71], %303 {strides = array<i32>} : memref<16x64xf32, #tpu.memory_space<vmem>>, vector<2x32xf32>,
    %c6_72 = arith.constant 6 : index
    %c32_73 = arith.constant 32 : index
    %333 = vector.load %arg30[%c6_72, %c32_73] : memref<16x64xf32, #tpu.memory_space<vmem>>, vector<2x32xf32>
    tpu.vector_store %arg30[%c6_72, %c32_73], %331 {strides = array<i32>} : memref<16x64xf32, #tpu.memory_space<vmem>>, vector<2x32xf32>,
    %334 = tpu.concatenate %303, %331 in 1 : vector<2x32xf32>, vector<2x32xf32> -> vector<2x64xf32>
    %335 = arith.truncf %334 : vector<2x64xf32> to vector<2x64xbf16>
    %c0_74 = arith.constant 0 : index
    %c0_75 = arith.constant 0 : index
    %336 = vector.load %arg7[%c0_74, %c0_75] : memref<64x192xbf16, #tpu.memory_space<vmem>>, vector<64x192xbf16>
    %cst_76 = arith.constant dense<0.000000e+00> : vector<2x192xf32>
    %337 = tpu.matmul %335, %336, %cst_76 {dimension_numbers = #tpu.dot_dimension_numbers<[1], [0], [0], [1], [0, 0, 1, 1], [], []>} : vector<2x64xbf16>, vector<64x192xbf16>, vector<2x192xf32> -> vector<2x192xf32>
    %c0_77 = arith.constant 0 : index
    %c0_78 = arith.constant 0 : index
    %338 = vector.load %arg8[%c0_77, %c0_78] : memref<1x192xf32, #tpu.memory_space<vmem>>, vector<1x192xf32>
    %339 = vector.broadcast %338 : vector<1x192xf32> to vector<2x192xf32>
    %340 = arith.addf %337, %339 : vector<2x192xf32>
    %341 = vector.extract_strided_slice %6 {offsets = [10, 0], sizes = [2, 96], strides = [1, 1]} : vector<16x192xf32> to vector<2x96xf32>
    %342 = vector.extract_strided_slice %340 {offsets = [0, 0], sizes = [2, 96], strides = [1, 1]} : vector<2x192xf32> to vector<2x96xf32>
    %343 = vector.extract_strided_slice %341 {offsets = [0, 0], sizes = [2, 32], strides = [1, 1]} : vector<2x96xf32> to vector<2x32xf32>
    %344 = vector.extract_strided_slice %342 {offsets = [0, 0], sizes = [2, 32], strides = [1, 1]} : vector<2x96xf32> to vector<2x32xf32>
    %345 = arith.addf %343, %344 : vector<2x32xf32>
    %346 = arith.negf %345 : vector<2x32xf32>
    %347 = math.exp %346 : vector<2x32xf32>
    %cst_79 = arith.constant 1.000000e+00 : f32
    %348 = vector.broadcast %cst_79 : f32 to vector<2x32xf32>
    %349 = arith.addf %348, %347 : vector<2x32xf32>
    %350 = arith.divf %348, %349 : vector<2x32xf32>
    %351 = vector.extract_strided_slice %341 {offsets = [0, 32], sizes = [2, 32], strides = [1, 1]} : vector<2x96xf32> to vector<2x32xf32>
    %352 = vector.extract_strided_slice %342 {offsets = [0, 32], sizes = [2, 32], strides = [1, 1]} : vector<2x96xf32> to vector<2x32xf32>
    %353 = arith.addf %351, %352 : vector<2x32xf32>
    %354 = arith.negf %353 : vector<2x32xf32>
    %355 = math.exp %354 : vector<2x32xf32>
    %cst_80 = arith.constant 1.000000e+00 : f32
    %356 = vector.broadcast %cst_80 : f32 to vector<2x32xf32>
    %357 = arith.addf %356, %355 : vector<2x32xf32>
    %358 = arith.divf %356, %357 : vector<2x32xf32>
    %359 = vector.extract_strided_slice %341 {offsets = [0, 64], sizes = [2, 32], strides = [1, 1]} : vector<2x96xf32> to vector<2x32xf32>
    %360 = vector.extract_strided_slice %342 {offsets = [0, 64], sizes = [2, 32], strides = [1, 1]} : vector<2x96xf32> to vector<2x32xf32>
    %361 = arith.mulf %350, %360 : vector<2x32xf32>
    %362 = arith.addf %359, %361 : vector<2x32xf32>
    %363 = math.tanh %362 : vector<2x32xf32>
    %cst_81 = arith.constant 1.000000e+00 : f32
    %364 = vector.broadcast %cst_81 : f32 to vector<2x32xf32>
    %365 = arith.subf %364, %358 : vector<2x32xf32>
    %366 = arith.mulf %365, %363 : vector<2x32xf32>
    %367 = arith.mulf %358, %303 : vector<2x32xf32>
    %368 = arith.addf %366, %367 : vector<2x32xf32>
    %369 = vector.extract_strided_slice %6 {offsets = [4, 96], sizes = [2, 96], strides = [1, 1]} : vector<16x192xf32> to vector<2x96xf32>
    %370 = vector.extract_strided_slice %340 {offsets = [0, 96], sizes = [2, 96], strides = [1, 1]} : vector<2x192xf32> to vector<2x96xf32>
    %371 = vector.extract_strided_slice %369 {offsets = [0, 0], sizes = [2, 32], strides = [1, 1]} : vector<2x96xf32> to vector<2x32xf32>
    %372 = vector.extract_strided_slice %370 {offsets = [0, 0], sizes = [2, 32], strides = [1, 1]} : vector<2x96xf32> to vector<2x32xf32>
    %373 = arith.addf %371, %372 : vector<2x32xf32>
    %374 = arith.negf %373 : vector<2x32xf32>
    %375 = math.exp %374 : vector<2x32xf32>
    %cst_82 = arith.constant 1.000000e+00 : f32
    %376 = vector.broadcast %cst_82 : f32 to vector<2x32xf32>
    %377 = arith.addf %376, %375 : vector<2x32xf32>
    %378 = arith.divf %376, %377 : vector<2x32xf32>
    %379 = vector.extract_strided_slice %369 {offsets = [0, 32], sizes = [2, 32], strides = [1, 1]} : vector<2x96xf32> to vector<2x32xf32>
    %380 = vector.extract_strided_slice %370 {offsets = [0, 32], sizes = [2, 32], strides = [1, 1]} : vector<2x96xf32> to vector<2x32xf32>
    %381 = arith.addf %379, %380 : vector<2x32xf32>
    %382 = arith.negf %381 : vector<2x32xf32>
    %383 = math.exp %382 : vector<2x32xf32>
    %cst_83 = arith.constant 1.000000e+00 : f32
    %384 = vector.broadcast %cst_83 : f32 to vector<2x32xf32>
    %385 = arith.addf %384, %383 : vector<2x32xf32>
    %386 = arith.divf %384, %385 : vector<2x32xf32>
    %387 = vector.extract_strided_slice %369 {offsets = [0, 64], sizes = [2, 32], strides = [1, 1]} : vector<2x96xf32> to vector<2x32xf32>
    %388 = vector.extract_strided_slice %370 {offsets = [0, 64], sizes = [2, 32], strides = [1, 1]} : vector<2x96xf32> to vector<2x32xf32>
    %389 = arith.mulf %378, %388 : vector<2x32xf32>
    %390 = arith.addf %387, %389 : vector<2x32xf32>
    %391 = math.tanh %390 : vector<2x32xf32>
    %cst_84 = arith.constant 1.000000e+00 : f32
    %392 = vector.broadcast %cst_84 : f32 to vector<2x32xf32>
    %393 = arith.subf %392, %386 : vector<2x32xf32>
    %394 = arith.mulf %393, %391 : vector<2x32xf32>
    %395 = arith.mulf %386, %331 : vector<2x32xf32>
    %396 = arith.addf %394, %395 : vector<2x32xf32>
    %c10_85 = arith.constant 10 : index
    %c0_86 = arith.constant 0 : index
    %397 = vector.load %arg30[%c10_85, %c0_86] : memref<16x64xf32, #tpu.memory_space<vmem>>, vector<2x32xf32>
    tpu.vector_store %arg30[%c10_85, %c0_86], %368 {strides = array<i32>} : memref<16x64xf32, #tpu.memory_space<vmem>>, vector<2x32xf32>,
    %c4_87 = arith.constant 4 : index
    %c32_88 = arith.constant 32 : index
    %398 = vector.load %arg30[%c4_87, %c32_88] : memref<16x64xf32, #tpu.memory_space<vmem>>, vector<2x32xf32>
    tpu.vector_store %arg30[%c4_87, %c32_88], %396 {strides = array<i32>} : memref<16x64xf32, #tpu.memory_space<vmem>>, vector<2x32xf32>,
    %399 = tpu.concatenate %368, %396 in 1 : vector<2x32xf32>, vector<2x32xf32> -> vector<2x64xf32>
    %400 = arith.truncf %399 : vector<2x64xf32> to vector<2x64xbf16>
    %c0_89 = arith.constant 0 : index
    %c0_90 = arith.constant 0 : index
    %401 = vector.load %arg7[%c0_89, %c0_90] : memref<64x192xbf16, #tpu.memory_space<vmem>>, vector<64x192xbf16>
    %cst_91 = arith.constant dense<0.000000e+00> : vector<2x192xf32>
    %402 = tpu.matmul %400, %401, %cst_91 {dimension_numbers = #tpu.dot_dimension_numbers<[1], [0], [0], [1], [0, 0, 1, 1], [], []>} : vector<2x64xbf16>, vector<64x192xbf16>, vector<2x192xf32> -> vector<2x192xf32>
    %c0_92 = arith.constant 0 : index
    %c0_93 = arith.constant 0 : index
    %403 = vector.load %arg8[%c0_92, %c0_93] : memref<1x192xf32, #tpu.memory_space<vmem>>, vector<1x192xf32>
    %404 = vector.broadcast %403 : vector<1x192xf32> to vector<2x192xf32>
    %405 = arith.addf %402, %404 : vector<2x192xf32>
    %406 = vector.extract_strided_slice %6 {offsets = [12, 0], sizes = [2, 96], strides = [1, 1]} : vector<16x192xf32> to vector<2x96xf32>
    %407 = vector.extract_strided_slice %405 {offsets = [0, 0], sizes = [2, 96], strides = [1, 1]} : vector<2x192xf32> to vector<2x96xf32>
    %408 = vector.extract_strided_slice %406 {offsets = [0, 0], sizes = [2, 32], strides = [1, 1]} : vector<2x96xf32> to vector<2x32xf32>
    %409 = vector.extract_strided_slice %407 {offsets = [0, 0], sizes = [2, 32], strides = [1, 1]} : vector<2x96xf32> to vector<2x32xf32>
    %410 = arith.addf %408, %409 : vector<2x32xf32>
    %411 = arith.negf %410 : vector<2x32xf32>
    %412 = math.exp %411 : vector<2x32xf32>
    %cst_94 = arith.constant 1.000000e+00 : f32
    %413 = vector.broadcast %cst_94 : f32 to vector<2x32xf32>
    %414 = arith.addf %413, %412 : vector<2x32xf32>
    %415 = arith.divf %413, %414 : vector<2x32xf32>
    %416 = vector.extract_strided_slice %406 {offsets = [0, 32], sizes = [2, 32], strides = [1, 1]} : vector<2x96xf32> to vector<2x32xf32>
    %417 = vector.extract_strided_slice %407 {offsets = [0, 32], sizes = [2, 32], strides = [1, 1]} : vector<2x96xf32> to vector<2x32xf32>
    %418 = arith.addf %416, %417 : vector<2x32xf32>
    %419 = arith.negf %418 : vector<2x32xf32>
    %420 = math.exp %419 : vector<2x32xf32>
    %cst_95 = arith.constant 1.000000e+00 : f32
    %421 = vector.broadcast %cst_95 : f32 to vector<2x32xf32>
    %422 = arith.addf %421, %420 : vector<2x32xf32>
    %423 = arith.divf %421, %422 : vector<2x32xf32>
    %424 = vector.extract_strided_slice %406 {offsets = [0, 64], sizes = [2, 32], strides = [1, 1]} : vector<2x96xf32> to vector<2x32xf32>
    %425 = vector.extract_strided_slice %407 {offsets = [0, 64], sizes = [2, 32], strides = [1, 1]} : vector<2x96xf32> to vector<2x32xf32>
    %426 = arith.mulf %415, %425 : vector<2x32xf32>
    %427 = arith.addf %424, %426 : vector<2x32xf32>
    %428 = math.tanh %427 : vector<2x32xf32>
    %cst_96 = arith.constant 1.000000e+00 : f32
    %429 = vector.broadcast %cst_96 : f32 to vector<2x32xf32>
    %430 = arith.subf %429, %423 : vector<2x32xf32>
    %431 = arith.mulf %430, %428 : vector<2x32xf32>
    %432 = arith.mulf %423, %368 : vector<2x32xf32>
    %433 = arith.addf %431, %432 : vector<2x32xf32>
    %434 = vector.extract_strided_slice %6 {offsets = [2, 96], sizes = [2, 96], strides = [1, 1]} : vector<16x192xf32> to vector<2x96xf32>
    %435 = vector.extract_strided_slice %405 {offsets = [0, 96], sizes = [2, 96], strides = [1, 1]} : vector<2x192xf32> to vector<2x96xf32>
    %436 = vector.extract_strided_slice %434 {offsets = [0, 0], sizes = [2, 32], strides = [1, 1]} : vector<2x96xf32> to vector<2x32xf32>
    %437 = vector.extract_strided_slice %435 {offsets = [0, 0], sizes = [2, 32], strides = [1, 1]} : vector<2x96xf32> to vector<2x32xf32>
    %438 = arith.addf %436, %437 : vector<2x32xf32>
    %439 = arith.negf %438 : vector<2x32xf32>
    %440 = math.exp %439 : vector<2x32xf32>
    %cst_97 = arith.constant 1.000000e+00 : f32
    %441 = vector.broadcast %cst_97 : f32 to vector<2x32xf32>
    %442 = arith.addf %441, %440 : vector<2x32xf32>
    %443 = arith.divf %441, %442 : vector<2x32xf32>
    %444 = vector.extract_strided_slice %434 {offsets = [0, 32], sizes = [2, 32], strides = [1, 1]} : vector<2x96xf32> to vector<2x32xf32>
    %445 = vector.extract_strided_slice %435 {offsets = [0, 32], sizes = [2, 32], strides = [1, 1]} : vector<2x96xf32> to vector<2x32xf32>
    %446 = arith.addf %444, %445 : vector<2x32xf32>
    %447 = arith.negf %446 : vector<2x32xf32>
    %448 = math.exp %447 : vector<2x32xf32>
    %cst_98 = arith.constant 1.000000e+00 : f32
    %449 = vector.broadcast %cst_98 : f32 to vector<2x32xf32>
    %450 = arith.addf %449, %448 : vector<2x32xf32>
    %451 = arith.divf %449, %450 : vector<2x32xf32>
    %452 = vector.extract_strided_slice %434 {offsets = [0, 64], sizes = [2, 32], strides = [1, 1]} : vector<2x96xf32> to vector<2x32xf32>
    %453 = vector.extract_strided_slice %435 {offsets = [0, 64], sizes = [2, 32], strides = [1, 1]} : vector<2x96xf32> to vector<2x32xf32>
    %454 = arith.mulf %443, %453 : vector<2x32xf32>
    %455 = arith.addf %452, %454 : vector<2x32xf32>
    %456 = math.tanh %455 : vector<2x32xf32>
    %cst_99 = arith.constant 1.000000e+00 : f32
    %457 = vector.broadcast %cst_99 : f32 to vector<2x32xf32>
    %458 = arith.subf %457, %451 : vector<2x32xf32>
    %459 = arith.mulf %458, %456 : vector<2x32xf32>
    %460 = arith.mulf %451, %396 : vector<2x32xf32>
    %461 = arith.addf %459, %460 : vector<2x32xf32>
    %c12_100 = arith.constant 12 : index
    %c0_101 = arith.constant 0 : index
    %462 = vector.load %arg30[%c12_100, %c0_101] : memref<16x64xf32, #tpu.memory_space<vmem>>, vector<2x32xf32>
    tpu.vector_store %arg30[%c12_100, %c0_101], %433 {strides = array<i32>} : memref<16x64xf32, #tpu.memory_space<vmem>>, vector<2x32xf32>,
    %c2_102 = arith.constant 2 : index
    %c32_103 = arith.constant 32 : index
    %463 = vector.load %arg30[%c2_102, %c32_103] : memref<16x64xf32, #tpu.memory_space<vmem>>, vector<2x32xf32>
    tpu.vector_store %arg30[%c2_102, %c32_103], %461 {strides = array<i32>} : memref<16x64xf32, #tpu.memory_space<vmem>>, vector<2x32xf32>,
    %464 = tpu.concatenate %433, %461 in 1 : vector<2x32xf32>, vector<2x32xf32> -> vector<2x64xf32>
    %465 = arith.truncf %464 : vector<2x64xf32> to vector<2x64xbf16>
    %c0_104 = arith.constant 0 : index
    %c0_105 = arith.constant 0 : index
    %466 = vector.load %arg7[%c0_104, %c0_105] : memref<64x192xbf16, #tpu.memory_space<vmem>>, vector<64x192xbf16>
    %cst_106 = arith.constant dense<0.000000e+00> : vector<2x192xf32>
    %467 = tpu.matmul %465, %466, %cst_106 {dimension_numbers = #tpu.dot_dimension_numbers<[1], [0], [0], [1], [0, 0, 1, 1], [], []>} : vector<2x64xbf16>, vector<64x192xbf16>, vector<2x192xf32> -> vector<2x192xf32>
    %c0_107 = arith.constant 0 : index
    %c0_108 = arith.constant 0 : index
    %468 = vector.load %arg8[%c0_107, %c0_108] : memref<1x192xf32, #tpu.memory_space<vmem>>, vector<1x192xf32>
    %469 = vector.broadcast %468 : vector<1x192xf32> to vector<2x192xf32>
    %470 = arith.addf %467, %469 : vector<2x192xf32>
    %471 = vector.extract_strided_slice %6 {offsets = [14, 0], sizes = [2, 96], strides = [1, 1]} : vector<16x192xf32> to vector<2x96xf32>
    %472 = vector.extract_strided_slice %470 {offsets = [0, 0], sizes = [2, 96], strides = [1, 1]} : vector<2x192xf32> to vector<2x96xf32>
    %473 = vector.extract_strided_slice %471 {offsets = [0, 0], sizes = [2, 32], strides = [1, 1]} : vector<2x96xf32> to vector<2x32xf32>
    %474 = vector.extract_strided_slice %472 {offsets = [0, 0], sizes = [2, 32], strides = [1, 1]} : vector<2x96xf32> to vector<2x32xf32>
    %475 = arith.addf %473, %474 : vector<2x32xf32>
    %476 = arith.negf %475 : vector<2x32xf32>
    %477 = math.exp %476 : vector<2x32xf32>
    %cst_109 = arith.constant 1.000000e+00 : f32
    %478 = vector.broadcast %cst_109 : f32 to vector<2x32xf32>
    %479 = arith.addf %478, %477 : vector<2x32xf32>
    %480 = arith.divf %478, %479 : vector<2x32xf32>
    %481 = vector.extract_strided_slice %471 {offsets = [0, 32], sizes = [2, 32], strides = [1, 1]} : vector<2x96xf32> to vector<2x32xf32>
    %482 = vector.extract_strided_slice %472 {offsets = [0, 32], sizes = [2, 32], strides = [1, 1]} : vector<2x96xf32> to vector<2x32xf32>
    %483 = arith.addf %481, %482 : vector<2x32xf32>
    %484 = arith.negf %483 : vector<2x32xf32>
    %485 = math.exp %484 : vector<2x32xf32>
    %cst_110 = arith.constant 1.000000e+00 : f32
    %486 = vector.broadcast %cst_110 : f32 to vector<2x32xf32>
    %487 = arith.addf %486, %485 : vector<2x32xf32>
    %488 = arith.divf %486, %487 : vector<2x32xf32>
    %489 = vector.extract_strided_slice %471 {offsets = [0, 64], sizes = [2, 32], strides = [1, 1]} : vector<2x96xf32> to vector<2x32xf32>
    %490 = vector.extract_strided_slice %472 {offsets = [0, 64], sizes = [2, 32], strides = [1, 1]} : vector<2x96xf32> to vector<2x32xf32>
    %491 = arith.mulf %480, %490 : vector<2x32xf32>
    %492 = arith.addf %489, %491 : vector<2x32xf32>
    %493 = math.tanh %492 : vector<2x32xf32>
    %cst_111 = arith.constant 1.000000e+00 : f32
    %494 = vector.broadcast %cst_111 : f32 to vector<2x32xf32>
    %495 = arith.subf %494, %488 : vector<2x32xf32>
    %496 = arith.mulf %495, %493 : vector<2x32xf32>
    %497 = arith.mulf %488, %433 : vector<2x32xf32>
    %498 = arith.addf %496, %497 : vector<2x32xf32>
    %499 = vector.extract_strided_slice %6 {offsets = [0, 96], sizes = [2, 96], strides = [1, 1]} : vector<16x192xf32> to vector<2x96xf32>
    %500 = vector.extract_strided_slice %470 {offsets = [0, 96], sizes = [2, 96], strides = [1, 1]} : vector<2x192xf32> to vector<2x96xf32>
    %501 = vector.extract_strided_slice %499 {offsets = [0, 0], sizes = [2, 32], strides = [1, 1]} : vector<2x96xf32> to vector<2x32xf32>
    %502 = vector.extract_strided_slice %500 {offsets = [0, 0], sizes = [2, 32], strides = [1, 1]} : vector<2x96xf32> to vector<2x32xf32>
    %503 = arith.addf %501, %502 : vector<2x32xf32>
    %504 = arith.negf %503 : vector<2x32xf32>
    %505 = math.exp %504 : vector<2x32xf32>
    %cst_112 = arith.constant 1.000000e+00 : f32
    %506 = vector.broadcast %cst_112 : f32 to vector<2x32xf32>
    %507 = arith.addf %506, %505 : vector<2x32xf32>
    %508 = arith.divf %506, %507 : vector<2x32xf32>
    %509 = vector.extract_strided_slice %499 {offsets = [0, 32], sizes = [2, 32], strides = [1, 1]} : vector<2x96xf32> to vector<2x32xf32>
    %510 = vector.extract_strided_slice %500 {offsets = [0, 32], sizes = [2, 32], strides = [1, 1]} : vector<2x96xf32> to vector<2x32xf32>
    %511 = arith.addf %509, %510 : vector<2x32xf32>
    %512 = arith.negf %511 : vector<2x32xf32>
    %513 = math.exp %512 : vector<2x32xf32>
    %cst_113 = arith.constant 1.000000e+00 : f32
    %514 = vector.broadcast %cst_113 : f32 to vector<2x32xf32>
    %515 = arith.addf %514, %513 : vector<2x32xf32>
    %516 = arith.divf %514, %515 : vector<2x32xf32>
    %517 = vector.extract_strided_slice %499 {offsets = [0, 64], sizes = [2, 32], strides = [1, 1]} : vector<2x96xf32> to vector<2x32xf32>
    %518 = vector.extract_strided_slice %500 {offsets = [0, 64], sizes = [2, 32], strides = [1, 1]} : vector<2x96xf32> to vector<2x32xf32>
    %519 = arith.mulf %508, %518 : vector<2x32xf32>
    %520 = arith.addf %517, %519 : vector<2x32xf32>
    %521 = math.tanh %520 : vector<2x32xf32>
    %cst_114 = arith.constant 1.000000e+00 : f32
    %522 = vector.broadcast %cst_114 : f32 to vector<2x32xf32>
    %523 = arith.subf %522, %516 : vector<2x32xf32>
    %524 = arith.mulf %523, %521 : vector<2x32xf32>
    %525 = arith.mulf %516, %461 : vector<2x32xf32>
    %526 = arith.addf %524, %525 : vector<2x32xf32>
    %c14_115 = arith.constant 14 : index
    %c0_116 = arith.constant 0 : index
    %527 = vector.load %arg30[%c14_115, %c0_116] : memref<16x64xf32, #tpu.memory_space<vmem>>, vector<2x32xf32>
    tpu.vector_store %arg30[%c14_115, %c0_116], %498 {strides = array<i32>} : memref<16x64xf32, #tpu.memory_space<vmem>>, vector<2x32xf32>,
    %c0_117 = arith.constant 0 : index
    %c32_118 = arith.constant 32 : index
    %528 = vector.load %arg30[%c0_117, %c32_118] : memref<16x64xf32, #tpu.memory_space<vmem>>, vector<2x32xf32>
    tpu.vector_store %arg30[%c0_117, %c32_118], %526 {strides = array<i32>} : memref<16x64xf32, #tpu.memory_space<vmem>>, vector<2x32xf32>,
    %c0_119 = arith.constant 0 : index
    %c0_120 = arith.constant 0 : index
    %529 = vector.load %arg30[%c0_119, %c0_120] : memref<16x64xf32, #tpu.memory_space<vmem>>, vector<16x64xf32>
    %530 = arith.truncf %529 : vector<16x64xf32> to vector<16x64xbf16>
    %c0_121 = arith.constant 0 : index
    %c0_122 = arith.constant 0 : index
    %531 = vector.load %arg9[%c0_121, %c0_122] : memref<64x32xbf16, #tpu.memory_space<vmem>>, vector<64x32xbf16>
    %cst_123 = arith.constant dense<0.000000e+00> : vector<16x32xf32>
    %532 = tpu.matmul %530, %531, %cst_123 {dimension_numbers = #tpu.dot_dimension_numbers<[1], [0], [0], [1], [0, 0, 1, 1], [], []>} : vector<16x64xbf16>, vector<64x32xbf16>, vector<16x32xf32> -> vector<16x32xf32>
    %c0_124 = arith.constant 0 : index
    %c0_125 = arith.constant 0 : index
    %533 = vector.load %arg10[%c0_124, %c0_125] : memref<1x32xf32, #tpu.memory_space<vmem>>, vector<1x32xf32>
    %534 = vector.broadcast %533 : vector<1x32xf32> to vector<16x32xf32>
    %535 = arith.addf %532, %534 : vector<16x32xf32>
    %536 = arith.truncf %535 : vector<16x32xf32> to vector<16x32xbf16>
    %c0_126 = arith.constant 0 : index
    %c0_127 = arith.constant 0 : index
    %537 = vector.load %arg11[%c0_126, %c0_127] : memref<32x192xbf16, #tpu.memory_space<vmem>>, vector<32x192xbf16>
    %cst_128 = arith.constant dense<0.000000e+00> : vector<16x192xf32>
    %538 = tpu.matmul %536, %537, %cst_128 {dimension_numbers = #tpu.dot_dimension_numbers<[1], [0], [0], [1], [0, 0, 1, 1], [], []>} : vector<16x32xbf16>, vector<32x192xbf16>, vector<16x192xf32> -> vector<16x192xf32>
    %c0_129 = arith.constant 0 : index
    %c0_130 = arith.constant 0 : index
    %539 = vector.load %arg12[%c0_129, %c0_130] : memref<1x192xf32, #tpu.memory_space<vmem>>, vector<1x192xf32>
    %540 = vector.broadcast %539 : vector<1x192xf32> to vector<16x192xf32>
    %541 = arith.addf %538, %540 : vector<16x192xf32>
    %cst_131 = arith.constant 0.000000e+00 : f32
    %542 = vector.broadcast %cst_131 : f32 to vector<2x32xf32>
    %cst_132 = arith.constant 0.000000e+00 : f32
    %543 = vector.broadcast %cst_132 : f32 to vector<2x32xf32>
    %544 = tpu.concatenate %542, %543 in 1 : vector<2x32xf32>, vector<2x32xf32> -> vector<2x64xf32>
    %545 = arith.truncf %544 : vector<2x64xf32> to vector<2x64xbf16>
    %c0_133 = arith.constant 0 : index
    %c0_134 = arith.constant 0 : index
    %546 = vector.load %arg13[%c0_133, %c0_134] : memref<64x192xbf16, #tpu.memory_space<vmem>>, vector<64x192xbf16>
    %cst_135 = arith.constant dense<0.000000e+00> : vector<2x192xf32>
    %547 = tpu.matmul %545, %546, %cst_135 {dimension_numbers = #tpu.dot_dimension_numbers<[1], [0], [0], [1], [0, 0, 1, 1], [], []>} : vector<2x64xbf16>, vector<64x192xbf16>, vector<2x192xf32> -> vector<2x192xf32>
    %c0_136 = arith.constant 0 : index
    %c0_137 = arith.constant 0 : index
    %548 = vector.load %arg14[%c0_136, %c0_137] : memref<1x192xf32, #tpu.memory_space<vmem>>, vector<1x192xf32>
    %549 = vector.broadcast %548 : vector<1x192xf32> to vector<2x192xf32>
    %550 = arith.addf %547, %549 : vector<2x192xf32>
    %551 = vector.extract_strided_slice %541 {offsets = [0, 0], sizes = [2, 96], strides = [1, 1]} : vector<16x192xf32> to vector<2x96xf32>
    %552 = vector.extract_strided_slice %550 {offsets = [0, 0], sizes = [2, 96], strides = [1, 1]} : vector<2x192xf32> to vector<2x96xf32>
    %553 = vector.extract_strided_slice %551 {offsets = [0, 0], sizes = [2, 32], strides = [1, 1]} : vector<2x96xf32> to vector<2x32xf32>
    %554 = vector.extract_strided_slice %552 {offsets = [0, 0], sizes = [2, 32], strides = [1, 1]} : vector<2x96xf32> to vector<2x32xf32>
    %555 = arith.addf %553, %554 : vector<2x32xf32>
    %556 = arith.negf %555 : vector<2x32xf32>
    %557 = math.exp %556 : vector<2x32xf32>
    %cst_138 = arith.constant 1.000000e+00 : f32
    %558 = vector.broadcast %cst_138 : f32 to vector<2x32xf32>
    %559 = arith.addf %558, %557 : vector<2x32xf32>
    %560 = arith.divf %558, %559 : vector<2x32xf32>
    %561 = vector.extract_strided_slice %551 {offsets = [0, 32], sizes = [2, 32], strides = [1, 1]} : vector<2x96xf32> to vector<2x32xf32>
    %562 = vector.extract_strided_slice %552 {offsets = [0, 32], sizes = [2, 32], strides = [1, 1]} : vector<2x96xf32> to vector<2x32xf32>
    %563 = arith.addf %561, %562 : vector<2x32xf32>
    %564 = arith.negf %563 : vector<2x32xf32>
    %565 = math.exp %564 : vector<2x32xf32>
    %cst_139 = arith.constant 1.000000e+00 : f32
    %566 = vector.broadcast %cst_139 : f32 to vector<2x32xf32>
    %567 = arith.addf %566, %565 : vector<2x32xf32>
    %568 = arith.divf %566, %567 : vector<2x32xf32>
    %569 = vector.extract_strided_slice %551 {offsets = [0, 64], sizes = [2, 32], strides = [1, 1]} : vector<2x96xf32> to vector<2x32xf32>
    %570 = vector.extract_strided_slice %552 {offsets = [0, 64], sizes = [2, 32], strides = [1, 1]} : vector<2x96xf32> to vector<2x32xf32>
    %571 = arith.mulf %560, %570 : vector<2x32xf32>
    %572 = arith.addf %569, %571 : vector<2x32xf32>
    %573 = math.tanh %572 : vector<2x32xf32>
    %cst_140 = arith.constant 1.000000e+00 : f32
    %574 = vector.broadcast %cst_140 : f32 to vector<2x32xf32>
    %575 = arith.subf %574, %568 : vector<2x32xf32>
    %576 = arith.mulf %575, %573 : vector<2x32xf32>
    %577 = arith.mulf %568, %542 : vector<2x32xf32>
    %578 = arith.addf %576, %577 : vector<2x32xf32>
    %579 = vector.extract_strided_slice %541 {offsets = [14, 96], sizes = [2, 96], strides = [1, 1]} : vector<16x192xf32> to vector<2x96xf32>
    %580 = vector.extract_strided_slice %550 {offsets = [0, 96], sizes = [2, 96], strides = [1, 1]} : vector<2x192xf32> to vector<2x96xf32>
    %581 = vector.extract_strided_slice %579 {offsets = [0, 0], sizes = [2, 32], strides = [1, 1]} : vector<2x96xf32> to vector<2x32xf32>
    %582 = vector.extract_strided_slice %580 {offsets = [0, 0], sizes = [2, 32], strides = [1, 1]} : vector<2x96xf32> to vector<2x32xf32>
    %583 = arith.addf %581, %582 : vector<2x32xf32>
    %584 = arith.negf %583 : vector<2x32xf32>
    %585 = math.exp %584 : vector<2x32xf32>
    %cst_141 = arith.constant 1.000000e+00 : f32
    %586 = vector.broadcast %cst_141 : f32 to vector<2x32xf32>
    %587 = arith.addf %586, %585 : vector<2x32xf32>
    %588 = arith.divf %586, %587 : vector<2x32xf32>
    %589 = vector.extract_strided_slice %579 {offsets = [0, 32], sizes = [2, 32], strides = [1, 1]} : vector<2x96xf32> to vector<2x32xf32>
    %590 = vector.extract_strided_slice %580 {offsets = [0, 32], sizes = [2, 32], strides = [1, 1]} : vector<2x96xf32> to vector<2x32xf32>
    %591 = arith.addf %589, %590 : vector<2x32xf32>
    %592 = arith.negf %591 : vector<2x32xf32>
    %593 = math.exp %592 : vector<2x32xf32>
    %cst_142 = arith.constant 1.000000e+00 : f32
    %594 = vector.broadcast %cst_142 : f32 to vector<2x32xf32>
    %595 = arith.addf %594, %593 : vector<2x32xf32>
    %596 = arith.divf %594, %595 : vector<2x32xf32>
    %597 = vector.extract_strided_slice %579 {offsets = [0, 64], sizes = [2, 32], strides = [1, 1]} : vector<2x96xf32> to vector<2x32xf32>
    %598 = vector.extract_strided_slice %580 {offsets = [0, 64], sizes = [2, 32], strides = [1, 1]} : vector<2x96xf32> to vector<2x32xf32>
    %599 = arith.mulf %588, %598 : vector<2x32xf32>
    %600 = arith.addf %597, %599 : vector<2x32xf32>
    %601 = math.tanh %600 : vector<2x32xf32>
    %cst_143 = arith.constant 1.000000e+00 : f32
    %602 = vector.broadcast %cst_143 : f32 to vector<2x32xf32>
    %603 = arith.subf %602, %596 : vector<2x32xf32>
    %604 = arith.mulf %603, %601 : vector<2x32xf32>
    %605 = arith.mulf %596, %543 : vector<2x32xf32>
    %606 = arith.addf %604, %605 : vector<2x32xf32>
    %c0_144 = arith.constant 0 : index
    %c0_145 = arith.constant 0 : index
    %607 = vector.load %arg31[%c0_144, %c0_145] : memref<16x64xf32, #tpu.memory_space<vmem>>, vector<2x32xf32>
    tpu.vector_store %arg31[%c0_144, %c0_145], %578 {strides = array<i32>} : memref<16x64xf32, #tpu.memory_space<vmem>>, vector<2x32xf32>,
    %c14_146 = arith.constant 14 : index
    %c32_147 = arith.constant 32 : index
    %608 = vector.load %arg31[%c14_146, %c32_147] : memref<16x64xf32, #tpu.memory_space<vmem>>, vector<2x32xf32>
    tpu.vector_store %arg31[%c14_146, %c32_147], %606 {strides = array<i32>} : memref<16x64xf32, #tpu.memory_space<vmem>>, vector<2x32xf32>,
    %609 = tpu.concatenate %578, %606 in 1 : vector<2x32xf32>, vector<2x32xf32> -> vector<2x64xf32>
    %610 = arith.truncf %609 : vector<2x64xf32> to vector<2x64xbf16>
    %c0_148 = arith.constant 0 : index
    %c0_149 = arith.constant 0 : index
    %611 = vector.load %arg13[%c0_148, %c0_149] : memref<64x192xbf16, #tpu.memory_space<vmem>>, vector<64x192xbf16>
    %cst_150 = arith.constant dense<0.000000e+00> : vector<2x192xf32>
    %612 = tpu.matmul %610, %611, %cst_150 {dimension_numbers = #tpu.dot_dimension_numbers<[1], [0], [0], [1], [0, 0, 1, 1], [], []>} : vector<2x64xbf16>, vector<64x192xbf16>, vector<2x192xf32> -> vector<2x192xf32>
    %c0_151 = arith.constant 0 : index
    %c0_152 = arith.constant 0 : index
    %613 = vector.load %arg14[%c0_151, %c0_152] : memref<1x192xf32, #tpu.memory_space<vmem>>, vector<1x192xf32>
    %614 = vector.broadcast %613 : vector<1x192xf32> to vector<2x192xf32>
    %615 = arith.addf %612, %614 : vector<2x192xf32>
    %616 = vector.extract_strided_slice %541 {offsets = [2, 0], sizes = [2, 96], strides = [1, 1]} : vector<16x192xf32> to vector<2x96xf32>
    %617 = vector.extract_strided_slice %615 {offsets = [0, 0], sizes = [2, 96], strides = [1, 1]} : vector<2x192xf32> to vector<2x96xf32>
    %618 = vector.extract_strided_slice %616 {offsets = [0, 0], sizes = [2, 32], strides = [1, 1]} : vector<2x96xf32> to vector<2x32xf32>
    %619 = vector.extract_strided_slice %617 {offsets = [0, 0], sizes = [2, 32], strides = [1, 1]} : vector<2x96xf32> to vector<2x32xf32>
    %620 = arith.addf %618, %619 : vector<2x32xf32>
    %621 = arith.negf %620 : vector<2x32xf32>
    %622 = math.exp %621 : vector<2x32xf32>
    %cst_153 = arith.constant 1.000000e+00 : f32
    %623 = vector.broadcast %cst_153 : f32 to vector<2x32xf32>
    %624 = arith.addf %623, %622 : vector<2x32xf32>
    %625 = arith.divf %623, %624 : vector<2x32xf32>
    %626 = vector.extract_strided_slice %616 {offsets = [0, 32], sizes = [2, 32], strides = [1, 1]} : vector<2x96xf32> to vector<2x32xf32>
    %627 = vector.extract_strided_slice %617 {offsets = [0, 32], sizes = [2, 32], strides = [1, 1]} : vector<2x96xf32> to vector<2x32xf32>
    %628 = arith.addf %626, %627 : vector<2x32xf32>
    %629 = arith.negf %628 : vector<2x32xf32>
    %630 = math.exp %629 : vector<2x32xf32>
    %cst_154 = arith.constant 1.000000e+00 : f32
    %631 = vector.broadcast %cst_154 : f32 to vector<2x32xf32>
    %632 = arith.addf %631, %630 : vector<2x32xf32>
    %633 = arith.divf %631, %632 : vector<2x32xf32>
    %634 = vector.extract_strided_slice %616 {offsets = [0, 64], sizes = [2, 32], strides = [1, 1]} : vector<2x96xf32> to vector<2x32xf32>
    %635 = vector.extract_strided_slice %617 {offsets = [0, 64], sizes = [2, 32], strides = [1, 1]} : vector<2x96xf32> to vector<2x32xf32>
    %636 = arith.mulf %625, %635 : vector<2x32xf32>
    %637 = arith.addf %634, %636 : vector<2x32xf32>
    %638 = math.tanh %637 : vector<2x32xf32>
    %cst_155 = arith.constant 1.000000e+00 : f32
    %639 = vector.broadcast %cst_155 : f32 to vector<2x32xf32>
    %640 = arith.subf %639, %633 : vector<2x32xf32>
    %641 = arith.mulf %640, %638 : vector<2x32xf32>
    %642 = arith.mulf %633, %578 : vector<2x32xf32>
    %643 = arith.addf %641, %642 : vector<2x32xf32>
    %644 = vector.extract_strided_slice %541 {offsets = [12, 96], sizes = [2, 96], strides = [1, 1]} : vector<16x192xf32> to vector<2x96xf32>
    %645 = vector.extract_strided_slice %615 {offsets = [0, 96], sizes = [2, 96], strides = [1, 1]} : vector<2x192xf32> to vector<2x96xf32>
    %646 = vector.extract_strided_slice %644 {offsets = [0, 0], sizes = [2, 32], strides = [1, 1]} : vector<2x96xf32> to vector<2x32xf32>
    %647 = vector.extract_strided_slice %645 {offsets = [0, 0], sizes = [2, 32], strides = [1, 1]} : vector<2x96xf32> to vector<2x32xf32>
    %648 = arith.addf %646, %647 : vector<2x32xf32>
    %649 = arith.negf %648 : vector<2x32xf32>
    %650 = math.exp %649 : vector<2x32xf32>
    %cst_156 = arith.constant 1.000000e+00 : f32
    %651 = vector.broadcast %cst_156 : f32 to vector<2x32xf32>
    %652 = arith.addf %651, %650 : vector<2x32xf32>
    %653 = arith.divf %651, %652 : vector<2x32xf32>
    %654 = vector.extract_strided_slice %644 {offsets = [0, 32], sizes = [2, 32], strides = [1, 1]} : vector<2x96xf32> to vector<2x32xf32>
    %655 = vector.extract_strided_slice %645 {offsets = [0, 32], sizes = [2, 32], strides = [1, 1]} : vector<2x96xf32> to vector<2x32xf32>
    %656 = arith.addf %654, %655 : vector<2x32xf32>
    %657 = arith.negf %656 : vector<2x32xf32>
    %658 = math.exp %657 : vector<2x32xf32>
    %cst_157 = arith.constant 1.000000e+00 : f32
    %659 = vector.broadcast %cst_157 : f32 to vector<2x32xf32>
    %660 = arith.addf %659, %658 : vector<2x32xf32>
    %661 = arith.divf %659, %660 : vector<2x32xf32>
    %662 = vector.extract_strided_slice %644 {offsets = [0, 64], sizes = [2, 32], strides = [1, 1]} : vector<2x96xf32> to vector<2x32xf32>
    %663 = vector.extract_strided_slice %645 {offsets = [0, 64], sizes = [2, 32], strides = [1, 1]} : vector<2x96xf32> to vector<2x32xf32>
    %664 = arith.mulf %653, %663 : vector<2x32xf32>
    %665 = arith.addf %662, %664 : vector<2x32xf32>
    %666 = math.tanh %665 : vector<2x32xf32>
    %cst_158 = arith.constant 1.000000e+00 : f32
    %667 = vector.broadcast %cst_158 : f32 to vector<2x32xf32>
    %668 = arith.subf %667, %661 : vector<2x32xf32>
    %669 = arith.mulf %668, %666 : vector<2x32xf32>
    %670 = arith.mulf %661, %606 : vector<2x32xf32>
    %671 = arith.addf %669, %670 : vector<2x32xf32>
    %c2_159 = arith.constant 2 : index
    %c0_160 = arith.constant 0 : index
    %672 = vector.load %arg31[%c2_159, %c0_160] : memref<16x64xf32, #tpu.memory_space<vmem>>, vector<2x32xf32>
    tpu.vector_store %arg31[%c2_159, %c0_160], %643 {strides = array<i32>} : memref<16x64xf32, #tpu.memory_space<vmem>>, vector<2x32xf32>,
    %c12_161 = arith.constant 12 : index
    %c32_162 = arith.constant 32 : index
    %673 = vector.load %arg31[%c12_161, %c32_162] : memref<16x64xf32, #tpu.memory_space<vmem>>, vector<2x32xf32>
    tpu.vector_store %arg31[%c12_161, %c32_162], %671 {strides = array<i32>} : memref<16x64xf32, #tpu.memory_space<vmem>>, vector<2x32xf32>,
    %674 = tpu.concatenate %643, %671 in 1 : vector<2x32xf32>, vector<2x32xf32> -> vector<2x64xf32>
    %675 = arith.truncf %674 : vector<2x64xf32> to vector<2x64xbf16>
    %c0_163 = arith.constant 0 : index
    %c0_164 = arith.constant 0 : index
    %676 = vector.load %arg13[%c0_163, %c0_164] : memref<64x192xbf16, #tpu.memory_space<vmem>>, vector<64x192xbf16>
    %cst_165 = arith.constant dense<0.000000e+00> : vector<2x192xf32>
    %677 = tpu.matmul %675, %676, %cst_165 {dimension_numbers = #tpu.dot_dimension_numbers<[1], [0], [0], [1], [0, 0, 1, 1], [], []>} : vector<2x64xbf16>, vector<64x192xbf16>, vector<2x192xf32> -> vector<2x192xf32>
    %c0_166 = arith.constant 0 : index
    %c0_167 = arith.constant 0 : index
    %678 = vector.load %arg14[%c0_166, %c0_167] : memref<1x192xf32, #tpu.memory_space<vmem>>, vector<1x192xf32>
    %679 = vector.broadcast %678 : vector<1x192xf32> to vector<2x192xf32>
    %680 = arith.addf %677, %679 : vector<2x192xf32>
    %681 = vector.extract_strided_slice %541 {offsets = [4, 0], sizes = [2, 96], strides = [1, 1]} : vector<16x192xf32> to vector<2x96xf32>
    %682 = vector.extract_strided_slice %680 {offsets = [0, 0], sizes = [2, 96], strides = [1, 1]} : vector<2x192xf32> to vector<2x96xf32>
    %683 = vector.extract_strided_slice %681 {offsets = [0, 0], sizes = [2, 32], strides = [1, 1]} : vector<2x96xf32> to vector<2x32xf32>
    %684 = vector.extract_strided_slice %682 {offsets = [0, 0], sizes = [2, 32], strides = [1, 1]} : vector<2x96xf32> to vector<2x32xf32>
    %685 = arith.addf %683, %684 : vector<2x32xf32>
    %686 = arith.negf %685 : vector<2x32xf32>
    %687 = math.exp %686 : vector<2x32xf32>
    %cst_168 = arith.constant 1.000000e+00 : f32
    %688 = vector.broadcast %cst_168 : f32 to vector<2x32xf32>
    %689 = arith.addf %688, %687 : vector<2x32xf32>
    %690 = arith.divf %688, %689 : vector<2x32xf32>
    %691 = vector.extract_strided_slice %681 {offsets = [0, 32], sizes = [2, 32], strides = [1, 1]} : vector<2x96xf32> to vector<2x32xf32>
    %692 = vector.extract_strided_slice %682 {offsets = [0, 32], sizes = [2, 32], strides = [1, 1]} : vector<2x96xf32> to vector<2x32xf32>
    %693 = arith.addf %691, %692 : vector<2x32xf32>
    %694 = arith.negf %693 : vector<2x32xf32>
    %695 = math.exp %694 : vector<2x32xf32>
    %cst_169 = arith.constant 1.000000e+00 : f32
    %696 = vector.broadcast %cst_169 : f32 to vector<2x32xf32>
    %697 = arith.addf %696, %695 : vector<2x32xf32>
    %698 = arith.divf %696, %697 : vector<2x32xf32>
    %699 = vector.extract_strided_slice %681 {offsets = [0, 64], sizes = [2, 32], strides = [1, 1]} : vector<2x96xf32> to vector<2x32xf32>
    %700 = vector.extract_strided_slice %682 {offsets = [0, 64], sizes = [2, 32], strides = [1, 1]} : vector<2x96xf32> to vector<2x32xf32>
    %701 = arith.mulf %690, %700 : vector<2x32xf32>
    %702 = arith.addf %699, %701 : vector<2x32xf32>
    %703 = math.tanh %702 : vector<2x32xf32>
    %cst_170 = arith.constant 1.000000e+00 : f32
    %704 = vector.broadcast %cst_170 : f32 to vector<2x32xf32>
    %705 = arith.subf %704, %698 : vector<2x32xf32>
    %706 = arith.mulf %705, %703 : vector<2x32xf32>
    %707 = arith.mulf %698, %643 : vector<2x32xf32>
    %708 = arith.addf %706, %707 : vector<2x32xf32>
    %709 = vector.extract_strided_slice %541 {offsets = [10, 96], sizes = [2, 96], strides = [1, 1]} : vector<16x192xf32> to vector<2x96xf32>
    %710 = vector.extract_strided_slice %680 {offsets = [0, 96], sizes = [2, 96], strides = [1, 1]} : vector<2x192xf32> to vector<2x96xf32>
    %711 = vector.extract_strided_slice %709 {offsets = [0, 0], sizes = [2, 32], strides = [1, 1]} : vector<2x96xf32> to vector<2x32xf32>
    %712 = vector.extract_strided_slice %710 {offsets = [0, 0], sizes = [2, 32], strides = [1, 1]} : vector<2x96xf32> to vector<2x32xf32>
    %713 = arith.addf %711, %712 : vector<2x32xf32>
    %714 = arith.negf %713 : vector<2x32xf32>
    %715 = math.exp %714 : vector<2x32xf32>
    %cst_171 = arith.constant 1.000000e+00 : f32
    %716 = vector.broadcast %cst_171 : f32 to vector<2x32xf32>
    %717 = arith.addf %716, %715 : vector<2x32xf32>
    %718 = arith.divf %716, %717 : vector<2x32xf32>
    %719 = vector.extract_strided_slice %709 {offsets = [0, 32], sizes = [2, 32], strides = [1, 1]} : vector<2x96xf32> to vector<2x32xf32>
    %720 = vector.extract_strided_slice %710 {offsets = [0, 32], sizes = [2, 32], strides = [1, 1]} : vector<2x96xf32> to vector<2x32xf32>
    %721 = arith.addf %719, %720 : vector<2x32xf32>
    %722 = arith.negf %721 : vector<2x32xf32>
    %723 = math.exp %722 : vector<2x32xf32>
    %cst_172 = arith.constant 1.000000e+00 : f32
    %724 = vector.broadcast %cst_172 : f32 to vector<2x32xf32>
    %725 = arith.addf %724, %723 : vector<2x32xf32>
    %726 = arith.divf %724, %725 : vector<2x32xf32>
    %727 = vector.extract_strided_slice %709 {offsets = [0, 64], sizes = [2, 32], strides = [1, 1]} : vector<2x96xf32> to vector<2x32xf32>
    %728 = vector.extract_strided_slice %710 {offsets = [0, 64], sizes = [2, 32], strides = [1, 1]} : vector<2x96xf32> to vector<2x32xf32>
    %729 = arith.mulf %718, %728 : vector<2x32xf32>
    %730 = arith.addf %727, %729 : vector<2x32xf32>
    %731 = math.tanh %730 : vector<2x32xf32>
    %cst_173 = arith.constant 1.000000e+00 : f32
    %732 = vector.broadcast %cst_173 : f32 to vector<2x32xf32>
    %733 = arith.subf %732, %726 : vector<2x32xf32>
    %734 = arith.mulf %733, %731 : vector<2x32xf32>
    %735 = arith.mulf %726, %671 : vector<2x32xf32>
    %736 = arith.addf %734, %735 : vector<2x32xf32>
    %c4_174 = arith.constant 4 : index
    %c0_175 = arith.constant 0 : index
    %737 = vector.load %arg31[%c4_174, %c0_175] : memref<16x64xf32, #tpu.memory_space<vmem>>, vector<2x32xf32>
    tpu.vector_store %arg31[%c4_174, %c0_175], %708 {strides = array<i32>} : memref<16x64xf32, #tpu.memory_space<vmem>>, vector<2x32xf32>,
    %c10_176 = arith.constant 10 : index
    %c32_177 = arith.constant 32 : index
    %738 = vector.load %arg31[%c10_176, %c32_177] : memref<16x64xf32, #tpu.memory_space<vmem>>, vector<2x32xf32>
    tpu.vector_store %arg31[%c10_176, %c32_177], %736 {strides = array<i32>} : memref<16x64xf32, #tpu.memory_space<vmem>>, vector<2x32xf32>,
    %739 = tpu.concatenate %708, %736 in 1 : vector<2x32xf32>, vector<2x32xf32> -> vector<2x64xf32>
    %740 = arith.truncf %739 : vector<2x64xf32> to vector<2x64xbf16>
    %c0_178 = arith.constant 0 : index
    %c0_179 = arith.constant 0 : index
    %741 = vector.load %arg13[%c0_178, %c0_179] : memref<64x192xbf16, #tpu.memory_space<vmem>>, vector<64x192xbf16>
    %cst_180 = arith.constant dense<0.000000e+00> : vector<2x192xf32>
    %742 = tpu.matmul %740, %741, %cst_180 {dimension_numbers = #tpu.dot_dimension_numbers<[1], [0], [0], [1], [0, 0, 1, 1], [], []>} : vector<2x64xbf16>, vector<64x192xbf16>, vector<2x192xf32> -> vector<2x192xf32>
    %c0_181 = arith.constant 0 : index
    %c0_182 = arith.constant 0 : index
    %743 = vector.load %arg14[%c0_181, %c0_182] : memref<1x192xf32, #tpu.memory_space<vmem>>, vector<1x192xf32>
    %744 = vector.broadcast %743 : vector<1x192xf32> to vector<2x192xf32>
    %745 = arith.addf %742, %744 : vector<2x192xf32>
    %746 = vector.extract_strided_slice %541 {offsets = [6, 0], sizes = [2, 96], strides = [1, 1]} : vector<16x192xf32> to vector<2x96xf32>
    %747 = vector.extract_strided_slice %745 {offsets = [0, 0], sizes = [2, 96], strides = [1, 1]} : vector<2x192xf32> to vector<2x96xf32>
    %748 = vector.extract_strided_slice %746 {offsets = [0, 0], sizes = [2, 32], strides = [1, 1]} : vector<2x96xf32> to vector<2x32xf32>
    %749 = vector.extract_strided_slice %747 {offsets = [0, 0], sizes = [2, 32], strides = [1, 1]} : vector<2x96xf32> to vector<2x32xf32>
    %750 = arith.addf %748, %749 : vector<2x32xf32>
    %751 = arith.negf %750 : vector<2x32xf32>
    %752 = math.exp %751 : vector<2x32xf32>
    %cst_183 = arith.constant 1.000000e+00 : f32
    %753 = vector.broadcast %cst_183 : f32 to vector<2x32xf32>
    %754 = arith.addf %753, %752 : vector<2x32xf32>
    %755 = arith.divf %753, %754 : vector<2x32xf32>
    %756 = vector.extract_strided_slice %746 {offsets = [0, 32], sizes = [2, 32], strides = [1, 1]} : vector<2x96xf32> to vector<2x32xf32>
    %757 = vector.extract_strided_slice %747 {offsets = [0, 32], sizes = [2, 32], strides = [1, 1]} : vector<2x96xf32> to vector<2x32xf32>
    %758 = arith.addf %756, %757 : vector<2x32xf32>
    %759 = arith.negf %758 : vector<2x32xf32>
    %760 = math.exp %759 : vector<2x32xf32>
    %cst_184 = arith.constant 1.000000e+00 : f32
    %761 = vector.broadcast %cst_184 : f32 to vector<2x32xf32>
    %762 = arith.addf %761, %760 : vector<2x32xf32>
    %763 = arith.divf %761, %762 : vector<2x32xf32>
    %764 = vector.extract_strided_slice %746 {offsets = [0, 64], sizes = [2, 32], strides = [1, 1]} : vector<2x96xf32> to vector<2x32xf32>
    %765 = vector.extract_strided_slice %747 {offsets = [0, 64], sizes = [2, 32], strides = [1, 1]} : vector<2x96xf32> to vector<2x32xf32>
    %766 = arith.mulf %755, %765 : vector<2x32xf32>
    %767 = arith.addf %764, %766 : vector<2x32xf32>
    %768 = math.tanh %767 : vector<2x32xf32>
    %cst_185 = arith.constant 1.000000e+00 : f32
    %769 = vector.broadcast %cst_185 : f32 to vector<2x32xf32>
    %770 = arith.subf %769, %763 : vector<2x32xf32>
    %771 = arith.mulf %770, %768 : vector<2x32xf32>
    %772 = arith.mulf %763, %708 : vector<2x32xf32>
    %773 = arith.addf %771, %772 : vector<2x32xf32>
    %774 = vector.extract_strided_slice %541 {offsets = [8, 96], sizes = [2, 96], strides = [1, 1]} : vector<16x192xf32> to vector<2x96xf32>
    %775 = vector.extract_strided_slice %745 {offsets = [0, 96], sizes = [2, 96], strides = [1, 1]} : vector<2x192xf32> to vector<2x96xf32>
    %776 = vector.extract_strided_slice %774 {offsets = [0, 0], sizes = [2, 32], strides = [1, 1]} : vector<2x96xf32> to vector<2x32xf32>
    %777 = vector.extract_strided_slice %775 {offsets = [0, 0], sizes = [2, 32], strides = [1, 1]} : vector<2x96xf32> to vector<2x32xf32>
    %778 = arith.addf %776, %777 : vector<2x32xf32>
    %779 = arith.negf %778 : vector<2x32xf32>
    %780 = math.exp %779 : vector<2x32xf32>
    %cst_186 = arith.constant 1.000000e+00 : f32
    %781 = vector.broadcast %cst_186 : f32 to vector<2x32xf32>
    %782 = arith.addf %781, %780 : vector<2x32xf32>
    %783 = arith.divf %781, %782 : vector<2x32xf32>
    %784 = vector.extract_strided_slice %774 {offsets = [0, 32], sizes = [2, 32], strides = [1, 1]} : vector<2x96xf32> to vector<2x32xf32>
    %785 = vector.extract_strided_slice %775 {offsets = [0, 32], sizes = [2, 32], strides = [1, 1]} : vector<2x96xf32> to vector<2x32xf32>
    %786 = arith.addf %784, %785 : vector<2x32xf32>
    %787 = arith.negf %786 : vector<2x32xf32>
    %788 = math.exp %787 : vector<2x32xf32>
    %cst_187 = arith.constant 1.000000e+00 : f32
    %789 = vector.broadcast %cst_187 : f32 to vector<2x32xf32>
    %790 = arith.addf %789, %788 : vector<2x32xf32>
    %791 = arith.divf %789, %790 : vector<2x32xf32>
    %792 = vector.extract_strided_slice %774 {offsets = [0, 64], sizes = [2, 32], strides = [1, 1]} : vector<2x96xf32> to vector<2x32xf32>
    %793 = vector.extract_strided_slice %775 {offsets = [0, 64], sizes = [2, 32], strides = [1, 1]} : vector<2x96xf32> to vector<2x32xf32>
    %794 = arith.mulf %783, %793 : vector<2x32xf32>
    %795 = arith.addf %792, %794 : vector<2x32xf32>
    %796 = math.tanh %795 : vector<2x32xf32>
    %cst_188 = arith.constant 1.000000e+00 : f32
    %797 = vector.broadcast %cst_188 : f32 to vector<2x32xf32>
    %798 = arith.subf %797, %791 : vector<2x32xf32>
    %799 = arith.mulf %798, %796 : vector<2x32xf32>
    %800 = arith.mulf %791, %736 : vector<2x32xf32>
    %801 = arith.addf %799, %800 : vector<2x32xf32>
    %c6_189 = arith.constant 6 : index
    %c0_190 = arith.constant 0 : index
    %802 = vector.load %arg31[%c6_189, %c0_190] : memref<16x64xf32, #tpu.memory_space<vmem>>, vector<2x32xf32>
    tpu.vector_store %arg31[%c6_189, %c0_190], %773 {strides = array<i32>} : memref<16x64xf32, #tpu.memory_space<vmem>>, vector<2x32xf32>,
    %c8_191 = arith.constant 8 : index
    %c32_192 = arith.constant 32 : index
    %803 = vector.load %arg31[%c8_191, %c32_192] : memref<16x64xf32, #tpu.memory_space<vmem>>, vector<2x32xf32>
    tpu.vector_store %arg31[%c8_191, %c32_192], %801 {strides = array<i32>} : memref<16x64xf32, #tpu.memory_space<vmem>>, vector<2x32xf32>,
    %804 = tpu.concatenate %773, %801 in 1 : vector<2x32xf32>, vector<2x32xf32> -> vector<2x64xf32>
    %805 = arith.truncf %804 : vector<2x64xf32> to vector<2x64xbf16>
    %c0_193 = arith.constant 0 : index
    %c0_194 = arith.constant 0 : index
    %806 = vector.load %arg13[%c0_193, %c0_194] : memref<64x192xbf16, #tpu.memory_space<vmem>>, vector<64x192xbf16>
    %cst_195 = arith.constant dense<0.000000e+00> : vector<2x192xf32>
    %807 = tpu.matmul %805, %806, %cst_195 {dimension_numbers = #tpu.dot_dimension_numbers<[1], [0], [0], [1], [0, 0, 1, 1], [], []>} : vector<2x64xbf16>, vector<64x192xbf16>, vector<2x192xf32> -> vector<2x192xf32>
    %c0_196 = arith.constant 0 : index
    %c0_197 = arith.constant 0 : index
    %808 = vector.load %arg14[%c0_196, %c0_197] : memref<1x192xf32, #tpu.memory_space<vmem>>, vector<1x192xf32>
    %809 = vector.broadcast %808 : vector<1x192xf32> to vector<2x192xf32>
    %810 = arith.addf %807, %809 : vector<2x192xf32>
    %811 = vector.extract_strided_slice %541 {offsets = [8, 0], sizes = [2, 96], strides = [1, 1]} : vector<16x192xf32> to vector<2x96xf32>
    %812 = vector.extract_strided_slice %810 {offsets = [0, 0], sizes = [2, 96], strides = [1, 1]} : vector<2x192xf32> to vector<2x96xf32>
    %813 = vector.extract_strided_slice %811 {offsets = [0, 0], sizes = [2, 32], strides = [1, 1]} : vector<2x96xf32> to vector<2x32xf32>
    %814 = vector.extract_strided_slice %812 {offsets = [0, 0], sizes = [2, 32], strides = [1, 1]} : vector<2x96xf32> to vector<2x32xf32>
    %815 = arith.addf %813, %814 : vector<2x32xf32>
    %816 = arith.negf %815 : vector<2x32xf32>
    %817 = math.exp %816 : vector<2x32xf32>
    %cst_198 = arith.constant 1.000000e+00 : f32
    %818 = vector.broadcast %cst_198 : f32 to vector<2x32xf32>
    %819 = arith.addf %818, %817 : vector<2x32xf32>
    %820 = arith.divf %818, %819 : vector<2x32xf32>
    %821 = vector.extract_strided_slice %811 {offsets = [0, 32], sizes = [2, 32], strides = [1, 1]} : vector<2x96xf32> to vector<2x32xf32>
    %822 = vector.extract_strided_slice %812 {offsets = [0, 32], sizes = [2, 32], strides = [1, 1]} : vector<2x96xf32> to vector<2x32xf32>
    %823 = arith.addf %821, %822 : vector<2x32xf32>
    %824 = arith.negf %823 : vector<2x32xf32>
    %825 = math.exp %824 : vector<2x32xf32>
    %cst_199 = arith.constant 1.000000e+00 : f32
    %826 = vector.broadcast %cst_199 : f32 to vector<2x32xf32>
    %827 = arith.addf %826, %825 : vector<2x32xf32>
    %828 = arith.divf %826, %827 : vector<2x32xf32>
    %829 = vector.extract_strided_slice %811 {offsets = [0, 64], sizes = [2, 32], strides = [1, 1]} : vector<2x96xf32> to vector<2x32xf32>
    %830 = vector.extract_strided_slice %812 {offsets = [0, 64], sizes = [2, 32], strides = [1, 1]} : vector<2x96xf32> to vector<2x32xf32>
    %831 = arith.mulf %820, %830 : vector<2x32xf32>
    %832 = arith.addf %829, %831 : vector<2x32xf32>
    %833 = math.tanh %832 : vector<2x32xf32>
    %cst_200 = arith.constant 1.000000e+00 : f32
    %834 = vector.broadcast %cst_200 : f32 to vector<2x32xf32>
    %835 = arith.subf %834, %828 : vector<2x32xf32>
    %836 = arith.mulf %835, %833 : vector<2x32xf32>
    %837 = arith.mulf %828, %773 : vector<2x32xf32>
    %838 = arith.addf %836, %837 : vector<2x32xf32>
    %839 = vector.extract_strided_slice %541 {offsets = [6, 96], sizes = [2, 96], strides = [1, 1]} : vector<16x192xf32> to vector<2x96xf32>
    %840 = vector.extract_strided_slice %810 {offsets = [0, 96], sizes = [2, 96], strides = [1, 1]} : vector<2x192xf32> to vector<2x96xf32>
    %841 = vector.extract_strided_slice %839 {offsets = [0, 0], sizes = [2, 32], strides = [1, 1]} : vector<2x96xf32> to vector<2x32xf32>
    %842 = vector.extract_strided_slice %840 {offsets = [0, 0], sizes = [2, 32], strides = [1, 1]} : vector<2x96xf32> to vector<2x32xf32>
    %843 = arith.addf %841, %842 : vector<2x32xf32>
    %844 = arith.negf %843 : vector<2x32xf32>
    %845 = math.exp %844 : vector<2x32xf32>
    %cst_201 = arith.constant 1.000000e+00 : f32
    %846 = vector.broadcast %cst_201 : f32 to vector<2x32xf32>
    %847 = arith.addf %846, %845 : vector<2x32xf32>
    %848 = arith.divf %846, %847 : vector<2x32xf32>
    %849 = vector.extract_strided_slice %839 {offsets = [0, 32], sizes = [2, 32], strides = [1, 1]} : vector<2x96xf32> to vector<2x32xf32>
    %850 = vector.extract_strided_slice %840 {offsets = [0, 32], sizes = [2, 32], strides = [1, 1]} : vector<2x96xf32> to vector<2x32xf32>
    %851 = arith.addf %849, %850 : vector<2x32xf32>
    %852 = arith.negf %851 : vector<2x32xf32>
    %853 = math.exp %852 : vector<2x32xf32>
    %cst_202 = arith.constant 1.000000e+00 : f32
    %854 = vector.broadcast %cst_202 : f32 to vector<2x32xf32>
    %855 = arith.addf %854, %853 : vector<2x32xf32>
    %856 = arith.divf %854, %855 : vector<2x32xf32>
    %857 = vector.extract_strided_slice %839 {offsets = [0, 64], sizes = [2, 32], strides = [1, 1]} : vector<2x96xf32> to vector<2x32xf32>
    %858 = vector.extract_strided_slice %840 {offsets = [0, 64], sizes = [2, 32], strides = [1, 1]} : vector<2x96xf32> to vector<2x32xf32>
    %859 = arith.mulf %848, %858 : vector<2x32xf32>
    %860 = arith.addf %857, %859 : vector<2x32xf32>
    %861 = math.tanh %860 : vector<2x32xf32>
    %cst_203 = arith.constant 1.000000e+00 : f32
    %862 = vector.broadcast %cst_203 : f32 to vector<2x32xf32>
    %863 = arith.subf %862, %856 : vector<2x32xf32>
    %864 = arith.mulf %863, %861 : vector<2x32xf32>
    %865 = arith.mulf %856, %801 : vector<2x32xf32>
    %866 = arith.addf %864, %865 : vector<2x32xf32>
    %c8_204 = arith.constant 8 : index
    %c0_205 = arith.constant 0 : index
    %867 = vector.load %arg31[%c8_204, %c0_205] : memref<16x64xf32, #tpu.memory_space<vmem>>, vector<2x32xf32>
    tpu.vector_store %arg31[%c8_204, %c0_205], %838 {strides = array<i32>} : memref<16x64xf32, #tpu.memory_space<vmem>>, vector<2x32xf32>,
    %c6_206 = arith.constant 6 : index
    %c32_207 = arith.constant 32 : index
    %868 = vector.load %arg31[%c6_206, %c32_207] : memref<16x64xf32, #tpu.memory_space<vmem>>, vector<2x32xf32>
    tpu.vector_store %arg31[%c6_206, %c32_207], %866 {strides = array<i32>} : memref<16x64xf32, #tpu.memory_space<vmem>>, vector<2x32xf32>,
    %869 = tpu.concatenate %838, %866 in 1 : vector<2x32xf32>, vector<2x32xf32> -> vector<2x64xf32>
    %870 = arith.truncf %869 : vector<2x64xf32> to vector<2x64xbf16>
    %c0_208 = arith.constant 0 : index
    %c0_209 = arith.constant 0 : index
    %871 = vector.load %arg13[%c0_208, %c0_209] : memref<64x192xbf16, #tpu.memory_space<vmem>>, vector<64x192xbf16>
    %cst_210 = arith.constant dense<0.000000e+00> : vector<2x192xf32>
    %872 = tpu.matmul %870, %871, %cst_210 {dimension_numbers = #tpu.dot_dimension_numbers<[1], [0], [0], [1], [0, 0, 1, 1], [], []>} : vector<2x64xbf16>, vector<64x192xbf16>, vector<2x192xf32> -> vector<2x192xf32>
    %c0_211 = arith.constant 0 : index
    %c0_212 = arith.constant 0 : index
    %873 = vector.load %arg14[%c0_211, %c0_212] : memref<1x192xf32, #tpu.memory_space<vmem>>, vector<1x192xf32>
    %874 = vector.broadcast %873 : vector<1x192xf32> to vector<2x192xf32>
    %875 = arith.addf %872, %874 : vector<2x192xf32>
    %876 = vector.extract_strided_slice %541 {offsets = [10, 0], sizes = [2, 96], strides = [1, 1]} : vector<16x192xf32> to vector<2x96xf32>
    %877 = vector.extract_strided_slice %875 {offsets = [0, 0], sizes = [2, 96], strides = [1, 1]} : vector<2x192xf32> to vector<2x96xf32>
    %878 = vector.extract_strided_slice %876 {offsets = [0, 0], sizes = [2, 32], strides = [1, 1]} : vector<2x96xf32> to vector<2x32xf32>
    %879 = vector.extract_strided_slice %877 {offsets = [0, 0], sizes = [2, 32], strides = [1, 1]} : vector<2x96xf32> to vector<2x32xf32>
    %880 = arith.addf %878, %879 : vector<2x32xf32>
    %881 = arith.negf %880 : vector<2x32xf32>
    %882 = math.exp %881 : vector<2x32xf32>
    %cst_213 = arith.constant 1.000000e+00 : f32
    %883 = vector.broadcast %cst_213 : f32 to vector<2x32xf32>
    %884 = arith.addf %883, %882 : vector<2x32xf32>
    %885 = arith.divf %883, %884 : vector<2x32xf32>
    %886 = vector.extract_strided_slice %876 {offsets = [0, 32], sizes = [2, 32], strides = [1, 1]} : vector<2x96xf32> to vector<2x32xf32>
    %887 = vector.extract_strided_slice %877 {offsets = [0, 32], sizes = [2, 32], strides = [1, 1]} : vector<2x96xf32> to vector<2x32xf32>
    %888 = arith.addf %886, %887 : vector<2x32xf32>
    %889 = arith.negf %888 : vector<2x32xf32>
    %890 = math.exp %889 : vector<2x32xf32>
    %cst_214 = arith.constant 1.000000e+00 : f32
    %891 = vector.broadcast %cst_214 : f32 to vector<2x32xf32>
    %892 = arith.addf %891, %890 : vector<2x32xf32>
    %893 = arith.divf %891, %892 : vector<2x32xf32>
    %894 = vector.extract_strided_slice %876 {offsets = [0, 64], sizes = [2, 32], strides = [1, 1]} : vector<2x96xf32> to vector<2x32xf32>
    %895 = vector.extract_strided_slice %877 {offsets = [0, 64], sizes = [2, 32], strides = [1, 1]} : vector<2x96xf32> to vector<2x32xf32>
    %896 = arith.mulf %885, %895 : vector<2x32xf32>
    %897 = arith.addf %894, %896 : vector<2x32xf32>
    %898 = math.tanh %897 : vector<2x32xf32>
    %cst_215 = arith.constant 1.000000e+00 : f32
    %899 = vector.broadcast %cst_215 : f32 to vector<2x32xf32>
    %900 = arith.subf %899, %893 : vector<2x32xf32>
    %901 = arith.mulf %900, %898 : vector<2x32xf32>
    %902 = arith.mulf %893, %838 : vector<2x32xf32>
    %903 = arith.addf %901, %902 : vector<2x32xf32>
    %904 = vector.extract_strided_slice %541 {offsets = [4, 96], sizes = [2, 96], strides = [1, 1]} : vector<16x192xf32> to vector<2x96xf32>
    %905 = vector.extract_strided_slice %875 {offsets = [0, 96], sizes = [2, 96], strides = [1, 1]} : vector<2x192xf32> to vector<2x96xf32>
    %906 = vector.extract_strided_slice %904 {offsets = [0, 0], sizes = [2, 32], strides = [1, 1]} : vector<2x96xf32> to vector<2x32xf32>
    %907 = vector.extract_strided_slice %905 {offsets = [0, 0], sizes = [2, 32], strides = [1, 1]} : vector<2x96xf32> to vector<2x32xf32>
    %908 = arith.addf %906, %907 : vector<2x32xf32>
    %909 = arith.negf %908 : vector<2x32xf32>
    %910 = math.exp %909 : vector<2x32xf32>
    %cst_216 = arith.constant 1.000000e+00 : f32
    %911 = vector.broadcast %cst_216 : f32 to vector<2x32xf32>
    %912 = arith.addf %911, %910 : vector<2x32xf32>
    %913 = arith.divf %911, %912 : vector<2x32xf32>
    %914 = vector.extract_strided_slice %904 {offsets = [0, 32], sizes = [2, 32], strides = [1, 1]} : vector<2x96xf32> to vector<2x32xf32>
    %915 = vector.extract_strided_slice %905 {offsets = [0, 32], sizes = [2, 32], strides = [1, 1]} : vector<2x96xf32> to vector<2x32xf32>
    %916 = arith.addf %914, %915 : vector<2x32xf32>
    %917 = arith.negf %916 : vector<2x32xf32>
    %918 = math.exp %917 : vector<2x32xf32>
    %cst_217 = arith.constant 1.000000e+00 : f32
    %919 = vector.broadcast %cst_217 : f32 to vector<2x32xf32>
    %920 = arith.addf %919, %918 : vector<2x32xf32>
    %921 = arith.divf %919, %920 : vector<2x32xf32>
    %922 = vector.extract_strided_slice %904 {offsets = [0, 64], sizes = [2, 32], strides = [1, 1]} : vector<2x96xf32> to vector<2x32xf32>
    %923 = vector.extract_strided_slice %905 {offsets = [0, 64], sizes = [2, 32], strides = [1, 1]} : vector<2x96xf32> to vector<2x32xf32>
    %924 = arith.mulf %913, %923 : vector<2x32xf32>
    %925 = arith.addf %922, %924 : vector<2x32xf32>
    %926 = math.tanh %925 : vector<2x32xf32>
    %cst_218 = arith.constant 1.000000e+00 : f32
    %927 = vector.broadcast %cst_218 : f32 to vector<2x32xf32>
    %928 = arith.subf %927, %921 : vector<2x32xf32>
    %929 = arith.mulf %928, %926 : vector<2x32xf32>
    %930 = arith.mulf %921, %866 : vector<2x32xf32>
    %931 = arith.addf %929, %930 : vector<2x32xf32>
    %c10_219 = arith.constant 10 : index
    %c0_220 = arith.constant 0 : index
    %932 = vector.load %arg31[%c10_219, %c0_220] : memref<16x64xf32, #tpu.memory_space<vmem>>, vector<2x32xf32>
    tpu.vector_store %arg31[%c10_219, %c0_220], %903 {strides = array<i32>} : memref<16x64xf32, #tpu.memory_space<vmem>>, vector<2x32xf32>,
    %c4_221 = arith.constant 4 : index
    %c32_222 = arith.constant 32 : index
    %933 = vector.load %arg31[%c4_221, %c32_222] : memref<16x64xf32, #tpu.memory_space<vmem>>, vector<2x32xf32>
    tpu.vector_store %arg31[%c4_221, %c32_222], %931 {strides = array<i32>} : memref<16x64xf32, #tpu.memory_space<vmem>>, vector<2x32xf32>,
    %934 = tpu.concatenate %903, %931 in 1 : vector<2x32xf32>, vector<2x32xf32> -> vector<2x64xf32>
    %935 = arith.truncf %934 : vector<2x64xf32> to vector<2x64xbf16>
    %c0_223 = arith.constant 0 : index
    %c0_224 = arith.constant 0 : index
    %936 = vector.load %arg13[%c0_223, %c0_224] : memref<64x192xbf16, #tpu.memory_space<vmem>>, vector<64x192xbf16>
    %cst_225 = arith.constant dense<0.000000e+00> : vector<2x192xf32>
    %937 = tpu.matmul %935, %936, %cst_225 {dimension_numbers = #tpu.dot_dimension_numbers<[1], [0], [0], [1], [0, 0, 1, 1], [], []>} : vector<2x64xbf16>, vector<64x192xbf16>, vector<2x192xf32> -> vector<2x192xf32>
    %c0_226 = arith.constant 0 : index
    %c0_227 = arith.constant 0 : index
    %938 = vector.load %arg14[%c0_226, %c0_227] : memref<1x192xf32, #tpu.memory_space<vmem>>, vector<1x192xf32>
    %939 = vector.broadcast %938 : vector<1x192xf32> to vector<2x192xf32>
    %940 = arith.addf %937, %939 : vector<2x192xf32>
    %941 = vector.extract_strided_slice %541 {offsets = [12, 0], sizes = [2, 96], strides = [1, 1]} : vector<16x192xf32> to vector<2x96xf32>
    %942 = vector.extract_strided_slice %940 {offsets = [0, 0], sizes = [2, 96], strides = [1, 1]} : vector<2x192xf32> to vector<2x96xf32>
    %943 = vector.extract_strided_slice %941 {offsets = [0, 0], sizes = [2, 32], strides = [1, 1]} : vector<2x96xf32> to vector<2x32xf32>
    %944 = vector.extract_strided_slice %942 {offsets = [0, 0], sizes = [2, 32], strides = [1, 1]} : vector<2x96xf32> to vector<2x32xf32>
    %945 = arith.addf %943, %944 : vector<2x32xf32>
    %946 = arith.negf %945 : vector<2x32xf32>
    %947 = math.exp %946 : vector<2x32xf32>
    %cst_228 = arith.constant 1.000000e+00 : f32
    %948 = vector.broadcast %cst_228 : f32 to vector<2x32xf32>
    %949 = arith.addf %948, %947 : vector<2x32xf32>
    %950 = arith.divf %948, %949 : vector<2x32xf32>
    %951 = vector.extract_strided_slice %941 {offsets = [0, 32], sizes = [2, 32], strides = [1, 1]} : vector<2x96xf32> to vector<2x32xf32>
    %952 = vector.extract_strided_slice %942 {offsets = [0, 32], sizes = [2, 32], strides = [1, 1]} : vector<2x96xf32> to vector<2x32xf32>
    %953 = arith.addf %951, %952 : vector<2x32xf32>
    %954 = arith.negf %953 : vector<2x32xf32>
    %955 = math.exp %954 : vector<2x32xf32>
    %cst_229 = arith.constant 1.000000e+00 : f32
    %956 = vector.broadcast %cst_229 : f32 to vector<2x32xf32>
    %957 = arith.addf %956, %955 : vector<2x32xf32>
    %958 = arith.divf %956, %957 : vector<2x32xf32>
    %959 = vector.extract_strided_slice %941 {offsets = [0, 64], sizes = [2, 32], strides = [1, 1]} : vector<2x96xf32> to vector<2x32xf32>
    %960 = vector.extract_strided_slice %942 {offsets = [0, 64], sizes = [2, 32], strides = [1, 1]} : vector<2x96xf32> to vector<2x32xf32>
    %961 = arith.mulf %950, %960 : vector<2x32xf32>
    %962 = arith.addf %959, %961 : vector<2x32xf32>
    %963 = math.tanh %962 : vector<2x32xf32>
    %cst_230 = arith.constant 1.000000e+00 : f32
    %964 = vector.broadcast %cst_230 : f32 to vector<2x32xf32>
    %965 = arith.subf %964, %958 : vector<2x32xf32>
    %966 = arith.mulf %965, %963 : vector<2x32xf32>
    %967 = arith.mulf %958, %903 : vector<2x32xf32>
    %968 = arith.addf %966, %967 : vector<2x32xf32>
    %969 = vector.extract_strided_slice %541 {offsets = [2, 96], sizes = [2, 96], strides = [1, 1]} : vector<16x192xf32> to vector<2x96xf32>
    %970 = vector.extract_strided_slice %940 {offsets = [0, 96], sizes = [2, 96], strides = [1, 1]} : vector<2x192xf32> to vector<2x96xf32>
    %971 = vector.extract_strided_slice %969 {offsets = [0, 0], sizes = [2, 32], strides = [1, 1]} : vector<2x96xf32> to vector<2x32xf32>
    %972 = vector.extract_strided_slice %970 {offsets = [0, 0], sizes = [2, 32], strides = [1, 1]} : vector<2x96xf32> to vector<2x32xf32>
    %973 = arith.addf %971, %972 : vector<2x32xf32>
    %974 = arith.negf %973 : vector<2x32xf32>
    %975 = math.exp %974 : vector<2x32xf32>
    %cst_231 = arith.constant 1.000000e+00 : f32
    %976 = vector.broadcast %cst_231 : f32 to vector<2x32xf32>
    %977 = arith.addf %976, %975 : vector<2x32xf32>
    %978 = arith.divf %976, %977 : vector<2x32xf32>
    %979 = vector.extract_strided_slice %969 {offsets = [0, 32], sizes = [2, 32], strides = [1, 1]} : vector<2x96xf32> to vector<2x32xf32>
    %980 = vector.extract_strided_slice %970 {offsets = [0, 32], sizes = [2, 32], strides = [1, 1]} : vector<2x96xf32> to vector<2x32xf32>
    %981 = arith.addf %979, %980 : vector<2x32xf32>
    %982 = arith.negf %981 : vector<2x32xf32>
    %983 = math.exp %982 : vector<2x32xf32>
    %cst_232 = arith.constant 1.000000e+00 : f32
    %984 = vector.broadcast %cst_232 : f32 to vector<2x32xf32>
    %985 = arith.addf %984, %983 : vector<2x32xf32>
    %986 = arith.divf %984, %985 : vector<2x32xf32>
    %987 = vector.extract_strided_slice %969 {offsets = [0, 64], sizes = [2, 32], strides = [1, 1]} : vector<2x96xf32> to vector<2x32xf32>
    %988 = vector.extract_strided_slice %970 {offsets = [0, 64], sizes = [2, 32], strides = [1, 1]} : vector<2x96xf32> to vector<2x32xf32>
    %989 = arith.mulf %978, %988 : vector<2x32xf32>
    %990 = arith.addf %987, %989 : vector<2x32xf32>
    %991 = math.tanh %990 : vector<2x32xf32>
    %cst_233 = arith.constant 1.000000e+00 : f32
    %992 = vector.broadcast %cst_233 : f32 to vector<2x32xf32>
    %993 = arith.subf %992, %986 : vector<2x32xf32>
    %994 = arith.mulf %993, %991 : vector<2x32xf32>
    %995 = arith.mulf %986, %931 : vector<2x32xf32>
    %996 = arith.addf %994, %995 : vector<2x32xf32>
    %c12_234 = arith.constant 12 : index
    %c0_235 = arith.constant 0 : index
    %997 = vector.load %arg31[%c12_234, %c0_235] : memref<16x64xf32, #tpu.memory_space<vmem>>, vector<2x32xf32>
    tpu.vector_store %arg31[%c12_234, %c0_235], %968 {strides = array<i32>} : memref<16x64xf32, #tpu.memory_space<vmem>>, vector<2x32xf32>,
    %c2_236 = arith.constant 2 : index
    %c32_237 = arith.constant 32 : index
    %998 = vector.load %arg31[%c2_236, %c32_237] : memref<16x64xf32, #tpu.memory_space<vmem>>, vector<2x32xf32>
    tpu.vector_store %arg31[%c2_236, %c32_237], %996 {strides = array<i32>} : memref<16x64xf32, #tpu.memory_space<vmem>>, vector<2x32xf32>,
    %999 = tpu.concatenate %968, %996 in 1 : vector<2x32xf32>, vector<2x32xf32> -> vector<2x64xf32>
    %1000 = arith.truncf %999 : vector<2x64xf32> to vector<2x64xbf16>
    %c0_238 = arith.constant 0 : index
    %c0_239 = arith.constant 0 : index
    %1001 = vector.load %arg13[%c0_238, %c0_239] : memref<64x192xbf16, #tpu.memory_space<vmem>>, vector<64x192xbf16>
    %cst_240 = arith.constant dense<0.000000e+00> : vector<2x192xf32>
    %1002 = tpu.matmul %1000, %1001, %cst_240 {dimension_numbers = #tpu.dot_dimension_numbers<[1], [0], [0], [1], [0, 0, 1, 1], [], []>} : vector<2x64xbf16>, vector<64x192xbf16>, vector<2x192xf32> -> vector<2x192xf32>
    %c0_241 = arith.constant 0 : index
    %c0_242 = arith.constant 0 : index
    %1003 = vector.load %arg14[%c0_241, %c0_242] : memref<1x192xf32, #tpu.memory_space<vmem>>, vector<1x192xf32>
    %1004 = vector.broadcast %1003 : vector<1x192xf32> to vector<2x192xf32>
    %1005 = arith.addf %1002, %1004 : vector<2x192xf32>
    %1006 = vector.extract_strided_slice %541 {offsets = [14, 0], sizes = [2, 96], strides = [1, 1]} : vector<16x192xf32> to vector<2x96xf32>
    %1007 = vector.extract_strided_slice %1005 {offsets = [0, 0], sizes = [2, 96], strides = [1, 1]} : vector<2x192xf32> to vector<2x96xf32>
    %1008 = vector.extract_strided_slice %1006 {offsets = [0, 0], sizes = [2, 32], strides = [1, 1]} : vector<2x96xf32> to vector<2x32xf32>
    %1009 = vector.extract_strided_slice %1007 {offsets = [0, 0], sizes = [2, 32], strides = [1, 1]} : vector<2x96xf32> to vector<2x32xf32>
    %1010 = arith.addf %1008, %1009 : vector<2x32xf32>
    %1011 = arith.negf %1010 : vector<2x32xf32>
    %1012 = math.exp %1011 : vector<2x32xf32>
    %cst_243 = arith.constant 1.000000e+00 : f32
    %1013 = vector.broadcast %cst_243 : f32 to vector<2x32xf32>
    %1014 = arith.addf %1013, %1012 : vector<2x32xf32>
    %1015 = arith.divf %1013, %1014 : vector<2x32xf32>
    %1016 = vector.extract_strided_slice %1006 {offsets = [0, 32], sizes = [2, 32], strides = [1, 1]} : vector<2x96xf32> to vector<2x32xf32>
    %1017 = vector.extract_strided_slice %1007 {offsets = [0, 32], sizes = [2, 32], strides = [1, 1]} : vector<2x96xf32> to vector<2x32xf32>
    %1018 = arith.addf %1016, %1017 : vector<2x32xf32>
    %1019 = arith.negf %1018 : vector<2x32xf32>
    %1020 = math.exp %1019 : vector<2x32xf32>
    %cst_244 = arith.constant 1.000000e+00 : f32
    %1021 = vector.broadcast %cst_244 : f32 to vector<2x32xf32>
    %1022 = arith.addf %1021, %1020 : vector<2x32xf32>
    %1023 = arith.divf %1021, %1022 : vector<2x32xf32>
    %1024 = vector.extract_strided_slice %1006 {offsets = [0, 64], sizes = [2, 32], strides = [1, 1]} : vector<2x96xf32> to vector<2x32xf32>
    %1025 = vector.extract_strided_slice %1007 {offsets = [0, 64], sizes = [2, 32], strides = [1, 1]} : vector<2x96xf32> to vector<2x32xf32>
    %1026 = arith.mulf %1015, %1025 : vector<2x32xf32>
    %1027 = arith.addf %1024, %1026 : vector<2x32xf32>
    %1028 = math.tanh %1027 : vector<2x32xf32>
    %cst_245 = arith.constant 1.000000e+00 : f32
    %1029 = vector.broadcast %cst_245 : f32 to vector<2x32xf32>
    %1030 = arith.subf %1029, %1023 : vector<2x32xf32>
    %1031 = arith.mulf %1030, %1028 : vector<2x32xf32>
    %1032 = arith.mulf %1023, %968 : vector<2x32xf32>
    %1033 = arith.addf %1031, %1032 : vector<2x32xf32>
    %1034 = vector.extract_strided_slice %541 {offsets = [0, 96], sizes = [2, 96], strides = [1, 1]} : vector<16x192xf32> to vector<2x96xf32>
    %1035 = vector.extract_strided_slice %1005 {offsets = [0, 96], sizes = [2, 96], strides = [1, 1]} : vector<2x192xf32> to vector<2x96xf32>
    %1036 = vector.extract_strided_slice %1034 {offsets = [0, 0], sizes = [2, 32], strides = [1, 1]} : vector<2x96xf32> to vector<2x32xf32>
    %1037 = vector.extract_strided_slice %1035 {offsets = [0, 0], sizes = [2, 32], strides = [1, 1]} : vector<2x96xf32> to vector<2x32xf32>
    %1038 = arith.addf %1036, %1037 : vector<2x32xf32>
    %1039 = arith.negf %1038 : vector<2x32xf32>
    %1040 = math.exp %1039 : vector<2x32xf32>
    %cst_246 = arith.constant 1.000000e+00 : f32
    %1041 = vector.broadcast %cst_246 : f32 to vector<2x32xf32>
    %1042 = arith.addf %1041, %1040 : vector<2x32xf32>
    %1043 = arith.divf %1041, %1042 : vector<2x32xf32>
    %1044 = vector.extract_strided_slice %1034 {offsets = [0, 32], sizes = [2, 32], strides = [1, 1]} : vector<2x96xf32> to vector<2x32xf32>
    %1045 = vector.extract_strided_slice %1035 {offsets = [0, 32], sizes = [2, 32], strides = [1, 1]} : vector<2x96xf32> to vector<2x32xf32>
    %1046 = arith.addf %1044, %1045 : vector<2x32xf32>
    %1047 = arith.negf %1046 : vector<2x32xf32>
    %1048 = math.exp %1047 : vector<2x32xf32>
    %cst_247 = arith.constant 1.000000e+00 : f32
    %1049 = vector.broadcast %cst_247 : f32 to vector<2x32xf32>
    %1050 = arith.addf %1049, %1048 : vector<2x32xf32>
    %1051 = arith.divf %1049, %1050 : vector<2x32xf32>
    %1052 = vector.extract_strided_slice %1034 {offsets = [0, 64], sizes = [2, 32], strides = [1, 1]} : vector<2x96xf32> to vector<2x32xf32>
    %1053 = vector.extract_strided_slice %1035 {offsets = [0, 64], sizes = [2, 32], strides = [1, 1]} : vector<2x96xf32> to vector<2x32xf32>
    %1054 = arith.mulf %1043, %1053 : vector<2x32xf32>
    %1055 = arith.addf %1052, %1054 : vector<2x32xf32>
    %1056 = math.tanh %1055 : vector<2x32xf32>
    %cst_248 = arith.constant 1.000000e+00 : f32
    %1057 = vector.broadcast %cst_248 : f32 to vector<2x32xf32>
    %1058 = arith.subf %1057, %1051 : vector<2x32xf32>
    %1059 = arith.mulf %1058, %1056 : vector<2x32xf32>
    %1060 = arith.mulf %1051, %996 : vector<2x32xf32>
    %1061 = arith.addf %1059, %1060 : vector<2x32xf32>
    %c14_249 = arith.constant 14 : index
    %c0_250 = arith.constant 0 : index
    %1062 = vector.load %arg31[%c14_249, %c0_250] : memref<16x64xf32, #tpu.memory_space<vmem>>, vector<2x32xf32>
    tpu.vector_store %arg31[%c14_249, %c0_250], %1033 {strides = array<i32>} : memref<16x64xf32, #tpu.memory_space<vmem>>, vector<2x32xf32>,
    %c0_251 = arith.constant 0 : index
    %c32_252 = arith.constant 32 : index
    %1063 = vector.load %arg31[%c0_251, %c32_252] : memref<16x64xf32, #tpu.memory_space<vmem>>, vector<2x32xf32>
    tpu.vector_store %arg31[%c0_251, %c32_252], %1061 {strides = array<i32>} : memref<16x64xf32, #tpu.memory_space<vmem>>, vector<2x32xf32>,
    %c0_253 = arith.constant 0 : index
    %c0_254 = arith.constant 0 : index
    %1064 = vector.load %arg31[%c0_253, %c0_254] : memref<16x64xf32, #tpu.memory_space<vmem>>, vector<16x64xf32>
    %1065 = arith.truncf %1064 : vector<16x64xf32> to vector<16x64xbf16>
    %c0_255 = arith.constant 0 : index
    %c0_256 = arith.constant 0 : index
    %1066 = vector.load %arg3[%c0_255, %c0_256] : memref<2x16xf32, #tpu.memory_space<vmem>>, vector<2x16xf32>
    %1067 = arith.truncf %1066 : vector<2x16xf32> to vector<2x16xbf16>
    %cst_257 = arith.constant dense<0.000000e+00> : vector<2x64xf32>
    %1068 = tpu.matmul %1067, %1065, %cst_257 {dimension_numbers = #tpu.dot_dimension_numbers<[1], [0], [0], [1], [0, 0, 1, 1], [], []>} : vector<2x16xbf16>, vector<16x64xbf16>, vector<2x64xf32> -> vector<2x64xf32>
    %1069 = arith.truncf %1068 : vector<2x64xf32> to vector<2x64xbf16>
    %c0_258 = arith.constant 0 : index
    %c0_259 = arith.constant 0 : index
    %1070 = vector.load %arg15[%c0_258, %c0_259] : memref<64x32xbf16, #tpu.memory_space<vmem>>, vector<64x32xbf16>
    %cst_260 = arith.constant dense<0.000000e+00> : vector<2x32xf32>
    %1071 = tpu.matmul %1069, %1070, %cst_260 {dimension_numbers = #tpu.dot_dimension_numbers<[1], [0], [0], [1], [0, 0, 1, 1], [], []>} : vector<2x64xbf16>, vector<64x32xbf16>, vector<2x32xf32> -> vector<2x32xf32>
    %c0_261 = arith.constant 0 : index
    %c0_262 = arith.constant 0 : index
    %1072 = vector.load %arg16[%c0_261, %c0_262] : memref<1x32xf32, #tpu.memory_space<vmem>>, vector<1x32xf32>
    %1073 = vector.broadcast %1072 : vector<1x32xf32> to vector<2x32xf32>
    %1074 = arith.addf %1071, %1073 : vector<2x32xf32>
    %1075 = math.tanh %1074 : vector<2x32xf32>
    %1076 = arith.truncf %1064 : vector<16x64xf32> to vector<16x64xbf16>
    %c0_263 = arith.constant 0 : index
    %c0_264 = arith.constant 0 : index
    %1077 = vector.load %arg17[%c0_263, %c0_264] : memref<64x32xbf16, #tpu.memory_space<vmem>>, vector<64x32xbf16>
    %cst_265 = arith.constant dense<0.000000e+00> : vector<16x32xf32>
    %1078 = tpu.matmul %1076, %1077, %cst_265 {dimension_numbers = #tpu.dot_dimension_numbers<[1], [0], [0], [1], [0, 0, 1, 1], [], []>} : vector<16x64xbf16>, vector<64x32xbf16>, vector<16x32xf32> -> vector<16x32xf32>
    %c0_266 = arith.constant 0 : index
    %c0_267 = arith.constant 0 : index
    %1079 = vector.load %arg18[%c0_266, %c0_267] : memref<1x32xf32, #tpu.memory_space<vmem>>, vector<1x32xf32>
    %1080 = vector.broadcast %1079 : vector<1x32xf32> to vector<16x32xf32>
    %1081 = arith.addf %1078, %1080 : vector<16x32xf32>
    %c0_268 = arith.constant 0 : index
    %c0_269 = arith.constant 0 : index
    %1082 = vector.load %arg2[%c0_268, %c0_269] : memref<16x32xf32, #tpu.memory_space<vmem>>, vector<16x32xf32>
    %c0_270 = arith.constant 0 : index
    %c0_271 = arith.constant 0 : index
    %1083 = vector.load %arg32[%c0_270, %c0_271] : memref<16x128xf32, #tpu.memory_space<vmem>>, vector<16x32xf32>
    tpu.vector_store %arg32[%c0_270, %c0_271], %1082 {strides = array<i32>} : memref<16x128xf32, #tpu.memory_space<vmem>>, vector<16x32xf32>,
    %1084 = arith.truncf %1082 : vector<16x32xf32> to vector<16x32xbf16>
    %c0_272 = arith.constant 0 : index
    %c0_273 = arith.constant 0 : index
    %1085 = vector.load %arg21[%c0_272, %c0_273] : memref<32x96xbf16, #tpu.memory_space<vmem>>, vector<32x96xbf16>
    %cst_274 = arith.constant dense<0.000000e+00> : vector<16x96xf32>
    %1086 = tpu.matmul %1084, %1085, %cst_274 {dimension_numbers = #tpu.dot_dimension_numbers<[1], [0], [0], [1], [0, 0, 1, 1], [], []>} : vector<16x32xbf16>, vector<32x96xbf16>, vector<16x96xf32> -> vector<16x96xf32>
    %c0_275 = arith.constant 0 : index
    %c0_276 = arith.constant 0 : index
    %1087 = vector.load %arg22[%c0_275, %c0_276] : memref<1x96xf32, #tpu.memory_space<vmem>>, vector<1x96xf32>
    %1088 = vector.broadcast %1087 : vector<1x96xf32> to vector<16x96xf32>
    %1089 = arith.addf %1086, %1088 : vector<16x96xf32>
    %c0_277 = arith.constant 0 : index
    %c0_278 = arith.constant 0 : index
    %1090 = vector.load %arg20[%c0_277, %c0_278] : memref<1x32xbf16, #tpu.memory_space<vmem>>, vector<1x32xbf16>
    %c0_279 = arith.constant 0 : index
    %c0_280 = arith.constant 0 : index
    %1091 = vector.load %arg4[%c0_279, %c0_280] : memref<2x16xf32, #tpu.memory_space<vmem>>, vector<2x16xf32>
    %1092 = arith.truncf %1075 : vector<2x32xf32> to vector<2x32xbf16>
    %c0_281 = arith.constant 0 : index
    %c0_282 = arith.constant 0 : index
    %1093 = vector.load %arg23[%c0_281, %c0_282] : memref<32x96xbf16, #tpu.memory_space<vmem>>, vector<32x96xbf16>
    %cst_283 = arith.constant dense<0.000000e+00> : vector<2x96xf32>
    %1094 = tpu.matmul %1092, %1093, %cst_283 {dimension_numbers = #tpu.dot_dimension_numbers<[1], [0], [0], [1], [0, 0, 1, 1], [], []>} : vector<2x32xbf16>, vector<32x96xbf16>, vector<2x96xf32> -> vector<2x96xf32>
    %c0_284 = arith.constant 0 : index
    %c0_285 = arith.constant 0 : index
    %1095 = vector.load %arg24[%c0_284, %c0_285] : memref<1x96xf32, #tpu.memory_space<vmem>>, vector<1x96xf32>
    %1096 = vector.broadcast %1095 : vector<1x96xf32> to vector<2x96xf32>
    %1097 = arith.addf %1094, %1096 : vector<2x96xf32>
    %1098 = vector.extract_strided_slice %1089 {offsets = [0, 0], sizes = [2, 96], strides = [1, 1]} : vector<16x96xf32> to vector<2x96xf32>
    %1099 = vector.extract_strided_slice %1098 {offsets = [0, 0], sizes = [2, 32], strides = [1, 1]} : vector<2x96xf32> to vector<2x32xf32>
    %1100 = vector.extract_strided_slice %1097 {offsets = [0, 0], sizes = [2, 32], strides = [1, 1]} : vector<2x96xf32> to vector<2x32xf32>
    %1101 = arith.addf %1099, %1100 : vector<2x32xf32>
    %1102 = arith.negf %1101 : vector<2x32xf32>
    %1103 = math.exp %1102 : vector<2x32xf32>
    %cst_286 = arith.constant 1.000000e+00 : f32
    %1104 = vector.broadcast %cst_286 : f32 to vector<2x32xf32>
    %1105 = arith.addf %1104, %1103 : vector<2x32xf32>
    %1106 = arith.divf %1104, %1105 : vector<2x32xf32>
    %1107 = vector.extract_strided_slice %1098 {offsets = [0, 32], sizes = [2, 32], strides = [1, 1]} : vector<2x96xf32> to vector<2x32xf32>
    %1108 = vector.extract_strided_slice %1097 {offsets = [0, 32], sizes = [2, 32], strides = [1, 1]} : vector<2x96xf32> to vector<2x32xf32>
    %1109 = arith.addf %1107, %1108 : vector<2x32xf32>
    %1110 = arith.negf %1109 : vector<2x32xf32>
    %1111 = math.exp %1110 : vector<2x32xf32>
    %cst_287 = arith.constant 1.000000e+00 : f32
    %1112 = vector.broadcast %cst_287 : f32 to vector<2x32xf32>
    %1113 = arith.addf %1112, %1111 : vector<2x32xf32>
    %1114 = arith.divf %1112, %1113 : vector<2x32xf32>
    %1115 = vector.extract_strided_slice %1098 {offsets = [0, 64], sizes = [2, 32], strides = [1, 1]} : vector<2x96xf32> to vector<2x32xf32>
    %1116 = vector.extract_strided_slice %1097 {offsets = [0, 64], sizes = [2, 32], strides = [1, 1]} : vector<2x96xf32> to vector<2x32xf32>
    %1117 = arith.mulf %1106, %1116 : vector<2x32xf32>
    %1118 = arith.addf %1115, %1117 : vector<2x32xf32>
    %1119 = math.tanh %1118 : vector<2x32xf32>
    %cst_288 = arith.constant 1.000000e+00 : f32
    %1120 = vector.broadcast %cst_288 : f32 to vector<2x32xf32>
    %1121 = arith.subf %1120, %1114 : vector<2x32xf32>
    %1122 = arith.mulf %1121, %1119 : vector<2x32xf32>
    %1123 = arith.mulf %1114, %1075 : vector<2x32xf32>
    %1124 = arith.addf %1122, %1123 : vector<2x32xf32>
    %1125 = arith.truncf %1124 : vector<2x32xf32> to vector<2x32xbf16>
    %c0_289 = arith.constant 0 : index
    %c0_290 = arith.constant 0 : index
    %1126 = vector.load %arg19[%c0_289, %c0_290] : memref<32x32xbf16, #tpu.memory_space<vmem>>, vector<32x32xbf16>
    %cst_291 = arith.constant dense<0.000000e+00> : vector<2x32xf32>
    %1127 = tpu.matmul %1125, %1126, %cst_291 {dimension_numbers = #tpu.dot_dimension_numbers<[1], [0], [0], [1], [0, 0, 1, 1], [], []>} : vector<2x32xbf16>, vector<32x32xbf16>, vector<2x32xf32> -> vector<2x32xf32>
    %1128 = tpu.concatenate %1127, %1127, %1127, %1127, %1127, %1127, %1127, %1127 in 0 : vector<2x32xf32>, vector<2x32xf32>, vector<2x32xf32>, vector<2x32xf32>, vector<2x32xf32>, vector<2x32xf32>, vector<2x32xf32>, vector<2x32xf32> -> vector<16x32xf32>
    %1129 = arith.addf %1081, %1128 : vector<16x32xf32>
    %1130 = math.tanh %1129 : vector<16x32xf32>
    %1131 = arith.truncf %1130 : vector<16x32xf32> to vector<16x32xbf16>
    %cst_292 = arith.constant dense<0.000000e+00> : vector<1x16xf32>
    %1132 = tpu.matmul %1090, %1131, %cst_292 {dimension_numbers = #tpu.dot_dimension_numbers<[1], [1], [0], [0], [0, 0, 1, 0], [], []>} : vector<1x32xbf16>, vector<16x32xbf16>, vector<1x16xf32> -> vector<1x16xf32>
    %1133 = vector.broadcast %1132 : vector<1x16xf32> to vector<2x16xf32>
    %1134 = arith.addf %1133, %1091 : vector<2x16xf32>
    %cst_293 = arith.constant dense<0xFF800000> : vector<2xf32>
    %1135 = vector.multi_reduction <maximumf>, %1134, %cst_293 [1] : vector<2x16xf32> to vector<2xf32>
    %1136 = vector.shape_cast %1135 : vector<2xf32> to vector<2x1xf32>
    %1137 = vector.broadcast %1136 : vector<2x1xf32> to vector<2x16xf32>
    %1138 = arith.subf %1134, %1137 : vector<2x16xf32>
    %1139 = math.exp %1138 : vector<2x16xf32>
    %cst_294 = arith.constant dense<0.000000e+00> : vector<2xf32>
    %1140 = vector.multi_reduction <add>, %1139, %cst_294 [1] : vector<2x16xf32> to vector<2xf32>
    %1141 = vector.shape_cast %1140 : vector<2xf32> to vector<2x1xf32>
    %1142 = tpu.reciprocal %1141 {approx = true} : vector<2x1xf32> -> vector<2x1xf32>
    %1143 = vector.broadcast %1142 : vector<2x1xf32> to vector<2x16xf32>
    %1144 = arith.mulf %1139, %1143 : vector<2x16xf32>
    %1145 = arith.truncf %1144 : vector<2x16xf32> to vector<2x16xbf16>
    %cst_295 = arith.constant dense<0.000000e+00> : vector<2x64xf32>
    %1146 = tpu.matmul %1145, %1065, %cst_295 {dimension_numbers = #tpu.dot_dimension_numbers<[1], [0], [0], [1], [0, 0, 1, 1], [], []>} : vector<2x16xbf16>, vector<16x64xbf16>, vector<2x64xf32> -> vector<2x64xf32>
    %1147 = tpu.concatenate %1146, %1124 in 1 : vector<2x64xf32>, vector<2x32xf32> -> vector<2x96xf32>
    %1148 = arith.truncf %1147 : vector<2x96xf32> to vector<2x96xbf16>
    %c0_296 = arith.constant 0 : index
    %c0_297 = arith.constant 0 : index
    %1149 = vector.load %arg25[%c0_296, %c0_297] : memref<96x192xbf16, #tpu.memory_space<vmem>>, vector<96x192xbf16>
    %cst_298 = arith.constant dense<0.000000e+00> : vector<2x192xf32>
    %1150 = tpu.matmul %1148, %1149, %cst_298 {dimension_numbers = #tpu.dot_dimension_numbers<[1], [0], [0], [1], [0, 0, 1, 1], [], []>} : vector<2x96xbf16>, vector<96x192xbf16>, vector<2x192xf32> -> vector<2x192xf32>
    %c0_299 = arith.constant 0 : index
    %c0_300 = arith.constant 0 : index
    %1151 = vector.load %arg26[%c0_299, %c0_300] : memref<1x192xf32, #tpu.memory_space<vmem>>, vector<1x192xf32>
    %1152 = vector.broadcast %1151 : vector<1x192xf32> to vector<2x192xf32>
    %1153 = arith.addf %1150, %1152 : vector<2x192xf32>
    %1154 = vector.extract_strided_slice %1153 {offsets = [0, 0], sizes = [2, 96], strides = [1, 1]} : vector<2x192xf32> to vector<2x96xf32>
    %1155 = vector.extract_strided_slice %1153 {offsets = [0, 96], sizes = [2, 96], strides = [1, 1]} : vector<2x192xf32> to vector<2x96xf32>
    %1156 = vector.extract_strided_slice %1154 {offsets = [0, 0], sizes = [2, 32], strides = [1, 1]} : vector<2x96xf32> to vector<2x32xf32>
    %1157 = vector.extract_strided_slice %1155 {offsets = [0, 0], sizes = [2, 32], strides = [1, 1]} : vector<2x96xf32> to vector<2x32xf32>
    %1158 = arith.addf %1156, %1157 : vector<2x32xf32>
    %1159 = arith.negf %1158 : vector<2x32xf32>
    %1160 = math.exp %1159 : vector<2x32xf32>
    %cst_301 = arith.constant 1.000000e+00 : f32
    %1161 = vector.broadcast %cst_301 : f32 to vector<2x32xf32>
    %1162 = arith.addf %1161, %1160 : vector<2x32xf32>
    %1163 = arith.divf %1161, %1162 : vector<2x32xf32>
    %1164 = vector.extract_strided_slice %1154 {offsets = [0, 32], sizes = [2, 32], strides = [1, 1]} : vector<2x96xf32> to vector<2x32xf32>
    %1165 = vector.extract_strided_slice %1155 {offsets = [0, 32], sizes = [2, 32], strides = [1, 1]} : vector<2x96xf32> to vector<2x32xf32>
    %1166 = arith.addf %1164, %1165 : vector<2x32xf32>
    %1167 = arith.negf %1166 : vector<2x32xf32>
    %1168 = math.exp %1167 : vector<2x32xf32>
    %cst_302 = arith.constant 1.000000e+00 : f32
    %1169 = vector.broadcast %cst_302 : f32 to vector<2x32xf32>
    %1170 = arith.addf %1169, %1168 : vector<2x32xf32>
    %1171 = arith.divf %1169, %1170 : vector<2x32xf32>
    %1172 = vector.extract_strided_slice %1154 {offsets = [0, 64], sizes = [2, 32], strides = [1, 1]} : vector<2x96xf32> to vector<2x32xf32>
    %1173 = vector.extract_strided_slice %1155 {offsets = [0, 64], sizes = [2, 32], strides = [1, 1]} : vector<2x96xf32> to vector<2x32xf32>
    %1174 = arith.mulf %1163, %1173 : vector<2x32xf32>
    %1175 = arith.addf %1172, %1174 : vector<2x32xf32>
    %1176 = math.tanh %1175 : vector<2x32xf32>
    %cst_303 = arith.constant 1.000000e+00 : f32
    %1177 = vector.broadcast %cst_303 : f32 to vector<2x32xf32>
    %1178 = arith.subf %1177, %1171 : vector<2x32xf32>
    %1179 = arith.mulf %1178, %1176 : vector<2x32xf32>
    %1180 = arith.mulf %1171, %1124 : vector<2x32xf32>
    %1181 = arith.addf %1179, %1180 : vector<2x32xf32>
    %c0_304 = arith.constant 0 : index
    %c32_305 = arith.constant 32 : index
    %1182 = vector.load %arg32[%c0_304, %c32_305] : memref<16x128xf32, #tpu.memory_space<vmem>>, vector<2x32xf32>
    tpu.vector_store %arg32[%c0_304, %c32_305], %1181 {strides = array<i32>} : memref<16x128xf32, #tpu.memory_space<vmem>>, vector<2x32xf32>,
    %c0_306 = arith.constant 0 : index
    %c64 = arith.constant 64 : index
    %1183 = vector.load %arg32[%c0_306, %c64] : memref<16x128xf32, #tpu.memory_space<vmem>>, vector<2x64xf32>
    tpu.vector_store %arg32[%c0_306, %c64], %1146 {strides = array<i32>} : memref<16x128xf32, #tpu.memory_space<vmem>>, vector<2x64xf32>,
    %1184 = arith.truncf %1181 : vector<2x32xf32> to vector<2x32xbf16>
    %c0_307 = arith.constant 0 : index
    %c0_308 = arith.constant 0 : index
    %1185 = vector.load %arg23[%c0_307, %c0_308] : memref<32x96xbf16, #tpu.memory_space<vmem>>, vector<32x96xbf16>
    %cst_309 = arith.constant dense<0.000000e+00> : vector<2x96xf32>
    %1186 = tpu.matmul %1184, %1185, %cst_309 {dimension_numbers = #tpu.dot_dimension_numbers<[1], [0], [0], [1], [0, 0, 1, 1], [], []>} : vector<2x32xbf16>, vector<32x96xbf16>, vector<2x96xf32> -> vector<2x96xf32>
    %c0_310 = arith.constant 0 : index
    %c0_311 = arith.constant 0 : index
    %1187 = vector.load %arg24[%c0_310, %c0_311] : memref<1x96xf32, #tpu.memory_space<vmem>>, vector<1x96xf32>
    %1188 = vector.broadcast %1187 : vector<1x96xf32> to vector<2x96xf32>
    %1189 = arith.addf %1186, %1188 : vector<2x96xf32>
    %1190 = vector.extract_strided_slice %1089 {offsets = [2, 0], sizes = [2, 96], strides = [1, 1]} : vector<16x96xf32> to vector<2x96xf32>
    %1191 = vector.extract_strided_slice %1190 {offsets = [0, 0], sizes = [2, 32], strides = [1, 1]} : vector<2x96xf32> to vector<2x32xf32>
    %1192 = vector.extract_strided_slice %1189 {offsets = [0, 0], sizes = [2, 32], strides = [1, 1]} : vector<2x96xf32> to vector<2x32xf32>
    %1193 = arith.addf %1191, %1192 : vector<2x32xf32>
    %1194 = arith.negf %1193 : vector<2x32xf32>
    %1195 = math.exp %1194 : vector<2x32xf32>
    %cst_312 = arith.constant 1.000000e+00 : f32
    %1196 = vector.broadcast %cst_312 : f32 to vector<2x32xf32>
    %1197 = arith.addf %1196, %1195 : vector<2x32xf32>
    %1198 = arith.divf %1196, %1197 : vector<2x32xf32>
    %1199 = vector.extract_strided_slice %1190 {offsets = [0, 32], sizes = [2, 32], strides = [1, 1]} : vector<2x96xf32> to vector<2x32xf32>
    %1200 = vector.extract_strided_slice %1189 {offsets = [0, 32], sizes = [2, 32], strides = [1, 1]} : vector<2x96xf32> to vector<2x32xf32>
    %1201 = arith.addf %1199, %1200 : vector<2x32xf32>
    %1202 = arith.negf %1201 : vector<2x32xf32>
    %1203 = math.exp %1202 : vector<2x32xf32>
    %cst_313 = arith.constant 1.000000e+00 : f32
    %1204 = vector.broadcast %cst_313 : f32 to vector<2x32xf32>
    %1205 = arith.addf %1204, %1203 : vector<2x32xf32>
    %1206 = arith.divf %1204, %1205 : vector<2x32xf32>
    %1207 = vector.extract_strided_slice %1190 {offsets = [0, 64], sizes = [2, 32], strides = [1, 1]} : vector<2x96xf32> to vector<2x32xf32>
    %1208 = vector.extract_strided_slice %1189 {offsets = [0, 64], sizes = [2, 32], strides = [1, 1]} : vector<2x96xf32> to vector<2x32xf32>
    %1209 = arith.mulf %1198, %1208 : vector<2x32xf32>
    %1210 = arith.addf %1207, %1209 : vector<2x32xf32>
    %1211 = math.tanh %1210 : vector<2x32xf32>
    %cst_314 = arith.constant 1.000000e+00 : f32
    %1212 = vector.broadcast %cst_314 : f32 to vector<2x32xf32>
    %1213 = arith.subf %1212, %1206 : vector<2x32xf32>
    %1214 = arith.mulf %1213, %1211 : vector<2x32xf32>
    %1215 = arith.mulf %1206, %1181 : vector<2x32xf32>
    %1216 = arith.addf %1214, %1215 : vector<2x32xf32>
    %1217 = arith.truncf %1216 : vector<2x32xf32> to vector<2x32xbf16>
    %c0_315 = arith.constant 0 : index
    %c0_316 = arith.constant 0 : index
    %1218 = vector.load %arg19[%c0_315, %c0_316] : memref<32x32xbf16, #tpu.memory_space<vmem>>, vector<32x32xbf16>
    %cst_317 = arith.constant dense<0.000000e+00> : vector<2x32xf32>
    %1219 = tpu.matmul %1217, %1218, %cst_317 {dimension_numbers = #tpu.dot_dimension_numbers<[1], [0], [0], [1], [0, 0, 1, 1], [], []>} : vector<2x32xbf16>, vector<32x32xbf16>, vector<2x32xf32> -> vector<2x32xf32>
    %1220 = tpu.concatenate %1219, %1219, %1219, %1219, %1219, %1219, %1219, %1219 in 0 : vector<2x32xf32>, vector<2x32xf32>, vector<2x32xf32>, vector<2x32xf32>, vector<2x32xf32>, vector<2x32xf32>, vector<2x32xf32>, vector<2x32xf32> -> vector<16x32xf32>
    %1221 = arith.addf %1081, %1220 : vector<16x32xf32>
    %1222 = math.tanh %1221 : vector<16x32xf32>
    %1223 = arith.truncf %1222 : vector<16x32xf32> to vector<16x32xbf16>
    %cst_318 = arith.constant dense<0.000000e+00> : vector<1x16xf32>
    %1224 = tpu.matmul %1090, %1223, %cst_318 {dimension_numbers = #tpu.dot_dimension_numbers<[1], [1], [0], [0], [0, 0, 1, 0], [], []>} : vector<1x32xbf16>, vector<16x32xbf16>, vector<1x16xf32> -> vector<1x16xf32>
    %1225 = vector.broadcast %1224 : vector<1x16xf32> to vector<2x16xf32>
    %1226 = arith.addf %1225, %1091 : vector<2x16xf32>
    %cst_319 = arith.constant dense<0xFF800000> : vector<2xf32>
    %1227 = vector.multi_reduction <maximumf>, %1226, %cst_319 [1] : vector<2x16xf32> to vector<2xf32>
    %1228 = vector.shape_cast %1227 : vector<2xf32> to vector<2x1xf32>
    %1229 = vector.broadcast %1228 : vector<2x1xf32> to vector<2x16xf32>
    %1230 = arith.subf %1226, %1229 : vector<2x16xf32>
    %1231 = math.exp %1230 : vector<2x16xf32>
    %cst_320 = arith.constant dense<0.000000e+00> : vector<2xf32>
    %1232 = vector.multi_reduction <add>, %1231, %cst_320 [1] : vector<2x16xf32> to vector<2xf32>
    %1233 = vector.shape_cast %1232 : vector<2xf32> to vector<2x1xf32>
    %1234 = tpu.reciprocal %1233 {approx = true} : vector<2x1xf32> -> vector<2x1xf32>
    %1235 = vector.broadcast %1234 : vector<2x1xf32> to vector<2x16xf32>
    %1236 = arith.mulf %1231, %1235 : vector<2x16xf32>
    %1237 = arith.truncf %1236 : vector<2x16xf32> to vector<2x16xbf16>
    %cst_321 = arith.constant dense<0.000000e+00> : vector<2x64xf32>
    %1238 = tpu.matmul %1237, %1065, %cst_321 {dimension_numbers = #tpu.dot_dimension_numbers<[1], [0], [0], [1], [0, 0, 1, 1], [], []>} : vector<2x16xbf16>, vector<16x64xbf16>, vector<2x64xf32> -> vector<2x64xf32>
    %1239 = tpu.concatenate %1238, %1216 in 1 : vector<2x64xf32>, vector<2x32xf32> -> vector<2x96xf32>
    %1240 = arith.truncf %1239 : vector<2x96xf32> to vector<2x96xbf16>
    %c0_322 = arith.constant 0 : index
    %c0_323 = arith.constant 0 : index
    %1241 = vector.load %arg25[%c0_322, %c0_323] : memref<96x192xbf16, #tpu.memory_space<vmem>>, vector<96x192xbf16>
    %cst_324 = arith.constant dense<0.000000e+00> : vector<2x192xf32>
    %1242 = tpu.matmul %1240, %1241, %cst_324 {dimension_numbers = #tpu.dot_dimension_numbers<[1], [0], [0], [1], [0, 0, 1, 1], [], []>} : vector<2x96xbf16>, vector<96x192xbf16>, vector<2x192xf32> -> vector<2x192xf32>
    %c0_325 = arith.constant 0 : index
    %c0_326 = arith.constant 0 : index
    %1243 = vector.load %arg26[%c0_325, %c0_326] : memref<1x192xf32, #tpu.memory_space<vmem>>, vector<1x192xf32>
    %1244 = vector.broadcast %1243 : vector<1x192xf32> to vector<2x192xf32>
    %1245 = arith.addf %1242, %1244 : vector<2x192xf32>
    %1246 = vector.extract_strided_slice %1245 {offsets = [0, 0], sizes = [2, 96], strides = [1, 1]} : vector<2x192xf32> to vector<2x96xf32>
    %1247 = vector.extract_strided_slice %1245 {offsets = [0, 96], sizes = [2, 96], strides = [1, 1]} : vector<2x192xf32> to vector<2x96xf32>
    %1248 = vector.extract_strided_slice %1246 {offsets = [0, 0], sizes = [2, 32], strides = [1, 1]} : vector<2x96xf32> to vector<2x32xf32>
    %1249 = vector.extract_strided_slice %1247 {offsets = [0, 0], sizes = [2, 32], strides = [1, 1]} : vector<2x96xf32> to vector<2x32xf32>
    %1250 = arith.addf %1248, %1249 : vector<2x32xf32>
    %1251 = arith.negf %1250 : vector<2x32xf32>
    %1252 = math.exp %1251 : vector<2x32xf32>
    %cst_327 = arith.constant 1.000000e+00 : f32
    %1253 = vector.broadcast %cst_327 : f32 to vector<2x32xf32>
    %1254 = arith.addf %1253, %1252 : vector<2x32xf32>
    %1255 = arith.divf %1253, %1254 : vector<2x32xf32>
    %1256 = vector.extract_strided_slice %1246 {offsets = [0, 32], sizes = [2, 32], strides = [1, 1]} : vector<2x96xf32> to vector<2x32xf32>
    %1257 = vector.extract_strided_slice %1247 {offsets = [0, 32], sizes = [2, 32], strides = [1, 1]} : vector<2x96xf32> to vector<2x32xf32>
    %1258 = arith.addf %1256, %1257 : vector<2x32xf32>
    %1259 = arith.negf %1258 : vector<2x32xf32>
    %1260 = math.exp %1259 : vector<2x32xf32>
    %cst_328 = arith.constant 1.000000e+00 : f32
    %1261 = vector.broadcast %cst_328 : f32 to vector<2x32xf32>
    %1262 = arith.addf %1261, %1260 : vector<2x32xf32>
    %1263 = arith.divf %1261, %1262 : vector<2x32xf32>
    %1264 = vector.extract_strided_slice %1246 {offsets = [0, 64], sizes = [2, 32], strides = [1, 1]} : vector<2x96xf32> to vector<2x32xf32>
    %1265 = vector.extract_strided_slice %1247 {offsets = [0, 64], sizes = [2, 32], strides = [1, 1]} : vector<2x96xf32> to vector<2x32xf32>
    %1266 = arith.mulf %1255, %1265 : vector<2x32xf32>
    %1267 = arith.addf %1264, %1266 : vector<2x32xf32>
    %1268 = math.tanh %1267 : vector<2x32xf32>
    %cst_329 = arith.constant 1.000000e+00 : f32
    %1269 = vector.broadcast %cst_329 : f32 to vector<2x32xf32>
    %1270 = arith.subf %1269, %1263 : vector<2x32xf32>
    %1271 = arith.mulf %1270, %1268 : vector<2x32xf32>
    %1272 = arith.mulf %1263, %1216 : vector<2x32xf32>
    %1273 = arith.addf %1271, %1272 : vector<2x32xf32>
    %c2_330 = arith.constant 2 : index
    %c32_331 = arith.constant 32 : index
    %1274 = vector.load %arg32[%c2_330, %c32_331] : memref<16x128xf32, #tpu.memory_space<vmem>>, vector<2x32xf32>
    tpu.vector_store %arg32[%c2_330, %c32_331], %1273 {strides = array<i32>} : memref<16x128xf32, #tpu.memory_space<vmem>>, vector<2x32xf32>,
    %c2_332 = arith.constant 2 : index
    %c64_333 = arith.constant 64 : index
    %1275 = vector.load %arg32[%c2_332, %c64_333] : memref<16x128xf32, #tpu.memory_space<vmem>>, vector<2x64xf32>
    tpu.vector_store %arg32[%c2_332, %c64_333], %1238 {strides = array<i32>} : memref<16x128xf32, #tpu.memory_space<vmem>>, vector<2x64xf32>,
    %1276 = arith.truncf %1273 : vector<2x32xf32> to vector<2x32xbf16>
    %c0_334 = arith.constant 0 : index
    %c0_335 = arith.constant 0 : index
    %1277 = vector.load %arg23[%c0_334, %c0_335] : memref<32x96xbf16, #tpu.memory_space<vmem>>, vector<32x96xbf16>
    %cst_336 = arith.constant dense<0.000000e+00> : vector<2x96xf32>
    %1278 = tpu.matmul %1276, %1277, %cst_336 {dimension_numbers = #tpu.dot_dimension_numbers<[1], [0], [0], [1], [0, 0, 1, 1], [], []>} : vector<2x32xbf16>, vector<32x96xbf16>, vector<2x96xf32> -> vector<2x96xf32>
    %c0_337 = arith.constant 0 : index
    %c0_338 = arith.constant 0 : index
    %1279 = vector.load %arg24[%c0_337, %c0_338] : memref<1x96xf32, #tpu.memory_space<vmem>>, vector<1x96xf32>
    %1280 = vector.broadcast %1279 : vector<1x96xf32> to vector<2x96xf32>
    %1281 = arith.addf %1278, %1280 : vector<2x96xf32>
    %1282 = vector.extract_strided_slice %1089 {offsets = [4, 0], sizes = [2, 96], strides = [1, 1]} : vector<16x96xf32> to vector<2x96xf32>
    %1283 = vector.extract_strided_slice %1282 {offsets = [0, 0], sizes = [2, 32], strides = [1, 1]} : vector<2x96xf32> to vector<2x32xf32>
    %1284 = vector.extract_strided_slice %1281 {offsets = [0, 0], sizes = [2, 32], strides = [1, 1]} : vector<2x96xf32> to vector<2x32xf32>
    %1285 = arith.addf %1283, %1284 : vector<2x32xf32>
    %1286 = arith.negf %1285 : vector<2x32xf32>
    %1287 = math.exp %1286 : vector<2x32xf32>
    %cst_339 = arith.constant 1.000000e+00 : f32
    %1288 = vector.broadcast %cst_339 : f32 to vector<2x32xf32>
    %1289 = arith.addf %1288, %1287 : vector<2x32xf32>
    %1290 = arith.divf %1288, %1289 : vector<2x32xf32>
    %1291 = vector.extract_strided_slice %1282 {offsets = [0, 32], sizes = [2, 32], strides = [1, 1]} : vector<2x96xf32> to vector<2x32xf32>
    %1292 = vector.extract_strided_slice %1281 {offsets = [0, 32], sizes = [2, 32], strides = [1, 1]} : vector<2x96xf32> to vector<2x32xf32>
    %1293 = arith.addf %1291, %1292 : vector<2x32xf32>
    %1294 = arith.negf %1293 : vector<2x32xf32>
    %1295 = math.exp %1294 : vector<2x32xf32>
    %cst_340 = arith.constant 1.000000e+00 : f32
    %1296 = vector.broadcast %cst_340 : f32 to vector<2x32xf32>
    %1297 = arith.addf %1296, %1295 : vector<2x32xf32>
    %1298 = arith.divf %1296, %1297 : vector<2x32xf32>
    %1299 = vector.extract_strided_slice %1282 {offsets = [0, 64], sizes = [2, 32], strides = [1, 1]} : vector<2x96xf32> to vector<2x32xf32>
    %1300 = vector.extract_strided_slice %1281 {offsets = [0, 64], sizes = [2, 32], strides = [1, 1]} : vector<2x96xf32> to vector<2x32xf32>
    %1301 = arith.mulf %1290, %1300 : vector<2x32xf32>
    %1302 = arith.addf %1299, %1301 : vector<2x32xf32>
    %1303 = math.tanh %1302 : vector<2x32xf32>
    %cst_341 = arith.constant 1.000000e+00 : f32
    %1304 = vector.broadcast %cst_341 : f32 to vector<2x32xf32>
    %1305 = arith.subf %1304, %1298 : vector<2x32xf32>
    %1306 = arith.mulf %1305, %1303 : vector<2x32xf32>
    %1307 = arith.mulf %1298, %1273 : vector<2x32xf32>
    %1308 = arith.addf %1306, %1307 : vector<2x32xf32>
    %1309 = arith.truncf %1308 : vector<2x32xf32> to vector<2x32xbf16>
    %c0_342 = arith.constant 0 : index
    %c0_343 = arith.constant 0 : index
    %1310 = vector.load %arg19[%c0_342, %c0_343] : memref<32x32xbf16, #tpu.memory_space<vmem>>, vector<32x32xbf16>
    %cst_344 = arith.constant dense<0.000000e+00> : vector<2x32xf32>
    %1311 = tpu.matmul %1309, %1310, %cst_344 {dimension_numbers = #tpu.dot_dimension_numbers<[1], [0], [0], [1], [0, 0, 1, 1], [], []>} : vector<2x32xbf16>, vector<32x32xbf16>, vector<2x32xf32> -> vector<2x32xf32>
    %1312 = tpu.concatenate %1311, %1311, %1311, %1311, %1311, %1311, %1311, %1311 in 0 : vector<2x32xf32>, vector<2x32xf32>, vector<2x32xf32>, vector<2x32xf32>, vector<2x32xf32>, vector<2x32xf32>, vector<2x32xf32>, vector<2x32xf32> -> vector<16x32xf32>
    %1313 = arith.addf %1081, %1312 : vector<16x32xf32>
    %1314 = math.tanh %1313 : vector<16x32xf32>
    %1315 = arith.truncf %1314 : vector<16x32xf32> to vector<16x32xbf16>
    %cst_345 = arith.constant dense<0.000000e+00> : vector<1x16xf32>
    %1316 = tpu.matmul %1090, %1315, %cst_345 {dimension_numbers = #tpu.dot_dimension_numbers<[1], [1], [0], [0], [0, 0, 1, 0], [], []>} : vector<1x32xbf16>, vector<16x32xbf16>, vector<1x16xf32> -> vector<1x16xf32>
    %1317 = vector.broadcast %1316 : vector<1x16xf32> to vector<2x16xf32>
    %1318 = arith.addf %1317, %1091 : vector<2x16xf32>
    %cst_346 = arith.constant dense<0xFF800000> : vector<2xf32>
    %1319 = vector.multi_reduction <maximumf>, %1318, %cst_346 [1] : vector<2x16xf32> to vector<2xf32>
    %1320 = vector.shape_cast %1319 : vector<2xf32> to vector<2x1xf32>
    %1321 = vector.broadcast %1320 : vector<2x1xf32> to vector<2x16xf32>
    %1322 = arith.subf %1318, %1321 : vector<2x16xf32>
    %1323 = math.exp %1322 : vector<2x16xf32>
    %cst_347 = arith.constant dense<0.000000e+00> : vector<2xf32>
    %1324 = vector.multi_reduction <add>, %1323, %cst_347 [1] : vector<2x16xf32> to vector<2xf32>
    %1325 = vector.shape_cast %1324 : vector<2xf32> to vector<2x1xf32>
    %1326 = tpu.reciprocal %1325 {approx = true} : vector<2x1xf32> -> vector<2x1xf32>
    %1327 = vector.broadcast %1326 : vector<2x1xf32> to vector<2x16xf32>
    %1328 = arith.mulf %1323, %1327 : vector<2x16xf32>
    %1329 = arith.truncf %1328 : vector<2x16xf32> to vector<2x16xbf16>
    %cst_348 = arith.constant dense<0.000000e+00> : vector<2x64xf32>
    %1330 = tpu.matmul %1329, %1065, %cst_348 {dimension_numbers = #tpu.dot_dimension_numbers<[1], [0], [0], [1], [0, 0, 1, 1], [], []>} : vector<2x16xbf16>, vector<16x64xbf16>, vector<2x64xf32> -> vector<2x64xf32>
    %1331 = tpu.concatenate %1330, %1308 in 1 : vector<2x64xf32>, vector<2x32xf32> -> vector<2x96xf32>
    %1332 = arith.truncf %1331 : vector<2x96xf32> to vector<2x96xbf16>
    %c0_349 = arith.constant 0 : index
    %c0_350 = arith.constant 0 : index
    %1333 = vector.load %arg25[%c0_349, %c0_350] : memref<96x192xbf16, #tpu.memory_space<vmem>>, vector<96x192xbf16>
    %cst_351 = arith.constant dense<0.000000e+00> : vector<2x192xf32>
    %1334 = tpu.matmul %1332, %1333, %cst_351 {dimension_numbers = #tpu.dot_dimension_numbers<[1], [0], [0], [1], [0, 0, 1, 1], [], []>} : vector<2x96xbf16>, vector<96x192xbf16>, vector<2x192xf32> -> vector<2x192xf32>
    %c0_352 = arith.constant 0 : index
    %c0_353 = arith.constant 0 : index
    %1335 = vector.load %arg26[%c0_352, %c0_353] : memref<1x192xf32, #tpu.memory_space<vmem>>, vector<1x192xf32>
    %1336 = vector.broadcast %1335 : vector<1x192xf32> to vector<2x192xf32>
    %1337 = arith.addf %1334, %1336 : vector<2x192xf32>
    %1338 = vector.extract_strided_slice %1337 {offsets = [0, 0], sizes = [2, 96], strides = [1, 1]} : vector<2x192xf32> to vector<2x96xf32>
    %1339 = vector.extract_strided_slice %1337 {offsets = [0, 96], sizes = [2, 96], strides = [1, 1]} : vector<2x192xf32> to vector<2x96xf32>
    %1340 = vector.extract_strided_slice %1338 {offsets = [0, 0], sizes = [2, 32], strides = [1, 1]} : vector<2x96xf32> to vector<2x32xf32>
    %1341 = vector.extract_strided_slice %1339 {offsets = [0, 0], sizes = [2, 32], strides = [1, 1]} : vector<2x96xf32> to vector<2x32xf32>
    %1342 = arith.addf %1340, %1341 : vector<2x32xf32>
    %1343 = arith.negf %1342 : vector<2x32xf32>
    %1344 = math.exp %1343 : vector<2x32xf32>
    %cst_354 = arith.constant 1.000000e+00 : f32
    %1345 = vector.broadcast %cst_354 : f32 to vector<2x32xf32>
    %1346 = arith.addf %1345, %1344 : vector<2x32xf32>
    %1347 = arith.divf %1345, %1346 : vector<2x32xf32>
    %1348 = vector.extract_strided_slice %1338 {offsets = [0, 32], sizes = [2, 32], strides = [1, 1]} : vector<2x96xf32> to vector<2x32xf32>
    %1349 = vector.extract_strided_slice %1339 {offsets = [0, 32], sizes = [2, 32], strides = [1, 1]} : vector<2x96xf32> to vector<2x32xf32>
    %1350 = arith.addf %1348, %1349 : vector<2x32xf32>
    %1351 = arith.negf %1350 : vector<2x32xf32>
    %1352 = math.exp %1351 : vector<2x32xf32>
    %cst_355 = arith.constant 1.000000e+00 : f32
    %1353 = vector.broadcast %cst_355 : f32 to vector<2x32xf32>
    %1354 = arith.addf %1353, %1352 : vector<2x32xf32>
    %1355 = arith.divf %1353, %1354 : vector<2x32xf32>
    %1356 = vector.extract_strided_slice %1338 {offsets = [0, 64], sizes = [2, 32], strides = [1, 1]} : vector<2x96xf32> to vector<2x32xf32>
    %1357 = vector.extract_strided_slice %1339 {offsets = [0, 64], sizes = [2, 32], strides = [1, 1]} : vector<2x96xf32> to vector<2x32xf32>
    %1358 = arith.mulf %1347, %1357 : vector<2x32xf32>
    %1359 = arith.addf %1356, %1358 : vector<2x32xf32>
    %1360 = math.tanh %1359 : vector<2x32xf32>
    %cst_356 = arith.constant 1.000000e+00 : f32
    %1361 = vector.broadcast %cst_356 : f32 to vector<2x32xf32>
    %1362 = arith.subf %1361, %1355 : vector<2x32xf32>
    %1363 = arith.mulf %1362, %1360 : vector<2x32xf32>
    %1364 = arith.mulf %1355, %1308 : vector<2x32xf32>
    %1365 = arith.addf %1363, %1364 : vector<2x32xf32>
    %c4_357 = arith.constant 4 : index
    %c32_358 = arith.constant 32 : index
    %1366 = vector.load %arg32[%c4_357, %c32_358] : memref<16x128xf32, #tpu.memory_space<vmem>>, vector<2x32xf32>
    tpu.vector_store %arg32[%c4_357, %c32_358], %1365 {strides = array<i32>} : memref<16x128xf32, #tpu.memory_space<vmem>>, vector<2x32xf32>,
    %c4_359 = arith.constant 4 : index
    %c64_360 = arith.constant 64 : index
    %1367 = vector.load %arg32[%c4_359, %c64_360] : memref<16x128xf32, #tpu.memory_space<vmem>>, vector<2x64xf32>
    tpu.vector_store %arg32[%c4_359, %c64_360], %1330 {strides = array<i32>} : memref<16x128xf32, #tpu.memory_space<vmem>>, vector<2x64xf32>,
    %1368 = arith.truncf %1365 : vector<2x32xf32> to vector<2x32xbf16>
    %c0_361 = arith.constant 0 : index
    %c0_362 = arith.constant 0 : index
    %1369 = vector.load %arg23[%c0_361, %c0_362] : memref<32x96xbf16, #tpu.memory_space<vmem>>, vector<32x96xbf16>
    %cst_363 = arith.constant dense<0.000000e+00> : vector<2x96xf32>
    %1370 = tpu.matmul %1368, %1369, %cst_363 {dimension_numbers = #tpu.dot_dimension_numbers<[1], [0], [0], [1], [0, 0, 1, 1], [], []>} : vector<2x32xbf16>, vector<32x96xbf16>, vector<2x96xf32> -> vector<2x96xf32>
    %c0_364 = arith.constant 0 : index
    %c0_365 = arith.constant 0 : index
    %1371 = vector.load %arg24[%c0_364, %c0_365] : memref<1x96xf32, #tpu.memory_space<vmem>>, vector<1x96xf32>
    %1372 = vector.broadcast %1371 : vector<1x96xf32> to vector<2x96xf32>
    %1373 = arith.addf %1370, %1372 : vector<2x96xf32>
    %1374 = vector.extract_strided_slice %1089 {offsets = [6, 0], sizes = [2, 96], strides = [1, 1]} : vector<16x96xf32> to vector<2x96xf32>
    %1375 = vector.extract_strided_slice %1374 {offsets = [0, 0], sizes = [2, 32], strides = [1, 1]} : vector<2x96xf32> to vector<2x32xf32>
    %1376 = vector.extract_strided_slice %1373 {offsets = [0, 0], sizes = [2, 32], strides = [1, 1]} : vector<2x96xf32> to vector<2x32xf32>
    %1377 = arith.addf %1375, %1376 : vector<2x32xf32>
    %1378 = arith.negf %1377 : vector<2x32xf32>
    %1379 = math.exp %1378 : vector<2x32xf32>
    %cst_366 = arith.constant 1.000000e+00 : f32
    %1380 = vector.broadcast %cst_366 : f32 to vector<2x32xf32>
    %1381 = arith.addf %1380, %1379 : vector<2x32xf32>
    %1382 = arith.divf %1380, %1381 : vector<2x32xf32>
    %1383 = vector.extract_strided_slice %1374 {offsets = [0, 32], sizes = [2, 32], strides = [1, 1]} : vector<2x96xf32> to vector<2x32xf32>
    %1384 = vector.extract_strided_slice %1373 {offsets = [0, 32], sizes = [2, 32], strides = [1, 1]} : vector<2x96xf32> to vector<2x32xf32>
    %1385 = arith.addf %1383, %1384 : vector<2x32xf32>
    %1386 = arith.negf %1385 : vector<2x32xf32>
    %1387 = math.exp %1386 : vector<2x32xf32>
    %cst_367 = arith.constant 1.000000e+00 : f32
    %1388 = vector.broadcast %cst_367 : f32 to vector<2x32xf32>
    %1389 = arith.addf %1388, %1387 : vector<2x32xf32>
    %1390 = arith.divf %1388, %1389 : vector<2x32xf32>
    %1391 = vector.extract_strided_slice %1374 {offsets = [0, 64], sizes = [2, 32], strides = [1, 1]} : vector<2x96xf32> to vector<2x32xf32>
    %1392 = vector.extract_strided_slice %1373 {offsets = [0, 64], sizes = [2, 32], strides = [1, 1]} : vector<2x96xf32> to vector<2x32xf32>
    %1393 = arith.mulf %1382, %1392 : vector<2x32xf32>
    %1394 = arith.addf %1391, %1393 : vector<2x32xf32>
    %1395 = math.tanh %1394 : vector<2x32xf32>
    %cst_368 = arith.constant 1.000000e+00 : f32
    %1396 = vector.broadcast %cst_368 : f32 to vector<2x32xf32>
    %1397 = arith.subf %1396, %1390 : vector<2x32xf32>
    %1398 = arith.mulf %1397, %1395 : vector<2x32xf32>
    %1399 = arith.mulf %1390, %1365 : vector<2x32xf32>
    %1400 = arith.addf %1398, %1399 : vector<2x32xf32>
    %1401 = arith.truncf %1400 : vector<2x32xf32> to vector<2x32xbf16>
    %c0_369 = arith.constant 0 : index
    %c0_370 = arith.constant 0 : index
    %1402 = vector.load %arg19[%c0_369, %c0_370] : memref<32x32xbf16, #tpu.memory_space<vmem>>, vector<32x32xbf16>
    %cst_371 = arith.constant dense<0.000000e+00> : vector<2x32xf32>
    %1403 = tpu.matmul %1401, %1402, %cst_371 {dimension_numbers = #tpu.dot_dimension_numbers<[1], [0], [0], [1], [0, 0, 1, 1], [], []>} : vector<2x32xbf16>, vector<32x32xbf16>, vector<2x32xf32> -> vector<2x32xf32>
    %1404 = tpu.concatenate %1403, %1403, %1403, %1403, %1403, %1403, %1403, %1403 in 0 : vector<2x32xf32>, vector<2x32xf32>, vector<2x32xf32>, vector<2x32xf32>, vector<2x32xf32>, vector<2x32xf32>, vector<2x32xf32>, vector<2x32xf32> -> vector<16x32xf32>
    %1405 = arith.addf %1081, %1404 : vector<16x32xf32>
    %1406 = math.tanh %1405 : vector<16x32xf32>
    %1407 = arith.truncf %1406 : vector<16x32xf32> to vector<16x32xbf16>
    %cst_372 = arith.constant dense<0.000000e+00> : vector<1x16xf32>
    %1408 = tpu.matmul %1090, %1407, %cst_372 {dimension_numbers = #tpu.dot_dimension_numbers<[1], [1], [0], [0], [0, 0, 1, 0], [], []>} : vector<1x32xbf16>, vector<16x32xbf16>, vector<1x16xf32> -> vector<1x16xf32>
    %1409 = vector.broadcast %1408 : vector<1x16xf32> to vector<2x16xf32>
    %1410 = arith.addf %1409, %1091 : vector<2x16xf32>
    %cst_373 = arith.constant dense<0xFF800000> : vector<2xf32>
    %1411 = vector.multi_reduction <maximumf>, %1410, %cst_373 [1] : vector<2x16xf32> to vector<2xf32>
    %1412 = vector.shape_cast %1411 : vector<2xf32> to vector<2x1xf32>
    %1413 = vector.broadcast %1412 : vector<2x1xf32> to vector<2x16xf32>
    %1414 = arith.subf %1410, %1413 : vector<2x16xf32>
    %1415 = math.exp %1414 : vector<2x16xf32>
    %cst_374 = arith.constant dense<0.000000e+00> : vector<2xf32>
    %1416 = vector.multi_reduction <add>, %1415, %cst_374 [1] : vector<2x16xf32> to vector<2xf32>
    %1417 = vector.shape_cast %1416 : vector<2xf32> to vector<2x1xf32>
    %1418 = tpu.reciprocal %1417 {approx = true} : vector<2x1xf32> -> vector<2x1xf32>
    %1419 = vector.broadcast %1418 : vector<2x1xf32> to vector<2x16xf32>
    %1420 = arith.mulf %1415, %1419 : vector<2x16xf32>
    %1421 = arith.truncf %1420 : vector<2x16xf32> to vector<2x16xbf16>
    %cst_375 = arith.constant dense<0.000000e+00> : vector<2x64xf32>
    %1422 = tpu.matmul %1421, %1065, %cst_375 {dimension_numbers = #tpu.dot_dimension_numbers<[1], [0], [0], [1], [0, 0, 1, 1], [], []>} : vector<2x16xbf16>, vector<16x64xbf16>, vector<2x64xf32> -> vector<2x64xf32>
    %1423 = tpu.concatenate %1422, %1400 in 1 : vector<2x64xf32>, vector<2x32xf32> -> vector<2x96xf32>
    %1424 = arith.truncf %1423 : vector<2x96xf32> to vector<2x96xbf16>
    %c0_376 = arith.constant 0 : index
    %c0_377 = arith.constant 0 : index
    %1425 = vector.load %arg25[%c0_376, %c0_377] : memref<96x192xbf16, #tpu.memory_space<vmem>>, vector<96x192xbf16>
    %cst_378 = arith.constant dense<0.000000e+00> : vector<2x192xf32>
    %1426 = tpu.matmul %1424, %1425, %cst_378 {dimension_numbers = #tpu.dot_dimension_numbers<[1], [0], [0], [1], [0, 0, 1, 1], [], []>} : vector<2x96xbf16>, vector<96x192xbf16>, vector<2x192xf32> -> vector<2x192xf32>
    %c0_379 = arith.constant 0 : index
    %c0_380 = arith.constant 0 : index
    %1427 = vector.load %arg26[%c0_379, %c0_380] : memref<1x192xf32, #tpu.memory_space<vmem>>, vector<1x192xf32>
    %1428 = vector.broadcast %1427 : vector<1x192xf32> to vector<2x192xf32>
    %1429 = arith.addf %1426, %1428 : vector<2x192xf32>
    %1430 = vector.extract_strided_slice %1429 {offsets = [0, 0], sizes = [2, 96], strides = [1, 1]} : vector<2x192xf32> to vector<2x96xf32>
    %1431 = vector.extract_strided_slice %1429 {offsets = [0, 96], sizes = [2, 96], strides = [1, 1]} : vector<2x192xf32> to vector<2x96xf32>
    %1432 = vector.extract_strided_slice %1430 {offsets = [0, 0], sizes = [2, 32], strides = [1, 1]} : vector<2x96xf32> to vector<2x32xf32>
    %1433 = vector.extract_strided_slice %1431 {offsets = [0, 0], sizes = [2, 32], strides = [1, 1]} : vector<2x96xf32> to vector<2x32xf32>
    %1434 = arith.addf %1432, %1433 : vector<2x32xf32>
    %1435 = arith.negf %1434 : vector<2x32xf32>
    %1436 = math.exp %1435 : vector<2x32xf32>
    %cst_381 = arith.constant 1.000000e+00 : f32
    %1437 = vector.broadcast %cst_381 : f32 to vector<2x32xf32>
    %1438 = arith.addf %1437, %1436 : vector<2x32xf32>
    %1439 = arith.divf %1437, %1438 : vector<2x32xf32>
    %1440 = vector.extract_strided_slice %1430 {offsets = [0, 32], sizes = [2, 32], strides = [1, 1]} : vector<2x96xf32> to vector<2x32xf32>
    %1441 = vector.extract_strided_slice %1431 {offsets = [0, 32], sizes = [2, 32], strides = [1, 1]} : vector<2x96xf32> to vector<2x32xf32>
    %1442 = arith.addf %1440, %1441 : vector<2x32xf32>
    %1443 = arith.negf %1442 : vector<2x32xf32>
    %1444 = math.exp %1443 : vector<2x32xf32>
    %cst_382 = arith.constant 1.000000e+00 : f32
    %1445 = vector.broadcast %cst_382 : f32 to vector<2x32xf32>
    %1446 = arith.addf %1445, %1444 : vector<2x32xf32>
    %1447 = arith.divf %1445, %1446 : vector<2x32xf32>
    %1448 = vector.extract_strided_slice %1430 {offsets = [0, 64], sizes = [2, 32], strides = [1, 1]} : vector<2x96xf32> to vector<2x32xf32>
    %1449 = vector.extract_strided_slice %1431 {offsets = [0, 64], sizes = [2, 32], strides = [1, 1]} : vector<2x96xf32> to vector<2x32xf32>
    %1450 = arith.mulf %1439, %1449 : vector<2x32xf32>
    %1451 = arith.addf %1448, %1450 : vector<2x32xf32>
    %1452 = math.tanh %1451 : vector<2x32xf32>
    %cst_383 = arith.constant 1.000000e+00 : f32
    %1453 = vector.broadcast %cst_383 : f32 to vector<2x32xf32>
    %1454 = arith.subf %1453, %1447 : vector<2x32xf32>
    %1455 = arith.mulf %1454, %1452 : vector<2x32xf32>
    %1456 = arith.mulf %1447, %1400 : vector<2x32xf32>
    %1457 = arith.addf %1455, %1456 : vector<2x32xf32>
    %c6_384 = arith.constant 6 : index
    %c32_385 = arith.constant 32 : index
    %1458 = vector.load %arg32[%c6_384, %c32_385] : memref<16x128xf32, #tpu.memory_space<vmem>>, vector<2x32xf32>
    tpu.vector_store %arg32[%c6_384, %c32_385], %1457 {strides = array<i32>} : memref<16x128xf32, #tpu.memory_space<vmem>>, vector<2x32xf32>,
    %c6_386 = arith.constant 6 : index
    %c64_387 = arith.constant 64 : index
    %1459 = vector.load %arg32[%c6_386, %c64_387] : memref<16x128xf32, #tpu.memory_space<vmem>>, vector<2x64xf32>
    tpu.vector_store %arg32[%c6_386, %c64_387], %1422 {strides = array<i32>} : memref<16x128xf32, #tpu.memory_space<vmem>>, vector<2x64xf32>,
    %1460 = arith.truncf %1457 : vector<2x32xf32> to vector<2x32xbf16>
    %c0_388 = arith.constant 0 : index
    %c0_389 = arith.constant 0 : index
    %1461 = vector.load %arg23[%c0_388, %c0_389] : memref<32x96xbf16, #tpu.memory_space<vmem>>, vector<32x96xbf16>
    %cst_390 = arith.constant dense<0.000000e+00> : vector<2x96xf32>
    %1462 = tpu.matmul %1460, %1461, %cst_390 {dimension_numbers = #tpu.dot_dimension_numbers<[1], [0], [0], [1], [0, 0, 1, 1], [], []>} : vector<2x32xbf16>, vector<32x96xbf16>, vector<2x96xf32> -> vector<2x96xf32>
    %c0_391 = arith.constant 0 : index
    %c0_392 = arith.constant 0 : index
    %1463 = vector.load %arg24[%c0_391, %c0_392] : memref<1x96xf32, #tpu.memory_space<vmem>>, vector<1x96xf32>
    %1464 = vector.broadcast %1463 : vector<1x96xf32> to vector<2x96xf32>
    %1465 = arith.addf %1462, %1464 : vector<2x96xf32>
    %1466 = vector.extract_strided_slice %1089 {offsets = [8, 0], sizes = [2, 96], strides = [1, 1]} : vector<16x96xf32> to vector<2x96xf32>
    %1467 = vector.extract_strided_slice %1466 {offsets = [0, 0], sizes = [2, 32], strides = [1, 1]} : vector<2x96xf32> to vector<2x32xf32>
    %1468 = vector.extract_strided_slice %1465 {offsets = [0, 0], sizes = [2, 32], strides = [1, 1]} : vector<2x96xf32> to vector<2x32xf32>
    %1469 = arith.addf %1467, %1468 : vector<2x32xf32>
    %1470 = arith.negf %1469 : vector<2x32xf32>
    %1471 = math.exp %1470 : vector<2x32xf32>
    %cst_393 = arith.constant 1.000000e+00 : f32
    %1472 = vector.broadcast %cst_393 : f32 to vector<2x32xf32>
    %1473 = arith.addf %1472, %1471 : vector<2x32xf32>
    %1474 = arith.divf %1472, %1473 : vector<2x32xf32>
    %1475 = vector.extract_strided_slice %1466 {offsets = [0, 32], sizes = [2, 32], strides = [1, 1]} : vector<2x96xf32> to vector<2x32xf32>
    %1476 = vector.extract_strided_slice %1465 {offsets = [0, 32], sizes = [2, 32], strides = [1, 1]} : vector<2x96xf32> to vector<2x32xf32>
    %1477 = arith.addf %1475, %1476 : vector<2x32xf32>
    %1478 = arith.negf %1477 : vector<2x32xf32>
    %1479 = math.exp %1478 : vector<2x32xf32>
    %cst_394 = arith.constant 1.000000e+00 : f32
    %1480 = vector.broadcast %cst_394 : f32 to vector<2x32xf32>
    %1481 = arith.addf %1480, %1479 : vector<2x32xf32>
    %1482 = arith.divf %1480, %1481 : vector<2x32xf32>
    %1483 = vector.extract_strided_slice %1466 {offsets = [0, 64], sizes = [2, 32], strides = [1, 1]} : vector<2x96xf32> to vector<2x32xf32>
    %1484 = vector.extract_strided_slice %1465 {offsets = [0, 64], sizes = [2, 32], strides = [1, 1]} : vector<2x96xf32> to vector<2x32xf32>
    %1485 = arith.mulf %1474, %1484 : vector<2x32xf32>
    %1486 = arith.addf %1483, %1485 : vector<2x32xf32>
    %1487 = math.tanh %1486 : vector<2x32xf32>
    %cst_395 = arith.constant 1.000000e+00 : f32
    %1488 = vector.broadcast %cst_395 : f32 to vector<2x32xf32>
    %1489 = arith.subf %1488, %1482 : vector<2x32xf32>
    %1490 = arith.mulf %1489, %1487 : vector<2x32xf32>
    %1491 = arith.mulf %1482, %1457 : vector<2x32xf32>
    %1492 = arith.addf %1490, %1491 : vector<2x32xf32>
    %1493 = arith.truncf %1492 : vector<2x32xf32> to vector<2x32xbf16>
    %c0_396 = arith.constant 0 : index
    %c0_397 = arith.constant 0 : index
    %1494 = vector.load %arg19[%c0_396, %c0_397] : memref<32x32xbf16, #tpu.memory_space<vmem>>, vector<32x32xbf16>
    %cst_398 = arith.constant dense<0.000000e+00> : vector<2x32xf32>
    %1495 = tpu.matmul %1493, %1494, %cst_398 {dimension_numbers = #tpu.dot_dimension_numbers<[1], [0], [0], [1], [0, 0, 1, 1], [], []>} : vector<2x32xbf16>, vector<32x32xbf16>, vector<2x32xf32> -> vector<2x32xf32>
    %1496 = tpu.concatenate %1495, %1495, %1495, %1495, %1495, %1495, %1495, %1495 in 0 : vector<2x32xf32>, vector<2x32xf32>, vector<2x32xf32>, vector<2x32xf32>, vector<2x32xf32>, vector<2x32xf32>, vector<2x32xf32>, vector<2x32xf32> -> vector<16x32xf32>
    %1497 = arith.addf %1081, %1496 : vector<16x32xf32>
    %1498 = math.tanh %1497 : vector<16x32xf32>
    %1499 = arith.truncf %1498 : vector<16x32xf32> to vector<16x32xbf16>
    %cst_399 = arith.constant dense<0.000000e+00> : vector<1x16xf32>
    %1500 = tpu.matmul %1090, %1499, %cst_399 {dimension_numbers = #tpu.dot_dimension_numbers<[1], [1], [0], [0], [0, 0, 1, 0], [], []>} : vector<1x32xbf16>, vector<16x32xbf16>, vector<1x16xf32> -> vector<1x16xf32>
    %1501 = vector.broadcast %1500 : vector<1x16xf32> to vector<2x16xf32>
    %1502 = arith.addf %1501, %1091 : vector<2x16xf32>
    %cst_400 = arith.constant dense<0xFF800000> : vector<2xf32>
    %1503 = vector.multi_reduction <maximumf>, %1502, %cst_400 [1] : vector<2x16xf32> to vector<2xf32>
    %1504 = vector.shape_cast %1503 : vector<2xf32> to vector<2x1xf32>
    %1505 = vector.broadcast %1504 : vector<2x1xf32> to vector<2x16xf32>
    %1506 = arith.subf %1502, %1505 : vector<2x16xf32>
    %1507 = math.exp %1506 : vector<2x16xf32>
    %cst_401 = arith.constant dense<0.000000e+00> : vector<2xf32>
    %1508 = vector.multi_reduction <add>, %1507, %cst_401 [1] : vector<2x16xf32> to vector<2xf32>
    %1509 = vector.shape_cast %1508 : vector<2xf32> to vector<2x1xf32>
    %1510 = tpu.reciprocal %1509 {approx = true} : vector<2x1xf32> -> vector<2x1xf32>
    %1511 = vector.broadcast %1510 : vector<2x1xf32> to vector<2x16xf32>
    %1512 = arith.mulf %1507, %1511 : vector<2x16xf32>
    %1513 = arith.truncf %1512 : vector<2x16xf32> to vector<2x16xbf16>
    %cst_402 = arith.constant dense<0.000000e+00> : vector<2x64xf32>
    %1514 = tpu.matmul %1513, %1065, %cst_402 {dimension_numbers = #tpu.dot_dimension_numbers<[1], [0], [0], [1], [0, 0, 1, 1], [], []>} : vector<2x16xbf16>, vector<16x64xbf16>, vector<2x64xf32> -> vector<2x64xf32>
    %1515 = tpu.concatenate %1514, %1492 in 1 : vector<2x64xf32>, vector<2x32xf32> -> vector<2x96xf32>
    %1516 = arith.truncf %1515 : vector<2x96xf32> to vector<2x96xbf16>
    %c0_403 = arith.constant 0 : index
    %c0_404 = arith.constant 0 : index
    %1517 = vector.load %arg25[%c0_403, %c0_404] : memref<96x192xbf16, #tpu.memory_space<vmem>>, vector<96x192xbf16>
    %cst_405 = arith.constant dense<0.000000e+00> : vector<2x192xf32>
    %1518 = tpu.matmul %1516, %1517, %cst_405 {dimension_numbers = #tpu.dot_dimension_numbers<[1], [0], [0], [1], [0, 0, 1, 1], [], []>} : vector<2x96xbf16>, vector<96x192xbf16>, vector<2x192xf32> -> vector<2x192xf32>
    %c0_406 = arith.constant 0 : index
    %c0_407 = arith.constant 0 : index
    %1519 = vector.load %arg26[%c0_406, %c0_407] : memref<1x192xf32, #tpu.memory_space<vmem>>, vector<1x192xf32>
    %1520 = vector.broadcast %1519 : vector<1x192xf32> to vector<2x192xf32>
    %1521 = arith.addf %1518, %1520 : vector<2x192xf32>
    %1522 = vector.extract_strided_slice %1521 {offsets = [0, 0], sizes = [2, 96], strides = [1, 1]} : vector<2x192xf32> to vector<2x96xf32>
    %1523 = vector.extract_strided_slice %1521 {offsets = [0, 96], sizes = [2, 96], strides = [1, 1]} : vector<2x192xf32> to vector<2x96xf32>
    %1524 = vector.extract_strided_slice %1522 {offsets = [0, 0], sizes = [2, 32], strides = [1, 1]} : vector<2x96xf32> to vector<2x32xf32>
    %1525 = vector.extract_strided_slice %1523 {offsets = [0, 0], sizes = [2, 32], strides = [1, 1]} : vector<2x96xf32> to vector<2x32xf32>
    %1526 = arith.addf %1524, %1525 : vector<2x32xf32>
    %1527 = arith.negf %1526 : vector<2x32xf32>
    %1528 = math.exp %1527 : vector<2x32xf32>
    %cst_408 = arith.constant 1.000000e+00 : f32
    %1529 = vector.broadcast %cst_408 : f32 to vector<2x32xf32>
    %1530 = arith.addf %1529, %1528 : vector<2x32xf32>
    %1531 = arith.divf %1529, %1530 : vector<2x32xf32>
    %1532 = vector.extract_strided_slice %1522 {offsets = [0, 32], sizes = [2, 32], strides = [1, 1]} : vector<2x96xf32> to vector<2x32xf32>
    %1533 = vector.extract_strided_slice %1523 {offsets = [0, 32], sizes = [2, 32], strides = [1, 1]} : vector<2x96xf32> to vector<2x32xf32>
    %1534 = arith.addf %1532, %1533 : vector<2x32xf32>
    %1535 = arith.negf %1534 : vector<2x32xf32>
    %1536 = math.exp %1535 : vector<2x32xf32>
    %cst_409 = arith.constant 1.000000e+00 : f32
    %1537 = vector.broadcast %cst_409 : f32 to vector<2x32xf32>
    %1538 = arith.addf %1537, %1536 : vector<2x32xf32>
    %1539 = arith.divf %1537, %1538 : vector<2x32xf32>
    %1540 = vector.extract_strided_slice %1522 {offsets = [0, 64], sizes = [2, 32], strides = [1, 1]} : vector<2x96xf32> to vector<2x32xf32>
    %1541 = vector.extract_strided_slice %1523 {offsets = [0, 64], sizes = [2, 32], strides = [1, 1]} : vector<2x96xf32> to vector<2x32xf32>
    %1542 = arith.mulf %1531, %1541 : vector<2x32xf32>
    %1543 = arith.addf %1540, %1542 : vector<2x32xf32>
    %1544 = math.tanh %1543 : vector<2x32xf32>
    %cst_410 = arith.constant 1.000000e+00 : f32
    %1545 = vector.broadcast %cst_410 : f32 to vector<2x32xf32>
    %1546 = arith.subf %1545, %1539 : vector<2x32xf32>
    %1547 = arith.mulf %1546, %1544 : vector<2x32xf32>
    %1548 = arith.mulf %1539, %1492 : vector<2x32xf32>
    %1549 = arith.addf %1547, %1548 : vector<2x32xf32>
    %c8_411 = arith.constant 8 : index
    %c32_412 = arith.constant 32 : index
    %1550 = vector.load %arg32[%c8_411, %c32_412] : memref<16x128xf32, #tpu.memory_space<vmem>>, vector<2x32xf32>
    tpu.vector_store %arg32[%c8_411, %c32_412], %1549 {strides = array<i32>} : memref<16x128xf32, #tpu.memory_space<vmem>>, vector<2x32xf32>,
    %c8_413 = arith.constant 8 : index
    %c64_414 = arith.constant 64 : index
    %1551 = vector.load %arg32[%c8_413, %c64_414] : memref<16x128xf32, #tpu.memory_space<vmem>>, vector<2x64xf32>
    tpu.vector_store %arg32[%c8_413, %c64_414], %1514 {strides = array<i32>} : memref<16x128xf32, #tpu.memory_space<vmem>>, vector<2x64xf32>,
    %1552 = arith.truncf %1549 : vector<2x32xf32> to vector<2x32xbf16>
    %c0_415 = arith.constant 0 : index
    %c0_416 = arith.constant 0 : index
    %1553 = vector.load %arg23[%c0_415, %c0_416] : memref<32x96xbf16, #tpu.memory_space<vmem>>, vector<32x96xbf16>
    %cst_417 = arith.constant dense<0.000000e+00> : vector<2x96xf32>
    %1554 = tpu.matmul %1552, %1553, %cst_417 {dimension_numbers = #tpu.dot_dimension_numbers<[1], [0], [0], [1], [0, 0, 1, 1], [], []>} : vector<2x32xbf16>, vector<32x96xbf16>, vector<2x96xf32> -> vector<2x96xf32>
    %c0_418 = arith.constant 0 : index
    %c0_419 = arith.constant 0 : index
    %1555 = vector.load %arg24[%c0_418, %c0_419] : memref<1x96xf32, #tpu.memory_space<vmem>>, vector<1x96xf32>
    %1556 = vector.broadcast %1555 : vector<1x96xf32> to vector<2x96xf32>
    %1557 = arith.addf %1554, %1556 : vector<2x96xf32>
    %1558 = vector.extract_strided_slice %1089 {offsets = [10, 0], sizes = [2, 96], strides = [1, 1]} : vector<16x96xf32> to vector<2x96xf32>
    %1559 = vector.extract_strided_slice %1558 {offsets = [0, 0], sizes = [2, 32], strides = [1, 1]} : vector<2x96xf32> to vector<2x32xf32>
    %1560 = vector.extract_strided_slice %1557 {offsets = [0, 0], sizes = [2, 32], strides = [1, 1]} : vector<2x96xf32> to vector<2x32xf32>
    %1561 = arith.addf %1559, %1560 : vector<2x32xf32>
    %1562 = arith.negf %1561 : vector<2x32xf32>
    %1563 = math.exp %1562 : vector<2x32xf32>
    %cst_420 = arith.constant 1.000000e+00 : f32
    %1564 = vector.broadcast %cst_420 : f32 to vector<2x32xf32>
    %1565 = arith.addf %1564, %1563 : vector<2x32xf32>
    %1566 = arith.divf %1564, %1565 : vector<2x32xf32>
    %1567 = vector.extract_strided_slice %1558 {offsets = [0, 32], sizes = [2, 32], strides = [1, 1]} : vector<2x96xf32> to vector<2x32xf32>
    %1568 = vector.extract_strided_slice %1557 {offsets = [0, 32], sizes = [2, 32], strides = [1, 1]} : vector<2x96xf32> to vector<2x32xf32>
    %1569 = arith.addf %1567, %1568 : vector<2x32xf32>
    %1570 = arith.negf %1569 : vector<2x32xf32>
    %1571 = math.exp %1570 : vector<2x32xf32>
    %cst_421 = arith.constant 1.000000e+00 : f32
    %1572 = vector.broadcast %cst_421 : f32 to vector<2x32xf32>
    %1573 = arith.addf %1572, %1571 : vector<2x32xf32>
    %1574 = arith.divf %1572, %1573 : vector<2x32xf32>
    %1575 = vector.extract_strided_slice %1558 {offsets = [0, 64], sizes = [2, 32], strides = [1, 1]} : vector<2x96xf32> to vector<2x32xf32>
    %1576 = vector.extract_strided_slice %1557 {offsets = [0, 64], sizes = [2, 32], strides = [1, 1]} : vector<2x96xf32> to vector<2x32xf32>
    %1577 = arith.mulf %1566, %1576 : vector<2x32xf32>
    %1578 = arith.addf %1575, %1577 : vector<2x32xf32>
    %1579 = math.tanh %1578 : vector<2x32xf32>
    %cst_422 = arith.constant 1.000000e+00 : f32
    %1580 = vector.broadcast %cst_422 : f32 to vector<2x32xf32>
    %1581 = arith.subf %1580, %1574 : vector<2x32xf32>
    %1582 = arith.mulf %1581, %1579 : vector<2x32xf32>
    %1583 = arith.mulf %1574, %1549 : vector<2x32xf32>
    %1584 = arith.addf %1582, %1583 : vector<2x32xf32>
    %1585 = arith.truncf %1584 : vector<2x32xf32> to vector<2x32xbf16>
    %c0_423 = arith.constant 0 : index
    %c0_424 = arith.constant 0 : index
    %1586 = vector.load %arg19[%c0_423, %c0_424] : memref<32x32xbf16, #tpu.memory_space<vmem>>, vector<32x32xbf16>
    %cst_425 = arith.constant dense<0.000000e+00> : vector<2x32xf32>
    %1587 = tpu.matmul %1585, %1586, %cst_425 {dimension_numbers = #tpu.dot_dimension_numbers<[1], [0], [0], [1], [0, 0, 1, 1], [], []>} : vector<2x32xbf16>, vector<32x32xbf16>, vector<2x32xf32> -> vector<2x32xf32>
    %1588 = tpu.concatenate %1587, %1587, %1587, %1587, %1587, %1587, %1587, %1587 in 0 : vector<2x32xf32>, vector<2x32xf32>, vector<2x32xf32>, vector<2x32xf32>, vector<2x32xf32>, vector<2x32xf32>, vector<2x32xf32>, vector<2x32xf32> -> vector<16x32xf32>
    %1589 = arith.addf %1081, %1588 : vector<16x32xf32>
    %1590 = math.tanh %1589 : vector<16x32xf32>
    %1591 = arith.truncf %1590 : vector<16x32xf32> to vector<16x32xbf16>
    %cst_426 = arith.constant dense<0.000000e+00> : vector<1x16xf32>
    %1592 = tpu.matmul %1090, %1591, %cst_426 {dimension_numbers = #tpu.dot_dimension_numbers<[1], [1], [0], [0], [0, 0, 1, 0], [], []>} : vector<1x32xbf16>, vector<16x32xbf16>, vector<1x16xf32> -> vector<1x16xf32>
    %1593 = vector.broadcast %1592 : vector<1x16xf32> to vector<2x16xf32>
    %1594 = arith.addf %1593, %1091 : vector<2x16xf32>
    %cst_427 = arith.constant dense<0xFF800000> : vector<2xf32>
    %1595 = vector.multi_reduction <maximumf>, %1594, %cst_427 [1] : vector<2x16xf32> to vector<2xf32>
    %1596 = vector.shape_cast %1595 : vector<2xf32> to vector<2x1xf32>
    %1597 = vector.broadcast %1596 : vector<2x1xf32> to vector<2x16xf32>
    %1598 = arith.subf %1594, %1597 : vector<2x16xf32>
    %1599 = math.exp %1598 : vector<2x16xf32>
    %cst_428 = arith.constant dense<0.000000e+00> : vector<2xf32>
    %1600 = vector.multi_reduction <add>, %1599, %cst_428 [1] : vector<2x16xf32> to vector<2xf32>
    %1601 = vector.shape_cast %1600 : vector<2xf32> to vector<2x1xf32>
    %1602 = tpu.reciprocal %1601 {approx = true} : vector<2x1xf32> -> vector<2x1xf32>
    %1603 = vector.broadcast %1602 : vector<2x1xf32> to vector<2x16xf32>
    %1604 = arith.mulf %1599, %1603 : vector<2x16xf32>
    %1605 = arith.truncf %1604 : vector<2x16xf32> to vector<2x16xbf16>
    %cst_429 = arith.constant dense<0.000000e+00> : vector<2x64xf32>
    %1606 = tpu.matmul %1605, %1065, %cst_429 {dimension_numbers = #tpu.dot_dimension_numbers<[1], [0], [0], [1], [0, 0, 1, 1], [], []>} : vector<2x16xbf16>, vector<16x64xbf16>, vector<2x64xf32> -> vector<2x64xf32>
    %1607 = tpu.concatenate %1606, %1584 in 1 : vector<2x64xf32>, vector<2x32xf32> -> vector<2x96xf32>
    %1608 = arith.truncf %1607 : vector<2x96xf32> to vector<2x96xbf16>
    %c0_430 = arith.constant 0 : index
    %c0_431 = arith.constant 0 : index
    %1609 = vector.load %arg25[%c0_430, %c0_431] : memref<96x192xbf16, #tpu.memory_space<vmem>>, vector<96x192xbf16>
    %cst_432 = arith.constant dense<0.000000e+00> : vector<2x192xf32>
    %1610 = tpu.matmul %1608, %1609, %cst_432 {dimension_numbers = #tpu.dot_dimension_numbers<[1], [0], [0], [1], [0, 0, 1, 1], [], []>} : vector<2x96xbf16>, vector<96x192xbf16>, vector<2x192xf32> -> vector<2x192xf32>
    %c0_433 = arith.constant 0 : index
    %c0_434 = arith.constant 0 : index
    %1611 = vector.load %arg26[%c0_433, %c0_434] : memref<1x192xf32, #tpu.memory_space<vmem>>, vector<1x192xf32>
    %1612 = vector.broadcast %1611 : vector<1x192xf32> to vector<2x192xf32>
    %1613 = arith.addf %1610, %1612 : vector<2x192xf32>
    %1614 = vector.extract_strided_slice %1613 {offsets = [0, 0], sizes = [2, 96], strides = [1, 1]} : vector<2x192xf32> to vector<2x96xf32>
    %1615 = vector.extract_strided_slice %1613 {offsets = [0, 96], sizes = [2, 96], strides = [1, 1]} : vector<2x192xf32> to vector<2x96xf32>
    %1616 = vector.extract_strided_slice %1614 {offsets = [0, 0], sizes = [2, 32], strides = [1, 1]} : vector<2x96xf32> to vector<2x32xf32>
    %1617 = vector.extract_strided_slice %1615 {offsets = [0, 0], sizes = [2, 32], strides = [1, 1]} : vector<2x96xf32> to vector<2x32xf32>
    %1618 = arith.addf %1616, %1617 : vector<2x32xf32>
    %1619 = arith.negf %1618 : vector<2x32xf32>
    %1620 = math.exp %1619 : vector<2x32xf32>
    %cst_435 = arith.constant 1.000000e+00 : f32
    %1621 = vector.broadcast %cst_435 : f32 to vector<2x32xf32>
    %1622 = arith.addf %1621, %1620 : vector<2x32xf32>
    %1623 = arith.divf %1621, %1622 : vector<2x32xf32>
    %1624 = vector.extract_strided_slice %1614 {offsets = [0, 32], sizes = [2, 32], strides = [1, 1]} : vector<2x96xf32> to vector<2x32xf32>
    %1625 = vector.extract_strided_slice %1615 {offsets = [0, 32], sizes = [2, 32], strides = [1, 1]} : vector<2x96xf32> to vector<2x32xf32>
    %1626 = arith.addf %1624, %1625 : vector<2x32xf32>
    %1627 = arith.negf %1626 : vector<2x32xf32>
    %1628 = math.exp %1627 : vector<2x32xf32>
    %cst_436 = arith.constant 1.000000e+00 : f32
    %1629 = vector.broadcast %cst_436 : f32 to vector<2x32xf32>
    %1630 = arith.addf %1629, %1628 : vector<2x32xf32>
    %1631 = arith.divf %1629, %1630 : vector<2x32xf32>
    %1632 = vector.extract_strided_slice %1614 {offsets = [0, 64], sizes = [2, 32], strides = [1, 1]} : vector<2x96xf32> to vector<2x32xf32>
    %1633 = vector.extract_strided_slice %1615 {offsets = [0, 64], sizes = [2, 32], strides = [1, 1]} : vector<2x96xf32> to vector<2x32xf32>
    %1634 = arith.mulf %1623, %1633 : vector<2x32xf32>
    %1635 = arith.addf %1632, %1634 : vector<2x32xf32>
    %1636 = math.tanh %1635 : vector<2x32xf32>
    %cst_437 = arith.constant 1.000000e+00 : f32
    %1637 = vector.broadcast %cst_437 : f32 to vector<2x32xf32>
    %1638 = arith.subf %1637, %1631 : vector<2x32xf32>
    %1639 = arith.mulf %1638, %1636 : vector<2x32xf32>
    %1640 = arith.mulf %1631, %1584 : vector<2x32xf32>
    %1641 = arith.addf %1639, %1640 : vector<2x32xf32>
    %c10_438 = arith.constant 10 : index
    %c32_439 = arith.constant 32 : index
    %1642 = vector.load %arg32[%c10_438, %c32_439] : memref<16x128xf32, #tpu.memory_space<vmem>>, vector<2x32xf32>
    tpu.vector_store %arg32[%c10_438, %c32_439], %1641 {strides = array<i32>} : memref<16x128xf32, #tpu.memory_space<vmem>>, vector<2x32xf32>,
    %c10_440 = arith.constant 10 : index
    %c64_441 = arith.constant 64 : index
    %1643 = vector.load %arg32[%c10_440, %c64_441] : memref<16x128xf32, #tpu.memory_space<vmem>>, vector<2x64xf32>
    tpu.vector_store %arg32[%c10_440, %c64_441], %1606 {strides = array<i32>} : memref<16x128xf32, #tpu.memory_space<vmem>>, vector<2x64xf32>,
    %1644 = arith.truncf %1641 : vector<2x32xf32> to vector<2x32xbf16>
    %c0_442 = arith.constant 0 : index
    %c0_443 = arith.constant 0 : index
    %1645 = vector.load %arg23[%c0_442, %c0_443] : memref<32x96xbf16, #tpu.memory_space<vmem>>, vector<32x96xbf16>
    %cst_444 = arith.constant dense<0.000000e+00> : vector<2x96xf32>
    %1646 = tpu.matmul %1644, %1645, %cst_444 {dimension_numbers = #tpu.dot_dimension_numbers<[1], [0], [0], [1], [0, 0, 1, 1], [], []>} : vector<2x32xbf16>, vector<32x96xbf16>, vector<2x96xf32> -> vector<2x96xf32>
    %c0_445 = arith.constant 0 : index
    %c0_446 = arith.constant 0 : index
    %1647 = vector.load %arg24[%c0_445, %c0_446] : memref<1x96xf32, #tpu.memory_space<vmem>>, vector<1x96xf32>
    %1648 = vector.broadcast %1647 : vector<1x96xf32> to vector<2x96xf32>
    %1649 = arith.addf %1646, %1648 : vector<2x96xf32>
    %1650 = vector.extract_strided_slice %1089 {offsets = [12, 0], sizes = [2, 96], strides = [1, 1]} : vector<16x96xf32> to vector<2x96xf32>
    %1651 = vector.extract_strided_slice %1650 {offsets = [0, 0], sizes = [2, 32], strides = [1, 1]} : vector<2x96xf32> to vector<2x32xf32>
    %1652 = vector.extract_strided_slice %1649 {offsets = [0, 0], sizes = [2, 32], strides = [1, 1]} : vector<2x96xf32> to vector<2x32xf32>
    %1653 = arith.addf %1651, %1652 : vector<2x32xf32>
    %1654 = arith.negf %1653 : vector<2x32xf32>
    %1655 = math.exp %1654 : vector<2x32xf32>
    %cst_447 = arith.constant 1.000000e+00 : f32
    %1656 = vector.broadcast %cst_447 : f32 to vector<2x32xf32>
    %1657 = arith.addf %1656, %1655 : vector<2x32xf32>
    %1658 = arith.divf %1656, %1657 : vector<2x32xf32>
    %1659 = vector.extract_strided_slice %1650 {offsets = [0, 32], sizes = [2, 32], strides = [1, 1]} : vector<2x96xf32> to vector<2x32xf32>
    %1660 = vector.extract_strided_slice %1649 {offsets = [0, 32], sizes = [2, 32], strides = [1, 1]} : vector<2x96xf32> to vector<2x32xf32>
    %1661 = arith.addf %1659, %1660 : vector<2x32xf32>
    %1662 = arith.negf %1661 : vector<2x32xf32>
    %1663 = math.exp %1662 : vector<2x32xf32>
    %cst_448 = arith.constant 1.000000e+00 : f32
    %1664 = vector.broadcast %cst_448 : f32 to vector<2x32xf32>
    %1665 = arith.addf %1664, %1663 : vector<2x32xf32>
    %1666 = arith.divf %1664, %1665 : vector<2x32xf32>
    %1667 = vector.extract_strided_slice %1650 {offsets = [0, 64], sizes = [2, 32], strides = [1, 1]} : vector<2x96xf32> to vector<2x32xf32>
    %1668 = vector.extract_strided_slice %1649 {offsets = [0, 64], sizes = [2, 32], strides = [1, 1]} : vector<2x96xf32> to vector<2x32xf32>
    %1669 = arith.mulf %1658, %1668 : vector<2x32xf32>
    %1670 = arith.addf %1667, %1669 : vector<2x32xf32>
    %1671 = math.tanh %1670 : vector<2x32xf32>
    %cst_449 = arith.constant 1.000000e+00 : f32
    %1672 = vector.broadcast %cst_449 : f32 to vector<2x32xf32>
    %1673 = arith.subf %1672, %1666 : vector<2x32xf32>
    %1674 = arith.mulf %1673, %1671 : vector<2x32xf32>
    %1675 = arith.mulf %1666, %1641 : vector<2x32xf32>
    %1676 = arith.addf %1674, %1675 : vector<2x32xf32>
    %1677 = arith.truncf %1676 : vector<2x32xf32> to vector<2x32xbf16>
    %c0_450 = arith.constant 0 : index
    %c0_451 = arith.constant 0 : index
    %1678 = vector.load %arg19[%c0_450, %c0_451] : memref<32x32xbf16, #tpu.memory_space<vmem>>, vector<32x32xbf16>
    %cst_452 = arith.constant dense<0.000000e+00> : vector<2x32xf32>
    %1679 = tpu.matmul %1677, %1678, %cst_452 {dimension_numbers = #tpu.dot_dimension_numbers<[1], [0], [0], [1], [0, 0, 1, 1], [], []>} : vector<2x32xbf16>, vector<32x32xbf16>, vector<2x32xf32> -> vector<2x32xf32>
    %1680 = tpu.concatenate %1679, %1679, %1679, %1679, %1679, %1679, %1679, %1679 in 0 : vector<2x32xf32>, vector<2x32xf32>, vector<2x32xf32>, vector<2x32xf32>, vector<2x32xf32>, vector<2x32xf32>, vector<2x32xf32>, vector<2x32xf32> -> vector<16x32xf32>
    %1681 = arith.addf %1081, %1680 : vector<16x32xf32>
    %1682 = math.tanh %1681 : vector<16x32xf32>
    %1683 = arith.truncf %1682 : vector<16x32xf32> to vector<16x32xbf16>
    %cst_453 = arith.constant dense<0.000000e+00> : vector<1x16xf32>
    %1684 = tpu.matmul %1090, %1683, %cst_453 {dimension_numbers = #tpu.dot_dimension_numbers<[1], [1], [0], [0], [0, 0, 1, 0], [], []>} : vector<1x32xbf16>, vector<16x32xbf16>, vector<1x16xf32> -> vector<1x16xf32>
    %1685 = vector.broadcast %1684 : vector<1x16xf32> to vector<2x16xf32>
    %1686 = arith.addf %1685, %1091 : vector<2x16xf32>
    %cst_454 = arith.constant dense<0xFF800000> : vector<2xf32>
    %1687 = vector.multi_reduction <maximumf>, %1686, %cst_454 [1] : vector<2x16xf32> to vector<2xf32>
    %1688 = vector.shape_cast %1687 : vector<2xf32> to vector<2x1xf32>
    %1689 = vector.broadcast %1688 : vector<2x1xf32> to vector<2x16xf32>
    %1690 = arith.subf %1686, %1689 : vector<2x16xf32>
    %1691 = math.exp %1690 : vector<2x16xf32>
    %cst_455 = arith.constant dense<0.000000e+00> : vector<2xf32>
    %1692 = vector.multi_reduction <add>, %1691, %cst_455 [1] : vector<2x16xf32> to vector<2xf32>
    %1693 = vector.shape_cast %1692 : vector<2xf32> to vector<2x1xf32>
    %1694 = tpu.reciprocal %1693 {approx = true} : vector<2x1xf32> -> vector<2x1xf32>
    %1695 = vector.broadcast %1694 : vector<2x1xf32> to vector<2x16xf32>
    %1696 = arith.mulf %1691, %1695 : vector<2x16xf32>
    %1697 = arith.truncf %1696 : vector<2x16xf32> to vector<2x16xbf16>
    %cst_456 = arith.constant dense<0.000000e+00> : vector<2x64xf32>
    %1698 = tpu.matmul %1697, %1065, %cst_456 {dimension_numbers = #tpu.dot_dimension_numbers<[1], [0], [0], [1], [0, 0, 1, 1], [], []>} : vector<2x16xbf16>, vector<16x64xbf16>, vector<2x64xf32> -> vector<2x64xf32>
    %1699 = tpu.concatenate %1698, %1676 in 1 : vector<2x64xf32>, vector<2x32xf32> -> vector<2x96xf32>
    %1700 = arith.truncf %1699 : vector<2x96xf32> to vector<2x96xbf16>
    %c0_457 = arith.constant 0 : index
    %c0_458 = arith.constant 0 : index
    %1701 = vector.load %arg25[%c0_457, %c0_458] : memref<96x192xbf16, #tpu.memory_space<vmem>>, vector<96x192xbf16>
    %cst_459 = arith.constant dense<0.000000e+00> : vector<2x192xf32>
    %1702 = tpu.matmul %1700, %1701, %cst_459 {dimension_numbers = #tpu.dot_dimension_numbers<[1], [0], [0], [1], [0, 0, 1, 1], [], []>} : vector<2x96xbf16>, vector<96x192xbf16>, vector<2x192xf32> -> vector<2x192xf32>
    %c0_460 = arith.constant 0 : index
    %c0_461 = arith.constant 0 : index
    %1703 = vector.load %arg26[%c0_460, %c0_461] : memref<1x192xf32, #tpu.memory_space<vmem>>, vector<1x192xf32>
    %1704 = vector.broadcast %1703 : vector<1x192xf32> to vector<2x192xf32>
    %1705 = arith.addf %1702, %1704 : vector<2x192xf32>
    %1706 = vector.extract_strided_slice %1705 {offsets = [0, 0], sizes = [2, 96], strides = [1, 1]} : vector<2x192xf32> to vector<2x96xf32>
    %1707 = vector.extract_strided_slice %1705 {offsets = [0, 96], sizes = [2, 96], strides = [1, 1]} : vector<2x192xf32> to vector<2x96xf32>
    %1708 = vector.extract_strided_slice %1706 {offsets = [0, 0], sizes = [2, 32], strides = [1, 1]} : vector<2x96xf32> to vector<2x32xf32>
    %1709 = vector.extract_strided_slice %1707 {offsets = [0, 0], sizes = [2, 32], strides = [1, 1]} : vector<2x96xf32> to vector<2x32xf32>
    %1710 = arith.addf %1708, %1709 : vector<2x32xf32>
    %1711 = arith.negf %1710 : vector<2x32xf32>
    %1712 = math.exp %1711 : vector<2x32xf32>
    %cst_462 = arith.constant 1.000000e+00 : f32
    %1713 = vector.broadcast %cst_462 : f32 to vector<2x32xf32>
    %1714 = arith.addf %1713, %1712 : vector<2x32xf32>
    %1715 = arith.divf %1713, %1714 : vector<2x32xf32>
    %1716 = vector.extract_strided_slice %1706 {offsets = [0, 32], sizes = [2, 32], strides = [1, 1]} : vector<2x96xf32> to vector<2x32xf32>
    %1717 = vector.extract_strided_slice %1707 {offsets = [0, 32], sizes = [2, 32], strides = [1, 1]} : vector<2x96xf32> to vector<2x32xf32>
    %1718 = arith.addf %1716, %1717 : vector<2x32xf32>
    %1719 = arith.negf %1718 : vector<2x32xf32>
    %1720 = math.exp %1719 : vector<2x32xf32>
    %cst_463 = arith.constant 1.000000e+00 : f32
    %1721 = vector.broadcast %cst_463 : f32 to vector<2x32xf32>
    %1722 = arith.addf %1721, %1720 : vector<2x32xf32>
    %1723 = arith.divf %1721, %1722 : vector<2x32xf32>
    %1724 = vector.extract_strided_slice %1706 {offsets = [0, 64], sizes = [2, 32], strides = [1, 1]} : vector<2x96xf32> to vector<2x32xf32>
    %1725 = vector.extract_strided_slice %1707 {offsets = [0, 64], sizes = [2, 32], strides = [1, 1]} : vector<2x96xf32> to vector<2x32xf32>
    %1726 = arith.mulf %1715, %1725 : vector<2x32xf32>
    %1727 = arith.addf %1724, %1726 : vector<2x32xf32>
    %1728 = math.tanh %1727 : vector<2x32xf32>
    %cst_464 = arith.constant 1.000000e+00 : f32
    %1729 = vector.broadcast %cst_464 : f32 to vector<2x32xf32>
    %1730 = arith.subf %1729, %1723 : vector<2x32xf32>
    %1731 = arith.mulf %1730, %1728 : vector<2x32xf32>
    %1732 = arith.mulf %1723, %1676 : vector<2x32xf32>
    %1733 = arith.addf %1731, %1732 : vector<2x32xf32>
    %c12_465 = arith.constant 12 : index
    %c32_466 = arith.constant 32 : index
    %1734 = vector.load %arg32[%c12_465, %c32_466] : memref<16x128xf32, #tpu.memory_space<vmem>>, vector<2x32xf32>
    tpu.vector_store %arg32[%c12_465, %c32_466], %1733 {strides = array<i32>} : memref<16x128xf32, #tpu.memory_space<vmem>>, vector<2x32xf32>,
    %c12_467 = arith.constant 12 : index
    %c64_468 = arith.constant 64 : index
    %1735 = vector.load %arg32[%c12_467, %c64_468] : memref<16x128xf32, #tpu.memory_space<vmem>>, vector<2x64xf32>
    tpu.vector_store %arg32[%c12_467, %c64_468], %1698 {strides = array<i32>} : memref<16x128xf32, #tpu.memory_space<vmem>>, vector<2x64xf32>,
    %1736 = arith.truncf %1733 : vector<2x32xf32> to vector<2x32xbf16>
    %c0_469 = arith.constant 0 : index
    %c0_470 = arith.constant 0 : index
    %1737 = vector.load %arg23[%c0_469, %c0_470] : memref<32x96xbf16, #tpu.memory_space<vmem>>, vector<32x96xbf16>
    %cst_471 = arith.constant dense<0.000000e+00> : vector<2x96xf32>
    %1738 = tpu.matmul %1736, %1737, %cst_471 {dimension_numbers = #tpu.dot_dimension_numbers<[1], [0], [0], [1], [0, 0, 1, 1], [], []>} : vector<2x32xbf16>, vector<32x96xbf16>, vector<2x96xf32> -> vector<2x96xf32>
    %c0_472 = arith.constant 0 : index
    %c0_473 = arith.constant 0 : index
    %1739 = vector.load %arg24[%c0_472, %c0_473] : memref<1x96xf32, #tpu.memory_space<vmem>>, vector<1x96xf32>
    %1740 = vector.broadcast %1739 : vector<1x96xf32> to vector<2x96xf32>
    %1741 = arith.addf %1738, %1740 : vector<2x96xf32>
    %1742 = vector.extract_strided_slice %1089 {offsets = [14, 0], sizes = [2, 96], strides = [1, 1]} : vector<16x96xf32> to vector<2x96xf32>
    %1743 = vector.extract_strided_slice %1742 {offsets = [0, 0], sizes = [2, 32], strides = [1, 1]} : vector<2x96xf32> to vector<2x32xf32>
    %1744 = vector.extract_strided_slice %1741 {offsets = [0, 0], sizes = [2, 32], strides = [1, 1]} : vector<2x96xf32> to vector<2x32xf32>
    %1745 = arith.addf %1743, %1744 : vector<2x32xf32>
    %1746 = arith.negf %1745 : vector<2x32xf32>
    %1747 = math.exp %1746 : vector<2x32xf32>
    %cst_474 = arith.constant 1.000000e+00 : f32
    %1748 = vector.broadcast %cst_474 : f32 to vector<2x32xf32>
    %1749 = arith.addf %1748, %1747 : vector<2x32xf32>
    %1750 = arith.divf %1748, %1749 : vector<2x32xf32>
    %1751 = vector.extract_strided_slice %1742 {offsets = [0, 32], sizes = [2, 32], strides = [1, 1]} : vector<2x96xf32> to vector<2x32xf32>
    %1752 = vector.extract_strided_slice %1741 {offsets = [0, 32], sizes = [2, 32], strides = [1, 1]} : vector<2x96xf32> to vector<2x32xf32>
    %1753 = arith.addf %1751, %1752 : vector<2x32xf32>
    %1754 = arith.negf %1753 : vector<2x32xf32>
    %1755 = math.exp %1754 : vector<2x32xf32>
    %cst_475 = arith.constant 1.000000e+00 : f32
    %1756 = vector.broadcast %cst_475 : f32 to vector<2x32xf32>
    %1757 = arith.addf %1756, %1755 : vector<2x32xf32>
    %1758 = arith.divf %1756, %1757 : vector<2x32xf32>
    %1759 = vector.extract_strided_slice %1742 {offsets = [0, 64], sizes = [2, 32], strides = [1, 1]} : vector<2x96xf32> to vector<2x32xf32>
    %1760 = vector.extract_strided_slice %1741 {offsets = [0, 64], sizes = [2, 32], strides = [1, 1]} : vector<2x96xf32> to vector<2x32xf32>
    %1761 = arith.mulf %1750, %1760 : vector<2x32xf32>
    %1762 = arith.addf %1759, %1761 : vector<2x32xf32>
    %1763 = math.tanh %1762 : vector<2x32xf32>
    %cst_476 = arith.constant 1.000000e+00 : f32
    %1764 = vector.broadcast %cst_476 : f32 to vector<2x32xf32>
    %1765 = arith.subf %1764, %1758 : vector<2x32xf32>
    %1766 = arith.mulf %1765, %1763 : vector<2x32xf32>
    %1767 = arith.mulf %1758, %1733 : vector<2x32xf32>
    %1768 = arith.addf %1766, %1767 : vector<2x32xf32>
    %1769 = arith.truncf %1768 : vector<2x32xf32> to vector<2x32xbf16>
    %c0_477 = arith.constant 0 : index
    %c0_478 = arith.constant 0 : index
    %1770 = vector.load %arg19[%c0_477, %c0_478] : memref<32x32xbf16, #tpu.memory_space<vmem>>, vector<32x32xbf16>
    %cst_479 = arith.constant dense<0.000000e+00> : vector<2x32xf32>
    %1771 = tpu.matmul %1769, %1770, %cst_479 {dimension_numbers = #tpu.dot_dimension_numbers<[1], [0], [0], [1], [0, 0, 1, 1], [], []>} : vector<2x32xbf16>, vector<32x32xbf16>, vector<2x32xf32> -> vector<2x32xf32>
    %1772 = tpu.concatenate %1771, %1771, %1771, %1771, %1771, %1771, %1771, %1771 in 0 : vector<2x32xf32>, vector<2x32xf32>, vector<2x32xf32>, vector<2x32xf32>, vector<2x32xf32>, vector<2x32xf32>, vector<2x32xf32>, vector<2x32xf32> -> vector<16x32xf32>
    %1773 = arith.addf %1081, %1772 : vector<16x32xf32>
    %1774 = math.tanh %1773 : vector<16x32xf32>
    %1775 = arith.truncf %1774 : vector<16x32xf32> to vector<16x32xbf16>
    %cst_480 = arith.constant dense<0.000000e+00> : vector<1x16xf32>
    %1776 = tpu.matmul %1090, %1775, %cst_480 {dimension_numbers = #tpu.dot_dimension_numbers<[1], [1], [0], [0], [0, 0, 1, 0], [], []>} : vector<1x32xbf16>, vector<16x32xbf16>, vector<1x16xf32> -> vector<1x16xf32>
    %1777 = vector.broadcast %1776 : vector<1x16xf32> to vector<2x16xf32>
    %1778 = arith.addf %1777, %1091 : vector<2x16xf32>
    %cst_481 = arith.constant dense<0xFF800000> : vector<2xf32>
    %1779 = vector.multi_reduction <maximumf>, %1778, %cst_481 [1] : vector<2x16xf32> to vector<2xf32>
    %1780 = vector.shape_cast %1779 : vector<2xf32> to vector<2x1xf32>
    %1781 = vector.broadcast %1780 : vector<2x1xf32> to vector<2x16xf32>
    %1782 = arith.subf %1778, %1781 : vector<2x16xf32>
    %1783 = math.exp %1782 : vector<2x16xf32>
    %cst_482 = arith.constant dense<0.000000e+00> : vector<2xf32>
    %1784 = vector.multi_reduction <add>, %1783, %cst_482 [1] : vector<2x16xf32> to vector<2xf32>
    %1785 = vector.shape_cast %1784 : vector<2xf32> to vector<2x1xf32>
    %1786 = tpu.reciprocal %1785 {approx = true} : vector<2x1xf32> -> vector<2x1xf32>
    %1787 = vector.broadcast %1786 : vector<2x1xf32> to vector<2x16xf32>
    %1788 = arith.mulf %1783, %1787 : vector<2x16xf32>
    %1789 = arith.truncf %1788 : vector<2x16xf32> to vector<2x16xbf16>
    %cst_483 = arith.constant dense<0.000000e+00> : vector<2x64xf32>
    %1790 = tpu.matmul %1789, %1065, %cst_483 {dimension_numbers = #tpu.dot_dimension_numbers<[1], [0], [0], [1], [0, 0, 1, 1], [], []>} : vector<2x16xbf16>, vector<16x64xbf16>, vector<2x64xf32> -> vector<2x64xf32>
    %1791 = tpu.concatenate %1790, %1768 in 1 : vector<2x64xf32>, vector<2x32xf32> -> vector<2x96xf32>
    %1792 = arith.truncf %1791 : vector<2x96xf32> to vector<2x96xbf16>
    %c0_484 = arith.constant 0 : index
    %c0_485 = arith.constant 0 : index
    %1793 = vector.load %arg25[%c0_484, %c0_485] : memref<96x192xbf16, #tpu.memory_space<vmem>>, vector<96x192xbf16>
    %cst_486 = arith.constant dense<0.000000e+00> : vector<2x192xf32>
    %1794 = tpu.matmul %1792, %1793, %cst_486 {dimension_numbers = #tpu.dot_dimension_numbers<[1], [0], [0], [1], [0, 0, 1, 1], [], []>} : vector<2x96xbf16>, vector<96x192xbf16>, vector<2x192xf32> -> vector<2x192xf32>
    %c0_487 = arith.constant 0 : index
    %c0_488 = arith.constant 0 : index
    %1795 = vector.load %arg26[%c0_487, %c0_488] : memref<1x192xf32, #tpu.memory_space<vmem>>, vector<1x192xf32>
    %1796 = vector.broadcast %1795 : vector<1x192xf32> to vector<2x192xf32>
    %1797 = arith.addf %1794, %1796 : vector<2x192xf32>
    %1798 = vector.extract_strided_slice %1797 {offsets = [0, 0], sizes = [2, 96], strides = [1, 1]} : vector<2x192xf32> to vector<2x96xf32>
    %1799 = vector.extract_strided_slice %1797 {offsets = [0, 96], sizes = [2, 96], strides = [1, 1]} : vector<2x192xf32> to vector<2x96xf32>
    %1800 = vector.extract_strided_slice %1798 {offsets = [0, 0], sizes = [2, 32], strides = [1, 1]} : vector<2x96xf32> to vector<2x32xf32>
    %1801 = vector.extract_strided_slice %1799 {offsets = [0, 0], sizes = [2, 32], strides = [1, 1]} : vector<2x96xf32> to vector<2x32xf32>
    %1802 = arith.addf %1800, %1801 : vector<2x32xf32>
    %1803 = arith.negf %1802 : vector<2x32xf32>
    %1804 = math.exp %1803 : vector<2x32xf32>
    %cst_489 = arith.constant 1.000000e+00 : f32
    %1805 = vector.broadcast %cst_489 : f32 to vector<2x32xf32>
    %1806 = arith.addf %1805, %1804 : vector<2x32xf32>
    %1807 = arith.divf %1805, %1806 : vector<2x32xf32>
    %1808 = vector.extract_strided_slice %1798 {offsets = [0, 32], sizes = [2, 32], strides = [1, 1]} : vector<2x96xf32> to vector<2x32xf32>
    %1809 = vector.extract_strided_slice %1799 {offsets = [0, 32], sizes = [2, 32], strides = [1, 1]} : vector<2x96xf32> to vector<2x32xf32>
    %1810 = arith.addf %1808, %1809 : vector<2x32xf32>
    %1811 = arith.negf %1810 : vector<2x32xf32>
    %1812 = math.exp %1811 : vector<2x32xf32>
    %cst_490 = arith.constant 1.000000e+00 : f32
    %1813 = vector.broadcast %cst_490 : f32 to vector<2x32xf32>
    %1814 = arith.addf %1813, %1812 : vector<2x32xf32>
    %1815 = arith.divf %1813, %1814 : vector<2x32xf32>
    %1816 = vector.extract_strided_slice %1798 {offsets = [0, 64], sizes = [2, 32], strides = [1, 1]} : vector<2x96xf32> to vector<2x32xf32>
    %1817 = vector.extract_strided_slice %1799 {offsets = [0, 64], sizes = [2, 32], strides = [1, 1]} : vector<2x96xf32> to vector<2x32xf32>
    %1818 = arith.mulf %1807, %1817 : vector<2x32xf32>
    %1819 = arith.addf %1816, %1818 : vector<2x32xf32>
    %1820 = math.tanh %1819 : vector<2x32xf32>
    %cst_491 = arith.constant 1.000000e+00 : f32
    %1821 = vector.broadcast %cst_491 : f32 to vector<2x32xf32>
    %1822 = arith.subf %1821, %1815 : vector<2x32xf32>
    %1823 = arith.mulf %1822, %1820 : vector<2x32xf32>
    %1824 = arith.mulf %1815, %1768 : vector<2x32xf32>
    %1825 = arith.addf %1823, %1824 : vector<2x32xf32>
    %c14_492 = arith.constant 14 : index
    %c32_493 = arith.constant 32 : index
    %1826 = vector.load %arg32[%c14_492, %c32_493] : memref<16x128xf32, #tpu.memory_space<vmem>>, vector<2x32xf32>
    tpu.vector_store %arg32[%c14_492, %c32_493], %1825 {strides = array<i32>} : memref<16x128xf32, #tpu.memory_space<vmem>>, vector<2x32xf32>,
    %c14_494 = arith.constant 14 : index
    %c64_495 = arith.constant 64 : index
    %1827 = vector.load %arg32[%c14_494, %c64_495] : memref<16x128xf32, #tpu.memory_space<vmem>>, vector<2x64xf32>
    tpu.vector_store %arg32[%c14_494, %c64_495], %1790 {strides = array<i32>} : memref<16x128xf32, #tpu.memory_space<vmem>>, vector<2x64xf32>,
    %c0_496 = arith.constant 0 : index
    %c0_497 = arith.constant 0 : index
    %1828 = vector.load %arg32[%c0_496, %c0_497] : memref<16x128xf32, #tpu.memory_space<vmem>>, vector<16x128xf32>
    %1829 = arith.truncf %1828 : vector<16x128xf32> to vector<16x128xbf16>
    %c0_498 = arith.constant 0 : index
    %c0_499 = arith.constant 0 : index
    %1830 = vector.load %arg27[%c0_498, %c0_499] : memref<128x32xbf16, #tpu.memory_space<vmem>>, vector<128x32xbf16>
    %cst_500 = arith.constant dense<0.000000e+00> : vector<16x32xf32>
    %1831 = tpu.matmul %1829, %1830, %cst_500 {dimension_numbers = #tpu.dot_dimension_numbers<[1], [0], [0], [1], [0, 0, 1, 1], [], []>} : vector<16x128xbf16>, vector<128x32xbf16>, vector<16x32xf32> -> vector<16x32xf32>
    %c0_501 = arith.constant 0 : index
    %c0_502 = arith.constant 0 : index
    %1832 = vector.load %arg28[%c0_501, %c0_502] : memref<1x32xf32, #tpu.memory_space<vmem>>, vector<1x32xf32>
    %1833 = vector.broadcast %1832 : vector<1x32xf32> to vector<16x32xf32>
    %1834 = arith.addf %1831, %1833 : vector<16x32xf32>
    %1835 = math.tanh %1834 : vector<16x32xf32>
    %c0_503 = arith.constant 0 : index
    %c0_504 = arith.constant 0 : index
    %1836 = vector.load %arg29[%c0_503, %c0_504] : memref<16x32xf32, #tpu.memory_space<vmem>>, vector<16x32xf32>
    tpu.vector_store %arg29[%c0_503, %c0_504], %1835 {strides = array<i32>} : memref<16x32xf32, #tpu.memory_space<vmem>>, vector<16x32xf32>,
    return
  }
  func.func @transform_0(%arg0: i32) -> (i32, i32) {
    %c0_i32 = arith.constant 0 : i32
    %c0_i32_0 = arith.constant 0 : i32
    %c0_i32_1 = arith.constant 0 : i32
    return %c0_i32, %c0_i32_0 : i32, i32
  }
  func.func @transform_1(%arg0: i32) -> (i32, i32) {
    %c0_i32 = arith.constant 0 : i32
    %c0_i32_0 = arith.constant 0 : i32
    %c0_i32_1 = arith.constant 0 : i32
    return %c0_i32, %c0_i32_0 : i32, i32
  }
  func.func @transform_2(%arg0: i32) -> (i32, i32) {
    %c0_i32 = arith.constant 0 : i32
    %c0_i32_0 = arith.constant 0 : i32
    %c0_i32_1 = arith.constant 0 : i32
    return %c0_i32, %c0_i32_0 : i32, i32
  }
  func.func @transform_3(%arg0: i32) -> (i32, i32) {
    %c0_i32 = arith.constant 0 : i32
    %c0_i32_0 = arith.constant 0 : i32
    %c0_i32_1 = arith.constant 0 : i32
    return %c0_i32, %c0_i32_0 : i32, i32
  }
  func.func @transform_4(%arg0: i32) -> (i32, i32) {
    %c0_i32 = arith.constant 0 : i32
    %c0_i32_0 = arith.constant 0 : i32
    %c0_i32_1 = arith.constant 0 : i32
    return %c0_i32, %c0_i32_0 : i32, i32
  }
  func.func @transform_5(%arg0: i32) -> (i32, i32) {
    %c0_i32 = arith.constant 0 : i32
    %c0_i32_0 = arith.constant 0 : i32
    %c0_i32_1 = arith.constant 0 : i32
    return %c0_i32, %c0_i32_0 : i32, i32
  }
  func.func @transform_6(%arg0: i32) -> (i32, i32) {
    %c0_i32 = arith.constant 0 : i32
    %c0_i32_0 = arith.constant 0 : i32
    %c0_i32_1 = arith.constant 0 : i32
    return %c0_i32, %c0_i32_0 : i32, i32
  }
  func.func @transform_7(%arg0: i32) -> (i32, i32) {
    %c0_i32 = arith.constant 0 : i32
    %c0_i32_0 = arith.constant 0 : i32
    %c0_i32_1 = arith.constant 0 : i32
    return %c0_i32, %c0_i32_0 : i32, i32
  }
  func.func @transform_8(%arg0: i32) -> (i32, i32) {
    %c0_i32 = arith.constant 0 : i32
    %c0_i32_0 = arith.constant 0 : i32
    %c0_i32_1 = arith.constant 0 : i32
    return %c0_i32, %c0_i32_0 : i32, i32
  }
  func.func @transform_9(%arg0: i32) -> (i32, i32) {
    %c0_i32 = arith.constant 0 : i32
    %c0_i32_0 = arith.constant 0 : i32
    %c0_i32_1 = arith.constant 0 : i32
    return %c0_i32, %c0_i32_0 : i32, i32
  }
  func.func @transform_10(%arg0: i32) -> (i32, i32) {
    %c0_i32 = arith.constant 0 : i32
    %c0_i32_0 = arith.constant 0 : i32
    %c0_i32_1 = arith.constant 0 : i32
    return %c0_i32, %c0_i32_0 : i32, i32
  }
  func.func @transform_11(%arg0: i32) -> (i32, i32) {
    %c0_i32 = arith.constant 0 : i32
    %c0_i32_0 = arith.constant 0 : i32
    %c0_i32_1 = arith.constant 0 : i32
    return %c0_i32, %c0_i32_0 : i32, i32
  }
  func.func @transform_12(%arg0: i32) -> (i32, i32) {
    %c0_i32 = arith.constant 0 : i32
    %c0_i32_0 = arith.constant 0 : i32
    %c0_i32_1 = arith.constant 0 : i32
    return %c0_i32, %c0_i32_0 : i32, i32
  }
  func.func @transform_13(%arg0: i32) -> (i32, i32) {
    %c0_i32 = arith.constant 0 : i32
    %c0_i32_0 = arith.constant 0 : i32
    %c0_i32_1 = arith.constant 0 : i32
    return %c0_i32, %c0_i32_0 : i32, i32
  }
  func.func @transform_14(%arg0: i32) -> (i32, i32) {
    %c0_i32 = arith.constant 0 : i32
    %c0_i32_0 = arith.constant 0 : i32
    %c0_i32_1 = arith.constant 0 : i32
    return %c0_i32, %c0_i32_0 : i32, i32
  }
  func.func @transform_15(%arg0: i32) -> (i32, i32) {
    %c0_i32 = arith.constant 0 : i32
    %c0_i32_0 = arith.constant 0 : i32
    %c0_i32_1 = arith.constant 0 : i32
    return %c0_i32, %c0_i32_0 : i32, i32
  }
  func.func @transform_16(%arg0: i32) -> (i32, i32) {
    %c0_i32 = arith.constant 0 : i32
    %c0_i32_0 = arith.constant 0 : i32
    %c0_i32_1 = arith.constant 0 : i32
    return %c0_i32, %c0_i32_0 : i32, i32
  }
  func.func @transform_17(%arg0: i32) -> (i32, i32) {
    %c0_i32 = arith.constant 0 : i32
    %c0_i32_0 = arith.constant 0 : i32
    %c0_i32_1 = arith.constant 0 : i32
    return %c0_i32, %c0_i32_0 : i32, i32
  }
  func.func @transform_18(%arg0: i32) -> (i32, i32) {
    %c0_i32 = arith.constant 0 : i32
    %c0_i32_0 = arith.constant 0 : i32
    %c0_i32_1 = arith.constant 0 : i32
    return %c0_i32, %c0_i32_0 : i32, i32
  }
  func.func @transform_19(%arg0: i32) -> (i32, i32) {
    %c0_i32 = arith.constant 0 : i32
    %c0_i32_0 = arith.constant 0 : i32
    %c0_i32_1 = arith.constant 0 : i32
    return %c0_i32, %c0_i32_0 : i32, i32
  }
  func.func @transform_20(%arg0: i32) -> (i32, i32) {
    %c0_i32 = arith.constant 0 : i32
    %c0_i32_0 = arith.constant 0 : i32
    %c0_i32_1 = arith.constant 0 : i32
    return %c0_i32, %c0_i32_0 : i32, i32
  }
  func.func @transform_21(%arg0: i32) -> (i32, i32) {
    %c0_i32 = arith.constant 0 : i32
    %c0_i32_0 = arith.constant 0 : i32
    %c0_i32_1 = arith.constant 0 : i32
    return %c0_i32, %c0_i32_0 : i32, i32
  }
  func.func @transform_22(%arg0: i32) -> (i32, i32) {
    %c0_i32 = arith.constant 0 : i32
    %c0_i32_0 = arith.constant 0 : i32
    %c0_i32_1 = arith.constant 0 : i32
    return %c0_i32, %c0_i32_0 : i32, i32
  }
  func.func @transform_23(%arg0: i32) -> (i32, i32) {
    %c0_i32 = arith.constant 0 : i32
    %c0_i32_0 = arith.constant 0 : i32
    %c0_i32_1 = arith.constant 0 : i32
    return %c0_i32, %c0_i32_0 : i32, i32
  }
  func.func @transform_24(%arg0: i32) -> (i32, i32) {
    %c0_i32 = arith.constant 0 : i32
    %c0_i32_0 = arith.constant 0 : i32
    %c0_i32_1 = arith.constant 0 : i32
    return %c0_i32, %c0_i32_0 : i32, i32
  }
  func.func @transform_25(%arg0: i32) -> (i32, i32) {
    %c0_i32 = arith.constant 0 : i32
    %c0_i32_0 = arith.constant 0 : i32
    %c0_i32_1 = arith.constant 0 : i32
    return %c0_i32, %c0_i32_0 : i32, i32
  }
  func.func @transform_26(%arg0: i32) -> (i32, i32) {
    %c0_i32 = arith.constant 0 : i32
    %c0_i32_0 = arith.constant 0 : i32
    %c0_i32_1 = arith.constant 0 : i32
    return %c0_i32, %c0_i32_0 : i32, i32
  }
  func.func @transform_27(%arg0: i32) -> (i32, i32) {
    %c0_i32 = arith.constant 0 : i32
    %c0_i32_0 = arith.constant 0 : i32
    %c0_i32_1 = arith.constant 0 : i32
    return %c0_i32, %c0_i32_0 : i32, i32
  }
  func.func @transform_28(%arg0: i32) -> (i32, i32) {
    %c0_i32 = arith.constant 0 : i32
    %c0_i32_0 = arith.constant 0 : i32
    %c0_i32_1 = arith.constant 0 : i32
    return %c0_i32, %c0_i32_0 : i32, i32
  }
}

</mosaic_0001>

<llo_original>
// kernel: dl4mt_train_forward.1
$region0: #{dl4mt_train_forward.1}
  #allocation0 [shape = 'u32[]', space=smem, size = 0x4, offset = 0x4, fixed_abs, tag = 'smem constant byte address 0x4 - core index']
  #allocation1 [shape = 'u32[144,128]{1,0:T(1,128)}', space=vmem, size = 0x12000, scoped, tag = 'internal scratch']
  #allocation2 [shape = 'f32[16,64]{1,0:T(8,128)}', space=vmem, size = 0x2000, scoped, tag = 'scratch operand']
  #allocation3 [shape = 'f32[16,64]{1,0:T(8,128)}', space=vmem, size = 0x2000, scoped, tag = 'scratch operand']
  #allocation4 [shape = 'f32[16,128]{1,0:T(8,128)}', space=vmem, size = 0x2000, scoped, tag = 'scratch operand']
  %s0 = inlined_call_operand.vmem [shape: f32[16,64], index: 0, kind: input, shape index: {}]
  %s1 = inlined_call_operand.vmem [shape: f32[16,32], index: 1, kind: input, shape index: {}]
  %s2 = inlined_call_operand.vmem [shape: f32[2,16], index: 2, kind: input, shape index: {}]
  %s3 = inlined_call_operand.vmem [shape: f32[2,16], index: 3, kind: input, shape index: {}]
  %s4 = inlined_call_operand.vmem [shape: bf16[64,192], index: 4, kind: input, shape index: {}]
  %s5 = inlined_call_operand.vmem [shape: f32[1,192], index: 5, kind: input, shape index: {}]
  %s6 = inlined_call_operand.vmem [shape: bf16[64,192], index: 6, kind: input, shape index: {}]
  %s7 = inlined_call_operand.vmem [shape: f32[1,192], index: 7, kind: input, shape index: {}]
  %s8 = inlined_call_operand.vmem [shape: bf16[64,32], index: 8, kind: input, shape index: {}]
  %s9 = inlined_call_operand.vmem [shape: f32[1,32], index: 9, kind: input, shape index: {}]
  %s10 = inlined_call_operand.vmem [shape: bf16[32,192], index: 10, kind: input, shape index: {}]
  %s11 = inlined_call_operand.vmem [shape: f32[1,192], index: 11, kind: input, shape index: {}]
  %s12 = inlined_call_operand.vmem [shape: bf16[64,192], index: 12, kind: input, shape index: {}]
  %s13 = inlined_call_operand.vmem [shape: f32[1,192], index: 13, kind: input, shape index: {}]
  %s14 = inlined_call_operand.vmem [shape: bf16[64,32], index: 14, kind: input, shape index: {}]
  %s15 = inlined_call_operand.vmem [shape: f32[1,32], index: 15, kind: input, shape index: {}]
  %s16 = inlined_call_operand.vmem [shape: bf16[64,32], index: 16, kind: input, shape index: {}]
  %s17 = inlined_call_operand.vmem [shape: f32[1,32], index: 17, kind: input, shape index: {}]
  %s18 = inlined_call_operand.vmem [shape: bf16[32,32], index: 18, kind: input, shape index: {}]
  %s19 = inlined_call_operand.vmem [shape: bf16[1,32], index: 19, kind: input, shape index: {}]
  %s20 = inlined_call_operand.vmem [shape: bf16[32,96], index: 20, kind: input, shape index: {}]
  %s21 = inlined_call_operand.vmem [shape: f32[1,96], index: 21, kind: input, shape index: {}]
  %s22 = inlined_call_operand.vmem [shape: bf16[32,96], index: 22, kind: input, shape index: {}]
  %s23 = inlined_call_operand.vmem [shape: f32[1,96], index: 23, kind: input, shape index: {}]
  %s24 = inlined_call_operand.vmem [shape: bf16[96,192], index: 24, kind: input, shape index: {}]
  %s25 = inlined_call_operand.vmem [shape: f32[1,192], index: 25, kind: input, shape index: {}]
  %s26 = inlined_call_operand.vmem [shape: bf16[128,32], index: 26, kind: input, shape index: {}]
  %s27 = inlined_call_operand.vmem [shape: f32[1,32], index: 27, kind: input, shape index: {}]
  %s28 = inlined_call_operand.vmem [shape: f32[16,32], index: 28, kind: output, shape index: {}]
  %s29 = sld [smem:[#allocation0]]
  $region122: #{dl4mt_train_forward.1} parent=0
    _
  %s31 = ssub.s32 1, %s29
  %s32 = scalar_select 0, %s31, %s29
  // Predicated region
  $region2: #{dl4mt_train_forward.1} parent=0 // pred_check
    _
  $region3: #{dl4mt_train_forward.1} parent=0 // pred_check_branch
    %34 = sbr.rel (0) target = $region5
  $region4: #{dl4mt_train_forward.1} parent=0 // pred_region
    _
  $region5: #{dl4mt_train_forward.1} parent=0 // pred_fallthru
    _
  // Predicated region
  $region6: #{dl4mt_train_forward.1} parent=0 // pred_check
    _
  $region7: #{dl4mt_train_forward.1} parent=0 // pred_check_branch
    %36 = sbr.rel (0) target = $region9
  $region8: #{dl4mt_train_forward.1} parent=0 // pred_region
    _
  $region9: #{dl4mt_train_forward.1} parent=0 // pred_fallthru
    _
  // Predicated region
  $region10: #{dl4mt_train_forward.1} parent=0 // pred_check
    _
  $region11: #{dl4mt_train_forward.1} parent=0 // pred_check_branch
    %38 = sbr.rel (0) target = $region13
  $region12: #{dl4mt_train_forward.1} parent=0 // pred_region
    _
  $region13: #{dl4mt_train_forward.1} parent=0 // pred_fallthru
    _
  // Predicated region
  $region14: #{dl4mt_train_forward.1} parent=0 // pred_check
    _
  $region15: #{dl4mt_train_forward.1} parent=0 // pred_check_branch
    %40 = sbr.rel (0) target = $region17
  $region16: #{dl4mt_train_forward.1} parent=0 // pred_region
    _
  $region17: #{dl4mt_train_forward.1} parent=0 // pred_fallthru
    _
  // Predicated region
  $region18: #{dl4mt_train_forward.1} parent=0 // pred_check
    _
  $region19: #{dl4mt_train_forward.1} parent=0 // pred_check_branch
    %42 = sbr.rel (0) target = $region21
  $region20: #{dl4mt_train_forward.1} parent=0 // pred_region
    _
  $region21: #{dl4mt_train_forward.1} parent=0 // pred_fallthru
    _
  // Predicated region
  $region22: #{dl4mt_train_forward.1} parent=0 // pred_check
    _
  $region23: #{dl4mt_train_forward.1} parent=0 // pred_check_branch
    %44 = sbr.rel (0) target = $region25
  $region24: #{dl4mt_train_forward.1} parent=0 // pred_region
    _
  $region25: #{dl4mt_train_forward.1} parent=0 // pred_fallthru
    _
  // Predicated region
  $region26: #{dl4mt_train_forward.1} parent=0 // pred_check
    _
  $region27: #{dl4mt_train_forward.1} parent=0 // pred_check_branch
    %46 = sbr.rel (0) target = $region29
  $region28: #{dl4mt_train_forward.1} parent=0 // pred_region
    _
  $region29: #{dl4mt_train_forward.1} parent=0 // pred_fallthru
    _
  // Predicated region
  $region30: #{dl4mt_train_forward.1} parent=0 // pred_check
    _
  $region31: #{dl4mt_train_forward.1} parent=0 // pred_check_branch
    %48 = sbr.rel (0) target = $region33
  $region32: #{dl4mt_train_forward.1} parent=0 // pred_region
    _
  $region33: #{dl4mt_train_forward.1} parent=0 // pred_fallthru
    _
  // Predicated region
  $region34: #{dl4mt_train_forward.1} parent=0 // pred_check
    _
  $region35: #{dl4mt_train_forward.1} parent=0 // pred_check_branch
    %50 = sbr.rel (0) target = $region37
  $region36: #{dl4mt_train_forward.1} parent=0 // pred_region
    _
  $region37: #{dl4mt_train_forward.1} parent=0 // pred_fallthru
    _
  // Predicated region
  $region38: #{dl4mt_train_forward.1} parent=0 // pred_check
    _
  $region39: #{dl4mt_train_forward.1} parent=0 // pred_check_branch
    %52 = sbr.rel (0) target = $region41
  $region40: #{dl4mt_train_forward.1} parent=0 // pred_region
    _
  $region41: #{dl4mt_train_forward.1} parent=0 // pred_fallthru
    _
  // Predicated region
  $region42: #{dl4mt_train_forward.1} parent=0 // pred_check
    _
  $region43: #{dl4mt_train_forward.1} parent=0 // pred_check_branch
    %54 = sbr.rel (0) target = $region45
  $region44: #{dl4mt_train_forward.1} parent=0 // pred_region
    _
  $region45: #{dl4mt_train_forward.1} parent=0 // pred_fallthru
    _
  // Predicated region
  $region46: #{dl4mt_train_forward.1} parent=0 // pred_check
    _
  $region47: #{dl4mt_train_forward.1} parent=0 // pred_check_branch
    %56 = sbr.rel (0) target = $region49
  $region48: #{dl4mt_train_forward.1} parent=0 // pred_region
    _
  $region49: #{dl4mt_train_forward.1} parent=0 // pred_fallthru
    _
  // Predicated region
  $region50: #{dl4mt_train_forward.1} parent=0 // pred_check
    _
  $region51: #{dl4mt_train_forward.1} parent=0 // pred_check_branch
    %58 = sbr.rel (0) target = $region53
  $region52: #{dl4mt_train_forward.1} parent=0 // pred_region
    _
  $region53: #{dl4mt_train_forward.1} parent=0 // pred_fallthru
    _
  // Predicated region
  $region54: #{dl4mt_train_forward.1} parent=0 // pred_check
    _
  $region55: #{dl4mt_train_forward.1} parent=0 // pred_check_branch
    %60 = sbr.rel (0) target = $region57
  $region56: #{dl4mt_train_forward.1} parent=0 // pred_region
    _
  $region57: #{dl4mt_train_forward.1} parent=0 // pred_fallthru
    _
  // Predicated region
  $region58: #{dl4mt_train_forward.1} parent=0 // pred_check
    _
  $region59: #{dl4mt_train_forward.1} parent=0 // pred_check_branch
    %62 = sbr.rel (0) target = $region61
  $region60: #{dl4mt_train_forward.1} parent=0 // pred_region
    _
  $region61: #{dl4mt_train_forward.1} parent=0 // pred_fallthru
    _
  // Predicated region
  $region62: #{dl4mt_train_forward.1} parent=0 // pred_check
    _
  $region63: #{dl4mt_train_forward.1} parent=0 // pred_check_branch
    %64 = sbr.rel (0) target = $region65
  $region64: #{dl4mt_train_forward.1} parent=0 // pred_region
    _
  $region65: #{dl4mt_train_forward.1} parent=0 // pred_fallthru
    _
  // Predicated region
  $region66: #{dl4mt_train_forward.1} parent=0 // pred_check
    _
  $region67: #{dl4mt_train_forward.1} parent=0 // pred_check_branch
    %66 = sbr.rel (0) target = $region69
  $region68: #{dl4mt_train_forward.1} parent=0 // pred_region
    _
  $region69: #{dl4mt_train_forward.1} parent=0 // pred_fallthru
    _
  // Predicated region
  $region70: #{dl4mt_train_forward.1} parent=0 // pred_check
    _
  $region71: #{dl4mt_train_forward.1} parent=0 // pred_check_branch
    %68 = sbr.rel (0) target = $region73
  $region72: #{dl4mt_train_forward.1} parent=0 // pred_region
    _
  $region73: #{dl4mt_train_forward.1} parent=0 // pred_fallthru
    _
  // Predicated region
  $region74: #{dl4mt_train_forward.1} parent=0 // pred_check
    _
  $region75: #{dl4mt_train_forward.1} parent=0 // pred_check_branch
    %70 = sbr.rel (0) target = $region77
  $region76: #{dl4mt_train_forward.1} parent=0 // pred_region
    _
  $region77: #{dl4mt_train_forward.1} parent=0 // pred_fallthru
    _
  // Predicated region
  $region78: #{dl4mt_train_forward.1} parent=0 // pred_check
    _
  $region79: #{dl4mt_train_forward.1} parent=0 // pred_check_branch
    %72 = sbr.rel (0) target = $region81
  $region80: #{dl4mt_train_forward.1} parent=0 // pred_region
    _
  $region81: #{dl4mt_train_forward.1} parent=0 // pred_fallthru
    _
  // Predicated region
  $region82: #{dl4mt_train_forward.1} parent=0 // pred_check
    _
  $region83: #{dl4mt_train_forward.1} parent=0 // pred_check_branch
    %74 = sbr.rel (0) target = $region85
  $region84: #{dl4mt_train_forward.1} parent=0 // pred_region
    _
  $region85: #{dl4mt_train_forward.1} parent=0 // pred_fallthru
    _
  // Predicated region
  $region86: #{dl4mt_train_forward.1} parent=0 // pred_check
    _
  $region87: #{dl4mt_train_forward.1} parent=0 // pred_check_branch
    %76 = sbr.rel (0) target = $region89
  $region88: #{dl4mt_train_forward.1} parent=0 // pred_region
    _
  $region89: #{dl4mt_train_forward.1} parent=0 // pred_fallthru
    _
  // Predicated region
  $region90: #{dl4mt_train_forward.1} parent=0 // pred_check
    _
  $region91: #{dl4mt_train_forward.1} parent=0 // pred_check_branch
    %78 = sbr.rel (0) target = $region93
  $region92: #{dl4mt_train_forward.1} parent=0 // pred_region
    _
  $region93: #{dl4mt_train_forward.1} parent=0 // pred_fallthru
    _
  // Predicated region
  $region94: #{dl4mt_train_forward.1} parent=0 // pred_check
    _
  $region95: #{dl4mt_train_forward.1} parent=0 // pred_check_branch
    %80 = sbr.rel (0) target = $region97
  $region96: #{dl4mt_train_forward.1} parent=0 // pred_region
    _
  $region97: #{dl4mt_train_forward.1} parent=0 // pred_fallthru
    _
  // Predicated region
  $region98: #{dl4mt_train_forward.1} parent=0 // pred_check
    _
  $region99: #{dl4mt_train_forward.1} parent=0 // pred_check_branch
    %82 = sbr.rel (0) target = $region101
  $region100: #{dl4mt_train_forward.1} parent=0 // pred_region
    _
  $region101: #{dl4mt_train_forward.1} parent=0 // pred_fallthru
    _
  // Predicated region
  $region102: #{dl4mt_train_forward.1} parent=0 // pred_check
    _
  $region103: #{dl4mt_train_forward.1} parent=0 // pred_check_branch
    %84 = sbr.rel (0) target = $region105
  $region104: #{dl4mt_train_forward.1} parent=0 // pred_region
    _
  $region105: #{dl4mt_train_forward.1} parent=0 // pred_fallthru
    _
  // Predicated region
  $region106: #{dl4mt_train_forward.1} parent=0 // pred_check
    _
  $region107: #{dl4mt_train_forward.1} parent=0 // pred_check_branch
    %86 = sbr.rel (0) target = $region109
  $region108: #{dl4mt_train_forward.1} parent=0 // pred_region
    _
  $region109: #{dl4mt_train_forward.1} parent=0 // pred_fallthru
    _
  // Predicated region
  $region110: #{dl4mt_train_forward.1} parent=0 // pred_check
    _
  $region111: #{dl4mt_train_forward.1} parent=0 // pred_check_branch
    %88 = sbr.rel (0) target = $region113
  $region112: #{dl4mt_train_forward.1} parent=0 // pred_region
    _
  $region113: #{dl4mt_train_forward.1} parent=0 // pred_fallthru
    _
  %v90 = vld [vmem:[%s0] sm:$0xff]
  %v91 = vld [vmem:[%s0 + $0x8] sm:$0xff]
  %v92 = vpack.c.bf16 %v91, %v90
  %v93 = vld [vmem:[%s4] sm:$0xff]
  %v94 = vld [vmem:[%s4 + $0x8] sm:$0xff]
  %v95 = vld [vmem:[%s4 + $0x10] sm:$0xff]
  %v96 = vld [vmem:[%s4 + $0x18] sm:$0xff]
  %v97 = vld [vmem:[%s4 + $0x20] sm:$0xff]
  %v98 = vld [vmem:[%s4 + $0x28] sm:$0xff]
  %v99 = vld [vmem:[%s4 + $0x30] sm:$0xff]
  %v100 = vld [vmem:[%s4 + $0x38] sm:$0xff]
  %v101 = vld [vmem:[%s5] sm:$0x3]
  %v103 = vlaneseq
  %v104 = vshrl.u32 %v103, 7
  %v105 = vsub.s32 0, %v104
  %v106 = vrot.slane %v101, %v105
  %v107 = vlaneseq
  %v108 = vshrl.u32 %v107, 7
  %v109 = vsub.s32 1, %v108
  %v110 = vrot.slane %v101, %v109
  %v121 = vunpack.c.l.b16 %v93
  %v122 = vunpack.c.h.b16 %v93
  %v123 = vunpack.c.l.b16 %v94
  %v124 = vunpack.c.h.b16 %v94
  %v125 = vunpack.c.l.b16 %v95
  %v126 = vunpack.c.h.b16 %v95
  %v127 = vunpack.c.l.b16 %v96
  %v128 = vunpack.c.h.b16 %v96
  %v129 = vunpack.c.l.b16 %v97
  %v130 = vunpack.c.h.b16 %v97
  %v131 = vunpack.c.l.b16 %v98
  %v132 = vunpack.c.h.b16 %v98
  %v133 = vunpack.c.l.b16 %v99
  %v134 = vunpack.c.h.b16 %v99
  %v135 = vunpack.c.l.b16 %v100
  %v136 = vunpack.c.h.b16 %v100
  %v137 = vpack.c.b16 %v123, %v121
  %v138 = vpack.c.b16 %v124, %v122
  %v139 = vpack.c.b16 %v127, %v125
  %v140 = vpack.c.b16 %v128, %v126
  %v141 = vpack.c.b16 %v131, %v129
  %v142 = vpack.c.b16 %v132, %v130
  %v143 = vpack.c.b16 %v135, %v133
  %v144 = vpack.c.b16 %v136, %v134
  %vm153 = vcmask 523264
  %v155 = vsel %vm153, %v92, 0
  %157 = vmatprep.subr.bf16.mxu0 0
  %158 = vmatpush1.bf16.msra.mxu0 0
  %159 = vmatprep.subr.bf16.mxu0 0
  %160 = vmatpush1.bf16.msra.mxu0 0
  %161 = vmatprep.subr.bf16.mxu0 0
  %162 = vmatpush1.bf16.msra.mxu0 0
  %163 = vmatprep.subr.bf16.mxu0 0
  %164 = vmatpush1.bf16.msra.mxu0 0
  %165 = vmatprep.subr.bf16.mxu0 %v144
  %166 = vmatpush1.bf16.msra.mxu0 %v143
  %167 = vmatprep.subr.bf16.mxu0 %v142
  %168 = vmatpush1.bf16.msra.mxu0 %v141
  %169 = vmatprep.subr.bf16.mxu0 %v140
  %170 = vmatpush1.bf16.msra.mxu0 %v139
  %171 = vmatprep.subr.bf16.mxu0 %v138
  %172 = vmatpush1.bf16.msra.mxu0 %v137
  %173 = vmatprep.subr.bf16.mxu0 0
  %174 = vmatpush2.bf16.msra.mxu0 0
  %175 = vmatprep.subr.bf16.mxu0 0
  %176 = vmatpush2.bf16.msra.mxu0 0
  %177 = vmatprep.subr.bf16.mxu0 0
  %178 = vmatpush2.bf16.msra.mxu0 0
  %179 = vmatprep.subr.bf16.mxu0 0
  %180 = vmatpush2.bf16.msra.mxu0 0
  %181 = vmatprep.subr.bf16.mxu0 0
  %182 = vmatpush2.bf16.msra.mxu0 0
  %183 = vmatprep.subr.bf16.mxu0 0
  %184 = vmatpush2.bf16.msra.mxu0 0
  %185 = vmatprep.subr.bf16.mxu0 0
  %186 = vmatpush2.bf16.msra.mxu0 0
  %187 = vmatprep.subr.bf16.mxu0 0
  %188 = vmatpush2.bf16.msra.mxu0 0
  %189 = vmatprep.mubr.bf16.mxu0 0
  %190 = vmatmul.mubr.bf16.gmra.mxu0 %v155
  %v191 = vpop.f32.mrf.mxu0
  %v192 = vadd.f32 %v106, %v191
  %v193 = vpop.f32.mrf.mxu0
  %v194 = vadd.f32 %v110, %v193
  %v195 = vpop.f32.mrf.mxu0
  %v196 = vadd.f32 %v106, %v195
  %v197 = vpop.f32.mrf.mxu0
  %v198 = vadd.f32 %v110, %v197
  %199 = vdwg.mxu0
  %v200 = vpack.c.bf16 0.0, 0.0
  %v201 = vld [vmem:[%s6] sm:$0xff]
  %v202 = vld [vmem:[%s6 + $0x8] sm:$0xff]
  %v203 = vld [vmem:[%s6 + $0x10] sm:$0xff]
  %v204 = vld [vmem:[%s6 + $0x18] sm:$0xff]
  %v205 = vld [vmem:[%s6 + $0x20] sm:$0xff]
  %v206 = vld [vmem:[%s6 + $0x28] sm:$0xff]
  %v207 = vld [vmem:[%s6 + $0x30] sm:$0xff]
  %v208 = vld [vmem:[%s6 + $0x38] sm:$0xff]
  %v209 = vld [vmem:[%s7] sm:$0x3]
  %v211 = vlaneseq
  %v212 = vshrl.u32 %v211, 7
  %v213 = vsub.s32 0, %v212
  %v214 = vrot.slane %v209, %v213
  %v215 = vlaneseq
  %v216 = vshrl.u32 %v215, 7
  %v217 = vsub.s32 1, %v216
  %v218 = vrot.slane %v209, %v217
  %v229 = vunpack.c.l.b16 %v201
  %v230 = vunpack.c.h.b16 %v201
  %v231 = vunpack.c.l.b16 %v202
  %v232 = vunpack.c.h.b16 %v202
  %v233 = vunpack.c.l.b16 %v203
  %v234 = vunpack.c.h.b16 %v203
  %v235 = vunpack.c.l.b16 %v204
  %v236 = vunpack.c.h.b16 %v204
  %v237 = vunpack.c.l.b16 %v205
  %v238 = vunpack.c.h.b16 %v205
  %v239 = vunpack.c.l.b16 %v206
  %v240 = vunpack.c.h.b16 %v206
  %v241 = vunpack.c.l.b16 %v207
  %v242 = vunpack.c.h.b16 %v207
  %v243 = vunpack.c.l.b16 %v208
  %v244 = vunpack.c.h.b16 %v208
  %v245 = vpack.c.b16 %v231, %v229
  %v246 = vpack.c.b16 %v232, %v230
  %v247 = vpack.c.b16 %v235, %v233
  %v248 = vpack.c.b16 %v236, %v234
  %v249 = vpack.c.b16 %v239, %v237
  %v250 = vpack.c.b16 %v240, %v238
  %v251 = vpack.c.b16 %v243, %v241
  %v252 = vpack.c.b16 %v244, %v242
  %v262 = vsel %vm153, %v200, 0
  %264 = vmatprep.subr.bf16.mxu0 0
  %265 = vmatpush1.bf16.msra.mxu0 0
  %266 = vmatprep.subr.bf16.mxu0 0
  %267 = vmatpush1.bf16.msra.mxu0 0
  %268 = vmatprep.subr.bf16.mxu0 0
  %269 = vmatpush1.bf16.msra.mxu0 0
  %270 = vmatprep.subr.bf16.mxu0 0
  %271 = vmatpush1.bf16.msra.mxu0 0
  %272 = vmatprep.subr.bf16.mxu0 %v252
  %273 = vmatpush1.bf16.msra.mxu0 %v251
  %274 = vmatprep.subr.bf16.mxu0 %v250
  %275 = vmatpush1.bf16.msra.mxu0 %v249
  %276 = vmatprep.subr.bf16.mxu0 %v248
  %277 = vmatpush1.bf16.msra.mxu0 %v247
  %278 = vmatprep.subr.bf16.mxu0 %v246
  %279 = vmatpush1.bf16.msra.mxu0 %v245
  %280 = vmatprep.subr.bf16.mxu0 0
  %281 = vmatpush2.bf16.msra.mxu0 0
  %282 = vmatprep.subr.bf16.mxu0 0
  %283 = vmatpush2.bf16.msra.mxu0 0
  %284 = vmatprep.subr.bf16.mxu0 0
  %285 = vmatpush2.bf16.msra.mxu0 0
  %286 = vmatprep.subr.bf16.mxu0 0
  %287 = vmatpush2.bf16.msra.mxu0 0
  %288 = vmatprep.subr.bf16.mxu0 0
  %289 = vmatpush2.bf16.msra.mxu0 0
  %290 = vmatprep.subr.bf16.mxu0 0
  %291 = vmatpush2.bf16.msra.mxu0 0
  %292 = vmatprep.subr.bf16.mxu0 0
  %293 = vmatpush2.bf16.msra.mxu0 0
  %294 = vmatprep.subr.bf16.mxu0 0
  %295 = vmatpush2.bf16.msra.mxu0 0
  %296 = vmatprep.mubr.bf16.mxu0 0
  %297 = vmatmul.mubr.bf16.gmra.mxu0 %v262
  %v298 = vpop.f32.mrf.mxu0
  %v299 = vadd.f32 %v214, %v298
  %v300 = vpop.f32.mrf.mxu0
  %v301 = vadd.f32 %v218, %v300
  %v302 = vpop.f32.mrf.mxu0
  %v303 = vpop.f32.mrf.mxu0
  %304 = vdwg.mxu0
  %v305 = vadd.f32 %v192, %v299
  %v306 = vxor.u32 %v305, 2147483648
  %v307 = vmul.f32 %v306, 1.442695
  %v308 = vpow.pop %v307
  %v309 = vadd.f32 %v308, 1.0
  %v310 = vrcp.pop %v309
  %v311 = vmul.f32 1.0, %v310
  %313 = vrot.lane.b32.xlu0 %v299, 64
  %v314 = vpop.permute.xlu0 %313
  %v316 = vmul.f32 %v311, %v314
  %318 = vrot.lane.b32.xlu0 %v316, 64
  %v319 = vpop.permute.xlu0 %318
  %v321 = vadd.f32 %v192, %v319
  %v322 = vtanh.pop %v321
  %v323 = vsub.f32 1.0, %v311
  %325 = vrot.lane.b32.xlu0 %v322, 96
  %v326 = vpop.permute.xlu0 %325
  %v328 = vmul.f32 %v323, %v326
  %v329 = vmul.f32 %v311, 0.0
  %v330 = vadd.f32 %v328, %v329
  %v331 = vrot.slane %v299, 2
  %v333 = vadd.f32 %v196, %v331
  %v334 = vxor.u32 %v333, 2147483648
  %v335 = vmul.f32 %v334, 1.442695
  %v336 = vpow.pop %v335
  %v337 = vadd.f32 %v336, 1.0
  %v338 = vrcp.pop %v337
  %v339 = vmul.f32 1.0, %v338
  %v341 = vrot.slane %v301, 2
  %v343 = vadd.f32 %v198, %v341
  %v344 = vxor.u32 %v343, 2147483648
  %v345 = vmul.f32 %v344, 1.442695
  %v346 = vpow.pop %v345
  %v347 = vadd.f32 %v346, 1.0
  %v348 = vrcp.pop %v347
  %v349 = vmul.f32 1.0, %v348
  %350 = vrot.lane.b32.xlu0 %v341, 64
  %v351 = vpop.permute.xlu0 %350
  %v353 = vmul.f32 %v339, %v351
  %355 = vrot.lane.b32.xlu0 %v353, 64
  %v356 = vpop.permute.xlu0 %355
  %v358 = vadd.f32 %v198, %v356
  %v359 = vtanh.pop %v358
  %v360 = vsub.f32 1.0, %v349
  %362 = vrot.lane.b32.xlu0 %v359, 96
  %v363 = vpop.permute.xlu0 %362
  %v365 = vmul.f32 %v360, %v363
  %v366 = vmul.f32 %v349, 0.0
  %v367 = vadd.f32 %v365, %v366
  %369 = vrot.lane.b32.xlu0 %v330, 96
  %v370 = vpop.permute.xlu0 %369
  %vm372 = vcmask 254976
  %373 = vst.msk [vmem:[#allocation2] sm:$0x3] %vm372, %v370
  %375 = vrot.lane.b32.xlu0 %v367, 32
  %v376 = vpop.permute.xlu0 %375
  %vm378 = vcmask 523526
  %379 = vst.msk [vmem:[#allocation2 + $0x8] sm:$0xc0] %vm378, %v376
  %v380 = vrot.slane %v367, 6
  %381 = vrot.lane.b32.xlu0 %v380, 32
  %v382 = vpop.permute.xlu0 %381
  %vm384 = vcmask 261120
  %v385 = vsel %vm384, %v370, %v382
  %v386 = vpack.c.bf16 %v385, %v385
  %v387 = vld [vmem:[%s6] sm:$0xff]
  %v388 = vld [vmem:[%s6 + $0x8] sm:$0xff]
  %v389 = vld [vmem:[%s6 + $0x10] sm:$0xff]
  %v390 = vld [vmem:[%s6 + $0x18] sm:$0xff]
  %v391 = vld [vmem:[%s6 + $0x20] sm:$0xff]
  %v392 = vld [vmem:[%s6 + $0x28] sm:$0xff]
  %v393 = vld [vmem:[%s6 + $0x30] sm:$0xff]
  %v394 = vld [vmem:[%s6 + $0x38] sm:$0xff]
  %v395 = vld [vmem:[%s7] sm:$0x3]
  %v397 = vlaneseq
  %v398 = vshrl.u32 %v397, 7
  %v399 = vsub.s32 0, %v398
  %v400 = vrot.slane %v395, %v399
  %v401 = vlaneseq
  %v402 = vshrl.u32 %v401, 7
  %v403 = vsub.s32 1, %v402
  %v404 = vrot.slane %v395, %v403
  %v415 = vunpack.c.l.b16 %v387
  %v416 = vunpack.c.h.b16 %v387
  %v417 = vunpack.c.l.b16 %v388
  %v418 = vunpack.c.h.b16 %v388
  %v419 = vunpack.c.l.b16 %v389
  %v420 = vunpack.c.h.b16 %v389
  %v421 = vunpack.c.l.b16 %v390
  %v422 = vunpack.c.h.b16 %v390
  %v423 = vunpack.c.l.b16 %v391
  %v424 = vunpack.c.h.b16 %v391
  %v425 = vunpack.c.l.b16 %v392
  %v426 = vunpack.c.h.b16 %v392
  %v427 = vunpack.c.l.b16 %v393
  %v428 = vunpack.c.h.b16 %v393
  %v429 = vunpack.c.l.b16 %v394
  %v430 = vunpack.c.h.b16 %v394
  %v431 = vpack.c.b16 %v417, %v415
  %v432 = vpack.c.b16 %v418, %v416
  %v433 = vpack.c.b16 %v421, %v419
  %v434 = vpack.c.b16 %v422, %v420
  %v435 = vpack.c.b16 %v425, %v423
  %v436 = vpack.c.b16 %v426, %v424
  %v437 = vpack.c.b16 %v429, %v427
  %v438 = vpack.c.b16 %v430, %v428
  %v448 = vsel %vm153, %v386, 0
  %450 = vmatprep.subr.bf16.mxu0 0
  %451 = vmatpush1.bf16.msra.mxu0 0
  %452 = vmatprep.subr.bf16.mxu0 0
  %453 = vmatpush1.bf16.msra.mxu0 0
  %454 = vmatprep.subr.bf16.mxu0 0
  %455 = vmatpush1.bf16.msra.mxu0 0
  %456 = vmatprep.subr.bf16.mxu0 0
  %457 = vmatpush1.bf16.msra.mxu0 0
  %458 = vmatprep.subr.bf16.mxu0 %v438
  %459 = vmatpush1.bf16.msra.mxu0 %v437
  %460 = vmatprep.subr.bf16.mxu0 %v436
  %461 = vmatpush1.bf16.msra.mxu0 %v435
  %462 = vmatprep.subr.bf16.mxu0 %v434
  %463 = vmatpush1.bf16.msra.mxu0 %v433
  %464 = vmatprep.subr.bf16.mxu0 %v432
  %465 = vmatpush1.bf16.msra.mxu0 %v431
  %466 = vmatprep.subr.bf16.mxu0 0
  %467 = vmatpush2.bf16.msra.mxu0 0
  %468 = vmatprep.subr.bf16.mxu0 0
  %469 = vmatpush2.bf16.msra.mxu0 0
  %470 = vmatprep.subr.bf16.mxu0 0
  %471 = vmatpush2.bf16.msra.mxu0 0
  %472 = vmatprep.subr.bf16.mxu0 0
  %473 = vmatpush2.bf16.msra.mxu0 0
  %474 = vmatprep.subr.bf16.mxu0 0
  %475 = vmatpush2.bf16.msra.mxu0 0
  %476 = vmatprep.subr.bf16.mxu0 0
  %477 = vmatpush2.bf16.msra.mxu0 0
  %478 = vmatprep.subr.bf16.mxu0 0
  %479 = vmatpush2.bf16.msra.mxu0 0
  %480 = vmatprep.subr.bf16.mxu0 0
  %481 = vmatpush2.bf16.msra.mxu0 0
  %482 = vmatprep.mubr.bf16.mxu0 0
  %483 = vmatmul.mubr.bf16.gmra.mxu0 %v448
  %v484 = vpop.f32.mrf.mxu0
  %v485 = vadd.f32 %v400, %v484
  %v486 = vpop.f32.mrf.mxu0
  %v487 = vadd.f32 %v404, %v486
  %v488 = vpop.f32.mrf.mxu0
  %v489 = vpop.f32.mrf.mxu0
  %490 = vdwg.mxu0
  %v492 = vrot.slane %v485, 6
  %v494 = vadd.f32 %v192, %v492
  %v495 = vxor.u32 %v494, 2147483648
  %v496 = vmul.f32 %v495, 1.442695
  %v497 = vpow.pop %v496
  %v498 = vadd.f32 %v497, 1.0
  %v499 = vrcp.pop %v498
  %v500 = vmul.f32 1.0, %v499
  %501 = vrot.lane.b32.xlu0 %v492, 64
  %v502 = vpop.permute.xlu0 %501
  %v504 = vmul.f32 %v500, %v502
  %506 = vrot.lane.b32.xlu0 %v504, 64
  %v507 = vpop.permute.xlu0 %506
  %v509 = vadd.f32 %v192, %v507
  %v510 = vtanh.pop %v509
  %v511 = vsub.f32 1.0, %v500
  %513 = vrot.lane.b32.xlu0 %v510, 96
  %v514 = vpop.permute.xlu0 %513
  %v516 = vmul.f32 %v511, %v514
  %v517 = vrot.slane %v330, 6
  %v519 = vmul.f32 %v500, %v517
  %v520 = vadd.f32 %v516, %v519
  %v521 = vrot.slane %v485, 4
  %v523 = vadd.f32 %v196, %v521
  %v524 = vxor.u32 %v523, 2147483648
  %v525 = vmul.f32 %v524, 1.442695
  %v526 = vpow.pop %v525
  %v527 = vadd.f32 %v526, 1.0
  %v528 = vrcp.pop %v527
  %v529 = vmul.f32 1.0, %v528
  %v531 = vrot.slane %v487, 4
  %v533 = vadd.f32 %v198, %v531
  %v534 = vxor.u32 %v533, 2147483648
  %v535 = vmul.f32 %v534, 1.442695
  %v536 = vpow.pop %v535
  %v537 = vadd.f32 %v536, 1.0
  %v538 = vrcp.pop %v537
  %v539 = vmul.f32 1.0, %v538
  %540 = vrot.lane.b32.xlu0 %v531, 64
  %v541 = vpop.permute.xlu0 %540
  %v543 = vmul.f32 %v529, %v541
  %545 = vrot.lane.b32.xlu0 %v543, 64
  %v546 = vpop.permute.xlu0 %545
  %v548 = vadd.f32 %v198, %v546
  %v549 = vtanh.pop %v548
  %v550 = vsub.f32 1.0, %v539
  %552 = vrot.lane.b32.xlu0 %v549, 96
  %v553 = vpop.permute.xlu0 %552
  %v555 = vmul.f32 %v550, %v553
  %v556 = vrot.slane %v367, 2
  %v558 = vmul.f32 %v539, %v556
  %v559 = vadd.f32 %v555, %v558
  %561 = vrot.lane.b32.xlu0 %v520, 96
  %v562 = vpop.permute.xlu0 %561
  %vm564 = vcmask 257026
  %565 = vst.msk [vmem:[#allocation2] sm:$0xc] %vm564, %v562
  %567 = vrot.lane.b32.xlu0 %v559, 32
  %v568 = vpop.permute.xlu0 %567
  %vm570 = vcmask 521476
  %571 = vst.msk [vmem:[#allocation2 + $0x8] sm:$0x30] %vm570, %v568
  %v572 = vrot.slane %v559, 2
  %573 = vrot.lane.b32.xlu0 %v572, 32
  %v574 = vpop.permute.xlu0 %573
  %v576 = vsel %vm384, %v562, %v574
  %v577 = vpack.c.bf16 %v576, %v576
  %v578 = vld [vmem:[%s6] sm:$0xff]
  %v579 = vld [vmem:[%s6 + $0x8] sm:$0xff]
  %v580 = vld [vmem:[%s6 + $0x10] sm:$0xff]
  %v581 = vld [vmem:[%s6 + $0x18] sm:$0xff]
  %v582 = vld [vmem:[%s6 + $0x20] sm:$0xff]
  %v583 = vld [vmem:[%s6 + $0x28] sm:$0xff]
  %v584 = vld [vmem:[%s6 + $0x30] sm:$0xff]
  %v585 = vld [vmem:[%s6 + $0x38] sm:$0xff]
  %v586 = vld [vmem:[%s7] sm:$0x3]
  %v588 = vlaneseq
  %v589 = vshrl.u32 %v588, 7
  %v590 = vsub.s32 0, %v589
  %v591 = vrot.slane %v586, %v590
  %v592 = vlaneseq
  %v593 = vshrl.u32 %v592, 7
  %v594 = vsub.s32 1, %v593
  %v595 = vrot.slane %v586, %v594
  %v599 = vrot.slane %v577, 1
  %v608 = vunpack.c.l.b16 %v578
  %v609 = vunpack.c.h.b16 %v578
  %v610 = vunpack.c.l.b16 %v579
  %v611 = vunpack.c.h.b16 %v579
  %v612 = vunpack.c.l.b16 %v580
  %v613 = vunpack.c.h.b16 %v580
  %v614 = vunpack.c.l.b16 %v581
  %v615 = vunpack.c.h.b16 %v581
  %v616 = vunpack.c.l.b16 %v582
  %v617 = vunpack.c.h.b16 %v582
  %v618 = vunpack.c.l.b16 %v583
  %v619 = vunpack.c.h.b16 %v583
  %v620 = vunpack.c.l.b16 %v584
  %v621 = vunpack.c.h.b16 %v584
  %v622 = vunpack.c.l.b16 %v585
  %v623 = vunpack.c.h.b16 %v585
  %v624 = vpack.c.b16 %v610, %v608
  %v625 = vpack.c.b16 %v611, %v609
  %v626 = vpack.c.b16 %v614, %v612
  %v627 = vpack.c.b16 %v615, %v613
  %v628 = vpack.c.b16 %v618, %v616
  %v629 = vpack.c.b16 %v619, %v617
  %v630 = vpack.c.b16 %v622, %v620
  %v631 = vpack.c.b16 %v623, %v621
  %v641 = vsel %vm153, %v599, 0
  %643 = vmatprep.subr.bf16.mxu0 0
  %644 = vmatpush1.bf16.msra.mxu0 0
  %645 = vmatprep.subr.bf16.mxu0 0
  %646 = vmatpush1.bf16.msra.mxu0 0
  %647 = vmatprep.subr.bf16.mxu0 0
  %648 = vmatpush1.bf16.msra.mxu0 0
  %649 = vmatprep.subr.bf16.mxu0 0
  %650 = vmatpush1.bf16.msra.mxu0 0
  %651 = vmatprep.subr.bf16.mxu0 %v631
  %652 = vmatpush1.bf16.msra.mxu0 %v630
  %653 = vmatprep.subr.bf16.mxu0 %v629
  %654 = vmatpush1.bf16.msra.mxu0 %v628
  %655 = vmatprep.subr.bf16.mxu0 %v627
  %656 = vmatpush1.bf16.msra.mxu0 %v626
  %657 = vmatprep.subr.bf16.mxu0 %v625
  %658 = vmatpush1.bf16.msra.mxu0 %v624
  %659 = vmatprep.subr.bf16.mxu0 0
  %660 = vmatpush2.bf16.msra.mxu0 0
  %661 = vmatprep.subr.bf16.mxu0 0
  %662 = vmatpush2.bf16.msra.mxu0 0
  %663 = vmatprep.subr.bf16.mxu0 0
  %664 = vmatpush2.bf16.msra.mxu0 0
  %665 = vmatprep.subr.bf16.mxu0 0
  %666 = vmatpush2.bf16.msra.mxu0 0
  %667 = vmatprep.subr.bf16.mxu0 0
  %668 = vmatpush2.bf16.msra.mxu0 0
  %669 = vmatprep.subr.bf16.mxu0 0
  %670 = vmatpush2.bf16.msra.mxu0 0
  %671 = vmatprep.subr.bf16.mxu0 0
  %672 = vmatpush2.bf16.msra.mxu0 0
  %673 = vmatprep.subr.bf16.mxu0 0
  %674 = vmatpush2.bf16.msra.mxu0 0
  %675 = vmatprep.mubr.bf16.mxu0 0
  %676 = vmatmul.mubr.bf16.gmra.mxu0 %v641
  %v677 = vpop.f32.mrf.mxu0
  %v678 = vadd.f32 %v591, %v677
  %v679 = vpop.f32.mrf.mxu0
  %v680 = vadd.f32 %v595, %v679
  %v681 = vpop.f32.mrf.mxu0
  %v682 = vpop.f32.mrf.mxu0
  %683 = vdwg.mxu0
  %v685 = vrot.slane %v678, 4
  %v687 = vadd.f32 %v192, %v685
  %v688 = vxor.u32 %v687, 2147483648
  %v689 = vmul.f32 %v688, 1.442695
  %v690 = vpow.pop %v689
  %v691 = vadd.f32 %v690, 1.0
  %v692 = vrcp.pop %v691
  %v693 = vmul.f32 1.0, %v692
  %694 = vrot.lane.b32.xlu0 %v685, 64
  %v695 = vpop.permute.xlu0 %694
  %v697 = vmul.f32 %v693, %v695
  %699 = vrot.lane.b32.xlu0 %v697, 64
  %v700 = vpop.permute.xlu0 %699
  %v702 = vadd.f32 %v192, %v700
  %v703 = vtanh.pop %v702
  %v704 = vsub.f32 1.0, %v693
  %706 = vrot.lane.b32.xlu0 %v703, 96
  %v707 = vpop.permute.xlu0 %706
  %v709 = vmul.f32 %v704, %v707
  %v710 = vrot.slane %v520, 6
  %v712 = vmul.f32 %v693, %v710
  %v713 = vadd.f32 %v709, %v712
  %v714 = vrot.slane %v678, 6
  %v716 = vadd.f32 %v196, %v714
  %v717 = vxor.u32 %v716, 2147483648
  %v718 = vmul.f32 %v717, 1.442695
  %v719 = vpow.pop %v718
  %v720 = vadd.f32 %v719, 1.0
  %v721 = vrcp.pop %v720
  %v722 = vmul.f32 1.0, %v721
  %v724 = vrot.slane %v680, 6
  %v726 = vadd.f32 %v198, %v724
  %v727 = vxor.u32 %v726, 2147483648
  %v728 = vmul.f32 %v727, 1.442695
  %v729 = vpow.pop %v728
  %v730 = vadd.f32 %v729, 1.0
  %v731 = vrcp.pop %v730
  %v732 = vmul.f32 1.0, %v731
  %733 = vrot.lane.b32.xlu0 %v724, 64
  %v734 = vpop.permute.xlu0 %733
  %v736 = vmul.f32 %v722, %v734
  %738 = vrot.lane.b32.xlu0 %v736, 64
  %v739 = vpop.permute.xlu0 %738
  %v741 = vadd.f32 %v198, %v739
  %v742 = vtanh.pop %v741
  %v743 = vsub.f32 1.0, %v732
  %745 = vrot.lane.b32.xlu0 %v742, 96
  %v746 = vpop.permute.xlu0 %745
  %v748 = vmul.f32 %v743, %v746
  %v750 = vmul.f32 %v732, %v572
  %v751 = vadd.f32 %v748, %v750
  %753 = vrot.lane.b32.xlu0 %v713, 96
  %v754 = vpop.permute.xlu0 %753
  %vm756 = vcmask 259076
  %757 = vst.msk [vmem:[#allocation2] sm:$0x30] %vm756, %v754
  %759 = vrot.lane.b32.xlu0 %v751, 32
  %v760 = vpop.permute.xlu0 %759
  %vm762 = vcmask 519426
  %763 = vst.msk [vmem:[#allocation2 + $0x8] sm:$0xc] %vm762, %v760
  %v764 = vrot.slane %v751, 6
  %765 = vrot.lane.b32.xlu0 %v764, 32
  %v766 = vpop.permute.xlu0 %765
  %v768 = vsel %vm384, %v754, %v766
  %v769 = vpack.c.bf16 %v768, %v768
  %v770 = vld [vmem:[%s6] sm:$0xff]
  %v771 = vld [vmem:[%s6 + $0x8] sm:$0xff]
  %v772 = vld [vmem:[%s6 + $0x10] sm:$0xff]
  %v773 = vld [vmem:[%s6 + $0x18] sm:$0xff]
  %v774 = vld [vmem:[%s6 + $0x20] sm:$0xff]
  %v775 = vld [vmem:[%s6 + $0x28] sm:$0xff]
  %v776 = vld [vmem:[%s6 + $0x30] sm:$0xff]
  %v777 = vld [vmem:[%s6 + $0x38] sm:$0xff]
  %v778 = vld [vmem:[%s7] sm:$0x3]
  %v780 = vlaneseq
  %v781 = vshrl.u32 %v780, 7
  %v782 = vsub.s32 0, %v781
  %v783 = vrot.slane %v778, %v782
  %v784 = vlaneseq
  %v785 = vshrl.u32 %v784, 7
  %v786 = vsub.s32 1, %v785
  %v787 = vrot.slane %v778, %v786
  %v791 = vrot.slane %v769, 2
  %v800 = vunpack.c.l.b16 %v770
  %v801 = vunpack.c.h.b16 %v770
  %v802 = vunpack.c.l.b16 %v771
  %v803 = vunpack.c.h.b16 %v771
  %v804 = vunpack.c.l.b16 %v772
  %v805 = vunpack.c.h.b16 %v772
  %v806 = vunpack.c.l.b16 %v773
  %v807 = vunpack.c.h.b16 %v773
  %v808 = vunpack.c.l.b16 %v774
  %v809 = vunpack.c.h.b16 %v774
  %v810 = vunpack.c.l.b16 %v775
  %v811 = vunpack.c.h.b16 %v775
  %v812 = vunpack.c.l.b16 %v776
  %v813 = vunpack.c.h.b16 %v776
  %v814 = vunpack.c.l.b16 %v777
  %v815 = vunpack.c.h.b16 %v777
  %v816 = vpack.c.b16 %v802, %v800
  %v817 = vpack.c.b16 %v803, %v801
  %v818 = vpack.c.b16 %v806, %v804
  %v819 = vpack.c.b16 %v807, %v805
  %v820 = vpack.c.b16 %v810, %v808
  %v821 = vpack.c.b16 %v811, %v809
  %v822 = vpack.c.b16 %v814, %v812
  %v823 = vpack.c.b16 %v815, %v813
  %v833 = vsel %vm153, %v791, 0
  %835 = vmatprep.subr.bf16.mxu0 0
  %836 = vmatpush1.bf16.msra.mxu0 0
  %837 = vmatprep.subr.bf16.mxu0 0
  %838 = vmatpush1.bf16.msra.mxu0 0
  %839 = vmatprep.subr.bf16.mxu0 0
  %840 = vmatpush1.bf16.msra.mxu0 0
  %841 = vmatprep.subr.bf16.mxu0 0
  %842 = vmatpush1.bf16.msra.mxu0 0
  %843 = vmatprep.subr.bf16.mxu0 %v823
  %844 = vmatpush1.bf16.msra.mxu0 %v822
  %845 = vmatprep.subr.bf16.mxu0 %v821
  %846 = vmatpush1.bf16.msra.mxu0 %v820
  %847 = vmatprep.subr.bf16.mxu0 %v819
  %848 = vmatpush1.bf16.msra.mxu0 %v818
  %849 = vmatprep.subr.bf16.mxu0 %v817
  %850 = vmatpush1.bf16.msra.mxu0 %v816
  %851 = vmatprep.subr.bf16.mxu0 0
  %852 = vmatpush2.bf16.msra.mxu0 0
  %853 = vmatprep.subr.bf16.mxu0 0
  %854 = vmatpush2.bf16.msra.mxu0 0
  %855 = vmatprep.subr.bf16.mxu0 0
  %856 = vmatpush2.bf16.msra.mxu0 0
  %857 = vmatprep.subr.bf16.mxu0 0
  %858 = vmatpush2.bf16.msra.mxu0 0
  %859 = vmatprep.subr.bf16.mxu0 0
  %860 = vmatpush2.bf16.msra.mxu0 0
  %861 = vmatprep.subr.bf16.mxu0 0
  %862 = vmatpush2.bf16.msra.mxu0 0
  %863 = vmatprep.subr.bf16.mxu0 0
  %864 = vmatpush2.bf16.msra.mxu0 0
  %865 = vmatprep.subr.bf16.mxu0 0
  %866 = vmatpush2.bf16.msra.mxu0 0
  %867 = vmatprep.mubr.bf16.mxu0 0
  %868 = vmatmul.mubr.bf16.gmra.mxu0 %v833
  %v869 = vpop.f32.mrf.mxu0
  %v870 = vadd.f32 %v783, %v869
  %v871 = vpop.f32.mrf.mxu0
  %v872 = vadd.f32 %v787, %v871
  %v873 = vpop.f32.mrf.mxu0
  %v874 = vpop.f32.mrf.mxu0
  %875 = vdwg.mxu0
  %v877 = vrot.slane %v870, 2
  %v879 = vadd.f32 %v192, %v877
  %v880 = vxor.u32 %v879, 2147483648
  %v881 = vmul.f32 %v880, 1.442695
  %v882 = vpow.pop %v881
  %v883 = vadd.f32 %v882, 1.0
  %v884 = vrcp.pop %v883
  %v885 = vmul.f32 1.0, %v884
  %886 = vrot.lane.b32.xlu0 %v877, 64
  %v887 = vpop.permute.xlu0 %886
  %v889 = vmul.f32 %v885, %v887
  %891 = vrot.lane.b32.xlu0 %v889, 64
  %v892 = vpop.permute.xlu0 %891
  %v894 = vadd.f32 %v192, %v892
  %v895 = vtanh.pop %v894
  %v896 = vsub.f32 1.0, %v885
  %898 = vrot.lane.b32.xlu0 %v895, 96
  %v899 = vpop.permute.xlu0 %898
  %v901 = vmul.f32 %v896, %v899
  %v902 = vrot.slane %v713, 6
  %v904 = vmul.f32 %v885, %v902
  %v905 = vadd.f32 %v901, %v904
  %v906 = vadd.f32 %v196, %v870
  %v907 = vxor.u32 %v906, 2147483648
  %v908 = vmul.f32 %v907, 1.442695
  %v909 = vpow.pop %v908
  %v910 = vadd.f32 %v909, 1.0
  %v911 = vrcp.pop %v910
  %v912 = vmul.f32 1.0, %v911
  %v913 = vadd.f32 %v198, %v872
  %v914 = vxor.u32 %v913, 2147483648
  %v915 = vmul.f32 %v914, 1.442695
  %v916 = vpow.pop %v915
  %v917 = vadd.f32 %v916, 1.0
  %v918 = vrcp.pop %v917
  %v919 = vmul.f32 1.0, %v918
  %921 = vrot.lane.b32.xlu0 %v872, 64
  %v922 = vpop.permute.xlu0 %921
  %v924 = vmul.f32 %v912, %v922
  %926 = vrot.lane.b32.xlu0 %v924, 64
  %v927 = vpop.permute.xlu0 %926
  %v929 = vadd.f32 %v198, %v927
  %v930 = vtanh.pop %v929
  %v931 = vsub.f32 1.0, %v919
  %933 = vrot.lane.b32.xlu0 %v930, 96
  %v934 = vpop.permute.xlu0 %933
  %v936 = vmul.f32 %v931, %v934
  %v937 = vrot.slane %v751, 2
  %v939 = vmul.f32 %v919, %v937
  %v940 = vadd.f32 %v936, %v939
  %942 = vrot.lane.b32.xlu0 %v905, 96
  %v943 = vpop.permute.xlu0 %942
  %vm945 = vcmask 261126
  %946 = vst.msk [vmem:[#allocation2] sm:$0xc0] %vm945, %v943
  %948 = vrot.lane.b32.xlu0 %v940, 32
  %v949 = vpop.permute.xlu0 %948
  %vm951 = vcmask 517376
  %952 = vst.msk [vmem:[#allocation2 + $0x8] sm:$0x3] %vm951, %v949
  %v953 = vrot.slane %v940, 2
  %954 = vrot.lane.b32.xlu0 %v953, 32
  %v955 = vpop.permute.xlu0 %954
  %v957 = vsel %vm384, %v943, %v955
  %v958 = vpack.c.bf16 %v957, %v957
  %v959 = vld [vmem:[%s6] sm:$0xff]
  %v960 = vld [vmem:[%s6 + $0x8] sm:$0xff]
  %v961 = vld [vmem:[%s6 + $0x10] sm:$0xff]
  %v962 = vld [vmem:[%s6 + $0x18] sm:$0xff]
  %v963 = vld [vmem:[%s6 + $0x20] sm:$0xff]
  %v964 = vld [vmem:[%s6 + $0x28] sm:$0xff]
  %v965 = vld [vmem:[%s6 + $0x30] sm:$0xff]
  %v966 = vld [vmem:[%s6 + $0x38] sm:$0xff]
  %v967 = vld [vmem:[%s7] sm:$0x3]
  %v969 = vlaneseq
  %v970 = vshrl.u32 %v969, 7
  %v971 = vsub.s32 0, %v970
  %v972 = vrot.slane %v967, %v971
  %v973 = vlaneseq
  %v974 = vshrl.u32 %v973, 7
  %v975 = vsub.s32 1, %v974
  %v976 = vrot.slane %v967, %v975
  %v980 = vrot.slane %v958, 3
  %v989 = vunpack.c.l.b16 %v959
  %v990 = vunpack.c.h.b16 %v959
  %v991 = vunpack.c.l.b16 %v960
  %v992 = vunpack.c.h.b16 %v960
  %v993 = vunpack.c.l.b16 %v961
  %v994 = vunpack.c.h.b16 %v961
  %v995 = vunpack.c.l.b16 %v962
  %v996 = vunpack.c.h.b16 %v962
  %v997 = vunpack.c.l.b16 %v963
  %v998 = vunpack.c.h.b16 %v963
  %v999 = vunpack.c.l.b16 %v964
  %v1000 = vunpack.c.h.b16 %v964
  %v1001 = vunpack.c.l.b16 %v965
  %v1002 = vunpack.c.h.b16 %v965
  %v1003 = vunpack.c.l.b16 %v966
  %v1004 = vunpack.c.h.b16 %v966
  %v1005 = vpack.c.b16 %v991, %v989
  %v1006 = vpack.c.b16 %v992, %v990
  %v1007 = vpack.c.b16 %v995, %v993
  %v1008 = vpack.c.b16 %v996, %v994
  %v1009 = vpack.c.b16 %v999, %v997
  %v1010 = vpack.c.b16 %v1000, %v998
  %v1011 = vpack.c.b16 %v1003, %v1001
  %v1012 = vpack.c.b16 %v1004, %v1002
  %v1022 = vsel %vm153, %v980, 0
  %1024 = vmatprep.subr.bf16.mxu0 0
  %1025 = vmatpush1.bf16.msra.mxu0 0
  %1026 = vmatprep.subr.bf16.mxu0 0
  %1027 = vmatpush1.bf16.msra.mxu0 0
  %1028 = vmatprep.subr.bf16.mxu0 0
  %1029 = vmatpush1.bf16.msra.mxu0 0
  %1030 = vmatprep.subr.bf16.mxu0 0
  %1031 = vmatpush1.bf16.msra.mxu0 0
  %1032 = vmatprep.subr.bf16.mxu0 %v1012
  %1033 = vmatpush1.bf16.msra.mxu0 %v1011
  %1034 = vmatprep.subr.bf16.mxu0 %v1010
  %1035 = vmatpush1.bf16.msra.mxu0 %v1009
  %1036 = vmatprep.subr.bf16.mxu0 %v1008
  %1037 = vmatpush1.bf16.msra.mxu0 %v1007
  %1038 = vmatprep.subr.bf16.mxu0 %v1006
  %1039 = vmatpush1.bf16.msra.mxu0 %v1005
  %1040 = vmatprep.subr.bf16.mxu0 0
  %1041 = vmatpush2.bf16.msra.mxu0 0
  %1042 = vmatprep.subr.bf16.mxu0 0
  %1043 = vmatpush2.bf16.msra.mxu0 0
  %1044 = vmatprep.subr.bf16.mxu0 0
  %1045 = vmatpush2.bf16.msra.mxu0 0
  %1046 = vmatprep.subr.bf16.mxu0 0
  %1047 = vmatpush2.bf16.msra.mxu0 0
  %1048 = vmatprep.subr.bf16.mxu0 0
  %1049 = vmatpush2.bf16.msra.mxu0 0
  %1050 = vmatprep.subr.bf16.mxu0 0
  %1051 = vmatpush2.bf16.msra.mxu0 0
  %1052 = vmatprep.subr.bf16.mxu0 0
  %1053 = vmatpush2.bf16.msra.mxu0 0
  %1054 = vmatprep.subr.bf16.mxu0 0
  %1055 = vmatpush2.bf16.msra.mxu0 0
  %1056 = vmatprep.mubr.bf16.mxu0 0
  %1057 = vmatmul.mubr.bf16.gmra.mxu0 %v1022
  %v1058 = vpop.f32.mrf.mxu0
  %v1059 = vadd.f32 %v972, %v1058
  %v1060 = vpop.f32.mrf.mxu0
  %v1061 = vadd.f32 %v976, %v1060
  %v1062 = vpop.f32.mrf.mxu0
  %v1063 = vpop.f32.mrf.mxu0
  %1064 = vdwg.mxu0
  %v1065 = vadd.f32 %v196, %v1059
  %v1066 = vxor.u32 %v1065, 2147483648
  %v1067 = vmul.f32 %v1066, 1.442695
  %v1068 = vpow.pop %v1067
  %v1069 = vadd.f32 %v1068, 1.0
  %v1070 = vrcp.pop %v1069
  %v1071 = vmul.f32 1.0, %v1070
  %1073 = vrot.lane.b32.xlu0 %v1059, 64
  %v1074 = vpop.permute.xlu0 %1073
  %v1076 = vmul.f32 %v1071, %v1074
  %1078 = vrot.lane.b32.xlu0 %v1076, 64
  %v1079 = vpop.permute.xlu0 %1078
  %v1081 = vadd.f32 %v196, %v1079
  %v1082 = vtanh.pop %v1081
  %v1083 = vsub.f32 1.0, %v1071
  %1085 = vrot.lane.b32.xlu0 %v1082, 96
  %v1086 = vpop.permute.xlu0 %1085
  %v1088 = vmul.f32 %v1083, %v1086
  %v1089 = vrot.slane %v905, 6
  %v1091 = vmul.f32 %v1071, %v1089
  %v1092 = vadd.f32 %v1088, %v1091
  %v1093 = vrot.slane %v1059, 2
  %v1095 = vadd.f32 %v192, %v1093
  %v1096 = vxor.u32 %v1095, 2147483648
  %v1097 = vmul.f32 %v1096, 1.442695
  %v1098 = vpow.pop %v1097
  %v1099 = vadd.f32 %v1098, 1.0
  %v1100 = vrcp.pop %v1099
  %v1101 = vmul.f32 1.0, %v1100
  %v1103 = vrot.slane %v1061, 2
  %v1105 = vadd.f32 %v194, %v1103
  %v1106 = vxor.u32 %v1105, 2147483648
  %v1107 = vmul.f32 %v1106, 1.442695
  %v1108 = vpow.pop %v1107
  %v1109 = vadd.f32 %v1108, 1.0
  %v1110 = vrcp.pop %v1109
  %v1111 = vmul.f32 1.0, %v1110
  %1112 = vrot.lane.b32.xlu0 %v1103, 64
  %v1113 = vpop.permute.xlu0 %1112
  %v1115 = vmul.f32 %v1101, %v1113
  %1117 = vrot.lane.b32.xlu0 %v1115, 64
  %v1118 = vpop.permute.xlu0 %1117
  %v1120 = vadd.f32 %v194, %v1118
  %v1121 = vtanh.pop %v1120
  %v1122 = vsub.f32 1.0, %v1111
  %1124 = vrot.lane.b32.xlu0 %v1121, 96
  %v1125 = vpop.permute.xlu0 %1124
  %v1127 = vmul.f32 %v1122, %v1125
  %v1129 = vmul.f32 %v1111, %v953
  %v1130 = vadd.f32 %v1127, %v1129
  %1132 = vrot.lane.b32.xlu0 %v1092, 96
  %v1133 = vpop.permute.xlu0 %1132
  %1135 = vst.msk [vmem:[#allocation2 + $0x8] sm:$0x3] %vm372, %v1133
  %1137 = vrot.lane.b32.xlu0 %v1130, 32
  %v1138 = vpop.permute.xlu0 %1137
  %1140 = vst.msk [vmem:[#allocation2] sm:$0xc0] %vm378, %v1138
  %v1141 = vrot.slane %v1130, 6
  %1142 = vrot.lane.b32.xlu0 %v1141, 32
  %v1143 = vpop.permute.xlu0 %1142
  %v1145 = vsel %vm384, %v1133, %v1143
  %v1146 = vpack.c.bf16 %v1145, %v1145
  %v1147 = vld [vmem:[%s6] sm:$0xff]
  %v1148 = vld [vmem:[%s6 + $0x8] sm:$0xff]
  %v1149 = vld [vmem:[%s6 + $0x10] sm:$0xff]
  %v1150 = vld [vmem:[%s6 + $0x18] sm:$0xff]
  %v1151 = vld [vmem:[%s6 + $0x20] sm:$0xff]
  %v1152 = vld [vmem:[%s6 + $0x28] sm:$0xff]
  %v1153 = vld [vmem:[%s6 + $0x30] sm:$0xff]
  %v1154 = vld [vmem:[%s6 + $0x38] sm:$0xff]
  %v1155 = vld [vmem:[%s7] sm:$0x3]
  %v1157 = vlaneseq
  %v1158 = vshrl.u32 %v1157, 7
  %v1159 = vsub.s32 0, %v1158
  %v1160 = vrot.slane %v1155, %v1159
  %v1161 = vlaneseq
  %v1162 = vshrl.u32 %v1161, 7
  %v1163 = vsub.s32 1, %v1162
  %v1164 = vrot.slane %v1155, %v1163
  %v1175 = vunpack.c.l.b16 %v1147
  %v1176 = vunpack.c.h.b16 %v1147
  %v1177 = vunpack.c.l.b16 %v1148
  %v1178 = vunpack.c.h.b16 %v1148
  %v1179 = vunpack.c.l.b16 %v1149
  %v1180 = vunpack.c.h.b16 %v1149
  %v1181 = vunpack.c.l.b16 %v1150
  %v1182 = vunpack.c.h.b16 %v1150
  %v1183 = vunpack.c.l.b16 %v1151
  %v1184 = vunpack.c.h.b16 %v1151
  %v1185 = vunpack.c.l.b16 %v1152
  %v1186 = vunpack.c.h.b16 %v1152
  %v1187 = vunpack.c.l.b16 %v1153
  %v1188 = vunpack.c.h.b16 %v1153
  %v1189 = vunpack.c.l.b16 %v1154
  %v1190 = vunpack.c.h.b16 %v1154
  %v1191 = vpack.c.b16 %v1177, %v1175
  %v1192 = vpack.c.b16 %v1178, %v1176
  %v1193 = vpack.c.b16 %v1181, %v1179
  %v1194 = vpack.c.b16 %v1182, %v1180
  %v1195 = vpack.c.b16 %v1185, %v1183
  %v1196 = vpack.c.b16 %v1186, %v1184
  %v1197 = vpack.c.b16 %v1189, %v1187
  %v1198 = vpack.c.b16 %v1190, %v1188
  %v1208 = vsel %vm153, %v1146, 0
  %1210 = vmatprep.subr.bf16.mxu0 0
  %1211 = vmatpush1.bf16.msra.mxu0 0
  %1212 = vmatprep.subr.bf16.mxu0 0
  %1213 = vmatpush1.bf16.msra.mxu0 0
  %1214 = vmatprep.subr.bf16.mxu0 0
  %1215 = vmatpush1.bf16.msra.mxu0 0
  %1216 = vmatprep.subr.bf16.mxu0 0
  %1217 = vmatpush1.bf16.msra.mxu0 0
  %1218 = vmatprep.subr.bf16.mxu0 %v1198
  %1219 = vmatpush1.bf16.msra.mxu0 %v1197
  %1220 = vmatprep.subr.bf16.mxu0 %v1196
  %1221 = vmatpush1.bf16.msra.mxu0 %v1195
  %1222 = vmatprep.subr.bf16.mxu0 %v1194
  %1223 = vmatpush1.bf16.msra.mxu0 %v1193
  %1224 = vmatprep.subr.bf16.mxu0 %v1192
  %1225 = vmatpush1.bf16.msra.mxu0 %v1191
  %1226 = vmatprep.subr.bf16.mxu0 0
  %1227 = vmatpush2.bf16.msra.mxu0 0
  %1228 = vmatprep.subr.bf16.mxu0 0
  %1229 = vmatpush2.bf16.msra.mxu0 0
  %1230 = vmatprep.subr.bf16.mxu0 0
  %1231 = vmatpush2.bf16.msra.mxu0 0
  %1232 = vmatprep.subr.bf16.mxu0 0
  %1233 = vmatpush2.bf16.msra.mxu0 0
  %1234 = vmatprep.subr.bf16.mxu0 0
  %1235 = vmatpush2.bf16.msra.mxu0 0
  %1236 = vmatprep.subr.bf16.mxu0 0
  %1237 = vmatpush2.bf16.msra.mxu0 0
  %1238 = vmatprep.subr.bf16.mxu0 0
  %1239 = vmatpush2.bf16.msra.mxu0 0
  %1240 = vmatprep.subr.bf16.mxu0 0
  %1241 = vmatpush2.bf16.msra.mxu0 0
  %1242 = vmatprep.mubr.bf16.mxu0 0
  %1243 = vmatmul.mubr.bf16.gmra.mxu0 %v1208
  %v1244 = vpop.f32.mrf.mxu0
  %v1245 = vadd.f32 %v1160, %v1244
  %v1246 = vpop.f32.mrf.mxu0
  %v1247 = vadd.f32 %v1164, %v1246
  %v1248 = vpop.f32.mrf.mxu0
  %v1249 = vpop.f32.mrf.mxu0
  %1250 = vdwg.mxu0
  %v1252 = vrot.slane %v1245, 6
  %v1254 = vadd.f32 %v196, %v1252
  %v1255 = vxor.u32 %v1254, 2147483648
  %v1256 = vmul.f32 %v1255, 1.442695
  %v1257 = vpow.pop %v1256
  %v1258 = vadd.f32 %v1257, 1.0
  %v1259 = vrcp.pop %v1258
  %v1260 = vmul.f32 1.0, %v1259
  %1261 = vrot.lane.b32.xlu0 %v1252, 64
  %v1262 = vpop.permute.xlu0 %1261
  %v1264 = vmul.f32 %v1260, %v1262
  %1266 = vrot.lane.b32.xlu0 %v1264, 64
  %v1267 = vpop.permute.xlu0 %1266
  %v1269 = vadd.f32 %v196, %v1267
  %v1270 = vtanh.pop %v1269
  %v1271 = vsub.f32 1.0, %v1260
  %1273 = vrot.lane.b32.xlu0 %v1270, 96
  %v1274 = vpop.permute.xlu0 %1273
  %v1276 = vmul.f32 %v1271, %v1274
  %v1277 = vrot.slane %v1092, 6
  %v1279 = vmul.f32 %v1260, %v1277
  %v1280 = vadd.f32 %v1276, %v1279
  %v1281 = vrot.slane %v1245, 4
  %v1283 = vadd.f32 %v192, %v1281
  %v1284 = vxor.u32 %v1283, 2147483648
  %v1285 = vmul.f32 %v1284, 1.442695
  %v1286 = vpow.pop %v1285
  %v1287 = vadd.f32 %v1286, 1.0
  %v1288 = vrcp.pop %v1287
  %v1289 = vmul.f32 1.0, %v1288
  %v1291 = vrot.slane %v1247, 4
  %v1293 = vadd.f32 %v194, %v1291
  %v1294 = vxor.u32 %v1293, 2147483648
  %v1295 = vmul.f32 %v1294, 1.442695
  %v1296 = vpow.pop %v1295
  %v1297 = vadd.f32 %v1296, 1.0
  %v1298 = vrcp.pop %v1297
  %v1299 = vmul.f32 1.0, %v1298
  %1300 = vrot.lane.b32.xlu0 %v1291, 64
  %v1301 = vpop.permute.xlu0 %1300
  %v1303 = vmul.f32 %v1289, %v1301
  %1305 = vrot.lane.b32.xlu0 %v1303, 64
  %v1306 = vpop.permute.xlu0 %1305
  %v1308 = vadd.f32 %v194, %v1306
  %v1309 = vtanh.pop %v1308
  %v1310 = vsub.f32 1.0, %v1299
  %1312 = vrot.lane.b32.xlu0 %v1309, 96
  %v1313 = vpop.permute.xlu0 %1312
  %v1315 = vmul.f32 %v1310, %v1313
  %v1316 = vrot.slane %v1130, 2
  %v1318 = vmul.f32 %v1299, %v1316
  %v1319 = vadd.f32 %v1315, %v1318
  %1321 = vrot.lane.b32.xlu0 %v1280, 96
  %v1322 = vpop.permute.xlu0 %1321
  %1324 = vst.msk [vmem:[#allocation2 + $0x8] sm:$0xc] %vm564, %v1322
  %1326 = vrot.lane.b32.xlu0 %v1319, 32
  %v1327 = vpop.permute.xlu0 %1326
  %1329 = vst.msk [vmem:[#allocation2] sm:$0x30] %vm570, %v1327
  %v1330 = vrot.slane %v1319, 2
  %1331 = vrot.lane.b32.xlu0 %v1330, 32
  %v1332 = vpop.permute.xlu0 %1331
  %v1334 = vsel %vm384, %v1322, %v1332
  %v1335 = vpack.c.bf16 %v1334, %v1334
  %v1336 = vld [vmem:[%s6] sm:$0xff]
  %v1337 = vld [vmem:[%s6 + $0x8] sm:$0xff]
  %v1338 = vld [vmem:[%s6 + $0x10] sm:$0xff]
  %v1339 = vld [vmem:[%s6 + $0x18] sm:$0xff]
  %v1340 = vld [vmem:[%s6 + $0x20] sm:$0xff]
  %v1341 = vld [vmem:[%s6 + $0x28] sm:$0xff]
  %v1342 = vld [vmem:[%s6 + $0x30] sm:$0xff]
  %v1343 = vld [vmem:[%s6 + $0x38] sm:$0xff]
  %v1344 = vld [vmem:[%s7] sm:$0x3]
  %v1346 = vlaneseq
  %v1347 = vshrl.u32 %v1346, 7
  %v1348 = vsub.s32 0, %v1347
  %v1349 = vrot.slane %v1344, %v1348
  %v1350 = vlaneseq
  %v1351 = vshrl.u32 %v1350, 7
  %v1352 = vsub.s32 1, %v1351
  %v1353 = vrot.slane %v1344, %v1352
  %v1357 = vrot.slane %v1335, 1
  %v1366 = vunpack.c.l.b16 %v1336
  %v1367 = vunpack.c.h.b16 %v1336
  %v1368 = vunpack.c.l.b16 %v1337
  %v1369 = vunpack.c.h.b16 %v1337
  %v1370 = vunpack.c.l.b16 %v1338
  %v1371 = vunpack.c.h.b16 %v1338
  %v1372 = vunpack.c.l.b16 %v1339
  %v1373 = vunpack.c.h.b16 %v1339
  %v1374 = vunpack.c.l.b16 %v1340
  %v1375 = vunpack.c.h.b16 %v1340
  %v1376 = vunpack.c.l.b16 %v1341
  %v1377 = vunpack.c.h.b16 %v1341
  %v1378 = vunpack.c.l.b16 %v1342
  %v1379 = vunpack.c.h.b16 %v1342
  %v1380 = vunpack.c.l.b16 %v1343
  %v1381 = vunpack.c.h.b16 %v1343
  %v1382 = vpack.c.b16 %v1368, %v1366
  %v1383 = vpack.c.b16 %v1369, %v1367
  %v1384 = vpack.c.b16 %v1372, %v1370
  %v1385 = vpack.c.b16 %v1373, %v1371
  %v1386 = vpack.c.b16 %v1376, %v1374
  %v1387 = vpack.c.b16 %v1377, %v1375
  %v1388 = vpack.c.b16 %v1380, %v1378
  %v1389 = vpack.c.b16 %v1381, %v1379
  %v1399 = vsel %vm153, %v1357, 0
  %1401 = vmatprep.subr.bf16.mxu0 0
  %1402 = vmatpush1.bf16.msra.mxu0 0
  %1403 = vmatprep.subr.bf16.mxu0 0
  %1404 = vmatpush1.bf16.msra.mxu0 0
  %1405 = vmatprep.subr.bf16.mxu0 0
  %1406 = vmatpush1.bf16.msra.mxu0 0
  %1407 = vmatprep.subr.bf16.mxu0 0
  %1408 = vmatpush1.bf16.msra.mxu0 0
  %1409 = vmatprep.subr.bf16.mxu0 %v1389
  %1410 = vmatpush1.bf16.msra.mxu0 %v1388
  %1411 = vmatprep.subr.bf16.mxu0 %v1387
  %1412 = vmatpush1.bf16.msra.mxu0 %v1386
  %1413 = vmatprep.subr.bf16.mxu0 %v1385
  %1414 = vmatpush1.bf16.msra.mxu0 %v1384
  %1415 = vmatprep.subr.bf16.mxu0 %v1383
  %1416 = vmatpush1.bf16.msra.mxu0 %v1382
  %1417 = vmatprep.subr.bf16.mxu0 0
  %1418 = vmatpush2.bf16.msra.mxu0 0
  %1419 = vmatprep.subr.bf16.mxu0 0
  %1420 = vmatpush2.bf16.msra.mxu0 0
  %1421 = vmatprep.subr.bf16.mxu0 0
  %1422 = vmatpush2.bf16.msra.mxu0 0
  %1423 = vmatprep.subr.bf16.mxu0 0
  %1424 = vmatpush2.bf16.msra.mxu0 0
  %1425 = vmatprep.subr.bf16.mxu0 0
  %1426 = vmatpush2.bf16.msra.mxu0 0
  %1427 = vmatprep.subr.bf16.mxu0 0
  %1428 = vmatpush2.bf16.msra.mxu0 0
  %1429 = vmatprep.subr.bf16.mxu0 0
  %1430 = vmatpush2.bf16.msra.mxu0 0
  %1431 = vmatprep.subr.bf16.mxu0 0
  %1432 = vmatpush2.bf16.msra.mxu0 0
  %1433 = vmatprep.mubr.bf16.mxu0 0
  %1434 = vmatmul.mubr.bf16.gmra.mxu0 %v1399
  %v1435 = vpop.f32.mrf.mxu0
  %v1436 = vadd.f32 %v1349, %v1435
  %v1437 = vpop.f32.mrf.mxu0
  %v1438 = vadd.f32 %v1353, %v1437
  %v1439 = vpop.f32.mrf.mxu0
  %v1440 = vpop.f32.mrf.mxu0
  %1441 = vdwg.mxu0
  %v1443 = vrot.slane %v1436, 4
  %v1445 = vadd.f32 %v196, %v1443
  %v1446 = vxor.u32 %v1445, 2147483648
  %v1447 = vmul.f32 %v1446, 1.442695
  %v1448 = vpow.pop %v1447
  %v1449 = vadd.f32 %v1448, 1.0
  %v1450 = vrcp.pop %v1449
  %v1451 = vmul.f32 1.0, %v1450
  %1452 = vrot.lane.b32.xlu0 %v1443, 64
  %v1453 = vpop.permute.xlu0 %1452
  %v1455 = vmul.f32 %v1451, %v1453
  %1457 = vrot.lane.b32.xlu0 %v1455, 64
  %v1458 = vpop.permute.xlu0 %1457
  %v1460 = vadd.f32 %v196, %v1458
  %v1461 = vtanh.pop %v1460
  %v1462 = vsub.f32 1.0, %v1451
  %1464 = vrot.lane.b32.xlu0 %v1461, 96
  %v1465 = vpop.permute.xlu0 %1464
  %v1467 = vmul.f32 %v1462, %v1465
  %v1468 = vrot.slane %v1280, 6
  %v1470 = vmul.f32 %v1451, %v1468
  %v1471 = vadd.f32 %v1467, %v1470
  %v1472 = vrot.slane %v1436, 6
  %v1474 = vadd.f32 %v192, %v1472
  %v1475 = vxor.u32 %v1474, 2147483648
  %v1476 = vmul.f32 %v1475, 1.442695
  %v1477 = vpow.pop %v1476
  %v1478 = vadd.f32 %v1477, 1.0
  %v1479 = vrcp.pop %v1478
  %v1480 = vmul.f32 1.0, %v1479
  %v1482 = vrot.slane %v1438, 6
  %v1484 = vadd.f32 %v194, %v1482
  %v1485 = vxor.u32 %v1484, 2147483648
  %v1486 = vmul.f32 %v1485, 1.442695
  %v1487 = vpow.pop %v1486
  %v1488 = vadd.f32 %v1487, 1.0
  %v1489 = vrcp.pop %v1488
  %v1490 = vmul.f32 1.0, %v1489
  %1491 = vrot.lane.b32.xlu0 %v1482, 64
  %v1492 = vpop.permute.xlu0 %1491
  %v1494 = vmul.f32 %v1480, %v1492
  %1496 = vrot.lane.b32.xlu0 %v1494, 64
  %v1497 = vpop.permute.xlu0 %1496
  %v1499 = vadd.f32 %v194, %v1497
  %v1500 = vtanh.pop %v1499
  %v1501 = vsub.f32 1.0, %v1490
  %1503 = vrot.lane.b32.xlu0 %v1500, 96
  %v1504 = vpop.permute.xlu0 %1503
  %v1506 = vmul.f32 %v1501, %v1504
  %v1508 = vmul.f32 %v1490, %v1330
  %v1509 = vadd.f32 %v1506, %v1508
  %1511 = vrot.lane.b32.xlu0 %v1471, 96
  %v1512 = vpop.permute.xlu0 %1511
  %1514 = vst.msk [vmem:[#allocation2 + $0x8] sm:$0x30] %vm756, %v1512
  %1516 = vrot.lane.b32.xlu0 %v1509, 32
  %v1517 = vpop.permute.xlu0 %1516
  %1519 = vst.msk [vmem:[#allocation2] sm:$0xc] %vm762, %v1517
  %v1520 = vrot.slane %v1509, 6
  %1521 = vrot.lane.b32.xlu0 %v1520, 32
  %v1522 = vpop.permute.xlu0 %1521
  %v1524 = vsel %vm384, %v1512, %v1522
  %v1525 = vpack.c.bf16 %v1524, %v1524
  %v1526 = vld [vmem:[%s6] sm:$0xff]
  %v1527 = vld [vmem:[%s6 + $0x8] sm:$0xff]
  %v1528 = vld [vmem:[%s6 + $0x10] sm:$0xff]
  %v1529 = vld [vmem:[%s6 + $0x18] sm:$0xff]
  %v1530 = vld [vmem:[%s6 + $0x20] sm:$0xff]
  %v1531 = vld [vmem:[%s6 + $0x28] sm:$0xff]
  %v1532 = vld [vmem:[%s6 + $0x30] sm:$0xff]
  %v1533 = vld [vmem:[%s6 + $0x38] sm:$0xff]
  %v1534 = vld [vmem:[%s7] sm:$0x3]
  %v1536 = vlaneseq
  %v1537 = vshrl.u32 %v1536, 7
  %v1538 = vsub.s32 0, %v1537
  %v1539 = vrot.slane %v1534, %v1538
  %v1540 = vlaneseq
  %v1541 = vshrl.u32 %v1540, 7
  %v1542 = vsub.s32 1, %v1541
  %v1543 = vrot.slane %v1534, %v1542
  %v1547 = vrot.slane %v1525, 2
  %v1556 = vunpack.c.l.b16 %v1526
  %v1557 = vunpack.c.h.b16 %v1526
  %v1558 = vunpack.c.l.b16 %v1527
  %v1559 = vunpack.c.h.b16 %v1527
  %v1560 = vunpack.c.l.b16 %v1528
  %v1561 = vunpack.c.h.b16 %v1528
  %v1562 = vunpack.c.l.b16 %v1529
  %v1563 = vunpack.c.h.b16 %v1529
  %v1564 = vunpack.c.l.b16 %v1530
  %v1565 = vunpack.c.h.b16 %v1530
  %v1566 = vunpack.c.l.b16 %v1531
  %v1567 = vunpack.c.h.b16 %v1531
  %v1568 = vunpack.c.l.b16 %v1532
  %v1569 = vunpack.c.h.b16 %v1532
  %v1570 = vunpack.c.l.b16 %v1533
  %v1571 = vunpack.c.h.b16 %v1533
  %v1572 = vpack.c.b16 %v1558, %v1556
  %v1573 = vpack.c.b16 %v1559, %v1557
  %v1574 = vpack.c.b16 %v1562, %v1560
  %v1575 = vpack.c.b16 %v1563, %v1561
  %v1576 = vpack.c.b16 %v1566, %v1564
  %v1577 = vpack.c.b16 %v1567, %v1565
  %v1578 = vpack.c.b16 %v1570, %v1568
  %v1579 = vpack.c.b16 %v1571, %v1569
  %v1589 = vsel %vm153, %v1547, 0
  %1591 = vmatprep.subr.bf16.mxu0 0
  %1592 = vmatpush1.bf16.msra.mxu0 0
  %1593 = vmatprep.subr.bf16.mxu0 0
  %1594 = vmatpush1.bf16.msra.mxu0 0
  %1595 = vmatprep.subr.bf16.mxu0 0
  %1596 = vmatpush1.bf16.msra.mxu0 0
  %1597 = vmatprep.subr.bf16.mxu0 0
  %1598 = vmatpush1.bf16.msra.mxu0 0
  %1599 = vmatprep.subr.bf16.mxu0 %v1579
  %1600 = vmatpush1.bf16.msra.mxu0 %v1578
  %1601 = vmatprep.subr.bf16.mxu0 %v1577
  %1602 = vmatpush1.bf16.msra.mxu0 %v1576
  %1603 = vmatprep.subr.bf16.mxu0 %v1575
  %1604 = vmatpush1.bf16.msra.mxu0 %v1574
  %1605 = vmatprep.subr.bf16.mxu0 %v1573
  %1606 = vmatpush1.bf16.msra.mxu0 %v1572
  %1607 = vmatprep.subr.bf16.mxu0 0
  %1608 = vmatpush2.bf16.msra.mxu0 0
  %1609 = vmatprep.subr.bf16.mxu0 0
  %1610 = vmatpush2.bf16.msra.mxu0 0
  %1611 = vmatprep.subr.bf16.mxu0 0
  %1612 = vmatpush2.bf16.msra.mxu0 0
  %1613 = vmatprep.subr.bf16.mxu0 0
  %1614 = vmatpush2.bf16.msra.mxu0 0
  %1615 = vmatprep.subr.bf16.mxu0 0
  %1616 = vmatpush2.bf16.msra.mxu0 0
  %1617 = vmatprep.subr.bf16.mxu0 0
  %1618 = vmatpush2.bf16.msra.mxu0 0
  %1619 = vmatprep.subr.bf16.mxu0 0
  %1620 = vmatpush2.bf16.msra.mxu0 0
  %1621 = vmatprep.subr.bf16.mxu0 0
  %1622 = vmatpush2.bf16.msra.mxu0 0
  %1623 = vmatprep.mubr.bf16.mxu0 0
  %1624 = vmatmul.mubr.bf16.gmra.mxu0 %v1589
  %v1625 = vpop.f32.mrf.mxu0
  %v1626 = vadd.f32 %v1539, %v1625
  %v1627 = vpop.f32.mrf.mxu0
  %v1628 = vadd.f32 %v1543, %v1627
  %v1629 = vpop.f32.mrf.mxu0
  %v1630 = vpop.f32.mrf.mxu0
  %1631 = vdwg.mxu0
  %v1633 = vrot.slane %v1626, 2
  %v1635 = vadd.f32 %v196, %v1633
  %v1636 = vxor.u32 %v1635, 2147483648
  %v1637 = vmul.f32 %v1636, 1.442695
  %v1638 = vpow.pop %v1637
  %v1639 = vadd.f32 %v1638, 1.0
  %v1640 = vrcp.pop %v1639
  %v1641 = vmul.f32 1.0, %v1640
  %1642 = vrot.lane.b32.xlu0 %v1633, 64
  %v1643 = vpop.permute.xlu0 %1642
  %v1645 = vmul.f32 %v1641, %v1643
  %1647 = vrot.lane.b32.xlu0 %v1645, 64
  %v1648 = vpop.permute.xlu0 %1647
  %v1650 = vadd.f32 %v196, %v1648
  %v1651 = vtanh.pop %v1650
  %v1652 = vsub.f32 1.0, %v1641
  %1654 = vrot.lane.b32.xlu0 %v1651, 96
  %v1655 = vpop.permute.xlu0 %1654
  %v1657 = vmul.f32 %v1652, %v1655
  %v1658 = vrot.slane %v1471, 6
  %v1660 = vmul.f32 %v1641, %v1658
  %v1661 = vadd.f32 %v1657, %v1660
  %v1662 = vadd.f32 %v192, %v1626
  %v1663 = vxor.u32 %v1662, 2147483648
  %v1664 = vmul.f32 %v1663, 1.442695
  %v1665 = vpow.pop %v1664
  %v1666 = vadd.f32 %v1665, 1.0
  %v1667 = vrcp.pop %v1666
  %v1668 = vmul.f32 1.0, %v1667
  %v1669 = vadd.f32 %v194, %v1628
  %v1670 = vxor.u32 %v1669, 2147483648
  %v1671 = vmul.f32 %v1670, 1.442695
  %v1672 = vpow.pop %v1671
  %v1673 = vadd.f32 %v1672, 1.0
  %v1674 = vrcp.pop %v1673
  %v1675 = vmul.f32 1.0, %v1674
  %1677 = vrot.lane.b32.xlu0 %v1628, 64
  %v1678 = vpop.permute.xlu0 %1677
  %v1680 = vmul.f32 %v1668, %v1678
  %1682 = vrot.lane.b32.xlu0 %v1680, 64
  %v1683 = vpop.permute.xlu0 %1682
  %v1685 = vadd.f32 %v194, %v1683
  %v1686 = vtanh.pop %v1685
  %v1687 = vsub.f32 1.0, %v1675
  %1689 = vrot.lane.b32.xlu0 %v1686, 96
  %v1690 = vpop.permute.xlu0 %1689
  %v1692 = vmul.f32 %v1687, %v1690
  %v1693 = vrot.slane %v1509, 2
  %v1695 = vmul.f32 %v1675, %v1693
  %v1696 = vadd.f32 %v1692, %v1695
  %1698 = vrot.lane.b32.xlu0 %v1661, 96
  %v1699 = vpop.permute.xlu0 %1698
  %1701 = vst.msk [vmem:[#allocation2 + $0x8] sm:$0xc0] %vm945, %v1699
  %1703 = vrot.lane.b32.xlu0 %v1696, 32
  %v1704 = vpop.permute.xlu0 %1703
  %1706 = vst.msk [vmem:[#allocation2] sm:$0x3] %vm951, %v1704
  %v1707 = vld [vmem:[#allocation2] sm:$0xff]
  %v1708 = vld [vmem:[#allocation2 + $0x8] sm:$0xff]
  %v1709 = vpack.c.bf16 %v1708, %v1707
  %v1710 = vld [vmem:[%s8] sm:$0xf]
  %v1711 = vld [vmem:[%s8 + $0x4] sm:$0xf]
  %v1712 = vld [vmem:[%s8 + $0x8] sm:$0xf]
  %v1713 = vld [vmem:[%s8 + $0xc] sm:$0xf]
  %v1714 = vld [vmem:[%s8 + $0x10] sm:$0xf]
  %v1715 = vld [vmem:[%s8 + $0x14] sm:$0xf]
  %v1716 = vld [vmem:[%s8 + $0x18] sm:$0xf]
  %v1717 = vld [vmem:[%s8 + $0x1c] sm:$0xf]
  %v1718 = vld [vmem:[%s9] sm:$0x1]
  %v1720 = vlaneseq
  %v1721 = vshrl.u32 %v1720, 7
  %v1722 = vsub.s32 0, %v1721
  %v1723 = vrot.slane %v1718, %v1722
  %v1733 = vunpack.c.l.b16 %v1710
  %v1734 = vunpack.c.l.b16 %v1711
  %v1735 = vunpack.c.l.b16 %v1712
  %v1736 = vunpack.c.l.b16 %v1713
  %v1737 = vunpack.c.l.b16 %v1714
  %v1738 = vunpack.c.l.b16 %v1715
  %v1739 = vunpack.c.l.b16 %v1716
  %v1740 = vunpack.c.l.b16 %v1717
  %v1741 = vpack.c.b16 %v1734, %v1733
  %v1742 = vpack.c.b16 %v1736, %v1735
  %v1743 = vpack.c.b16 %v1738, %v1737
  %v1744 = vpack.c.b16 %v1740, %v1739
  %v1750 = vsel %vm153, %v1709, 0
  %1752 = vmatprep.subr.bf16.mxu0 0
  %1753 = vmatpush1.bf16.msra.mxu0 0
  %1754 = vmatprep.subr.bf16.mxu0 0
  %1755 = vmatpush1.bf16.msra.mxu0 0
  %1756 = vmatprep.subr.bf16.mxu0 0
  %1757 = vmatpush1.bf16.msra.mxu0 0
  %1758 = vmatprep.subr.bf16.mxu0 0
  %1759 = vmatpush1.bf16.msra.mxu0 0
  %1760 = vmatprep.subr.bf16.mxu0 0
  %1761 = vmatpush1.bf16.msra.mxu0 %v1744
  %1762 = vmatprep.subr.bf16.mxu0 0
  %1763 = vmatpush1.bf16.msra.mxu0 %v1743
  %1764 = vmatprep.subr.bf16.mxu0 0
  %1765 = vmatpush1.bf16.msra.mxu0 %v1742
  %1766 = vmatprep.subr.bf16.mxu0 0
  %1767 = vmatpush1.bf16.msra.mxu0 %v1741
  %1768 = vmatprep.subr.bf16.mxu0 0
  %1769 = vmatpush2.bf16.msra.mxu0 0
  %1770 = vmatprep.subr.bf16.mxu0 0
  %1771 = vmatpush2.bf16.msra.mxu0 0
  %1772 = vmatprep.subr.bf16.mxu0 0
  %1773 = vmatpush2.bf16.msra.mxu0 0
  %1774 = vmatprep.subr.bf16.mxu0 0
  %1775 = vmatpush2.bf16.msra.mxu0 0
  %1776 = vmatprep.subr.bf16.mxu0 0
  %1777 = vmatpush2.bf16.msra.mxu0 0
  %1778 = vmatprep.subr.bf16.mxu0 0
  %1779 = vmatpush2.bf16.msra.mxu0 0
  %1780 = vmatprep.subr.bf16.mxu0 0
  %1781 = vmatpush2.bf16.msra.mxu0 0
  %1782 = vmatprep.subr.bf16.mxu0 0
  %1783 = vmatpush2.bf16.msra.mxu0 0
  %1784 = vmatprep.mubr.bf16.mxu0 0
  %1785 = vmatmul.mubr.bf16.gmra.mxu0 %v1750
  %v1786 = vpop.f32.mrf.mxu0
  %v1787 = vadd.f32 %v1723, %v1786
  %v1788 = vpop.f32.mrf.mxu0
  %v1789 = vpop.f32.mrf.mxu0
  %v1790 = vadd.f32 %v1723, %v1789
  %v1791 = vpop.f32.mrf.mxu0
  %1792 = vdwg.mxu0
  %v1793 = vpack.c.bf16 %v1790, %v1787
  %v1794 = vld [vmem:[%s10] sm:$0xff]
  %v1795 = vld [vmem:[%s10 + $0x8] sm:$0xff]
  %v1796 = vld [vmem:[%s10 + $0x10] sm:$0xff]
  %v1797 = vld [vmem:[%s10 + $0x18] sm:$0xff]
  %v1798 = vld [vmem:[%s11] sm:$0x3]
  %v1800 = vlaneseq
  %v1801 = vshrl.u32 %v1800, 7
  %v1802 = vsub.s32 0, %v1801
  %v1803 = vrot.slane %v1798, %v1802
  %v1804 = vlaneseq
  %v1805 = vshrl.u32 %v1804, 7
  %v1806 = vsub.s32 1, %v1805
  %v1807 = vrot.slane %v1798, %v1806
  %v1814 = vunpack.c.l.b16 %v1794
  %v1815 = vunpack.c.h.b16 %v1794
  %v1816 = vunpack.c.l.b16 %v1795
  %v1817 = vunpack.c.h.b16 %v1795
  %v1818 = vunpack.c.l.b16 %v1796
  %v1819 = vunpack.c.h.b16 %v1796
  %v1820 = vunpack.c.l.b16 %v1797
  %v1821 = vunpack.c.h.b16 %v1797
  %v1822 = vpack.c.b16 %v1816, %v1814
  %v1823 = vpack.c.b16 %v1817, %v1815
  %v1824 = vpack.c.b16 %v1820, %v1818
  %v1825 = vpack.c.b16 %v1821, %v1819
  %v1831 = vsel %vm384, %v1793, 0
  %1833 = vmatprep.subr.bf16.mxu0 0
  %1834 = vmatpush1.bf16.msra.mxu0 0
  %1835 = vmatprep.subr.bf16.mxu0 0
  %1836 = vmatpush1.bf16.msra.mxu0 0
  %1837 = vmatprep.subr.bf16.mxu0 0
  %1838 = vmatpush1.bf16.msra.mxu0 0
  %1839 = vmatprep.subr.bf16.mxu0 0
  %1840 = vmatpush1.bf16.msra.mxu0 0
  %1841 = vmatprep.subr.bf16.mxu0 0
  %1842 = vmatpush1.bf16.msra.mxu0 0
  %1843 = vmatprep.subr.bf16.mxu0 0
  %1844 = vmatpush1.bf16.msra.mxu0 0
  %1845 = vmatprep.subr.bf16.mxu0 %v1825
  %1846 = vmatpush1.bf16.msra.mxu0 %v1824
  %1847 = vmatprep.subr.bf16.mxu0 %v1823
  %1848 = vmatpush1.bf16.msra.mxu0 %v1822
  %1849 = vmatprep.subr.bf16.mxu0 0
  %1850 = vmatpush2.bf16.msra.mxu0 0
  %1851 = vmatprep.subr.bf16.mxu0 0
  %1852 = vmatpush2.bf16.msra.mxu0 0
  %1853 = vmatprep.subr.bf16.mxu0 0
  %1854 = vmatpush2.bf16.msra.mxu0 0
  %1855 = vmatprep.subr.bf16.mxu0 0
  %1856 = vmatpush2.bf16.msra.mxu0 0
  %1857 = vmatprep.subr.bf16.mxu0 0
  %1858 = vmatpush2.bf16.msra.mxu0 0
  %1859 = vmatprep.subr.bf16.mxu0 0
  %1860 = vmatpush2.bf16.msra.mxu0 0
  %1861 = vmatprep.subr.bf16.mxu0 0
  %1862 = vmatpush2.bf16.msra.mxu0 0
  %1863 = vmatprep.subr.bf16.mxu0 0
  %1864 = vmatpush2.bf16.msra.mxu0 0
  %1865 = vmatprep.mubr.bf16.mxu0 0
  %1866 = vmatmul.mubr.bf16.gmra.mxu0 %v1831
  %v1867 = vpop.f32.mrf.mxu0
  %v1868 = vadd.f32 %v1803, %v1867
  %v1869 = vpop.f32.mrf.mxu0
  %v1870 = vadd.f32 %v1807, %v1869
  %v1871 = vpop.f32.mrf.mxu0
  %v1872 = vadd.f32 %v1803, %v1871
  %v1873 = vpop.f32.mrf.mxu0
  %v1874 = vadd.f32 %v1807, %v1873
  %1875 = vdwg.mxu0
  %v1876 = vld [vmem:[%s12] sm:$0xff]
  %v1877 = vld [vmem:[%s12 + $0x8] sm:$0xff]
  %v1878 = vld [vmem:[%s12 + $0x10] sm:$0xff]
  %v1879 = vld [vmem:[%s12 + $0x18] sm:$0xff]
  %v1880 = vld [vmem:[%s12 + $0x20] sm:$0xff]
  %v1881 = vld [vmem:[%s12 + $0x28] sm:$0xff]
  %v1882 = vld [vmem:[%s12 + $0x30] sm:$0xff]
  %v1883 = vld [vmem:[%s12 + $0x38] sm:$0xff]
  %v1884 = vld [vmem:[%s13] sm:$0x3]
  %v1886 = vlaneseq
  %v1887 = vshrl.u32 %v1886, 7
  %v1888 = vsub.s32 0, %v1887
  %v1889 = vrot.slane %v1884, %v1888
  %v1890 = vlaneseq
  %v1891 = vshrl.u32 %v1890, 7
  %v1892 = vsub.s32 1, %v1891
  %v1893 = vrot.slane %v1884, %v1892
  %v1904 = vunpack.c.l.b16 %v1876
  %v1905 = vunpack.c.h.b16 %v1876
  %v1906 = vunpack.c.l.b16 %v1877
  %v1907 = vunpack.c.h.b16 %v1877
  %v1908 = vunpack.c.l.b16 %v1878
  %v1909 = vunpack.c.h.b16 %v1878
  %v1910 = vunpack.c.l.b16 %v1879
  %v1911 = vunpack.c.h.b16 %v1879
  %v1912 = vunpack.c.l.b16 %v1880
  %v1913 = vunpack.c.h.b16 %v1880
  %v1914 = vunpack.c.l.b16 %v1881
  %v1915 = vunpack.c.h.b16 %v1881
  %v1916 = vunpack.c.l.b16 %v1882
  %v1917 = vunpack.c.h.b16 %v1882
  %v1918 = vunpack.c.l.b16 %v1883
  %v1919 = vunpack.c.h.b16 %v1883
  %v1920 = vpack.c.b16 %v1906, %v1904
  %v1921 = vpack.c.b16 %v1907, %v1905
  %v1922 = vpack.c.b16 %v1910, %v1908
  %v1923 = vpack.c.b16 %v1911, %v1909
  %v1924 = vpack.c.b16 %v1914, %v1912
  %v1925 = vpack.c.b16 %v1915, %v1913
  %v1926 = vpack.c.b16 %v1918, %v1916
  %v1927 = vpack.c.b16 %v1919, %v1917
  %1936 = vmatprep.subr.bf16.mxu0 0
  %1937 = vmatpush1.bf16.msra.mxu0 0
  %1938 = vmatprep.subr.bf16.mxu0 0
  %1939 = vmatpush1.bf16.msra.mxu0 0
  %1940 = vmatprep.subr.bf16.mxu0 0
  %1941 = vmatpush1.bf16.msra.mxu0 0
  %1942 = vmatprep.subr.bf16.mxu0 0
  %1943 = vmatpush1.bf16.msra.mxu0 0
  %1944 = vmatprep.subr.bf16.mxu0 %v1927
  %1945 = vmatpush1.bf16.msra.mxu0 %v1926
  %1946 = vmatprep.subr.bf16.mxu0 %v1925
  %1947 = vmatpush1.bf16.msra.mxu0 %v1924
  %1948 = vmatprep.subr.bf16.mxu0 %v1923
  %1949 = vmatpush1.bf16.msra.mxu0 %v1922
  %1950 = vmatprep.subr.bf16.mxu0 %v1921
  %1951 = vmatpush1.bf16.msra.mxu0 %v1920
  %1952 = vmatprep.subr.bf16.mxu0 0
  %1953 = vmatpush2.bf16.msra.mxu0 0
  %1954 = vmatprep.subr.bf16.mxu0 0
  %1955 = vmatpush2.bf16.msra.mxu0 0
  %1956 = vmatprep.subr.bf16.mxu0 0
  %1957 = vmatpush2.bf16.msra.mxu0 0
  %1958 = vmatprep.subr.bf16.mxu0 0
  %1959 = vmatpush2.bf16.msra.mxu0 0
  %1960 = vmatprep.subr.bf16.mxu0 0
  %1961 = vmatpush2.bf16.msra.mxu0 0
  %1962 = vmatprep.subr.bf16.mxu0 0
  %1963 = vmatpush2.bf16.msra.mxu0 0
  %1964 = vmatprep.subr.bf16.mxu0 0
  %1965 = vmatpush2.bf16.msra.mxu0 0
  %1966 = vmatprep.subr.bf16.mxu0 0
  %1967 = vmatpush2.bf16.msra.mxu0 0
  %1968 = vmatprep.mubr.bf16.mxu0 0
  %1969 = vmatmul.mubr.bf16.gmra.mxu0 %v262
  %v1970 = vpop.f32.mrf.mxu0
  %v1971 = vadd.f32 %v1889, %v1970
  %v1972 = vpop.f32.mrf.mxu0
  %v1973 = vadd.f32 %v1893, %v1972
  %v1974 = vpop.f32.mrf.mxu0
  %v1975 = vpop.f32.mrf.mxu0
  %1976 = vdwg.mxu0
  %v1977 = vadd.f32 %v1868, %v1971
  %v1978 = vxor.u32 %v1977, 2147483648
  %v1979 = vmul.f32 %v1978, 1.442695
  %v1980 = vpow.pop %v1979
  %v1981 = vadd.f32 %v1980, 1.0
  %v1982 = vrcp.pop %v1981
  %v1983 = vmul.f32 1.0, %v1982
  %1985 = vrot.lane.b32.xlu0 %v1971, 64
  %v1986 = vpop.permute.xlu0 %1985
  %v1988 = vmul.f32 %v1983, %v1986
  %1990 = vrot.lane.b32.xlu0 %v1988, 64
  %v1991 = vpop.permute.xlu0 %1990
  %v1993 = vadd.f32 %v1868, %v1991
  %v1994 = vtanh.pop %v1993
  %v1995 = vsub.f32 1.0, %v1983
  %1997 = vrot.lane.b32.xlu0 %v1994, 96
  %v1998 = vpop.permute.xlu0 %1997
  %v2000 = vmul.f32 %v1995, %v1998
  %v2001 = vmul.f32 %v1983, 0.0
  %v2002 = vadd.f32 %v2000, %v2001
  %v2003 = vrot.slane %v1971, 2
  %v2005 = vadd.f32 %v1872, %v2003
  %v2006 = vxor.u32 %v2005, 2147483648
  %v2007 = vmul.f32 %v2006, 1.442695
  %v2008 = vpow.pop %v2007
  %v2009 = vadd.f32 %v2008, 1.0
  %v2010 = vrcp.pop %v2009
  %v2011 = vmul.f32 1.0, %v2010
  %v2013 = vrot.slane %v1973, 2
  %v2015 = vadd.f32 %v1874, %v2013
  %v2016 = vxor.u32 %v2015, 2147483648
  %v2017 = vmul.f32 %v2016, 1.442695
  %v2018 = vpow.pop %v2017
  %v2019 = vadd.f32 %v2018, 1.0
  %v2020 = vrcp.pop %v2019
  %v2021 = vmul.f32 1.0, %v2020
  %2022 = vrot.lane.b32.xlu0 %v2013, 64
  %v2023 = vpop.permute.xlu0 %2022
  %v2025 = vmul.f32 %v2011, %v2023
  %2027 = vrot.lane.b32.xlu0 %v2025, 64
  %v2028 = vpop.permute.xlu0 %2027
  %v2030 = vadd.f32 %v1874, %v2028
  %v2031 = vtanh.pop %v2030
  %v2032 = vsub.f32 1.0, %v2021
  %2034 = vrot.lane.b32.xlu0 %v2031, 96
  %v2035 = vpop.permute.xlu0 %2034
  %v2037 = vmul.f32 %v2032, %v2035
  %v2038 = vmul.f32 %v2021, 0.0
  %v2039 = vadd.f32 %v2037, %v2038
  %2041 = vrot.lane.b32.xlu0 %v2002, 96
  %v2042 = vpop.permute.xlu0 %2041
  %2044 = vst.msk [vmem:[#allocation3] sm:$0x3] %vm372, %v2042
  %2046 = vrot.lane.b32.xlu0 %v2039, 32
  %v2047 = vpop.permute.xlu0 %2046
  %2049 = vst.msk [vmem:[#allocation3 + $0x8] sm:$0xc0] %vm378, %v2047
  %v2050 = vrot.slane %v2039, 6
  %2051 = vrot.lane.b32.xlu0 %v2050, 32
  %v2052 = vpop.permute.xlu0 %2051
  %v2054 = vsel %vm384, %v2042, %v2052
  %v2055 = vpack.c.bf16 %v2054, %v2054
  %v2056 = vld [vmem:[%s12] sm:$0xff]
  %v2057 = vld [vmem:[%s12 + $0x8] sm:$0xff]
  %v2058 = vld [vmem:[%s12 + $0x10] sm:$0xff]
  %v2059 = vld [vmem:[%s12 + $0x18] sm:$0xff]
  %v2060 = vld [vmem:[%s12 + $0x20] sm:$0xff]
  %v2061 = vld [vmem:[%s12 + $0x28] sm:$0xff]
  %v2062 = vld [vmem:[%s12 + $0x30] sm:$0xff]
  %v2063 = vld [vmem:[%s12 + $0x38] sm:$0xff]
  %v2064 = vld [vmem:[%s13] sm:$0x3]
  %v2066 = vlaneseq
  %v2067 = vshrl.u32 %v2066, 7
  %v2068 = vsub.s32 0, %v2067
  %v2069 = vrot.slane %v2064, %v2068
  %v2070 = vlaneseq
  %v2071 = vshrl.u32 %v2070, 7
  %v2072 = vsub.s32 1, %v2071
  %v2073 = vrot.slane %v2064, %v2072
  %v2084 = vunpack.c.l.b16 %v2056
  %v2085 = vunpack.c.h.b16 %v2056
  %v2086 = vunpack.c.l.b16 %v2057
  %v2087 = vunpack.c.h.b16 %v2057
  %v2088 = vunpack.c.l.b16 %v2058
  %v2089 = vunpack.c.h.b16 %v2058
  %v2090 = vunpack.c.l.b16 %v2059
  %v2091 = vunpack.c.h.b16 %v2059
  %v2092 = vunpack.c.l.b16 %v2060
  %v2093 = vunpack.c.h.b16 %v2060
  %v2094 = vunpack.c.l.b16 %v2061
  %v2095 = vunpack.c.h.b16 %v2061
  %v2096 = vunpack.c.l.b16 %v2062
  %v2097 = vunpack.c.h.b16 %v2062
  %v2098 = vunpack.c.l.b16 %v2063
  %v2099 = vunpack.c.h.b16 %v2063
  %v2100 = vpack.c.b16 %v2086, %v2084
  %v2101 = vpack.c.b16 %v2087, %v2085
  %v2102 = vpack.c.b16 %v2090, %v2088
  %v2103 = vpack.c.b16 %v2091, %v2089
  %v2104 = vpack.c.b16 %v2094, %v2092
  %v2105 = vpack.c.b16 %v2095, %v2093
  %v2106 = vpack.c.b16 %v2098, %v2096
  %v2107 = vpack.c.b16 %v2099, %v2097
  %v2117 = vsel %vm153, %v2055, 0
  %2119 = vmatprep.subr.bf16.mxu0 0
  %2120 = vmatpush1.bf16.msra.mxu0 0
  %2121 = vmatprep.subr.bf16.mxu0 0
  %2122 = vmatpush1.bf16.msra.mxu0 0
  %2123 = vmatprep.subr.bf16.mxu0 0
  %2124 = vmatpush1.bf16.msra.mxu0 0
  %2125 = vmatprep.subr.bf16.mxu0 0
  %2126 = vmatpush1.bf16.msra.mxu0 0
  %2127 = vmatprep.subr.bf16.mxu0 %v2107
  %2128 = vmatpush1.bf16.msra.mxu0 %v2106
  %2129 = vmatprep.subr.bf16.mxu0 %v2105
  %2130 = vmatpush1.bf16.msra.mxu0 %v2104
  %2131 = vmatprep.subr.bf16.mxu0 %v2103
  %2132 = vmatpush1.bf16.msra.mxu0 %v2102
  %2133 = vmatprep.subr.bf16.mxu0 %v2101
  %2134 = vmatpush1.bf16.msra.mxu0 %v2100
  %2135 = vmatprep.subr.bf16.mxu0 0
  %2136 = vmatpush2.bf16.msra.mxu0 0
  %2137 = vmatprep.subr.bf16.mxu0 0
  %2138 = vmatpush2.bf16.msra.mxu0 0
  %2139 = vmatprep.subr.bf16.mxu0 0
  %2140 = vmatpush2.bf16.msra.mxu0 0
  %2141 = vmatprep.subr.bf16.mxu0 0
  %2142 = vmatpush2.bf16.msra.mxu0 0
  %2143 = vmatprep.subr.bf16.mxu0 0
  %2144 = vmatpush2.bf16.msra.mxu0 0
  %2145 = vmatprep.subr.bf16.mxu0 0
  %2146 = vmatpush2.bf16.msra.mxu0 0
  %2147 = vmatprep.subr.bf16.mxu0 0
  %2148 = vmatpush2.bf16.msra.mxu0 0
  %2149 = vmatprep.subr.bf16.mxu0 0
  %2150 = vmatpush2.bf16.msra.mxu0 0
  %2151 = vmatprep.mubr.bf16.mxu0 0
  %2152 = vmatmul.mubr.bf16.gmra.mxu0 %v2117
  %v2153 = vpop.f32.mrf.mxu0
  %v2154 = vadd.f32 %v2069, %v2153
  %v2155 = vpop.f32.mrf.mxu0
  %v2156 = vadd.f32 %v2073, %v2155
  %v2157 = vpop.f32.mrf.mxu0
  %v2158 = vpop.f32.mrf.mxu0
  %2159 = vdwg.mxu0
  %v2161 = vrot.slane %v2154, 6
  %v2163 = vadd.f32 %v1868, %v2161
  %v2164 = vxor.u32 %v2163, 2147483648
  %v2165 = vmul.f32 %v2164, 1.442695
  %v2166 = vpow.pop %v2165
  %v2167 = vadd.f32 %v2166, 1.0
  %v2168 = vrcp.pop %v2167
  %v2169 = vmul.f32 1.0, %v2168
  %2170 = vrot.lane.b32.xlu0 %v2161, 64
  %v2171 = vpop.permute.xlu0 %2170
  %v2173 = vmul.f32 %v2169, %v2171
  %2175 = vrot.lane.b32.xlu0 %v2173, 64
  %v2176 = vpop.permute.xlu0 %2175
  %v2178 = vadd.f32 %v1868, %v2176
  %v2179 = vtanh.pop %v2178
  %v2180 = vsub.f32 1.0, %v2169
  %2182 = vrot.lane.b32.xlu0 %v2179, 96
  %v2183 = vpop.permute.xlu0 %2182
  %v2185 = vmul.f32 %v2180, %v2183
  %v2186 = vrot.slane %v2002, 6
  %v2188 = vmul.f32 %v2169, %v2186
  %v2189 = vadd.f32 %v2185, %v2188
  %v2190 = vrot.slane %v2154, 4
  %v2192 = vadd.f32 %v1872, %v2190
  %v2193 = vxor.u32 %v2192, 2147483648
  %v2194 = vmul.f32 %v2193, 1.442695
  %v2195 = vpow.pop %v2194
  %v2196 = vadd.f32 %v2195, 1.0
  %v2197 = vrcp.pop %v2196
  %v2198 = vmul.f32 1.0, %v2197
  %v2200 = vrot.slane %v2156, 4
  %v2202 = vadd.f32 %v1874, %v2200
  %v2203 = vxor.u32 %v2202, 2147483648
  %v2204 = vmul.f32 %v2203, 1.442695
  %v2205 = vpow.pop %v2204
  %v2206 = vadd.f32 %v2205, 1.0
  %v2207 = vrcp.pop %v2206
  %v2208 = vmul.f32 1.0, %v2207
  %2209 = vrot.lane.b32.xlu0 %v2200, 64
  %v2210 = vpop.permute.xlu0 %2209
  %v2212 = vmul.f32 %v2198, %v2210
  %2214 = vrot.lane.b32.xlu0 %v2212, 64
  %v2215 = vpop.permute.xlu0 %2214
  %v2217 = vadd.f32 %v1874, %v2215
  %v2218 = vtanh.pop %v2217
  %v2219 = vsub.f32 1.0, %v2208
  %2221 = vrot.lane.b32.xlu0 %v2218, 96
  %v2222 = vpop.permute.xlu0 %2221
  %v2224 = vmul.f32 %v2219, %v2222
  %v2225 = vrot.slane %v2039, 2
  %v2227 = vmul.f32 %v2208, %v2225
  %v2228 = vadd.f32 %v2224, %v2227
  %2230 = vrot.lane.b32.xlu0 %v2189, 96
  %v2231 = vpop.permute.xlu0 %2230
  %2233 = vst.msk [vmem:[#allocation3] sm:$0xc] %vm564, %v2231
  %2235 = vrot.lane.b32.xlu0 %v2228, 32
  %v2236 = vpop.permute.xlu0 %2235
  %2238 = vst.msk [vmem:[#allocation3 + $0x8] sm:$0x30] %vm570, %v2236
  %v2239 = vrot.slane %v2228, 2
  %2240 = vrot.lane.b32.xlu0 %v2239, 32
  %v2241 = vpop.permute.xlu0 %2240
  %v2243 = vsel %vm384, %v2231, %v2241
  %v2244 = vpack.c.bf16 %v2243, %v2243
  %v2245 = vld [vmem:[%s12] sm:$0xff]
  %v2246 = vld [vmem:[%s12 + $0x8] sm:$0xff]
  %v2247 = vld [vmem:[%s12 + $0x10] sm:$0xff]
  %v2248 = vld [vmem:[%s12 + $0x18] sm:$0xff]
  %v2249 = vld [vmem:[%s12 + $0x20] sm:$0xff]
  %v2250 = vld [vmem:[%s12 + $0x28] sm:$0xff]
  %v2251 = vld [vmem:[%s12 + $0x30] sm:$0xff]
  %v2252 = vld [vmem:[%s12 + $0x38] sm:$0xff]
  %v2253 = vld [vmem:[%s13] sm:$0x3]
  %v2255 = vlaneseq
  %v2256 = vshrl.u32 %v2255, 7
  %v2257 = vsub.s32 0, %v2256
  %v2258 = vrot.slane %v2253, %v2257
  %v2259 = vlaneseq
  %v2260 = vshrl.u32 %v2259, 7
  %v2261 = vsub.s32 1, %v2260
  %v2262 = vrot.slane %v2253, %v2261
  %v2266 = vrot.slane %v2244, 1
  %v2275 = vunpack.c.l.b16 %v2245
  %v2276 = vunpack.c.h.b16 %v2245
  %v2277 = vunpack.c.l.b16 %v2246
  %v2278 = vunpack.c.h.b16 %v2246
  %v2279 = vunpack.c.l.b16 %v2247
  %v2280 = vunpack.c.h.b16 %v2247
  %v2281 = vunpack.c.l.b16 %v2248
  %v2282 = vunpack.c.h.b16 %v2248
  %v2283 = vunpack.c.l.b16 %v2249
  %v2284 = vunpack.c.h.b16 %v2249
  %v2285 = vunpack.c.l.b16 %v2250
  %v2286 = vunpack.c.h.b16 %v2250
  %v2287 = vunpack.c.l.b16 %v2251
  %v2288 = vunpack.c.h.b16 %v2251
  %v2289 = vunpack.c.l.b16 %v2252
  %v2290 = vunpack.c.h.b16 %v2252
  %v2291 = vpack.c.b16 %v2277, %v2275
  %v2292 = vpack.c.b16 %v2278, %v2276
  %v2293 = vpack.c.b16 %v2281, %v2279
  %v2294 = vpack.c.b16 %v2282, %v2280
  %v2295 = vpack.c.b16 %v2285, %v2283
  %v2296 = vpack.c.b16 %v2286, %v2284
  %v2297 = vpack.c.b16 %v2289, %v2287
  %v2298 = vpack.c.b16 %v2290, %v2288
  %v2308 = vsel %vm153, %v2266, 0
  %2310 = vmatprep.subr.bf16.mxu0 0
  %2311 = vmatpush1.bf16.msra.mxu0 0
  %2312 = vmatprep.subr.bf16.mxu0 0
  %2313 = vmatpush1.bf16.msra.mxu0 0
  %2314 = vmatprep.subr.bf16.mxu0 0
  %2315 = vmatpush1.bf16.msra.mxu0 0
  %2316 = vmatprep.subr.bf16.mxu0 0
  %2317 = vmatpush1.bf16.msra.mxu0 0
  %2318 = vmatprep.subr.bf16.mxu0 %v2298
  %2319 = vmatpush1.bf16.msra.mxu0 %v2297
  %2320 = vmatprep.subr.bf16.mxu0 %v2296
  %2321 = vmatpush1.bf16.msra.mxu0 %v2295
  %2322 = vmatprep.subr.bf16.mxu0 %v2294
  %2323 = vmatpush1.bf16.msra.mxu0 %v2293
  %2324 = vmatprep.subr.bf16.mxu0 %v2292
  %2325 = vmatpush1.bf16.msra.mxu0 %v2291
  %2326 = vmatprep.subr.bf16.mxu0 0
  %2327 = vmatpush2.bf16.msra.mxu0 0
  %2328 = vmatprep.subr.bf16.mxu0 0
  %2329 = vmatpush2.bf16.msra.mxu0 0
  %2330 = vmatprep.subr.bf16.mxu0 0
  %2331 = vmatpush2.bf16.msra.mxu0 0
  %2332 = vmatprep.subr.bf16.mxu0 0
  %2333 = vmatpush2.bf16.msra.mxu0 0
  %2334 = vmatprep.subr.bf16.mxu0 0
  %2335 = vmatpush2.bf16.msra.mxu0 0
  %2336 = vmatprep.subr.bf16.mxu0 0
  %2337 = vmatpush2.bf16.msra.mxu0 0
  %2338 = vmatprep.subr.bf16.mxu0 0
  %2339 = vmatpush2.bf16.msra.mxu0 0
  %2340 = vmatprep.subr.bf16.mxu0 0
  %2341 = vmatpush2.bf16.msra.mxu0 0
  %2342 = vmatprep.mubr.bf16.mxu0 0
  %2343 = vmatmul.mubr.bf16.gmra.mxu0 %v2308
  %v2344 = vpop.f32.mrf.mxu0
  %v2345 = vadd.f32 %v2258, %v2344
  %v2346 = vpop.f32.mrf.mxu0
  %v2347 = vadd.f32 %v2262, %v2346
  %v2348 = vpop.f32.mrf.mxu0
  %v2349 = vpop.f32.mrf.mxu0
  %2350 = vdwg.mxu0
  %v2352 = vrot.slane %v2345, 4
  %v2354 = vadd.f32 %v1868, %v2352
  %v2355 = vxor.u32 %v2354, 2147483648
  %v2356 = vmul.f32 %v2355, 1.442695
  %v2357 = vpow.pop %v2356
  %v2358 = vadd.f32 %v2357, 1.0
  %v2359 = vrcp.pop %v2358
  %v2360 = vmul.f32 1.0, %v2359
  %2361 = vrot.lane.b32.xlu0 %v2352, 64
  %v2362 = vpop.permute.xlu0 %2361
  %v2364 = vmul.f32 %v2360, %v2362
  %2366 = vrot.lane.b32.xlu0 %v2364, 64
  %v2367 = vpop.permute.xlu0 %2366
  %v2369 = vadd.f32 %v1868, %v2367
  %v2370 = vtanh.pop %v2369
  %v2371 = vsub.f32 1.0, %v2360
  %2373 = vrot.lane.b32.xlu0 %v2370, 96
  %v2374 = vpop.permute.xlu0 %2373
  %v2376 = vmul.f32 %v2371, %v2374
  %v2377 = vrot.slane %v2189, 6
  %v2379 = vmul.f32 %v2360, %v2377
  %v2380 = vadd.f32 %v2376, %v2379
  %v2381 = vrot.slane %v2345, 6
  %v2383 = vadd.f32 %v1872, %v2381
  %v2384 = vxor.u32 %v2383, 2147483648
  %v2385 = vmul.f32 %v2384, 1.442695
  %v2386 = vpow.pop %v2385
  %v2387 = vadd.f32 %v2386, 1.0
  %v2388 = vrcp.pop %v2387
  %v2389 = vmul.f32 1.0, %v2388
  %v2391 = vrot.slane %v2347, 6
  %v2393 = vadd.f32 %v1874, %v2391
  %v2394 = vxor.u32 %v2393, 2147483648
  %v2395 = vmul.f32 %v2394, 1.442695
  %v2396 = vpow.pop %v2395
  %v2397 = vadd.f32 %v2396, 1.0
  %v2398 = vrcp.pop %v2397
  %v2399 = vmul.f32 1.0, %v2398
  %2400 = vrot.lane.b32.xlu0 %v2391, 64
  %v2401 = vpop.permute.xlu0 %2400
  %v2403 = vmul.f32 %v2389, %v2401
  %2405 = vrot.lane.b32.xlu0 %v2403, 64
  %v2406 = vpop.permute.xlu0 %2405
  %v2408 = vadd.f32 %v1874, %v2406
  %v2409 = vtanh.pop %v2408
  %v2410 = vsub.f32 1.0, %v2399
  %2412 = vrot.lane.b32.xlu0 %v2409, 96
  %v2413 = vpop.permute.xlu0 %2412
  %v2415 = vmul.f32 %v2410, %v2413
  %v2417 = vmul.f32 %v2399, %v2239
  %v2418 = vadd.f32 %v2415, %v2417
  %2420 = vrot.lane.b32.xlu0 %v2380, 96
  %v2421 = vpop.permute.xlu0 %2420
  %2423 = vst.msk [vmem:[#allocation3] sm:$0x30] %vm756, %v2421
  %2425 = vrot.lane.b32.xlu0 %v2418, 32
  %v2426 = vpop.permute.xlu0 %2425
  %2428 = vst.msk [vmem:[#allocation3 + $0x8] sm:$0xc] %vm762, %v2426
  %v2429 = vrot.slane %v2418, 6
  %2430 = vrot.lane.b32.xlu0 %v2429, 32
  %v2431 = vpop.permute.xlu0 %2430
  %v2433 = vsel %vm384, %v2421, %v2431
  %v2434 = vpack.c.bf16 %v2433, %v2433
  %v2435 = vld [vmem:[%s12] sm:$0xff]
  %v2436 = vld [vmem:[%s12 + $0x8] sm:$0xff]
  %v2437 = vld [vmem:[%s12 + $0x10] sm:$0xff]
  %v2438 = vld [vmem:[%s12 + $0x18] sm:$0xff]
  %v2439 = vld [vmem:[%s12 + $0x20] sm:$0xff]
  %v2440 = vld [vmem:[%s12 + $0x28] sm:$0xff]
  %v2441 = vld [vmem:[%s12 + $0x30] sm:$0xff]
  %v2442 = vld [vmem:[%s12 + $0x38] sm:$0xff]
  %v2443 = vld [vmem:[%s13] sm:$0x3]
  %v2445 = vlaneseq
  %v2446 = vshrl.u32 %v2445, 7
  %v2447 = vsub.s32 0, %v2446
  %v2448 = vrot.slane %v2443, %v2447
  %v2449 = vlaneseq
  %v2450 = vshrl.u32 %v2449, 7
  %v2451 = vsub.s32 1, %v2450
  %v2452 = vrot.slane %v2443, %v2451
  %v2456 = vrot.slane %v2434, 2
  %v2465 = vunpack.c.l.b16 %v2435
  %v2466 = vunpack.c.h.b16 %v2435
  %v2467 = vunpack.c.l.b16 %v2436
  %v2468 = vunpack.c.h.b16 %v2436
  %v2469 = vunpack.c.l.b16 %v2437
  %v2470 = vunpack.c.h.b16 %v2437
  %v2471 = vunpack.c.l.b16 %v2438
  %v2472 = vunpack.c.h.b16 %v2438
  %v2473 = vunpack.c.l.b16 %v2439
  %v2474 = vunpack.c.h.b16 %v2439
  %v2475 = vunpack.c.l.b16 %v2440
  %v2476 = vunpack.c.h.b16 %v2440
  %v2477 = vunpack.c.l.b16 %v2441
  %v2478 = vunpack.c.h.b16 %v2441
  %v2479 = vunpack.c.l.b16 %v2442
  %v2480 = vunpack.c.h.b16 %v2442
  %v2481 = vpack.c.b16 %v2467, %v2465
  %v2482 = vpack.c.b16 %v2468, %v2466
  %v2483 = vpack.c.b16 %v2471, %v2469
  %v2484 = vpack.c.b16 %v2472, %v2470
  %v2485 = vpack.c.b16 %v2475, %v2473
  %v2486 = vpack.c.b16 %v2476, %v2474
  %v2487 = vpack.c.b16 %v2479, %v2477
  %v2488 = vpack.c.b16 %v2480, %v2478
  %v2498 = vsel %vm153, %v2456, 0
  %2500 = vmatprep.subr.bf16.mxu0 0
  %2501 = vmatpush1.bf16.msra.mxu0 0
  %2502 = vmatprep.subr.bf16.mxu0 0
  %2503 = vmatpush1.bf16.msra.mxu0 0
  %2504 = vmatprep.subr.bf16.mxu0 0
  %2505 = vmatpush1.bf16.msra.mxu0 0
  %2506 = vmatprep.subr.bf16.mxu0 0
  %2507 = vmatpush1.bf16.msra.mxu0 0
  %2508 = vmatprep.subr.bf16.mxu0 %v2488
  %2509 = vmatpush1.bf16.msra.mxu0 %v2487
  %2510 = vmatprep.subr.bf16.mxu0 %v2486
  %2511 = vmatpush1.bf16.msra.mxu0 %v2485
  %2512 = vmatprep.subr.bf16.mxu0 %v2484
  %2513 = vmatpush1.bf16.msra.mxu0 %v2483
  %2514 = vmatprep.subr.bf16.mxu0 %v2482
  %2515 = vmatpush1.bf16.msra.mxu0 %v2481
  %2516 = vmatprep.subr.bf16.mxu0 0
  %2517 = vmatpush2.bf16.msra.mxu0 0
  %2518 = vmatprep.subr.bf16.mxu0 0
  %2519 = vmatpush2.bf16.msra.mxu0 0
  %2520 = vmatprep.subr.bf16.mxu0 0
  %2521 = vmatpush2.bf16.msra.mxu0 0
  %2522 = vmatprep.subr.bf16.mxu0 0
  %2523 = vmatpush2.bf16.msra.mxu0 0
  %2524 = vmatprep.subr.bf16.mxu0 0
  %2525 = vmatpush2.bf16.msra.mxu0 0
  %2526 = vmatprep.subr.bf16.mxu0 0
  %2527 = vmatpush2.bf16.msra.mxu0 0
  %2528 = vmatprep.subr.bf16.mxu0 0
  %2529 = vmatpush2.bf16.msra.mxu0 0
  %2530 = vmatprep.subr.bf16.mxu0 0
  %2531 = vmatpush2.bf16.msra.mxu0 0
  %2532 = vmatprep.mubr.bf16.mxu0 0
  %2533 = vmatmul.mubr.bf16.gmra.mxu0 %v2498
  %v2534 = vpop.f32.mrf.mxu0
  %v2535 = vadd.f32 %v2448, %v2534
  %v2536 = vpop.f32.mrf.mxu0
  %v2537 = vadd.f32 %v2452, %v2536
  %v2538 = vpop.f32.mrf.mxu0
  %v2539 = vpop.f32.mrf.mxu0
  %2540 = vdwg.mxu0
  %v2542 = vrot.slane %v2535, 2
  %v2544 = vadd.f32 %v1868, %v2542
  %v2545 = vxor.u32 %v2544, 2147483648
  %v2546 = vmul.f32 %v2545, 1.442695
  %v2547 = vpow.pop %v2546
  %v2548 = vadd.f32 %v2547, 1.0
  %v2549 = vrcp.pop %v2548
  %v2550 = vmul.f32 1.0, %v2549
  %2551 = vrot.lane.b32.xlu0 %v2542, 64
  %v2552 = vpop.permute.xlu0 %2551
  %v2554 = vmul.f32 %v2550, %v2552
  %2556 = vrot.lane.b32.xlu0 %v2554, 64
  %v2557 = vpop.permute.xlu0 %2556
  %v2559 = vadd.f32 %v1868, %v2557
  %v2560 = vtanh.pop %v2559
  %v2561 = vsub.f32 1.0, %v2550
  %2563 = vrot.lane.b32.xlu0 %v2560, 96
  %v2564 = vpop.permute.xlu0 %2563
  %v2566 = vmul.f32 %v2561, %v2564
  %v2567 = vrot.slane %v2380, 6
  %v2569 = vmul.f32 %v2550, %v2567
  %v2570 = vadd.f32 %v2566, %v2569
  %v2571 = vadd.f32 %v1872, %v2535
  %v2572 = vxor.u32 %v2571, 2147483648
  %v2573 = vmul.f32 %v2572, 1.442695
  %v2574 = vpow.pop %v2573
  %v2575 = vadd.f32 %v2574, 1.0
  %v2576 = vrcp.pop %v2575
  %v2577 = vmul.f32 1.0, %v2576
  %v2578 = vadd.f32 %v1874, %v2537
  %v2579 = vxor.u32 %v2578, 2147483648
  %v2580 = vmul.f32 %v2579, 1.442695
  %v2581 = vpow.pop %v2580
  %v2582 = vadd.f32 %v2581, 1.0
  %v2583 = vrcp.pop %v2582
  %v2584 = vmul.f32 1.0, %v2583
  %2586 = vrot.lane.b32.xlu0 %v2537, 64
  %v2587 = vpop.permute.xlu0 %2586
  %v2589 = vmul.f32 %v2577, %v2587
  %2591 = vrot.lane.b32.xlu0 %v2589, 64
  %v2592 = vpop.permute.xlu0 %2591
  %v2594 = vadd.f32 %v1874, %v2592
  %v2595 = vtanh.pop %v2594
  %v2596 = vsub.f32 1.0, %v2584
  %2598 = vrot.lane.b32.xlu0 %v2595, 96
  %v2599 = vpop.permute.xlu0 %2598
  %v2601 = vmul.f32 %v2596, %v2599
  %v2602 = vrot.slane %v2418, 2
  %v2604 = vmul.f32 %v2584, %v2602
  %v2605 = vadd.f32 %v2601, %v2604
  %2607 = vrot.lane.b32.xlu0 %v2570, 96
  %v2608 = vpop.permute.xlu0 %2607
  %2610 = vst.msk [vmem:[#allocation3] sm:$0xc0] %vm945, %v2608
  %2612 = vrot.lane.b32.xlu0 %v2605, 32
  %v2613 = vpop.permute.xlu0 %2612
  %2615 = vst.msk [vmem:[#allocation3 + $0x8] sm:$0x3] %vm951, %v2613
  %v2616 = vrot.slane %v2605, 2
  %2617 = vrot.lane.b32.xlu0 %v2616, 32
  %v2618 = vpop.permute.xlu0 %2617
  %v2620 = vsel %vm384, %v2608, %v2618
  %v2621 = vpack.c.bf16 %v2620, %v2620
  %v2622 = vld [vmem:[%s12] sm:$0xff]
  %v2623 = vld [vmem:[%s12 + $0x8] sm:$0xff]
  %v2624 = vld [vmem:[%s12 + $0x10] sm:$0xff]
  %v2625 = vld [vmem:[%s12 + $0x18] sm:$0xff]
  %v2626 = vld [vmem:[%s12 + $0x20] sm:$0xff]
  %v2627 = vld [vmem:[%s12 + $0x28] sm:$0xff]
  %v2628 = vld [vmem:[%s12 + $0x30] sm:$0xff]
  %v2629 = vld [vmem:[%s12 + $0x38] sm:$0xff]
  %v2630 = vld [vmem:[%s13] sm:$0x3]
  %v2632 = vlaneseq
  %v2633 = vshrl.u32 %v2632, 7
  %v2634 = vsub.s32 0, %v2633
  %v2635 = vrot.slane %v2630, %v2634
  %v2636 = vlaneseq
  %v2637 = vshrl.u32 %v2636, 7
  %v2638 = vsub.s32 1, %v2637
  %v2639 = vrot.slane %v2630, %v2638
  %v2643 = vrot.slane %v2621, 3
  %v2652 = vunpack.c.l.b16 %v2622
  %v2653 = vunpack.c.h.b16 %v2622
  %v2654 = vunpack.c.l.b16 %v2623
  %v2655 = vunpack.c.h.b16 %v2623
  %v2656 = vunpack.c.l.b16 %v2624
  %v2657 = vunpack.c.h.b16 %v2624
  %v2658 = vunpack.c.l.b16 %v2625
  %v2659 = vunpack.c.h.b16 %v2625
  %v2660 = vunpack.c.l.b16 %v2626
  %v2661 = vunpack.c.h.b16 %v2626
  %v2662 = vunpack.c.l.b16 %v2627
  %v2663 = vunpack.c.h.b16 %v2627
  %v2664 = vunpack.c.l.b16 %v2628
  %v2665 = vunpack.c.h.b16 %v2628
  %v2666 = vunpack.c.l.b16 %v2629
  %v2667 = vunpack.c.h.b16 %v2629
  %v2668 = vpack.c.b16 %v2654, %v2652
  %v2669 = vpack.c.b16 %v2655, %v2653
  %v2670 = vpack.c.b16 %v2658, %v2656
  %v2671 = vpack.c.b16 %v2659, %v2657
  %v2672 = vpack.c.b16 %v2662, %v2660
  %v2673 = vpack.c.b16 %v2663, %v2661
  %v2674 = vpack.c.b16 %v2666, %v2664
  %v2675 = vpack.c.b16 %v2667, %v2665
  %v2685 = vsel %vm153, %v2643, 0
  %2687 = vmatprep.subr.bf16.mxu0 0
  %2688 = vmatpush1.bf16.msra.mxu0 0
  %2689 = vmatprep.subr.bf16.mxu0 0
  %2690 = vmatpush1.bf16.msra.mxu0 0
  %2691 = vmatprep.subr.bf16.mxu0 0
  %2692 = vmatpush1.bf16.msra.mxu0 0
  %2693 = vmatprep.subr.bf16.mxu0 0
  %2694 = vmatpush1.bf16.msra.mxu0 0
  %2695 = vmatprep.subr.bf16.mxu0 %v2675
  %2696 = vmatpush1.bf16.msra.mxu0 %v2674
  %2697 = vmatprep.subr.bf16.mxu0 %v2673
  %2698 = vmatpush1.bf16.msra.mxu0 %v2672
  %2699 = vmatprep.subr.bf16.mxu0 %v2671
  %2700 = vmatpush1.bf16.msra.mxu0 %v2670
  %2701 = vmatprep.subr.bf16.mxu0 %v2669
  %2702 = vmatpush1.bf16.msra.mxu0 %v2668
  %2703 = vmatprep.subr.bf16.mxu0 0
  %2704 = vmatpush2.bf16.msra.mxu0 0
  %2705 = vmatprep.subr.bf16.mxu0 0
  %2706 = vmatpush2.bf16.msra.mxu0 0
  %2707 = vmatprep.subr.bf16.mxu0 0
  %2708 = vmatpush2.bf16.msra.mxu0 0
  %2709 = vmatprep.subr.bf16.mxu0 0
  %2710 = vmatpush2.bf16.msra.mxu0 0
  %2711 = vmatprep.subr.bf16.mxu0 0
  %2712 = vmatpush2.bf16.msra.mxu0 0
  %2713 = vmatprep.subr.bf16.mxu0 0
  %2714 = vmatpush2.bf16.msra.mxu0 0
  %2715 = vmatprep.subr.bf16.mxu0 0
  %2716 = vmatpush2.bf16.msra.mxu0 0
  %2717 = vmatprep.subr.bf16.mxu0 0
  %2718 = vmatpush2.bf16.msra.mxu0 0
  %2719 = vmatprep.mubr.bf16.mxu0 0
  %2720 = vmatmul.mubr.bf16.gmra.mxu0 %v2685
  %v2721 = vpop.f32.mrf.mxu0
  %v2722 = vadd.f32 %v2635, %v2721
  %v2723 = vpop.f32.mrf.mxu0
  %v2724 = vadd.f32 %v2639, %v2723
  %v2725 = vpop.f32.mrf.mxu0
  %v2726 = vpop.f32.mrf.mxu0
  %2727 = vdwg.mxu0
  %v2728 = vadd.f32 %v1872, %v2722
  %v2729 = vxor.u32 %v2728, 2147483648
  %v2730 = vmul.f32 %v2729, 1.442695
  %v2731 = vpow.pop %v2730
  %v2732 = vadd.f32 %v2731, 1.0
  %v2733 = vrcp.pop %v2732
  %v2734 = vmul.f32 1.0, %v2733
  %2736 = vrot.lane.b32.xlu0 %v2722, 64
  %v2737 = vpop.permute.xlu0 %2736
  %v2739 = vmul.f32 %v2734, %v2737
  %2741 = vrot.lane.b32.xlu0 %v2739, 64
  %v2742 = vpop.permute.xlu0 %2741
  %v2744 = vadd.f32 %v1872, %v2742
  %v2745 = vtanh.pop %v2744
  %v2746 = vsub.f32 1.0, %v2734
  %2748 = vrot.lane.b32.xlu0 %v2745, 96
  %v2749 = vpop.permute.xlu0 %2748
  %v2751 = vmul.f32 %v2746, %v2749
  %v2752 = vrot.slane %v2570, 6
  %v2754 = vmul.f32 %v2734, %v2752
  %v2755 = vadd.f32 %v2751, %v2754
  %v2756 = vrot.slane %v2722, 2
  %v2758 = vadd.f32 %v1868, %v2756
  %v2759 = vxor.u32 %v2758, 2147483648
  %v2760 = vmul.f32 %v2759, 1.442695
  %v2761 = vpow.pop %v2760
  %v2762 = vadd.f32 %v2761, 1.0
  %v2763 = vrcp.pop %v2762
  %v2764 = vmul.f32 1.0, %v2763
  %v2766 = vrot.slane %v2724, 2
  %v2768 = vadd.f32 %v1870, %v2766
  %v2769 = vxor.u32 %v2768, 2147483648
  %v2770 = vmul.f32 %v2769, 1.442695
  %v2771 = vpow.pop %v2770
  %v2772 = vadd.f32 %v2771, 1.0
  %v2773 = vrcp.pop %v2772
  %v2774 = vmul.f32 1.0, %v2773
  %2775 = vrot.lane.b32.xlu0 %v2766, 64
  %v2776 = vpop.permute.xlu0 %2775
  %v2778 = vmul.f32 %v2764, %v2776
  %2780 = vrot.lane.b32.xlu0 %v2778, 64
  %v2781 = vpop.permute.xlu0 %2780
  %v2783 = vadd.f32 %v1870, %v2781
  %v2784 = vtanh.pop %v2783
  %v2785 = vsub.f32 1.0, %v2774
  %2787 = vrot.lane.b32.xlu0 %v2784, 96
  %v2788 = vpop.permute.xlu0 %2787
  %v2790 = vmul.f32 %v2785, %v2788
  %v2792 = vmul.f32 %v2774, %v2616
  %v2793 = vadd.f32 %v2790, %v2792
  %2795 = vrot.lane.b32.xlu0 %v2755, 96
  %v2796 = vpop.permute.xlu0 %2795
  %2798 = vst.msk [vmem:[#allocation3 + $0x8] sm:$0x3] %vm372, %v2796
  %2800 = vrot.lane.b32.xlu0 %v2793, 32
  %v2801 = vpop.permute.xlu0 %2800
  %2803 = vst.msk [vmem:[#allocation3] sm:$0xc0] %vm378, %v2801
  %v2804 = vrot.slane %v2793, 6
  %2805 = vrot.lane.b32.xlu0 %v2804, 32
  %v2806 = vpop.permute.xlu0 %2805
  %v2808 = vsel %vm384, %v2796, %v2806
  %v2809 = vpack.c.bf16 %v2808, %v2808
  %v2810 = vld [vmem:[%s12] sm:$0xff]
  %v2811 = vld [vmem:[%s12 + $0x8] sm:$0xff]
  %v2812 = vld [vmem:[%s12 + $0x10] sm:$0xff]
  %v2813 = vld [vmem:[%s12 + $0x18] sm:$0xff]
  %v2814 = vld [vmem:[%s12 + $0x20] sm:$0xff]
  %v2815 = vld [vmem:[%s12 + $0x28] sm:$0xff]
  %v2816 = vld [vmem:[%s12 + $0x30] sm:$0xff]
  %v2817 = vld [vmem:[%s12 + $0x38] sm:$0xff]
  %v2818 = vld [vmem:[%s13] sm:$0x3]
  %v2820 = vlaneseq
  %v2821 = vshrl.u32 %v2820, 7
  %v2822 = vsub.s32 0, %v2821
  %v2823 = vrot.slane %v2818, %v2822
  %v2824 = vlaneseq
  %v2825 = vshrl.u32 %v2824, 7
  %v2826 = vsub.s32 1, %v2825
  %v2827 = vrot.slane %v2818, %v2826
  %v2838 = vunpack.c.l.b16 %v2810
  %v2839 = vunpack.c.h.b16 %v2810
  %v2840 = vunpack.c.l.b16 %v2811
  %v2841 = vunpack.c.h.b16 %v2811
  %v2842 = vunpack.c.l.b16 %v2812
  %v2843 = vunpack.c.h.b16 %v2812
  %v2844 = vunpack.c.l.b16 %v2813
  %v2845 = vunpack.c.h.b16 %v2813
  %v2846 = vunpack.c.l.b16 %v2814
  %v2847 = vunpack.c.h.b16 %v2814
  %v2848 = vunpack.c.l.b16 %v2815
  %v2849 = vunpack.c.h.b16 %v2815
  %v2850 = vunpack.c.l.b16 %v2816
  %v2851 = vunpack.c.h.b16 %v2816
  %v2852 = vunpack.c.l.b16 %v2817
  %v2853 = vunpack.c.h.b16 %v2817
  %v2854 = vpack.c.b16 %v2840, %v2838
  %v2855 = vpack.c.b16 %v2841, %v2839
  %v2856 = vpack.c.b16 %v2844, %v2842
  %v2857 = vpack.c.b16 %v2845, %v2843
  %v2858 = vpack.c.b16 %v2848, %v2846
  %v2859 = vpack.c.b16 %v2849, %v2847
  %v2860 = vpack.c.b16 %v2852, %v2850
  %v2861 = vpack.c.b16 %v2853, %v2851
  %v2871 = vsel %vm153, %v2809, 0
  %2873 = vmatprep.subr.bf16.mxu0 0
  %2874 = vmatpush1.bf16.msra.mxu0 0
  %2875 = vmatprep.subr.bf16.mxu0 0
  %2876 = vmatpush1.bf16.msra.mxu0 0
  %2877 = vmatprep.subr.bf16.mxu0 0
  %2878 = vmatpush1.bf16.msra.mxu0 0
  %2879 = vmatprep.subr.bf16.mxu0 0
  %2880 = vmatpush1.bf16.msra.mxu0 0
  %2881 = vmatprep.subr.bf16.mxu0 %v2861
  %2882 = vmatpush1.bf16.msra.mxu0 %v2860
  %2883 = vmatprep.subr.bf16.mxu0 %v2859
  %2884 = vmatpush1.bf16.msra.mxu0 %v2858
  %2885 = vmatprep.subr.bf16.mxu0 %v2857
  %2886 = vmatpush1.bf16.msra.mxu0 %v2856
  %2887 = vmatprep.subr.bf16.mxu0 %v2855
  %2888 = vmatpush1.bf16.msra.mxu0 %v2854
  %2889 = vmatprep.subr.bf16.mxu0 0
  %2890 = vmatpush2.bf16.msra.mxu0 0
  %2891 = vmatprep.subr.bf16.mxu0 0
  %2892 = vmatpush2.bf16.msra.mxu0 0
  %2893 = vmatprep.subr.bf16.mxu0 0
  %2894 = vmatpush2.bf16.msra.mxu0 0
  %2895 = vmatprep.subr.bf16.mxu0 0
  %2896 = vmatpush2.bf16.msra.mxu0 0
  %2897 = vmatprep.subr.bf16.mxu0 0
  %2898 = vmatpush2.bf16.msra.mxu0 0
  %2899 = vmatprep.subr.bf16.mxu0 0
  %2900 = vmatpush2.bf16.msra.mxu0 0
  %2901 = vmatprep.subr.bf16.mxu0 0
  %2902 = vmatpush2.bf16.msra.mxu0 0
  %2903 = vmatprep.subr.bf16.mxu0 0
  %2904 = vmatpush2.bf16.msra.mxu0 0
  %2905 = vmatprep.mubr.bf16.mxu0 0
  %2906 = vmatmul.mubr.bf16.gmra.mxu0 %v2871
  %v2907 = vpop.f32.mrf.mxu0
  %v2908 = vadd.f32 %v2823, %v2907
  %v2909 = vpop.f32.mrf.mxu0
  %v2910 = vadd.f32 %v2827, %v2909
  %v2911 = vpop.f32.mrf.mxu0
  %v2912 = vpop.f32.mrf.mxu0
  %2913 = vdwg.mxu0
  %v2915 = vrot.slane %v2908, 6
  %v2917 = vadd.f32 %v1872, %v2915
  %v2918 = vxor.u32 %v2917, 2147483648
  %v2919 = vmul.f32 %v2918, 1.442695
  %v2920 = vpow.pop %v2919
  %v2921 = vadd.f32 %v2920, 1.0
  %v2922 = vrcp.pop %v2921
  %v2923 = vmul.f32 1.0, %v2922
  %2924 = vrot.lane.b32.xlu0 %v2915, 64
  %v2925 = vpop.permute.xlu0 %2924
  %v2927 = vmul.f32 %v2923, %v2925
  %2929 = vrot.lane.b32.xlu0 %v2927, 64
  %v2930 = vpop.permute.xlu0 %2929
  %v2932 = vadd.f32 %v1872, %v2930
  %v2933 = vtanh.pop %v2932
  %v2934 = vsub.f32 1.0, %v2923
  %2936 = vrot.lane.b32.xlu0 %v2933, 96
  %v2937 = vpop.permute.xlu0 %2936
  %v2939 = vmul.f32 %v2934, %v2937
  %v2940 = vrot.slane %v2755, 6
  %v2942 = vmul.f32 %v2923, %v2940
  %v2943 = vadd.f32 %v2939, %v2942
  %v2944 = vrot.slane %v2908, 4
  %v2946 = vadd.f32 %v1868, %v2944
  %v2947 = vxor.u32 %v2946, 2147483648
  %v2948 = vmul.f32 %v2947, 1.442695
  %v2949 = vpow.pop %v2948
  %v2950 = vadd.f32 %v2949, 1.0
  %v2951 = vrcp.pop %v2950
  %v2952 = vmul.f32 1.0, %v2951
  %v2954 = vrot.slane %v2910, 4
  %v2956 = vadd.f32 %v1870, %v2954
  %v2957 = vxor.u32 %v2956, 2147483648
  %v2958 = vmul.f32 %v2957, 1.442695
  %v2959 = vpow.pop %v2958
  %v2960 = vadd.f32 %v2959, 1.0
  %v2961 = vrcp.pop %v2960
  %v2962 = vmul.f32 1.0, %v2961
  %2963 = vrot.lane.b32.xlu0 %v2954, 64
  %v2964 = vpop.permute.xlu0 %2963
  %v2966 = vmul.f32 %v2952, %v2964
  %2968 = vrot.lane.b32.xlu0 %v2966, 64
  %v2969 = vpop.permute.xlu0 %2968
  %v2971 = vadd.f32 %v1870, %v2969
  %v2972 = vtanh.pop %v2971
  %v2973 = vsub.f32 1.0, %v2962
  %2975 = vrot.lane.b32.xlu0 %v2972, 96
  %v2976 = vpop.permute.xlu0 %2975
  %v2978 = vmul.f32 %v2973, %v2976
  %v2979 = vrot.slane %v2793, 2
  %v2981 = vmul.f32 %v2962, %v2979
  %v2982 = vadd.f32 %v2978, %v2981
  %2984 = vrot.lane.b32.xlu0 %v2943, 96
  %v2985 = vpop.permute.xlu0 %2984
  %2987 = vst.msk [vmem:[#allocation3 + $0x8] sm:$0xc] %vm564, %v2985
  %2989 = vrot.lane.b32.xlu0 %v2982, 32
  %v2990 = vpop.permute.xlu0 %2989
  %2992 = vst.msk [vmem:[#allocation3] sm:$0x30] %vm570, %v2990
  %v2993 = vrot.slane %v2982, 2
  %2994 = vrot.lane.b32.xlu0 %v2993, 32
  %v2995 = vpop.permute.xlu0 %2994
  %v2997 = vsel %vm384, %v2985, %v2995
  %v2998 = vpack.c.bf16 %v2997, %v2997
  %v2999 = vld [vmem:[%s12] sm:$0xff]
  %v3000 = vld [vmem:[%s12 + $0x8] sm:$0xff]
  %v3001 = vld [vmem:[%s12 + $0x10] sm:$0xff]
  %v3002 = vld [vmem:[%s12 + $0x18] sm:$0xff]
  %v3003 = vld [vmem:[%s12 + $0x20] sm:$0xff]
  %v3004 = vld [vmem:[%s12 + $0x28] sm:$0xff]
  %v3005 = vld [vmem:[%s12 + $0x30] sm:$0xff]
  %v3006 = vld [vmem:[%s12 + $0x38] sm:$0xff]
  %v3007 = vld [vmem:[%s13] sm:$0x3]
  %v3009 = vlaneseq
  %v3010 = vshrl.u32 %v3009, 7
  %v3011 = vsub.s32 0, %v3010
  %v3012 = vrot.slane %v3007, %v3011
  %v3013 = vlaneseq
  %v3014 = vshrl.u32 %v3013, 7
  %v3015 = vsub.s32 1, %v3014
  %v3016 = vrot.slane %v3007, %v3015
  %v3020 = vrot.slane %v2998, 1
  %v3029 = vunpack.c.l.b16 %v2999
  %v3030 = vunpack.c.h.b16 %v2999
  %v3031 = vunpack.c.l.b16 %v3000
  %v3032 = vunpack.c.h.b16 %v3000
  %v3033 = vunpack.c.l.b16 %v3001
  %v3034 = vunpack.c.h.b16 %v3001
  %v3035 = vunpack.c.l.b16 %v3002
  %v3036 = vunpack.c.h.b16 %v3002
  %v3037 = vunpack.c.l.b16 %v3003
  %v3038 = vunpack.c.h.b16 %v3003
  %v3039 = vunpack.c.l.b16 %v3004
  %v3040 = vunpack.c.h.b16 %v3004
  %v3041 = vunpack.c.l.b16 %v3005
  %v3042 = vunpack.c.h.b16 %v3005
  %v3043 = vunpack.c.l.b16 %v3006
  %v3044 = vunpack.c.h.b16 %v3006
  %v3045 = vpack.c.b16 %v3031, %v3029
  %v3046 = vpack.c.b16 %v3032, %v3030
  %v3047 = vpack.c.b16 %v3035, %v3033
  %v3048 = vpack.c.b16 %v3036, %v3034
  %v3049 = vpack.c.b16 %v3039, %v3037
  %v3050 = vpack.c.b16 %v3040, %v3038
  %v3051 = vpack.c.b16 %v3043, %v3041
  %v3052 = vpack.c.b16 %v3044, %v3042
  %v3062 = vsel %vm153, %v3020, 0
  %3064 = vmatprep.subr.bf16.mxu0 0
  %3065 = vmatpush1.bf16.msra.mxu0 0
  %3066 = vmatprep.subr.bf16.mxu0 0
  %3067 = vmatpush1.bf16.msra.mxu0 0
  %3068 = vmatprep.subr.bf16.mxu0 0
  %3069 = vmatpush1.bf16.msra.mxu0 0
  %3070 = vmatprep.subr.bf16.mxu0 0
  %3071 = vmatpush1.bf16.msra.mxu0 0
  %3072 = vmatprep.subr.bf16.mxu0 %v3052
  %3073 = vmatpush1.bf16.msra.mxu0 %v3051
  %3074 = vmatprep.subr.bf16.mxu0 %v3050
  %3075 = vmatpush1.bf16.msra.mxu0 %v3049
  %3076 = vmatprep.subr.bf16.mxu0 %v3048
  %3077 = vmatpush1.bf16.msra.mxu0 %v3047
  %3078 = vmatprep.subr.bf16.mxu0 %v3046
  %3079 = vmatpush1.bf16.msra.mxu0 %v3045
  %3080 = vmatprep.subr.bf16.mxu0 0
  %3081 = vmatpush2.bf16.msra.mxu0 0
  %3082 = vmatprep.subr.bf16.mxu0 0
  %3083 = vmatpush2.bf16.msra.mxu0 0
  %3084 = vmatprep.subr.bf16.mxu0 0
  %3085 = vmatpush2.bf16.msra.mxu0 0
  %3086 = vmatprep.subr.bf16.mxu0 0
  %3087 = vmatpush2.bf16.msra.mxu0 0
  %3088 = vmatprep.subr.bf16.mxu0 0
  %3089 = vmatpush2.bf16.msra.mxu0 0
  %3090 = vmatprep.subr.bf16.mxu0 0
  %3091 = vmatpush2.bf16.msra.mxu0 0
  %3092 = vmatprep.subr.bf16.mxu0 0
  %3093 = vmatpush2.bf16.msra.mxu0 0
  %3094 = vmatprep.subr.bf16.mxu0 0
  %3095 = vmatpush2.bf16.msra.mxu0 0
  %3096 = vmatprep.mubr.bf16.mxu0 0
  %3097 = vmatmul.mubr.bf16.gmra.mxu0 %v3062
  %v3098 = vpop.f32.mrf.mxu0
  %v3099 = vadd.f32 %v3012, %v3098
  %v3100 = vpop.f32.mrf.mxu0
  %v3101 = vadd.f32 %v3016, %v3100
  %v3102 = vpop.f32.mrf.mxu0
  %v3103 = vpop.f32.mrf.mxu0
  %3104 = vdwg.mxu0
  %v3106 = vrot.slane %v3099, 4
  %v3108 = vadd.f32 %v1872, %v3106
  %v3109 = vxor.u32 %v3108, 2147483648
  %v3110 = vmul.f32 %v3109, 1.442695
  %v3111 = vpow.pop %v3110
  %v3112 = vadd.f32 %v3111, 1.0
  %v3113 = vrcp.pop %v3112
  %v3114 = vmul.f32 1.0, %v3113
  %3115 = vrot.lane.b32.xlu0 %v3106, 64
  %v3116 = vpop.permute.xlu0 %3115
  %v3118 = vmul.f32 %v3114, %v3116
  %3120 = vrot.lane.b32.xlu0 %v3118, 64
  %v3121 = vpop.permute.xlu0 %3120
  %v3123 = vadd.f32 %v1872, %v3121
  %v3124 = vtanh.pop %v3123
  %v3125 = vsub.f32 1.0, %v3114
  %3127 = vrot.lane.b32.xlu0 %v3124, 96
  %v3128 = vpop.permute.xlu0 %3127
  %v3130 = vmul.f32 %v3125, %v3128
  %v3131 = vrot.slane %v2943, 6
  %v3133 = vmul.f32 %v3114, %v3131
  %v3134 = vadd.f32 %v3130, %v3133
  %v3135 = vrot.slane %v3099, 6
  %v3137 = vadd.f32 %v1868, %v3135
  %v3138 = vxor.u32 %v3137, 2147483648
  %v3139 = vmul.f32 %v3138, 1.442695
  %v3140 = vpow.pop %v3139
  %v3141 = vadd.f32 %v3140, 1.0
  %v3142 = vrcp.pop %v3141
  %v3143 = vmul.f32 1.0, %v3142
  %v3145 = vrot.slane %v3101, 6
  %v3147 = vadd.f32 %v1870, %v3145
  %v3148 = vxor.u32 %v3147, 2147483648
  %v3149 = vmul.f32 %v3148, 1.442695
  %v3150 = vpow.pop %v3149
  %v3151 = vadd.f32 %v3150, 1.0
  %v3152 = vrcp.pop %v3151
  %v3153 = vmul.f32 1.0, %v3152
  %3154 = vrot.lane.b32.xlu0 %v3145, 64
  %v3155 = vpop.permute.xlu0 %3154
  %v3157 = vmul.f32 %v3143, %v3155
  %3159 = vrot.lane.b32.xlu0 %v3157, 64
  %v3160 = vpop.permute.xlu0 %3159
  %v3162 = vadd.f32 %v1870, %v3160
  %v3163 = vtanh.pop %v3162
  %v3164 = vsub.f32 1.0, %v3153
  %3166 = vrot.lane.b32.xlu0 %v3163, 96
  %v3167 = vpop.permute.xlu0 %3166
  %v3169 = vmul.f32 %v3164, %v3167
  %v3171 = vmul.f32 %v3153, %v2993
  %v3172 = vadd.f32 %v3169, %v3171
  %3174 = vrot.lane.b32.xlu0 %v3134, 96
  %v3175 = vpop.permute.xlu0 %3174
  %3177 = vst.msk [vmem:[#allocation3 + $0x8] sm:$0x30] %vm756, %v3175
  %3179 = vrot.lane.b32.xlu0 %v3172, 32
  %v3180 = vpop.permute.xlu0 %3179
  %3182 = vst.msk [vmem:[#allocation3] sm:$0xc] %vm762, %v3180
  %v3183 = vrot.slane %v3172, 6
  %3184 = vrot.lane.b32.xlu0 %v3183, 32
  %v3185 = vpop.permute.xlu0 %3184
  %v3187 = vsel %vm384, %v3175, %v3185
  %v3188 = vpack.c.bf16 %v3187, %v3187
  %v3189 = vld [vmem:[%s12] sm:$0xff]
  %v3190 = vld [vmem:[%s12 + $0x8] sm:$0xff]
  %v3191 = vld [vmem:[%s12 + $0x10] sm:$0xff]
  %v3192 = vld [vmem:[%s12 + $0x18] sm:$0xff]
  %v3193 = vld [vmem:[%s12 + $0x20] sm:$0xff]
  %v3194 = vld [vmem:[%s12 + $0x28] sm:$0xff]
  %v3195 = vld [vmem:[%s12 + $0x30] sm:$0xff]
  %v3196 = vld [vmem:[%s12 + $0x38] sm:$0xff]
  %v3197 = vld [vmem:[%s13] sm:$0x3]
  %v3199 = vlaneseq
  %v3200 = vshrl.u32 %v3199, 7
  %v3201 = vsub.s32 0, %v3200
  %v3202 = vrot.slane %v3197, %v3201
  %v3203 = vlaneseq
  %v3204 = vshrl.u32 %v3203, 7
  %v3205 = vsub.s32 1, %v3204
  %v3206 = vrot.slane %v3197, %v3205
  %v3210 = vrot.slane %v3188, 2
  %v3219 = vunpack.c.l.b16 %v3189
  %v3220 = vunpack.c.h.b16 %v3189
  %v3221 = vunpack.c.l.b16 %v3190
  %v3222 = vunpack.c.h.b16 %v3190
  %v3223 = vunpack.c.l.b16 %v3191
  %v3224 = vunpack.c.h.b16 %v3191
  %v3225 = vunpack.c.l.b16 %v3192
  %v3226 = vunpack.c.h.b16 %v3192
  %v3227 = vunpack.c.l.b16 %v3193
  %v3228 = vunpack.c.h.b16 %v3193
  %v3229 = vunpack.c.l.b16 %v3194
  %v3230 = vunpack.c.h.b16 %v3194
  %v3231 = vunpack.c.l.b16 %v3195
  %v3232 = vunpack.c.h.b16 %v3195
  %v3233 = vunpack.c.l.b16 %v3196
  %v3234 = vunpack.c.h.b16 %v3196
  %v3235 = vpack.c.b16 %v3221, %v3219
  %v3236 = vpack.c.b16 %v3222, %v3220
  %v3237 = vpack.c.b16 %v3225, %v3223
  %v3238 = vpack.c.b16 %v3226, %v3224
  %v3239 = vpack.c.b16 %v3229, %v3227
  %v3240 = vpack.c.b16 %v3230, %v3228
  %v3241 = vpack.c.b16 %v3233, %v3231
  %v3242 = vpack.c.b16 %v3234, %v3232
  %v3252 = vsel %vm153, %v3210, 0
  %3254 = vmatprep.subr.bf16.mxu0 0
  %3255 = vmatpush1.bf16.msra.mxu0 0
  %3256 = vmatprep.subr.bf16.mxu0 0
  %3257 = vmatpush1.bf16.msra.mxu0 0
  %3258 = vmatprep.subr.bf16.mxu0 0
  %3259 = vmatpush1.bf16.msra.mxu0 0
  %3260 = vmatprep.subr.bf16.mxu0 0
  %3261 = vmatpush1.bf16.msra.mxu0 0
  %3262 = vmatprep.subr.bf16.mxu0 %v3242
  %3263 = vmatpush1.bf16.msra.mxu0 %v3241
  %3264 = vmatprep.subr.bf16.mxu0 %v3240
  %3265 = vmatpush1.bf16.msra.mxu0 %v3239
  %3266 = vmatprep.subr.bf16.mxu0 %v3238
  %3267 = vmatpush1.bf16.msra.mxu0 %v3237
  %3268 = vmatprep.subr.bf16.mxu0 %v3236
  %3269 = vmatpush1.bf16.msra.mxu0 %v3235
  %3270 = vmatprep.subr.bf16.mxu0 0
  %3271 = vmatpush2.bf16.msra.mxu0 0
  %3272 = vmatprep.subr.bf16.mxu0 0
  %3273 = vmatpush2.bf16.msra.mxu0 0
  %3274 = vmatprep.subr.bf16.mxu0 0
  %3275 = vmatpush2.bf16.msra.mxu0 0
  %3276 = vmatprep.subr.bf16.mxu0 0
  %3277 = vmatpush2.bf16.msra.mxu0 0
  %3278 = vmatprep.subr.bf16.mxu0 0
  %3279 = vmatpush2.bf16.msra.mxu0 0
  %3280 = vmatprep.subr.bf16.mxu0 0
  %3281 = vmatpush2.bf16.msra.mxu0 0
  %3282 = vmatprep.subr.bf16.mxu0 0
  %3283 = vmatpush2.bf16.msra.mxu0 0
  %3284 = vmatprep.subr.bf16.mxu0 0
  %3285 = vmatpush2.bf16.msra.mxu0 0
  %3286 = vmatprep.mubr.bf16.mxu0 0
  %3287 = vmatmul.mubr.bf16.gmra.mxu0 %v3252
  %v3288 = vpop.f32.mrf.mxu0
  %v3289 = vadd.f32 %v3202, %v3288
  %v3290 = vpop.f32.mrf.mxu0
  %v3291 = vadd.f32 %v3206, %v3290
  %v3292 = vpop.f32.mrf.mxu0
  %v3293 = vpop.f32.mrf.mxu0
  %3294 = vdwg.mxu0
  %v3296 = vrot.slane %v3289, 2
  %v3298 = vadd.f32 %v1872, %v3296
  %v3299 = vxor.u32 %v3298, 2147483648
  %v3300 = vmul.f32 %v3299, 1.442695
  %v3301 = vpow.pop %v3300
  %v3302 = vadd.f32 %v3301, 1.0
  %v3303 = vrcp.pop %v3302
  %v3304 = vmul.f32 1.0, %v3303
  %3305 = vrot.lane.b32.xlu0 %v3296, 64
  %v3306 = vpop.permute.xlu0 %3305
  %v3308 = vmul.f32 %v3304, %v3306
  %3310 = vrot.lane.b32.xlu0 %v3308, 64
  %v3311 = vpop.permute.xlu0 %3310
  %v3313 = vadd.f32 %v1872, %v3311
  %v3314 = vtanh.pop %v3313
  %v3315 = vsub.f32 1.0, %v3304
  %3317 = vrot.lane.b32.xlu0 %v3314, 96
  %v3318 = vpop.permute.xlu0 %3317
  %v3320 = vmul.f32 %v3315, %v3318
  %v3321 = vrot.slane %v3134, 6
  %v3323 = vmul.f32 %v3304, %v3321
  %v3324 = vadd.f32 %v3320, %v3323
  %v3325 = vadd.f32 %v1868, %v3289
  %v3326 = vxor.u32 %v3325, 2147483648
  %v3327 = vmul.f32 %v3326, 1.442695
  %v3328 = vpow.pop %v3327
  %v3329 = vadd.f32 %v3328, 1.0
  %v3330 = vrcp.pop %v3329
  %v3331 = vmul.f32 1.0, %v3330
  %v3332 = vadd.f32 %v1870, %v3291
  %v3333 = vxor.u32 %v3332, 2147483648
  %v3334 = vmul.f32 %v3333, 1.442695
  %v3335 = vpow.pop %v3334
  %v3336 = vadd.f32 %v3335, 1.0
  %v3337 = vrcp.pop %v3336
  %v3338 = vmul.f32 1.0, %v3337
  %3340 = vrot.lane.b32.xlu0 %v3291, 64
  %v3341 = vpop.permute.xlu0 %3340
  %v3343 = vmul.f32 %v3331, %v3341
  %3345 = vrot.lane.b32.xlu0 %v3343, 64
  %v3346 = vpop.permute.xlu0 %3345
  %v3348 = vadd.f32 %v1870, %v3346
  %v3349 = vtanh.pop %v3348
  %v3350 = vsub.f32 1.0, %v3338
  %3352 = vrot.lane.b32.xlu0 %v3349, 96
  %v3353 = vpop.permute.xlu0 %3352
  %v3355 = vmul.f32 %v3350, %v3353
  %v3356 = vrot.slane %v3172, 2
  %v3358 = vmul.f32 %v3338, %v3356
  %v3359 = vadd.f32 %v3355, %v3358
  %3361 = vrot.lane.b32.xlu0 %v3324, 96
  %v3362 = vpop.permute.xlu0 %3361
  %3364 = vst.msk [vmem:[#allocation3 + $0x8] sm:$0xc0] %vm945, %v3362
  %3366 = vrot.lane.b32.xlu0 %v3359, 32
  %v3367 = vpop.permute.xlu0 %3366
  %3369 = vst.msk [vmem:[#allocation3] sm:$0x3] %vm951, %v3367
  %v3370 = vld [vmem:[#allocation3] sm:$0xff]
  %v3371 = vld [vmem:[#allocation3 + $0x8] sm:$0xff]
  %v3372 = vpack.c.bf16 %v3371, %v3370
  %v3373 = vld [vmem:[%s2] sm:$0x3]
  %v3374 = vpack.c.bf16 %v3373, %v3373
  %vm3375 = vcmask 130048
  %v3377 = vsel %vm3375, %v3374, 0
  %3379 = vmatprep.subr.bf16.mxu0 0
  %3380 = vmatpush1.bf16.msra.mxu0 0
  %3381 = vmatprep.subr.bf16.mxu0 0
  %3382 = vmatpush1.bf16.msra.mxu0 0
  %3383 = vmatprep.subr.bf16.mxu0 0
  %3384 = vmatpush1.bf16.msra.mxu0 0
  %3385 = vmatprep.subr.bf16.mxu0 0
  %3386 = vmatpush1.bf16.msra.mxu0 0
  %3387 = vmatprep.subr.bf16.mxu0 0
  %3388 = vmatpush1.bf16.msra.mxu0 0
  %3389 = vmatprep.subr.bf16.mxu0 0
  %3390 = vmatpush1.bf16.msra.mxu0 0
  %3391 = vmatprep.subr.bf16.mxu0 0
  %3392 = vmatpush1.bf16.msra.mxu0 0
  %3393 = vmatprep.subr.bf16.mxu0 0
  %3394 = vmatpush1.bf16.msra.mxu0 %v3372
  %3395 = vmatprep.subr.bf16.mxu0 0
  %3396 = vmatpush2.bf16.msra.mxu0 0
  %3397 = vmatprep.subr.bf16.mxu0 0
  %3398 = vmatpush2.bf16.msra.mxu0 0
  %3399 = vmatprep.subr.bf16.mxu0 0
  %3400 = vmatpush2.bf16.msra.mxu0 0
  %3401 = vmatprep.subr.bf16.mxu0 0
  %3402 = vmatpush2.bf16.msra.mxu0 0
  %3403 = vmatprep.subr.bf16.mxu0 0
  %3404 = vmatpush2.bf16.msra.mxu0 0
  %3405 = vmatprep.subr.bf16.mxu0 0
  %3406 = vmatpush2.bf16.msra.mxu0 0
  %3407 = vmatprep.subr.bf16.mxu0 0
  %3408 = vmatpush2.bf16.msra.mxu0 0
  %3409 = vmatprep.subr.bf16.mxu0 0
  %3410 = vmatpush2.bf16.msra.mxu0 0
  %3411 = vmatprep.mubr.bf16.mxu0 0
  %3412 = vmatmul.mubr.bf16.gmra.mxu0 %v3377
  %v3413 = vpop.f32.mrf.mxu0
  %v3414 = vadd.f32 0.0, %v3413
  %v3415 = vpop.f32.mrf.mxu0
  %v3416 = vpop.f32.mrf.mxu0
  %v3417 = vpop.f32.mrf.mxu0
  %3418 = vdwg.mxu0
  %v3419 = vpack.c.bf16 %v3414, %v3414
  %v3420 = vld [vmem:[%s14] sm:$0xf]
  %v3421 = vld [vmem:[%s14 + $0x4] sm:$0xf]
  %v3422 = vld [vmem:[%s14 + $0x8] sm:$0xf]
  %v3423 = vld [vmem:[%s14 + $0xc] sm:$0xf]
  %v3424 = vld [vmem:[%s14 + $0x10] sm:$0xf]
  %v3425 = vld [vmem:[%s14 + $0x14] sm:$0xf]
  %v3426 = vld [vmem:[%s14 + $0x18] sm:$0xf]
  %v3427 = vld [vmem:[%s14 + $0x1c] sm:$0xf]
  %v3428 = vld [vmem:[%s15] sm:$0x1]
  %v3430 = vlaneseq
  %v3431 = vshrl.u32 %v3430, 7
  %v3432 = vsub.s32 0, %v3431
  %v3433 = vrot.slane %v3428, %v3432
  %v3443 = vunpack.c.l.b16 %v3420
  %v3444 = vunpack.c.l.b16 %v3421
  %v3445 = vunpack.c.l.b16 %v3422
  %v3446 = vunpack.c.l.b16 %v3423
  %v3447 = vunpack.c.l.b16 %v3424
  %v3448 = vunpack.c.l.b16 %v3425
  %v3449 = vunpack.c.l.b16 %v3426
  %v3450 = vunpack.c.l.b16 %v3427
  %v3451 = vpack.c.b16 %v3444, %v3443
  %v3452 = vpack.c.b16 %v3446, %v3445
  %v3453 = vpack.c.b16 %v3448, %v3447
  %v3454 = vpack.c.b16 %v3450, %v3449
  %v3460 = vsel %vm153, %v3419, 0
  %3462 = vmatprep.subr.bf16.mxu0 0
  %3463 = vmatpush1.bf16.msra.mxu0 0
  %3464 = vmatprep.subr.bf16.mxu0 0
  %3465 = vmatpush1.bf16.msra.mxu0 0
  %3466 = vmatprep.subr.bf16.mxu0 0
  %3467 = vmatpush1.bf16.msra.mxu0 0
  %3468 = vmatprep.subr.bf16.mxu0 0
  %3469 = vmatpush1.bf16.msra.mxu0 0
  %3470 = vmatprep.subr.bf16.mxu0 0
  %3471 = vmatpush1.bf16.msra.mxu0 %v3454
  %3472 = vmatprep.subr.bf16.mxu0 0
  %3473 = vmatpush1.bf16.msra.mxu0 %v3453
  %3474 = vmatprep.subr.bf16.mxu0 0
  %3475 = vmatpush1.bf16.msra.mxu0 %v3452
  %3476 = vmatprep.subr.bf16.mxu0 0
  %3477 = vmatpush1.bf16.msra.mxu0 %v3451
  %3478 = vmatprep.subr.bf16.mxu0 0
  %3479 = vmatpush2.bf16.msra.mxu0 0
  %3480 = vmatprep.subr.bf16.mxu0 0
  %3481 = vmatpush2.bf16.msra.mxu0 0
  %3482 = vmatprep.subr.bf16.mxu0 0
  %3483 = vmatpush2.bf16.msra.mxu0 0
  %3484 = vmatprep.subr.bf16.mxu0 0
  %3485 = vmatpush2.bf16.msra.mxu0 0
  %3486 = vmatprep.subr.bf16.mxu0 0
  %3487 = vmatpush2.bf16.msra.mxu0 0
  %3488 = vmatprep.subr.bf16.mxu0 0
  %3489 = vmatpush2.bf16.msra.mxu0 0
  %3490 = vmatprep.subr.bf16.mxu0 0
  %3491 = vmatpush2.bf16.msra.mxu0 0
  %3492 = vmatprep.subr.bf16.mxu0 0
  %3493 = vmatpush2.bf16.msra.mxu0 0
  %3494 = vmatprep.mubr.bf16.mxu0 0
  %3495 = vmatmul.mubr.bf16.gmra.mxu0 %v3460
  %v3496 = vpop.f32.mrf.mxu0
  %v3497 = vadd.f32 %v3433, %v3496
  %v3498 = vpop.f32.mrf.mxu0
  %v3499 = vpop.f32.mrf.mxu0
  %v3500 = vpop.f32.mrf.mxu0
  %3501 = vdwg.mxu0
  %v3502 = vtanh.pop %v3497
  %v3503 = vld [vmem:[%s16] sm:$0xf]
  %v3504 = vld [vmem:[%s16 + $0x4] sm:$0xf]
  %v3505 = vld [vmem:[%s16 + $0x8] sm:$0xf]
  %v3506 = vld [vmem:[%s16 + $0xc] sm:$0xf]
  %v3507 = vld [vmem:[%s16 + $0x10] sm:$0xf]
  %v3508 = vld [vmem:[%s16 + $0x14] sm:$0xf]
  %v3509 = vld [vmem:[%s16 + $0x18] sm:$0xf]
  %v3510 = vld [vmem:[%s16 + $0x1c] sm:$0xf]
  %v3511 = vld [vmem:[%s17] sm:$0x1]
  %v3513 = vlaneseq
  %v3514 = vshrl.u32 %v3513, 7
  %v3515 = vsub.s32 0, %v3514
  %v3516 = vrot.slane %v3511, %v3515
  %v3526 = vunpack.c.l.b16 %v3503
  %v3527 = vunpack.c.l.b16 %v3504
  %v3528 = vunpack.c.l.b16 %v3505
  %v3529 = vunpack.c.l.b16 %v3506
  %v3530 = vunpack.c.l.b16 %v3507
  %v3531 = vunpack.c.l.b16 %v3508
  %v3532 = vunpack.c.l.b16 %v3509
  %v3533 = vunpack.c.l.b16 %v3510
  %v3534 = vpack.c.b16 %v3527, %v3526
  %v3535 = vpack.c.b16 %v3529, %v3528
  %v3536 = vpack.c.b16 %v3531, %v3530
  %v3537 = vpack.c.b16 %v3533, %v3532
  %v3543 = vsel %vm153, %v3372, 0
  %3545 = vmatprep.subr.bf16.mxu0 0
  %3546 = vmatpush1.bf16.msra.mxu0 0
  %3547 = vmatprep.subr.bf16.mxu0 0
  %3548 = vmatpush1.bf16.msra.mxu0 0
  %3549 = vmatprep.subr.bf16.mxu0 0
  %3550 = vmatpush1.bf16.msra.mxu0 0
  %3551 = vmatprep.subr.bf16.mxu0 0
  %3552 = vmatpush1.bf16.msra.mxu0 0
  %3553 = vmatprep.subr.bf16.mxu0 0
  %3554 = vmatpush1.bf16.msra.mxu0 %v3537
  %3555 = vmatprep.subr.bf16.mxu0 0
  %3556 = vmatpush1.bf16.msra.mxu0 %v3536
  %3557 = vmatprep.subr.bf16.mxu0 0
  %3558 = vmatpush1.bf16.msra.mxu0 %v3535
  %3559 = vmatprep.subr.bf16.mxu0 0
  %3560 = vmatpush1.bf16.msra.mxu0 %v3534
  %3561 = vmatprep.subr.bf16.mxu0 0
  %3562 = vmatpush2.bf16.msra.mxu0 0
  %3563 = vmatprep.subr.bf16.mxu0 0
  %3564 = vmatpush2.bf16.msra.mxu0 0
  %3565 = vmatprep.subr.bf16.mxu0 0
  %3566 = vmatpush2.bf16.msra.mxu0 0
  %3567 = vmatprep.subr.bf16.mxu0 0
  %3568 = vmatpush2.bf16.msra.mxu0 0
  %3569 = vmatprep.subr.bf16.mxu0 0
  %3570 = vmatpush2.bf16.msra.mxu0 0
  %3571 = vmatprep.subr.bf16.mxu0 0
  %3572 = vmatpush2.bf16.msra.mxu0 0
  %3573 = vmatprep.subr.bf16.mxu0 0
  %3574 = vmatpush2.bf16.msra.mxu0 0
  %3575 = vmatprep.subr.bf16.mxu0 0
  %3576 = vmatpush2.bf16.msra.mxu0 0
  %3577 = vmatprep.mubr.bf16.mxu0 0
  %3578 = vmatmul.mubr.bf16.gmra.mxu0 %v3543
  %v3579 = vpop.f32.mrf.mxu0
  %v3580 = vadd.f32 %v3516, %v3579
  %v3581 = vpop.f32.mrf.mxu0
  %v3582 = vpop.f32.mrf.mxu0
  %v3583 = vadd.f32 %v3516, %v3582
  %v3584 = vpop.f32.mrf.mxu0
  %3585 = vdwg.mxu0
  %v3586 = vld [vmem:[%s1] sm:$0xff]
  %v3587 = vld [vmem:[%s1 + $0x8] sm:$0xff]
  %3588 = vst.msk [vmem:[#allocation4] sm:$0xff] %vm384, %v3586
  %3589 = vst.msk [vmem:[#allocation4 + $0x8] sm:$0xff] %vm384, %v3587
  %v3590 = vpack.c.bf16 %v3587, %v3586
  %v3591 = vld [vmem:[%s20] sm:$0xf]
  %v3592 = vld [vmem:[%s20 + $0x4] sm:$0xf]
  %v3593 = vld [vmem:[%s20 + $0x8] sm:$0xf]
  %v3594 = vld [vmem:[%s20 + $0xc] sm:$0xf]
  %v3595 = vld [vmem:[%s21] sm:$0x1]
  %v3597 = vlaneseq
  %v3598 = vshrl.u32 %v3597, 7
  %v3599 = vsub.s32 0, %v3598
  %v3600 = vrot.slane %v3595, %v3599
  %v3606 = vunpack.c.l.b16 %v3591
  %v3607 = vunpack.c.l.b16 %v3592
  %v3608 = vunpack.c.l.b16 %v3593
  %v3609 = vunpack.c.l.b16 %v3594
  %v3610 = vpack.c.b16 %v3607, %v3606
  %v3611 = vpack.c.b16 %v3609, %v3608
  %v3615 = vsel %vm384, %v3590, 0
  %3617 = vmatprep.subr.bf16.mxu0 0
  %3618 = vmatpush1.bf16.msra.mxu0 0
  %3619 = vmatprep.subr.bf16.mxu0 0
  %3620 = vmatpush1.bf16.msra.mxu0 0
  %3621 = vmatprep.subr.bf16.mxu0 0
  %3622 = vmatpush1.bf16.msra.mxu0 0
  %3623 = vmatprep.subr.bf16.mxu0 0
  %3624 = vmatpush1.bf16.msra.mxu0 0
  %3625 = vmatprep.subr.bf16.mxu0 0
  %3626 = vmatpush1.bf16.msra.mxu0 0
  %3627 = vmatprep.subr.bf16.mxu0 0
  %3628 = vmatpush1.bf16.msra.mxu0 0
  %3629 = vmatprep.subr.bf16.mxu0 0
  %3630 = vmatpush1.bf16.msra.mxu0 %v3611
  %3631 = vmatprep.subr.bf16.mxu0 0
  %3632 = vmatpush1.bf16.msra.mxu0 %v3610
  %3633 = vmatprep.subr.bf16.mxu0 0
  %3634 = vmatpush2.bf16.msra.mxu0 0
  %3635 = vmatprep.subr.bf16.mxu0 0
  %3636 = vmatpush2.bf16.msra.mxu0 0
  %3637 = vmatprep.subr.bf16.mxu0 0
  %3638 = vmatpush2.bf16.msra.mxu0 0
  %3639 = vmatprep.subr.bf16.mxu0 0
  %3640 = vmatpush2.bf16.msra.mxu0 0
  %3641 = vmatprep.subr.bf16.mxu0 0
  %3642 = vmatpush2.bf16.msra.mxu0 0
  %3643 = vmatprep.subr.bf16.mxu0 0
  %3644 = vmatpush2.bf16.msra.mxu0 0
  %3645 = vmatprep.subr.bf16.mxu0 0
  %3646 = vmatpush2.bf16.msra.mxu0 0
  %3647 = vmatprep.subr.bf16.mxu0 0
  %3648 = vmatpush2.bf16.msra.mxu0 0
  %3649 = vmatprep.mubr.bf16.mxu0 0
  %3650 = vmatmul.mubr.bf16.gmra.mxu0 %v3615
  %v3651 = vpop.f32.mrf.mxu0
  %v3652 = vadd.f32 %v3600, %v3651
  %v3653 = vpop.f32.mrf.mxu0
  %v3654 = vpop.f32.mrf.mxu0
  %v3655 = vadd.f32 %v3600, %v3654
  %v3656 = vpop.f32.mrf.mxu0
  %3657 = vdwg.mxu0
  %v3658 = vld [vmem:[%s19] sm:$0x1]
  %v3659 = vld [vmem:[%s3] sm:$0x3]
  %v3660 = vpack.c.bf16 %v3502, %v3502
  %v3661 = vld [vmem:[%s22] sm:$0xf]
  %v3662 = vld [vmem:[%s22 + $0x4] sm:$0xf]
  %v3663 = vld [vmem:[%s22 + $0x8] sm:$0xf]
  %v3664 = vld [vmem:[%s22 + $0xc] sm:$0xf]
  %v3665 = vld [vmem:[%s23] sm:$0x1]
  %v3667 = vlaneseq
  %v3668 = vshrl.u32 %v3667, 7
  %v3669 = vsub.s32 0, %v3668
  %v3670 = vrot.slane %v3665, %v3669
  %v3676 = vunpack.c.l.b16 %v3661
  %v3677 = vunpack.c.l.b16 %v3662
  %v3678 = vunpack.c.l.b16 %v3663
  %v3679 = vunpack.c.l.b16 %v3664
  %v3680 = vpack.c.b16 %v3677, %v3676
  %v3681 = vpack.c.b16 %v3679, %v3678
  %v3685 = vsel %vm384, %v3660, 0
  %3687 = vmatprep.subr.bf16.mxu0 0
  %3688 = vmatpush1.bf16.msra.mxu0 0
  %3689 = vmatprep.subr.bf16.mxu0 0
  %3690 = vmatpush1.bf16.msra.mxu0 0
  %3691 = vmatprep.subr.bf16.mxu0 0
  %3692 = vmatpush1.bf16.msra.mxu0 0
  %3693 = vmatprep.subr.bf16.mxu0 0
  %3694 = vmatpush1.bf16.msra.mxu0 0
  %3695 = vmatprep.subr.bf16.mxu0 0
  %3696 = vmatpush1.bf16.msra.mxu0 0
  %3697 = vmatprep.subr.bf16.mxu0 0
  %3698 = vmatpush1.bf16.msra.mxu0 0
  %3699 = vmatprep.subr.bf16.mxu0 0
  %3700 = vmatpush1.bf16.msra.mxu0 %v3681
  %3701 = vmatprep.subr.bf16.mxu0 0
  %3702 = vmatpush1.bf16.msra.mxu0 %v3680
  %3703 = vmatprep.subr.bf16.mxu0 0
  %3704 = vmatpush2.bf16.msra.mxu0 0
  %3705 = vmatprep.subr.bf16.mxu0 0
  %3706 = vmatpush2.bf16.msra.mxu0 0
  %3707 = vmatprep.subr.bf16.mxu0 0
  %3708 = vmatpush2.bf16.msra.mxu0 0
  %3709 = vmatprep.subr.bf16.mxu0 0
  %3710 = vmatpush2.bf16.msra.mxu0 0
  %3711 = vmatprep.subr.bf16.mxu0 0
  %3712 = vmatpush2.bf16.msra.mxu0 0
  %3713 = vmatprep.subr.bf16.mxu0 0
  %3714 = vmatpush2.bf16.msra.mxu0 0
  %3715 = vmatprep.subr.bf16.mxu0 0
  %3716 = vmatpush2.bf16.msra.mxu0 0
  %3717 = vmatprep.subr.bf16.mxu0 0
  %3718 = vmatpush2.bf16.msra.mxu0 0
  %3719 = vmatprep.mubr.bf16.mxu0 0
  %3720 = vmatmul.mubr.bf16.gmra.mxu0 %v3685
  %v3721 = vpop.f32.mrf.mxu0
  %v3722 = vadd.f32 %v3670, %v3721
  %v3723 = vpop.f32.mrf.mxu0
  %v3724 = vpop.f32.mrf.mxu0
  %v3725 = vpop.f32.mrf.mxu0
  %3726 = vdwg.mxu0
  %v3727 = vadd.f32 %v3652, %v3722
  %v3728 = vxor.u32 %v3727, 2147483648
  %v3729 = vmul.f32 %v3728, 1.442695
  %v3730 = vpow.pop %v3729
  %v3731 = vadd.f32 %v3730, 1.0
  %v3732 = vrcp.pop %v3731
  %v3733 = vmul.f32 1.0, %v3732
  %3735 = vrot.lane.b32.xlu0 %v3722, 64
  %v3736 = vpop.permute.xlu0 %3735
  %v3738 = vmul.f32 %v3733, %v3736
  %3740 = vrot.lane.b32.xlu0 %v3738, 64
  %v3741 = vpop.permute.xlu0 %3740
  %v3743 = vadd.f32 %v3652, %v3741
  %v3744 = vtanh.pop %v3743
  %v3745 = vsub.f32 1.0, %v3733
  %3747 = vrot.lane.b32.xlu0 %v3744, 96
  %v3748 = vpop.permute.xlu0 %3747
  %v3750 = vmul.f32 %v3745, %v3748
  %3752 = vrot.lane.b32.xlu0 %v3502, 32
  %v3753 = vpop.permute.xlu0 %3752
  %v3755 = vmul.f32 %v3733, %v3753
  %v3756 = vadd.f32 %v3750, %v3755
  %v3757 = vpack.c.bf16 %v3756, %v3756
  %v3758 = vld [vmem:[%s18] sm:$0xf]
  %v3759 = vld [vmem:[%s18 + $0x4] sm:$0xf]
  %v3760 = vld [vmem:[%s18 + $0x8] sm:$0xf]
  %v3761 = vld [vmem:[%s18 + $0xc] sm:$0xf]
  %3763 = vrot.lane.b32.xlu0 %v3757, 96
  %v3764 = vpop.permute.xlu0 %3763
  %v3769 = vunpack.c.l.b16 %v3758
  %v3770 = vunpack.c.l.b16 %v3759
  %v3771 = vunpack.c.l.b16 %v3760
  %v3772 = vunpack.c.l.b16 %v3761
  %v3773 = vpack.c.b16 %v3770, %v3769
  %v3774 = vpack.c.b16 %v3772, %v3771
  %v3778 = vsel %vm384, %v3764, 0
  %3780 = vmatprep.subr.bf16.mxu0 0
  %3781 = vmatpush1.bf16.msra.mxu0 0
  %3782 = vmatprep.subr.bf16.mxu0 0
  %3783 = vmatpush1.bf16.msra.mxu0 0
  %3784 = vmatprep.subr.bf16.mxu0 0
  %3785 = vmatpush1.bf16.msra.mxu0 0
  %3786 = vmatprep.subr.bf16.mxu0 0
  %3787 = vmatpush1.bf16.msra.mxu0 0
  %3788 = vmatprep.subr.bf16.mxu0 0
  %3789 = vmatpush1.bf16.msra.mxu0 0
  %3790 = vmatprep.subr.bf16.mxu0 0
  %3791 = vmatpush1.bf16.msra.mxu0 0
  %3792 = vmatprep.subr.bf16.mxu0 0
  %3793 = vmatpush1.bf16.msra.mxu0 %v3774
  %3794 = vmatprep.subr.bf16.mxu0 0
  %3795 = vmatpush1.bf16.msra.mxu0 %v3773
  %3796 = vmatprep.subr.bf16.mxu0 0
  %3797 = vmatpush2.bf16.msra.mxu0 0
  %3798 = vmatprep.subr.bf16.mxu0 0
  %3799 = vmatpush2.bf16.msra.mxu0 0
  %3800 = vmatprep.subr.bf16.mxu0 0
  %3801 = vmatpush2.bf16.msra.mxu0 0
  %3802 = vmatprep.subr.bf16.mxu0 0
  %3803 = vmatpush2.bf16.msra.mxu0 0
  %3804 = vmatprep.subr.bf16.mxu0 0
  %3805 = vmatpush2.bf16.msra.mxu0 0
  %3806 = vmatprep.subr.bf16.mxu0 0
  %3807 = vmatpush2.bf16.msra.mxu0 0
  %3808 = vmatprep.subr.bf16.mxu0 0
  %3809 = vmatpush2.bf16.msra.mxu0 0
  %3810 = vmatprep.subr.bf16.mxu0 0
  %3811 = vmatpush2.bf16.msra.mxu0 0
  %3812 = vmatprep.mubr.bf16.mxu0 0
  %3813 = vmatmul.mubr.bf16.gmra.mxu0 %v3778
  %v3814 = vpop.f32.mrf.mxu0
  %v3815 = vadd.f32 0.0, %v3814
  %v3816 = vpop.f32.mrf.mxu0
  %v3817 = vpop.f32.mrf.mxu0
  %v3818 = vpop.f32.mrf.mxu0
  %3819 = vdwg.mxu0
  %v3821 = vrot.slane %v3815, 6
  %v3823 = vrot.slane %v3815, 4
  %v3825 = vrot.slane %v3815, 2
  %vm3827 = vcmask 1041408
  %v3828 = vsel %vm3827, %v3815, %v3821
  %vm3829 = vcmask 1043456
  %v3830 = vsel %vm3829, %v3828, %v3823
  %vm3831 = vcmask 1045504
  %v3832 = vsel %vm3831, %v3830, %v3825
  %v3833 = vadd.f32 %v3580, %v3832
  %v3834 = vadd.f32 %v3583, %v3832
  %v3835 = vtanh.pop %v3833
  %v3836 = vtanh.pop %v3834
  %v3837 = vpack.c.bf16 %v3836, %v3835
  %v3839 = vsel %vm384, %v3658, 0
  %v3842 = vsel %vm384, %v3837, 0
  %3844 = vmatprep.subr.bf16.mxu0 0
  %3845 = vmatpush1.bf16.xpose.msra.mxu0 0
  %3846 = vmatprep.subr.bf16.mxu0 0
  %3847 = vmatpush1.bf16.xpose.msra.mxu0 0
  %3848 = vmatprep.subr.bf16.mxu0 0
  %3849 = vmatpush1.bf16.xpose.msra.mxu0 0
  %3850 = vmatprep.subr.bf16.mxu0 0
  %3851 = vmatpush1.bf16.xpose.msra.mxu0 0
  %3852 = vmatprep.subr.bf16.mxu0 0
  %3853 = vmatpush1.bf16.xpose.msra.mxu0 0
  %3854 = vmatprep.subr.bf16.mxu0 0
  %3855 = vmatpush1.bf16.xpose.msra.mxu0 0
  %3856 = vmatprep.subr.bf16.mxu0 0
  %3857 = vmatpush1.bf16.xpose.msra.mxu0 0
  %3858 = vmatprep.subr.bf16.mxu0 0
  %3859 = vmatpush1.bf16.xpose.msra.mxu0 %v3842
  %3860 = vmatprep.subr.bf16.mxu0 0
  %3861 = vmatpush2.bf16.xpose.msra.mxu0 0
  %3862 = vmatprep.subr.bf16.mxu0 0
  %3863 = vmatpush2.bf16.xpose.msra.mxu0 0
  %3864 = vmatprep.subr.bf16.mxu0 0
  %3865 = vmatpush2.bf16.xpose.msra.mxu0 0
  %3866 = vmatprep.subr.bf16.mxu0 0
  %3867 = vmatpush2.bf16.xpose.msra.mxu0 0
  %3868 = vmatprep.subr.bf16.mxu0 0
  %3869 = vmatpush2.bf16.xpose.msra.mxu0 0
  %3870 = vmatprep.subr.bf16.mxu0 0
  %3871 = vmatpush2.bf16.xpose.msra.mxu0 0
  %3872 = vmatprep.subr.bf16.mxu0 0
  %3873 = vmatpush2.bf16.xpose.msra.mxu0 0
  %3874 = vmatprep.subr.bf16.mxu0 0
  %3875 = vmatpush2.bf16.xpose.msra.mxu0 0
  %3876 = vmatprep.mubr.bf16.mxu0 0
  %3877 = vmatmul.mubr.bf16.gmra.mxu0 %v3839
  %v3878 = vpop.f32.mrf.mxu0
  %v3879 = vadd.f32 0.0, %v3878
  %v3880 = vpop.f32.mrf.mxu0
  %v3881 = vpop.f32.mrf.mxu0
  %v3882 = vpop.f32.mrf.mxu0
  %3883 = vdwg.mxu0
  %v3884 = vlaneseq
  %v3885 = vshrl.u32 %v3884, 7
  %v3886 = vsub.s32 0, %v3885
  %v3887 = vrot.slane %v3879, %v3886
  %v3888 = vadd.f32 %v3887, %v3659
  %vm3889 = vcmask 123904
  %v3890 = vsel %vm3889, %v3888, -inf
  %3891 = vmax.xlane.f32.xlu0 %v3890
  %v3892 = vpop.xlane.xlu0 %3891
  %v3893 = vsub.f32 %v3888, %v3892
  %v3894 = vmul.f32 %v3893, 1.442695
  %v3895 = vpow.pop %v3894
  %v3896 = vsel %vm3889, %v3895, 0.0
  %3897 = vadd.xlane.f32.xlu0 %v3896
  %v3898 = vpop.xlane.xlu0 %3897
  %v3899 = vrcp.pop %v3898
  %v3900 = vmul.f32 %v3895, %v3899
  %v3901 = vpack.c.bf16 %v3900, %v3900
  %v3903 = vsel %vm3375, %v3901, 0
  %3905 = vmatprep.subr.bf16.mxu0 0
  %3906 = vmatpush1.bf16.msra.mxu0 0
  %3907 = vmatprep.subr.bf16.mxu0 0
  %3908 = vmatpush1.bf16.msra.mxu0 0
  %3909 = vmatprep.subr.bf16.mxu0 0
  %3910 = vmatpush1.bf16.msra.mxu0 0
  %3911 = vmatprep.subr.bf16.mxu0 0
  %3912 = vmatpush1.bf16.msra.mxu0 0
  %3913 = vmatprep.subr.bf16.mxu0 0
  %3914 = vmatpush1.bf16.msra.mxu0 0
  %3915 = vmatprep.subr.bf16.mxu0 0
  %3916 = vmatpush1.bf16.msra.mxu0 0
  %3917 = vmatprep.subr.bf16.mxu0 0
  %3918 = vmatpush1.bf16.msra.mxu0 0
  %3919 = vmatprep.subr.bf16.mxu0 0
  %3920 = vmatpush1.bf16.msra.mxu0 %v3372
  %3921 = vmatprep.subr.bf16.mxu0 0
  %3922 = vmatpush2.bf16.msra.mxu0 0
  %3923 = vmatprep.subr.bf16.mxu0 0
  %3924 = vmatpush2.bf16.msra.mxu0 0
  %3925 = vmatprep.subr.bf16.mxu0 0
  %3926 = vmatpush2.bf16.msra.mxu0 0
  %3927 = vmatprep.subr.bf16.mxu0 0
  %3928 = vmatpush2.bf16.msra.mxu0 0
  %3929 = vmatprep.subr.bf16.mxu0 0
  %3930 = vmatpush2.bf16.msra.mxu0 0
  %3931 = vmatprep.subr.bf16.mxu0 0
  %3932 = vmatpush2.bf16.msra.mxu0 0
  %3933 = vmatprep.subr.bf16.mxu0 0
  %3934 = vmatpush2.bf16.msra.mxu0 0
  %3935 = vmatprep.subr.bf16.mxu0 0
  %3936 = vmatpush2.bf16.msra.mxu0 0
  %3937 = vmatprep.mubr.bf16.mxu0 0
  %3938 = vmatmul.mubr.bf16.gmra.mxu0 %v3903
  %v3939 = vpop.f32.mrf.mxu0
  %v3940 = vadd.f32 0.0, %v3939
  %v3941 = vpop.f32.mrf.mxu0
  %v3942 = vpop.f32.mrf.mxu0
  %v3943 = vpop.f32.mrf.mxu0
  %3944 = vdwg.mxu0
  %3946 = vrot.lane.b32.xlu0 %v3756, 32
  %v3947 = vpop.permute.xlu0 %3946
  %v3949 = vsel %vm153, %v3940, %v3947
  %v3950 = vpack.c.bf16 %v3949, %v3949
  %v3951 = vld [vmem:[%s24] sm:$0xff]
  %v3952 = vld [vmem:[%s24 + $0x8] sm:$0xff]
  %v3953 = vld [vmem:[%s24 + $0x10] sm:$0xff]
  %v3954 = vld [vmem:[%s24 + $0x18] sm:$0xff]
  %v3955 = vld [vmem:[%s24 + $0x20] sm:$0xff]
  %v3956 = vld [vmem:[%s24 + $0x28] sm:$0xff]
  %v3957 = vld [vmem:[%s24 + $0x30] sm:$0xff]
  %v3958 = vld [vmem:[%s24 + $0x38] sm:$0xff]
  %v3959 = vld [vmem:[%s24 + $0x40] sm:$0xff]
  %v3960 = vld [vmem:[%s24 + $0x48] sm:$0xff]
  %v3961 = vld [vmem:[%s24 + $0x50] sm:$0xff]
  %v3962 = vld [vmem:[%s24 + $0x58] sm:$0xff]
  %v3963 = vld [vmem:[%s25] sm:$0x3]
  %v3965 = vlaneseq
  %v3966 = vshrl.u32 %v3965, 7
  %v3967 = vsub.s32 0, %v3966
  %v3968 = vrot.slane %v3963, %v3967
  %v3969 = vlaneseq
  %v3970 = vshrl.u32 %v3969, 7
  %v3971 = vsub.s32 1, %v3970
  %v3972 = vrot.slane %v3963, %v3971
  %v3987 = vunpack.c.l.b16 %v3951
  %v3988 = vunpack.c.h.b16 %v3951
  %v3989 = vunpack.c.l.b16 %v3952
  %v3990 = vunpack.c.h.b16 %v3952
  %v3991 = vunpack.c.l.b16 %v3953
  %v3992 = vunpack.c.h.b16 %v3953
  %v3993 = vunpack.c.l.b16 %v3954
  %v3994 = vunpack.c.h.b16 %v3954
  %v3995 = vunpack.c.l.b16 %v3955
  %v3996 = vunpack.c.h.b16 %v3955
  %v3997 = vunpack.c.l.b16 %v3956
  %v3998 = vunpack.c.h.b16 %v3956
  %v3999 = vunpack.c.l.b16 %v3957
  %v4000 = vunpack.c.h.b16 %v3957
  %v4001 = vunpack.c.l.b16 %v3958
  %v4002 = vunpack.c.h.b16 %v3958
  %v4003 = vunpack.c.l.b16 %v3959
  %v4004 = vunpack.c.h.b16 %v3959
  %v4005 = vunpack.c.l.b16 %v3960
  %v4006 = vunpack.c.h.b16 %v3960
  %v4007 = vunpack.c.l.b16 %v3961
  %v4008 = vunpack.c.h.b16 %v3961
  %v4009 = vunpack.c.l.b16 %v3962
  %v4010 = vunpack.c.h.b16 %v3962
  %v4011 = vpack.c.b16 %v3989, %v3987
  %v4012 = vpack.c.b16 %v3990, %v3988
  %v4013 = vpack.c.b16 %v3993, %v3991
  %v4014 = vpack.c.b16 %v3994, %v3992
  %v4015 = vpack.c.b16 %v3997, %v3995
  %v4016 = vpack.c.b16 %v3998, %v3996
  %v4017 = vpack.c.b16 %v4001, %v3999
  %v4018 = vpack.c.b16 %v4002, %v4000
  %v4019 = vpack.c.b16 %v4005, %v4003
  %v4020 = vpack.c.b16 %v4006, %v4004
  %v4021 = vpack.c.b16 %v4009, %v4007
  %v4022 = vpack.c.b16 %v4010, %v4008
  %vm4035 = vcmask 785408
  %v4037 = vsel %vm4035, %v3950, 0
  %4039 = vmatprep.subr.bf16.mxu0 0
  %4040 = vmatpush1.bf16.msra.mxu0 0
  %4041 = vmatprep.subr.bf16.mxu0 0
  %4042 = vmatpush1.bf16.msra.mxu0 0
  %4043 = vmatprep.subr.bf16.mxu0 %v4022
  %4044 = vmatpush1.bf16.msra.mxu0 %v4021
  %4045 = vmatprep.subr.bf16.mxu0 %v4020
  %4046 = vmatpush1.bf16.msra.mxu0 %v4019
  %4047 = vmatprep.subr.bf16.mxu0 %v4018
  %4048 = vmatpush1.bf16.msra.mxu0 %v4017
  %4049 = vmatprep.subr.bf16.mxu0 %v4016
  %4050 = vmatpush1.bf16.msra.mxu0 %v4015
  %4051 = vmatprep.subr.bf16.mxu0 %v4014
  %4052 = vmatpush1.bf16.msra.mxu0 %v4013
  %4053 = vmatprep.subr.bf16.mxu0 %v4012
  %4054 = vmatpush1.bf16.msra.mxu0 %v4011
  %4055 = vmatprep.subr.bf16.mxu0 0
  %4056 = vmatpush2.bf16.msra.mxu0 0
  %4057 = vmatprep.subr.bf16.mxu0 0
  %4058 = vmatpush2.bf16.msra.mxu0 0
  %4059 = vmatprep.subr.bf16.mxu0 0
  %4060 = vmatpush2.bf16.msra.mxu0 0
  %4061 = vmatprep.subr.bf16.mxu0 0
  %4062 = vmatpush2.bf16.msra.mxu0 0
  %4063 = vmatprep.subr.bf16.mxu0 0
  %4064 = vmatpush2.bf16.msra.mxu0 0
  %4065 = vmatprep.subr.bf16.mxu0 0
  %4066 = vmatpush2.bf16.msra.mxu0 0
  %4067 = vmatprep.subr.bf16.mxu0 0
  %4068 = vmatpush2.bf16.msra.mxu0 0
  %4069 = vmatprep.subr.bf16.mxu0 0
  %4070 = vmatpush2.bf16.msra.mxu0 0
  %4071 = vmatprep.mubr.bf16.mxu0 0
  %4072 = vmatmul.mubr.bf16.gmra.mxu0 %v4037
  %v4073 = vpop.f32.mrf.mxu0
  %v4074 = vadd.f32 %v3968, %v4073
  %v4075 = vpop.f32.mrf.mxu0
  %v4076 = vadd.f32 %v3972, %v4075
  %v4077 = vpop.f32.mrf.mxu0
  %v4078 = vpop.f32.mrf.mxu0
  %4079 = vdwg.mxu0
  %4081 = vrot.lane.b32.xlu0 %v4074, 32
  %v4082 = vpop.permute.xlu0 %4081
  %v4084 = vadd.f32 %v4074, %v4082
  %v4085 = vxor.u32 %v4084, 2147483648
  %v4086 = vmul.f32 %v4085, 1.442695
  %v4087 = vpow.pop %v4086
  %v4088 = vadd.f32 %v4087, 1.0
  %v4089 = vrcp.pop %v4088
  %v4090 = vmul.f32 1.0, %v4089
  %4092 = vrot.lane.b32.xlu0 %v4076, 32
  %v4093 = vpop.permute.xlu0 %4092
  %v4095 = vadd.f32 %v4074, %v4093
  %v4096 = vxor.u32 %v4095, 2147483648
  %v4097 = vmul.f32 %v4096, 1.442695
  %v4098 = vpow.pop %v4097
  %v4099 = vadd.f32 %v4098, 1.0
  %v4100 = vrcp.pop %v4099
  %v4101 = vmul.f32 1.0, %v4100
  %4102 = vrot.lane.b32.xlu0 %v4076, 96
  %v4103 = vpop.permute.xlu0 %4102
  %v4105 = vmul.f32 %v4090, %v4103
  %4107 = vrot.lane.b32.xlu0 %v4105, 64
  %v4108 = vpop.permute.xlu0 %4107
  %v4110 = vadd.f32 %v4074, %v4108
  %v4111 = vtanh.pop %v4110
  %v4112 = vsub.f32 1.0, %v4101
  %4114 = vrot.lane.b32.xlu0 %v4111, 96
  %v4115 = vpop.permute.xlu0 %4114
  %v4117 = vmul.f32 %v4112, %v4115
  %v4118 = vmul.f32 %v4101, %v3756
  %v4119 = vadd.f32 %v4117, %v4118
  %4120 = vst.msk [vmem:[#allocation4] sm:$0x3] %vm951, %v4119
  %4122 = vrot.lane.b32.xlu0 %v3940, 64
  %v4123 = vpop.permute.xlu0 %4122
  %vm4125 = vcmask 1041920
  %4126 = vst.msk [vmem:[#allocation4] sm:$0x3] %vm4125, %v4123
  %v4127 = vpack.c.bf16 %v4119, %v4119
  %v4128 = vld [vmem:[%s22] sm:$0xf]
  %v4129 = vld [vmem:[%s22 + $0x4] sm:$0xf]
  %v4130 = vld [vmem:[%s22 + $0x8] sm:$0xf]
  %v4131 = vld [vmem:[%s22 + $0xc] sm:$0xf]
  %v4132 = vld [vmem:[%s23] sm:$0x1]
  %v4134 = vlaneseq
  %v4135 = vshrl.u32 %v4134, 7
  %v4136 = vsub.s32 0, %v4135
  %v4137 = vrot.slane %v4132, %v4136
  %4140 = vrot.lane.b32.xlu0 %v4127, 96
  %v4141 = vpop.permute.xlu0 %4140
  %v4146 = vunpack.c.l.b16 %v4128
  %v4147 = vunpack.c.l.b16 %v4129
  %v4148 = vunpack.c.l.b16 %v4130
  %v4149 = vunpack.c.l.b16 %v4131
  %v4150 = vpack.c.b16 %v4147, %v4146
  %v4151 = vpack.c.b16 %v4149, %v4148
  %v4155 = vsel %vm384, %v4141, 0
  %4157 = vmatprep.subr.bf16.mxu0 0
  %4158 = vmatpush1.bf16.msra.mxu0 0
  %4159 = vmatprep.subr.bf16.mxu0 0
  %4160 = vmatpush1.bf16.msra.mxu0 0
  %4161 = vmatprep.subr.bf16.mxu0 0
  %4162 = vmatpush1.bf16.msra.mxu0 0
  %4163 = vmatprep.subr.bf16.mxu0 0
  %4164 = vmatpush1.bf16.msra.mxu0 0
  %4165 = vmatprep.subr.bf16.mxu0 0
  %4166 = vmatpush1.bf16.msra.mxu0 0
  %4167 = vmatprep.subr.bf16.mxu0 0
  %4168 = vmatpush1.bf16.msra.mxu0 0
  %4169 = vmatprep.subr.bf16.mxu0 0
  %4170 = vmatpush1.bf16.msra.mxu0 %v4151
  %4171 = vmatprep.subr.bf16.mxu0 0
  %4172 = vmatpush1.bf16.msra.mxu0 %v4150
  %4173 = vmatprep.subr.bf16.mxu0 0
  %4174 = vmatpush2.bf16.msra.mxu0 0
  %4175 = vmatprep.subr.bf16.mxu0 0
  %4176 = vmatpush2.bf16.msra.mxu0 0
  %4177 = vmatprep.subr.bf16.mxu0 0
  %4178 = vmatpush2.bf16.msra.mxu0 0
  %4179 = vmatprep.subr.bf16.mxu0 0
  %4180 = vmatpush2.bf16.msra.mxu0 0
  %4181 = vmatprep.subr.bf16.mxu0 0
  %4182 = vmatpush2.bf16.msra.mxu0 0
  %4183 = vmatprep.subr.bf16.mxu0 0
  %4184 = vmatpush2.bf16.msra.mxu0 0
  %4185 = vmatprep.subr.bf16.mxu0 0
  %4186 = vmatpush2.bf16.msra.mxu0 0
  %4187 = vmatprep.subr.bf16.mxu0 0
  %4188 = vmatpush2.bf16.msra.mxu0 0
  %4189 = vmatprep.mubr.bf16.mxu0 0
  %4190 = vmatmul.mubr.bf16.gmra.mxu0 %v4155
  %v4191 = vpop.f32.mrf.mxu0
  %v4192 = vadd.f32 %v4137, %v4191
  %v4193 = vpop.f32.mrf.mxu0
  %v4194 = vpop.f32.mrf.mxu0
  %v4195 = vpop.f32.mrf.mxu0
  %4196 = vdwg.mxu0
  %v4198 = vrot.slane %v4192, 6
  %v4200 = vadd.f32 %v3652, %v4198
  %v4201 = vxor.u32 %v4200, 2147483648
  %v4202 = vmul.f32 %v4201, 1.442695
  %v4203 = vpow.pop %v4202
  %v4204 = vadd.f32 %v4203, 1.0
  %v4205 = vrcp.pop %v4204
  %v4206 = vmul.f32 1.0, %v4205
  %4207 = vrot.lane.b32.xlu0 %v4198, 64
  %v4208 = vpop.permute.xlu0 %4207
  %v4210 = vmul.f32 %v4206, %v4208
  %4212 = vrot.lane.b32.xlu0 %v4210, 64
  %v4213 = vpop.permute.xlu0 %4212
  %v4215 = vadd.f32 %v3652, %v4213
  %v4216 = vtanh.pop %v4215
  %v4217 = vsub.f32 1.0, %v4206
  %4219 = vrot.lane.b32.xlu0 %v4216, 96
  %v4220 = vpop.permute.xlu0 %4219
  %v4222 = vmul.f32 %v4217, %v4220
  %v4224 = vrot.slane %v4119, 6
  %v4226 = vmul.f32 %v4206, %v4224
  %v4227 = vadd.f32 %v4222, %v4226
  %v4228 = vpack.c.bf16 %v4227, %v4227
  %v4229 = vld [vmem:[%s18] sm:$0xf]
  %v4230 = vld [vmem:[%s18 + $0x4] sm:$0xf]
  %v4231 = vld [vmem:[%s18 + $0x8] sm:$0xf]
  %v4232 = vld [vmem:[%s18 + $0xc] sm:$0xf]
  %v4234 = vrot.slane %v4228, 1
  %4235 = vrot.lane.b32.xlu0 %v4234, 96
  %v4236 = vpop.permute.xlu0 %4235
  %v4241 = vunpack.c.l.b16 %v4229
  %v4242 = vunpack.c.l.b16 %v4230
  %v4243 = vunpack.c.l.b16 %v4231
  %v4244 = vunpack.c.l.b16 %v4232
  %v4245 = vpack.c.b16 %v4242, %v4241
  %v4246 = vpack.c.b16 %v4244, %v4243
  %v4250 = vsel %vm384, %v4236, 0
  %4252 = vmatprep.subr.bf16.mxu0 0
  %4253 = vmatpush1.bf16.msra.mxu0 0
  %4254 = vmatprep.subr.bf16.mxu0 0
  %4255 = vmatpush1.bf16.msra.mxu0 0
  %4256 = vmatprep.subr.bf16.mxu0 0
  %4257 = vmatpush1.bf16.msra.mxu0 0
  %4258 = vmatprep.subr.bf16.mxu0 0
  %4259 = vmatpush1.bf16.msra.mxu0 0
  %4260 = vmatprep.subr.bf16.mxu0 0
  %4261 = vmatpush1.bf16.msra.mxu0 0
  %4262 = vmatprep.subr.bf16.mxu0 0
  %4263 = vmatpush1.bf16.msra.mxu0 0
  %4264 = vmatprep.subr.bf16.mxu0 0
  %4265 = vmatpush1.bf16.msra.mxu0 %v4246
  %4266 = vmatprep.subr.bf16.mxu0 0
  %4267 = vmatpush1.bf16.msra.mxu0 %v4245
  %4268 = vmatprep.subr.bf16.mxu0 0
  %4269 = vmatpush2.bf16.msra.mxu0 0
  %4270 = vmatprep.subr.bf16.mxu0 0
  %4271 = vmatpush2.bf16.msra.mxu0 0
  %4272 = vmatprep.subr.bf16.mxu0 0
  %4273 = vmatpush2.bf16.msra.mxu0 0
  %4274 = vmatprep.subr.bf16.mxu0 0
  %4275 = vmatpush2.bf16.msra.mxu0 0
  %4276 = vmatprep.subr.bf16.mxu0 0
  %4277 = vmatpush2.bf16.msra.mxu0 0
  %4278 = vmatprep.subr.bf16.mxu0 0
  %4279 = vmatpush2.bf16.msra.mxu0 0
  %4280 = vmatprep.subr.bf16.mxu0 0
  %4281 = vmatpush2.bf16.msra.mxu0 0
  %4282 = vmatprep.subr.bf16.mxu0 0
  %4283 = vmatpush2.bf16.msra.mxu0 0
  %4284 = vmatprep.mubr.bf16.mxu0 0
  %4285 = vmatmul.mubr.bf16.gmra.mxu0 %v4250
  %v4286 = vpop.f32.mrf.mxu0
  %v4287 = vadd.f32 0.0, %v4286
  %v4288 = vpop.f32.mrf.mxu0
  %v4289 = vpop.f32.mrf.mxu0
  %v4290 = vpop.f32.mrf.mxu0
  %4291 = vdwg.mxu0
  %v4293 = vrot.slane %v4287, 6
  %v4295 = vrot.slane %v4287, 4
  %v4297 = vrot.slane %v4287, 2
  %v4299 = vsel %vm3827, %v4287, %v4293
  %v4300 = vsel %vm3829, %v4299, %v4295
  %v4301 = vsel %vm3831, %v4300, %v4297
  %v4302 = vadd.f32 %v3580, %v4301
  %v4303 = vadd.f32 %v3583, %v4301
  %v4304 = vtanh.pop %v4302
  %v4305 = vtanh.pop %v4303
  %v4306 = vpack.c.bf16 %v4305, %v4304
  %v4308 = vsel %vm384, %v4306, 0
  %4310 = vmatprep.subr.bf16.mxu0 0
  %4311 = vmatpush1.bf16.xpose.msra.mxu0 0
  %4312 = vmatprep.subr.bf16.mxu0 0
  %4313 = vmatpush1.bf16.xpose.msra.mxu0 0
  %4314 = vmatprep.subr.bf16.mxu0 0
  %4315 = vmatpush1.bf16.xpose.msra.mxu0 0
  %4316 = vmatprep.subr.bf16.mxu0 0
  %4317 = vmatpush1.bf16.xpose.msra.mxu0 0
  %4318 = vmatprep.subr.bf16.mxu0 0
  %4319 = vmatpush1.bf16.xpose.msra.mxu0 0
  %4320 = vmatprep.subr.bf16.mxu0 0
  %4321 = vmatpush1.bf16.xpose.msra.mxu0 0
  %4322 = vmatprep.subr.bf16.mxu0 0
  %4323 = vmatpush1.bf16.xpose.msra.mxu0 0
  %4324 = vmatprep.subr.bf16.mxu0 0
  %4325 = vmatpush1.bf16.xpose.msra.mxu0 %v4308
  %4326 = vmatprep.subr.bf16.mxu0 0
  %4327 = vmatpush2.bf16.xpose.msra.mxu0 0
  %4328 = vmatprep.subr.bf16.mxu0 0
  %4329 = vmatpush2.bf16.xpose.msra.mxu0 0
  %4330 = vmatprep.subr.bf16.mxu0 0
  %4331 = vmatpush2.bf16.xpose.msra.mxu0 0
  %4332 = vmatprep.subr.bf16.mxu0 0
  %4333 = vmatpush2.bf16.xpose.msra.mxu0 0
  %4334 = vmatprep.subr.bf16.mxu0 0
  %4335 = vmatpush2.bf16.xpose.msra.mxu0 0
  %4336 = vmatprep.subr.bf16.mxu0 0
  %4337 = vmatpush2.bf16.xpose.msra.mxu0 0
  %4338 = vmatprep.subr.bf16.mxu0 0
  %4339 = vmatpush2.bf16.xpose.msra.mxu0 0
  %4340 = vmatprep.subr.bf16.mxu0 0
  %4341 = vmatpush2.bf16.xpose.msra.mxu0 0
  %4342 = vmatprep.mubr.bf16.mxu0 0
  %4343 = vmatmul.mubr.bf16.gmra.mxu0 %v3839
  %v4344 = vpop.f32.mrf.mxu0
  %v4345 = vadd.f32 0.0, %v4344
  %v4346 = vpop.f32.mrf.mxu0
  %v4347 = vpop.f32.mrf.mxu0
  %v4348 = vpop.f32.mrf.mxu0
  %4349 = vdwg.mxu0
  %v4350 = vlaneseq
  %v4351 = vshrl.u32 %v4350, 7
  %v4352 = vsub.s32 0, %v4351
  %v4353 = vrot.slane %v4345, %v4352
  %v4354 = vadd.f32 %v4353, %v3659
  %v4355 = vsel %vm3889, %v4354, -inf
  %4356 = vmax.xlane.f32.xlu0 %v4355
  %v4357 = vpop.xlane.xlu0 %4356
  %v4358 = vsub.f32 %v4354, %v4357
  %v4359 = vmul.f32 %v4358, 1.442695
  %v4360 = vpow.pop %v4359
  %v4361 = vsel %vm3889, %v4360, 0.0
  %4362 = vadd.xlane.f32.xlu0 %v4361
  %v4363 = vpop.xlane.xlu0 %4362
  %v4364 = vrcp.pop %v4363
  %v4365 = vmul.f32 %v4360, %v4364
  %v4366 = vpack.c.bf16 %v4365, %v4365
  %v4368 = vsel %vm3375, %v4366, 0
  %4370 = vmatprep.subr.bf16.mxu0 0
  %4371 = vmatpush1.bf16.msra.mxu0 0
  %4372 = vmatprep.subr.bf16.mxu0 0
  %4373 = vmatpush1.bf16.msra.mxu0 0
  %4374 = vmatprep.subr.bf16.mxu0 0
  %4375 = vmatpush1.bf16.msra.mxu0 0
  %4376 = vmatprep.subr.bf16.mxu0 0
  %4377 = vmatpush1.bf16.msra.mxu0 0
  %4378 = vmatprep.subr.bf16.mxu0 0
  %4379 = vmatpush1.bf16.msra.mxu0 0
  %4380 = vmatprep.subr.bf16.mxu0 0
  %4381 = vmatpush1.bf16.msra.mxu0 0
  %4382 = vmatprep.subr.bf16.mxu0 0
  %4383 = vmatpush1.bf16.msra.mxu0 0
  %4384 = vmatprep.subr.bf16.mxu0 0
  %4385 = vmatpush1.bf16.msra.mxu0 %v3372
  %4386 = vmatprep.subr.bf16.mxu0 0
  %4387 = vmatpush2.bf16.msra.mxu0 0
  %4388 = vmatprep.subr.bf16.mxu0 0
  %4389 = vmatpush2.bf16.msra.mxu0 0
  %4390 = vmatprep.subr.bf16.mxu0 0
  %4391 = vmatpush2.bf16.msra.mxu0 0
  %4392 = vmatprep.subr.bf16.mxu0 0
  %4393 = vmatpush2.bf16.msra.mxu0 0
  %4394 = vmatprep.subr.bf16.mxu0 0
  %4395 = vmatpush2.bf16.msra.mxu0 0
  %4396 = vmatprep.subr.bf16.mxu0 0
  %4397 = vmatpush2.bf16.msra.mxu0 0
  %4398 = vmatprep.subr.bf16.mxu0 0
  %4399 = vmatpush2.bf16.msra.mxu0 0
  %4400 = vmatprep.subr.bf16.mxu0 0
  %4401 = vmatpush2.bf16.msra.mxu0 0
  %4402 = vmatprep.mubr.bf16.mxu0 0
  %4403 = vmatmul.mubr.bf16.gmra.mxu0 %v4368
  %v4404 = vpop.f32.mrf.mxu0
  %v4405 = vadd.f32 0.0, %v4404
  %v4406 = vpop.f32.mrf.mxu0
  %v4407 = vpop.f32.mrf.mxu0
  %v4408 = vpop.f32.mrf.mxu0
  %4409 = vdwg.mxu0
  %v4411 = vrot.slane %v4227, 2
  %4412 = vrot.lane.b32.xlu0 %v4411, 32
  %v4413 = vpop.permute.xlu0 %4412
  %v4415 = vsel %vm153, %v4405, %v4413
  %v4416 = vpack.c.bf16 %v4415, %v4415
  %v4417 = vld [vmem:[%s24] sm:$0xff]
  %v4418 = vld [vmem:[%s24 + $0x8] sm:$0xff]
  %v4419 = vld [vmem:[%s24 + $0x10] sm:$0xff]
  %v4420 = vld [vmem:[%s24 + $0x18] sm:$0xff]
  %v4421 = vld [vmem:[%s24 + $0x20] sm:$0xff]
  %v4422 = vld [vmem:[%s24 + $0x28] sm:$0xff]
  %v4423 = vld [vmem:[%s24 + $0x30] sm:$0xff]
  %v4424 = vld [vmem:[%s24 + $0x38] sm:$0xff]
  %v4425 = vld [vmem:[%s24 + $0x40] sm:$0xff]
  %v4426 = vld [vmem:[%s24 + $0x48] sm:$0xff]
  %v4427 = vld [vmem:[%s24 + $0x50] sm:$0xff]
  %v4428 = vld [vmem:[%s24 + $0x58] sm:$0xff]
  %v4429 = vld [vmem:[%s25] sm:$0x3]
  %v4431 = vlaneseq
  %v4432 = vshrl.u32 %v4431, 7
  %v4433 = vsub.s32 0, %v4432
  %v4434 = vrot.slane %v4429, %v4433
  %v4435 = vlaneseq
  %v4436 = vshrl.u32 %v4435, 7
  %v4437 = vsub.s32 1, %v4436
  %v4438 = vrot.slane %v4429, %v4437
  %v4453 = vunpack.c.l.b16 %v4417
  %v4454 = vunpack.c.h.b16 %v4417
  %v4455 = vunpack.c.l.b16 %v4418
  %v4456 = vunpack.c.h.b16 %v4418
  %v4457 = vunpack.c.l.b16 %v4419
  %v4458 = vunpack.c.h.b16 %v4419
  %v4459 = vunpack.c.l.b16 %v4420
  %v4460 = vunpack.c.h.b16 %v4420
  %v4461 = vunpack.c.l.b16 %v4421
  %v4462 = vunpack.c.h.b16 %v4421
  %v4463 = vunpack.c.l.b16 %v4422
  %v4464 = vunpack.c.h.b16 %v4422
  %v4465 = vunpack.c.l.b16 %v4423
  %v4466 = vunpack.c.h.b16 %v4423
  %v4467 = vunpack.c.l.b16 %v4424
  %v4468 = vunpack.c.h.b16 %v4424
  %v4469 = vunpack.c.l.b16 %v4425
  %v4470 = vunpack.c.h.b16 %v4425
  %v4471 = vunpack.c.l.b16 %v4426
  %v4472 = vunpack.c.h.b16 %v4426
  %v4473 = vunpack.c.l.b16 %v4427
  %v4474 = vunpack.c.h.b16 %v4427
  %v4475 = vunpack.c.l.b16 %v4428
  %v4476 = vunpack.c.h.b16 %v4428
  %v4477 = vpack.c.b16 %v4455, %v4453
  %v4478 = vpack.c.b16 %v4456, %v4454
  %v4479 = vpack.c.b16 %v4459, %v4457
  %v4480 = vpack.c.b16 %v4460, %v4458
  %v4481 = vpack.c.b16 %v4463, %v4461
  %v4482 = vpack.c.b16 %v4464, %v4462
  %v4483 = vpack.c.b16 %v4467, %v4465
  %v4484 = vpack.c.b16 %v4468, %v4466
  %v4485 = vpack.c.b16 %v4471, %v4469
  %v4486 = vpack.c.b16 %v4472, %v4470
  %v4487 = vpack.c.b16 %v4475, %v4473
  %v4488 = vpack.c.b16 %v4476, %v4474
  %v4502 = vsel %vm4035, %v4416, 0
  %4504 = vmatprep.subr.bf16.mxu0 0
  %4505 = vmatpush1.bf16.msra.mxu0 0
  %4506 = vmatprep.subr.bf16.mxu0 0
  %4507 = vmatpush1.bf16.msra.mxu0 0
  %4508 = vmatprep.subr.bf16.mxu0 %v4488
  %4509 = vmatpush1.bf16.msra.mxu0 %v4487
  %4510 = vmatprep.subr.bf16.mxu0 %v4486
  %4511 = vmatpush1.bf16.msra.mxu0 %v4485
  %4512 = vmatprep.subr.bf16.mxu0 %v4484
  %4513 = vmatpush1.bf16.msra.mxu0 %v4483
  %4514 = vmatprep.subr.bf16.mxu0 %v4482
  %4515 = vmatpush1.bf16.msra.mxu0 %v4481
  %4516 = vmatprep.subr.bf16.mxu0 %v4480
  %4517 = vmatpush1.bf16.msra.mxu0 %v4479
  %4518 = vmatprep.subr.bf16.mxu0 %v4478
  %4519 = vmatpush1.bf16.msra.mxu0 %v4477
  %4520 = vmatprep.subr.bf16.mxu0 0
  %4521 = vmatpush2.bf16.msra.mxu0 0
  %4522 = vmatprep.subr.bf16.mxu0 0
  %4523 = vmatpush2.bf16.msra.mxu0 0
  %4524 = vmatprep.subr.bf16.mxu0 0
  %4525 = vmatpush2.bf16.msra.mxu0 0
  %4526 = vmatprep.subr.bf16.mxu0 0
  %4527 = vmatpush2.bf16.msra.mxu0 0
  %4528 = vmatprep.subr.bf16.mxu0 0
  %4529 = vmatpush2.bf16.msra.mxu0 0
  %4530 = vmatprep.subr.bf16.mxu0 0
  %4531 = vmatpush2.bf16.msra.mxu0 0
  %4532 = vmatprep.subr.bf16.mxu0 0
  %4533 = vmatpush2.bf16.msra.mxu0 0
  %4534 = vmatprep.subr.bf16.mxu0 0
  %4535 = vmatpush2.bf16.msra.mxu0 0
  %4536 = vmatprep.mubr.bf16.mxu0 0
  %4537 = vmatmul.mubr.bf16.gmra.mxu0 %v4502
  %v4538 = vpop.f32.mrf.mxu0
  %v4539 = vadd.f32 %v4434, %v4538
  %v4540 = vpop.f32.mrf.mxu0
  %v4541 = vadd.f32 %v4438, %v4540
  %v4542 = vpop.f32.mrf.mxu0
  %v4543 = vpop.f32.mrf.mxu0
  %4544 = vdwg.mxu0
  %4546 = vrot.lane.b32.xlu0 %v4539, 32
  %v4547 = vpop.permute.xlu0 %4546
  %v4549 = vadd.f32 %v4539, %v4547
  %v4550 = vxor.u32 %v4549, 2147483648
  %v4551 = vmul.f32 %v4550, 1.442695
  %v4552 = vpow.pop %v4551
  %v4553 = vadd.f32 %v4552, 1.0
  %v4554 = vrcp.pop %v4553
  %v4555 = vmul.f32 1.0, %v4554
  %4557 = vrot.lane.b32.xlu0 %v4541, 32
  %v4558 = vpop.permute.xlu0 %4557
  %v4560 = vadd.f32 %v4539, %v4558
  %v4561 = vxor.u32 %v4560, 2147483648
  %v4562 = vmul.f32 %v4561, 1.442695
  %v4563 = vpow.pop %v4562
  %v4564 = vadd.f32 %v4563, 1.0
  %v4565 = vrcp.pop %v4564
  %v4566 = vmul.f32 1.0, %v4565
  %4567 = vrot.lane.b32.xlu0 %v4541, 96
  %v4568 = vpop.permute.xlu0 %4567
  %v4570 = vmul.f32 %v4555, %v4568
  %4572 = vrot.lane.b32.xlu0 %v4570, 64
  %v4573 = vpop.permute.xlu0 %4572
  %v4575 = vadd.f32 %v4539, %v4573
  %v4576 = vtanh.pop %v4575
  %v4577 = vsub.f32 1.0, %v4566
  %4579 = vrot.lane.b32.xlu0 %v4576, 96
  %v4580 = vpop.permute.xlu0 %4579
  %v4582 = vmul.f32 %v4577, %v4580
  %v4584 = vmul.f32 %v4566, %v4411
  %v4585 = vadd.f32 %v4582, %v4584
  %4586 = vst.msk [vmem:[#allocation4 + $0x2] sm:$0x3] %vm951, %v4585
  %4588 = vrot.lane.b32.xlu0 %v4405, 64
  %v4589 = vpop.permute.xlu0 %4588
  %4591 = vst.msk [vmem:[#allocation4 + $0x2] sm:$0x3] %vm4125, %v4589
  %v4592 = vpack.c.bf16 %v4585, %v4585
  %v4593 = vld [vmem:[%s22] sm:$0xf]
  %v4594 = vld [vmem:[%s22 + $0x4] sm:$0xf]
  %v4595 = vld [vmem:[%s22 + $0x8] sm:$0xf]
  %v4596 = vld [vmem:[%s22 + $0xc] sm:$0xf]
  %v4597 = vld [vmem:[%s23] sm:$0x1]
  %v4599 = vlaneseq
  %v4600 = vshrl.u32 %v4599, 7
  %v4601 = vsub.s32 0, %v4600
  %v4602 = vrot.slane %v4597, %v4601
  %4605 = vrot.lane.b32.xlu0 %v4592, 96
  %v4606 = vpop.permute.xlu0 %4605
  %v4611 = vunpack.c.l.b16 %v4593
  %v4612 = vunpack.c.l.b16 %v4594
  %v4613 = vunpack.c.l.b16 %v4595
  %v4614 = vunpack.c.l.b16 %v4596
  %v4615 = vpack.c.b16 %v4612, %v4611
  %v4616 = vpack.c.b16 %v4614, %v4613
  %v4620 = vsel %vm384, %v4606, 0
  %4622 = vmatprep.subr.bf16.mxu0 0
  %4623 = vmatpush1.bf16.msra.mxu0 0
  %4624 = vmatprep.subr.bf16.mxu0 0
  %4625 = vmatpush1.bf16.msra.mxu0 0
  %4626 = vmatprep.subr.bf16.mxu0 0
  %4627 = vmatpush1.bf16.msra.mxu0 0
  %4628 = vmatprep.subr.bf16.mxu0 0
  %4629 = vmatpush1.bf16.msra.mxu0 0
  %4630 = vmatprep.subr.bf16.mxu0 0
  %4631 = vmatpush1.bf16.msra.mxu0 0
  %4632 = vmatprep.subr.bf16.mxu0 0
  %4633 = vmatpush1.bf16.msra.mxu0 0
  %4634 = vmatprep.subr.bf16.mxu0 0
  %4635 = vmatpush1.bf16.msra.mxu0 %v4616
  %4636 = vmatprep.subr.bf16.mxu0 0
  %4637 = vmatpush1.bf16.msra.mxu0 %v4615
  %4638 = vmatprep.subr.bf16.mxu0 0
  %4639 = vmatpush2.bf16.msra.mxu0 0
  %4640 = vmatprep.subr.bf16.mxu0 0
  %4641 = vmatpush2.bf16.msra.mxu0 0
  %4642 = vmatprep.subr.bf16.mxu0 0
  %4643 = vmatpush2.bf16.msra.mxu0 0
  %4644 = vmatprep.subr.bf16.mxu0 0
  %4645 = vmatpush2.bf16.msra.mxu0 0
  %4646 = vmatprep.subr.bf16.mxu0 0
  %4647 = vmatpush2.bf16.msra.mxu0 0
  %4648 = vmatprep.subr.bf16.mxu0 0
  %4649 = vmatpush2.bf16.msra.mxu0 0
  %4650 = vmatprep.subr.bf16.mxu0 0
  %4651 = vmatpush2.bf16.msra.mxu0 0
  %4652 = vmatprep.subr.bf16.mxu0 0
  %4653 = vmatpush2.bf16.msra.mxu0 0
  %4654 = vmatprep.mubr.bf16.mxu0 0
  %4655 = vmatmul.mubr.bf16.gmra.mxu0 %v4620
  %v4656 = vpop.f32.mrf.mxu0
  %v4657 = vadd.f32 %v4602, %v4656
  %v4658 = vpop.f32.mrf.mxu0
  %v4659 = vpop.f32.mrf.mxu0
  %v4660 = vpop.f32.mrf.mxu0
  %4661 = vdwg.mxu0
  %v4663 = vrot.slane %v4657, 4
  %v4665 = vadd.f32 %v3652, %v4663
  %v4666 = vxor.u32 %v4665, 2147483648
  %v4667 = vmul.f32 %v4666, 1.442695
  %v4668 = vpow.pop %v4667
  %v4669 = vadd.f32 %v4668, 1.0
  %v4670 = vrcp.pop %v4669
  %v4671 = vmul.f32 1.0, %v4670
  %4672 = vrot.lane.b32.xlu0 %v4663, 64
  %v4673 = vpop.permute.xlu0 %4672
  %v4675 = vmul.f32 %v4671, %v4673
  %4677 = vrot.lane.b32.xlu0 %v4675, 64
  %v4678 = vpop.permute.xlu0 %4677
  %v4680 = vadd.f32 %v3652, %v4678
  %v4681 = vtanh.pop %v4680
  %v4682 = vsub.f32 1.0, %v4671
  %4684 = vrot.lane.b32.xlu0 %v4681, 96
  %v4685 = vpop.permute.xlu0 %4684
  %v4687 = vmul.f32 %v4682, %v4685
  %v4689 = vrot.slane %v4585, 4
  %v4691 = vmul.f32 %v4671, %v4689
  %v4692 = vadd.f32 %v4687, %v4691
  %v4693 = vpack.c.bf16 %v4692, %v4692
  %v4694 = vld [vmem:[%s18] sm:$0xf]
  %v4695 = vld [vmem:[%s18 + $0x4] sm:$0xf]
  %v4696 = vld [vmem:[%s18 + $0x8] sm:$0xf]
  %v4697 = vld [vmem:[%s18 + $0xc] sm:$0xf]
  %v4699 = vrot.slane %v4693, 2
  %4700 = vrot.lane.b32.xlu0 %v4699, 96
  %v4701 = vpop.permute.xlu0 %4700
  %v4706 = vunpack.c.l.b16 %v4694
  %v4707 = vunpack.c.l.b16 %v4695
  %v4708 = vunpack.c.l.b16 %v4696
  %v4709 = vunpack.c.l.b16 %v4697
  %v4710 = vpack.c.b16 %v4707, %v4706
  %v4711 = vpack.c.b16 %v4709, %v4708
  %v4715 = vsel %vm384, %v4701, 0
  %4717 = vmatprep.subr.bf16.mxu0 0
  %4718 = vmatpush1.bf16.msra.mxu0 0
  %4719 = vmatprep.subr.bf16.mxu0 0
  %4720 = vmatpush1.bf16.msra.mxu0 0
  %4721 = vmatprep.subr.bf16.mxu0 0
  %4722 = vmatpush1.bf16.msra.mxu0 0
  %4723 = vmatprep.subr.bf16.mxu0 0
  %4724 = vmatpush1.bf16.msra.mxu0 0
  %4725 = vmatprep.subr.bf16.mxu0 0
  %4726 = vmatpush1.bf16.msra.mxu0 0
  %4727 = vmatprep.subr.bf16.mxu0 0
  %4728 = vmatpush1.bf16.msra.mxu0 0
  %4729 = vmatprep.subr.bf16.mxu0 0
  %4730 = vmatpush1.bf16.msra.mxu0 %v4711
  %4731 = vmatprep.subr.bf16.mxu0 0
  %4732 = vmatpush1.bf16.msra.mxu0 %v4710
  %4733 = vmatprep.subr.bf16.mxu0 0
  %4734 = vmatpush2.bf16.msra.mxu0 0
  %4735 = vmatprep.subr.bf16.mxu0 0
  %4736 = vmatpush2.bf16.msra.mxu0 0
  %4737 = vmatprep.subr.bf16.mxu0 0
  %4738 = vmatpush2.bf16.msra.mxu0 0
  %4739 = vmatprep.subr.bf16.mxu0 0
  %4740 = vmatpush2.bf16.msra.mxu0 0
  %4741 = vmatprep.subr.bf16.mxu0 0
  %4742 = vmatpush2.bf16.msra.mxu0 0
  %4743 = vmatprep.subr.bf16.mxu0 0
  %4744 = vmatpush2.bf16.msra.mxu0 0
  %4745 = vmatprep.subr.bf16.mxu0 0
  %4746 = vmatpush2.bf16.msra.mxu0 0
  %4747 = vmatprep.subr.bf16.mxu0 0
  %4748 = vmatpush2.bf16.msra.mxu0 0
  %4749 = vmatprep.mubr.bf16.mxu0 0
  %4750 = vmatmul.mubr.bf16.gmra.mxu0 %v4715
  %v4751 = vpop.f32.mrf.mxu0
  %v4752 = vadd.f32 0.0, %v4751
  %v4753 = vpop.f32.mrf.mxu0
  %v4754 = vpop.f32.mrf.mxu0
  %v4755 = vpop.f32.mrf.mxu0
  %4756 = vdwg.mxu0
  %v4758 = vrot.slane %v4752, 6
  %v4760 = vrot.slane %v4752, 4
  %v4762 = vrot.slane %v4752, 2
  %v4764 = vsel %vm3827, %v4752, %v4758
  %v4765 = vsel %vm3829, %v4764, %v4760
  %v4766 = vsel %vm3831, %v4765, %v4762
  %v4767 = vadd.f32 %v3580, %v4766
  %v4768 = vadd.f32 %v3583, %v4766
  %v4769 = vtanh.pop %v4767
  %v4770 = vtanh.pop %v4768
  %v4771 = vpack.c.bf16 %v4770, %v4769
  %v4773 = vsel %vm384, %v4771, 0
  %4775 = vmatprep.subr.bf16.mxu0 0
  %4776 = vmatpush1.bf16.xpose.msra.mxu0 0
  %4777 = vmatprep.subr.bf16.mxu0 0
  %4778 = vmatpush1.bf16.xpose.msra.mxu0 0
  %4779 = vmatprep.subr.bf16.mxu0 0
  %4780 = vmatpush1.bf16.xpose.msra.mxu0 0
  %4781 = vmatprep.subr.bf16.mxu0 0
  %4782 = vmatpush1.bf16.xpose.msra.mxu0 0
  %4783 = vmatprep.subr.bf16.mxu0 0
  %4784 = vmatpush1.bf16.xpose.msra.mxu0 0
  %4785 = vmatprep.subr.bf16.mxu0 0
  %4786 = vmatpush1.bf16.xpose.msra.mxu0 0
  %4787 = vmatprep.subr.bf16.mxu0 0
  %4788 = vmatpush1.bf16.xpose.msra.mxu0 0
  %4789 = vmatprep.subr.bf16.mxu0 0
  %4790 = vmatpush1.bf16.xpose.msra.mxu0 %v4773
  %4791 = vmatprep.subr.bf16.mxu0 0
  %4792 = vmatpush2.bf16.xpose.msra.mxu0 0
  %4793 = vmatprep.subr.bf16.mxu0 0
  %4794 = vmatpush2.bf16.xpose.msra.mxu0 0
  %4795 = vmatprep.subr.bf16.mxu0 0
  %4796 = vmatpush2.bf16.xpose.msra.mxu0 0
  %4797 = vmatprep.subr.bf16.mxu0 0
  %4798 = vmatpush2.bf16.xpose.msra.mxu0 0
  %4799 = vmatprep.subr.bf16.mxu0 0
  %4800 = vmatpush2.bf16.xpose.msra.mxu0 0
  %4801 = vmatprep.subr.bf16.mxu0 0
  %4802 = vmatpush2.bf16.xpose.msra.mxu0 0
  %4803 = vmatprep.subr.bf16.mxu0 0
  %4804 = vmatpush2.bf16.xpose.msra.mxu0 0
  %4805 = vmatprep.subr.bf16.mxu0 0
  %4806 = vmatpush2.bf16.xpose.msra.mxu0 0
  %4807 = vmatprep.mubr.bf16.mxu0 0
  %4808 = vmatmul.mubr.bf16.gmra.mxu0 %v3839
  %v4809 = vpop.f32.mrf.mxu0
  %v4810 = vadd.f32 0.0, %v4809
  %v4811 = vpop.f32.mrf.mxu0
  %v4812 = vpop.f32.mrf.mxu0
  %v4813 = vpop.f32.mrf.mxu0
  %4814 = vdwg.mxu0
  %v4815 = vlaneseq
  %v4816 = vshrl.u32 %v4815, 7
  %v4817 = vsub.s32 0, %v4816
  %v4818 = vrot.slane %v4810, %v4817
  %v4819 = vadd.f32 %v4818, %v3659
  %v4820 = vsel %vm3889, %v4819, -inf
  %4821 = vmax.xlane.f32.xlu0 %v4820
  %v4822 = vpop.xlane.xlu0 %4821
  %v4823 = vsub.f32 %v4819, %v4822
  %v4824 = vmul.f32 %v4823, 1.442695
  %v4825 = vpow.pop %v4824
  %v4826 = vsel %vm3889, %v4825, 0.0
  %4827 = vadd.xlane.f32.xlu0 %v4826
  %v4828 = vpop.xlane.xlu0 %4827
  %v4829 = vrcp.pop %v4828
  %v4830 = vmul.f32 %v4825, %v4829
  %v4831 = vpack.c.bf16 %v4830, %v4830
  %v4833 = vsel %vm3375, %v4831, 0
  %4835 = vmatprep.subr.bf16.mxu0 0
  %4836 = vmatpush1.bf16.msra.mxu0 0
  %4837 = vmatprep.subr.bf16.mxu0 0
  %4838 = vmatpush1.bf16.msra.mxu0 0
  %4839 = vmatprep.subr.bf16.mxu0 0
  %4840 = vmatpush1.bf16.msra.mxu0 0
  %4841 = vmatprep.subr.bf16.mxu0 0
  %4842 = vmatpush1.bf16.msra.mxu0 0
  %4843 = vmatprep.subr.bf16.mxu0 0
  %4844 = vmatpush1.bf16.msra.mxu0 0
  %4845 = vmatprep.subr.bf16.mxu0 0
  %4846 = vmatpush1.bf16.msra.mxu0 0
  %4847 = vmatprep.subr.bf16.mxu0 0
  %4848 = vmatpush1.bf16.msra.mxu0 0
  %4849 = vmatprep.subr.bf16.mxu0 0
  %4850 = vmatpush1.bf16.msra.mxu0 %v3372
  %4851 = vmatprep.subr.bf16.mxu0 0
  %4852 = vmatpush2.bf16.msra.mxu0 0
  %4853 = vmatprep.subr.bf16.mxu0 0
  %4854 = vmatpush2.bf16.msra.mxu0 0
  %4855 = vmatprep.subr.bf16.mxu0 0
  %4856 = vmatpush2.bf16.msra.mxu0 0
  %4857 = vmatprep.subr.bf16.mxu0 0
  %4858 = vmatpush2.bf16.msra.mxu0 0
  %4859 = vmatprep.subr.bf16.mxu0 0
  %4860 = vmatpush2.bf16.msra.mxu0 0
  %4861 = vmatprep.subr.bf16.mxu0 0
  %4862 = vmatpush2.bf16.msra.mxu0 0
  %4863 = vmatprep.subr.bf16.mxu0 0
  %4864 = vmatpush2.bf16.msra.mxu0 0
  %4865 = vmatprep.subr.bf16.mxu0 0
  %4866 = vmatpush2.bf16.msra.mxu0 0
  %4867 = vmatprep.mubr.bf16.mxu0 0
  %4868 = vmatmul.mubr.bf16.gmra.mxu0 %v4833
  %v4869 = vpop.f32.mrf.mxu0
  %v4870 = vadd.f32 0.0, %v4869
  %v4871 = vpop.f32.mrf.mxu0
  %v4872 = vpop.f32.mrf.mxu0
  %v4873 = vpop.f32.mrf.mxu0
  %4874 = vdwg.mxu0
  %v4876 = vrot.slane %v4692, 4
  %4877 = vrot.lane.b32.xlu0 %v4876, 32
  %v4878 = vpop.permute.xlu0 %4877
  %v4880 = vsel %vm153, %v4870, %v4878
  %v4881 = vpack.c.bf16 %v4880, %v4880
  %v4882 = vld [vmem:[%s24] sm:$0xff]
  %v4883 = vld [vmem:[%s24 + $0x8] sm:$0xff]
  %v4884 = vld [vmem:[%s24 + $0x10] sm:$0xff]
  %v4885 = vld [vmem:[%s24 + $0x18] sm:$0xff]
  %v4886 = vld [vmem:[%s24 + $0x20] sm:$0xff]
  %v4887 = vld [vmem:[%s24 + $0x28] sm:$0xff]
  %v4888 = vld [vmem:[%s24 + $0x30] sm:$0xff]
  %v4889 = vld [vmem:[%s24 + $0x38] sm:$0xff]
  %v4890 = vld [vmem:[%s24 + $0x40] sm:$0xff]
  %v4891 = vld [vmem:[%s24 + $0x48] sm:$0xff]
  %v4892 = vld [vmem:[%s24 + $0x50] sm:$0xff]
  %v4893 = vld [vmem:[%s24 + $0x58] sm:$0xff]
  %v4894 = vld [vmem:[%s25] sm:$0x3]
  %v4896 = vlaneseq
  %v4897 = vshrl.u32 %v4896, 7
  %v4898 = vsub.s32 0, %v4897
  %v4899 = vrot.slane %v4894, %v4898
  %v4900 = vlaneseq
  %v4901 = vshrl.u32 %v4900, 7
  %v4902 = vsub.s32 1, %v4901
  %v4903 = vrot.slane %v4894, %v4902
  %v4918 = vunpack.c.l.b16 %v4882
  %v4919 = vunpack.c.h.b16 %v4882
  %v4920 = vunpack.c.l.b16 %v4883
  %v4921 = vunpack.c.h.b16 %v4883
  %v4922 = vunpack.c.l.b16 %v4884
  %v4923 = vunpack.c.h.b16 %v4884
  %v4924 = vunpack.c.l.b16 %v4885
  %v4925 = vunpack.c.h.b16 %v4885
  %v4926 = vunpack.c.l.b16 %v4886
  %v4927 = vunpack.c.h.b16 %v4886
  %v4928 = vunpack.c.l.b16 %v4887
  %v4929 = vunpack.c.h.b16 %v4887
  %v4930 = vunpack.c.l.b16 %v4888
  %v4931 = vunpack.c.h.b16 %v4888
  %v4932 = vunpack.c.l.b16 %v4889
  %v4933 = vunpack.c.h.b16 %v4889
  %v4934 = vunpack.c.l.b16 %v4890
  %v4935 = vunpack.c.h.b16 %v4890
  %v4936 = vunpack.c.l.b16 %v4891
  %v4937 = vunpack.c.h.b16 %v4891
  %v4938 = vunpack.c.l.b16 %v4892
  %v4939 = vunpack.c.h.b16 %v4892
  %v4940 = vunpack.c.l.b16 %v4893
  %v4941 = vunpack.c.h.b16 %v4893
  %v4942 = vpack.c.b16 %v4920, %v4918
  %v4943 = vpack.c.b16 %v4921, %v4919
  %v4944 = vpack.c.b16 %v4924, %v4922
  %v4945 = vpack.c.b16 %v4925, %v4923
  %v4946 = vpack.c.b16 %v4928, %v4926
  %v4947 = vpack.c.b16 %v4929, %v4927
  %v4948 = vpack.c.b16 %v4932, %v4930
  %v4949 = vpack.c.b16 %v4933, %v4931
  %v4950 = vpack.c.b16 %v4936, %v4934
  %v4951 = vpack.c.b16 %v4937, %v4935
  %v4952 = vpack.c.b16 %v4940, %v4938
  %v4953 = vpack.c.b16 %v4941, %v4939
  %v4967 = vsel %vm4035, %v4881, 0
  %4969 = vmatprep.subr.bf16.mxu0 0
  %4970 = vmatpush1.bf16.msra.mxu0 0
  %4971 = vmatprep.subr.bf16.mxu0 0
  %4972 = vmatpush1.bf16.msra.mxu0 0
  %4973 = vmatprep.subr.bf16.mxu0 %v4953
  %4974 = vmatpush1.bf16.msra.mxu0 %v4952
  %4975 = vmatprep.subr.bf16.mxu0 %v4951
  %4976 = vmatpush1.bf16.msra.mxu0 %v4950
  %4977 = vmatprep.subr.bf16.mxu0 %v4949
  %4978 = vmatpush1.bf16.msra.mxu0 %v4948
  %4979 = vmatprep.subr.bf16.mxu0 %v4947
  %4980 = vmatpush1.bf16.msra.mxu0 %v4946
  %4981 = vmatprep.subr.bf16.mxu0 %v4945
  %4982 = vmatpush1.bf16.msra.mxu0 %v4944
  %4983 = vmatprep.subr.bf16.mxu0 %v4943
  %4984 = vmatpush1.bf16.msra.mxu0 %v4942
  %4985 = vmatprep.subr.bf16.mxu0 0
  %4986 = vmatpush2.bf16.msra.mxu0 0
  %4987 = vmatprep.subr.bf16.mxu0 0
  %4988 = vmatpush2.bf16.msra.mxu0 0
  %4989 = vmatprep.subr.bf16.mxu0 0
  %4990 = vmatpush2.bf16.msra.mxu0 0
  %4991 = vmatprep.subr.bf16.mxu0 0
  %4992 = vmatpush2.bf16.msra.mxu0 0
  %4993 = vmatprep.subr.bf16.mxu0 0
  %4994 = vmatpush2.bf16.msra.mxu0 0
  %4995 = vmatprep.subr.bf16.mxu0 0
  %4996 = vmatpush2.bf16.msra.mxu0 0
  %4997 = vmatprep.subr.bf16.mxu0 0
  %4998 = vmatpush2.bf16.msra.mxu0 0
  %4999 = vmatprep.subr.bf16.mxu0 0
  %5000 = vmatpush2.bf16.msra.mxu0 0
  %5001 = vmatprep.mubr.bf16.mxu0 0
  %5002 = vmatmul.mubr.bf16.gmra.mxu0 %v4967
  %v5003 = vpop.f32.mrf.mxu0
  %v5004 = vadd.f32 %v4899, %v5003
  %v5005 = vpop.f32.mrf.mxu0
  %v5006 = vadd.f32 %v4903, %v5005
  %v5007 = vpop.f32.mrf.mxu0
  %v5008 = vpop.f32.mrf.mxu0
  %5009 = vdwg.mxu0
  %5011 = vrot.lane.b32.xlu0 %v5004, 32
  %v5012 = vpop.permute.xlu0 %5011
  %v5014 = vadd.f32 %v5004, %v5012
  %v5015 = vxor.u32 %v5014, 2147483648
  %v5016 = vmul.f32 %v5015, 1.442695
  %v5017 = vpow.pop %v5016
  %v5018 = vadd.f32 %v5017, 1.0
  %v5019 = vrcp.pop %v5018
  %v5020 = vmul.f32 1.0, %v5019
  %5022 = vrot.lane.b32.xlu0 %v5006, 32
  %v5023 = vpop.permute.xlu0 %5022
  %v5025 = vadd.f32 %v5004, %v5023
  %v5026 = vxor.u32 %v5025, 2147483648
  %v5027 = vmul.f32 %v5026, 1.442695
  %v5028 = vpow.pop %v5027
  %v5029 = vadd.f32 %v5028, 1.0
  %v5030 = vrcp.pop %v5029
  %v5031 = vmul.f32 1.0, %v5030
  %5032 = vrot.lane.b32.xlu0 %v5006, 96
  %v5033 = vpop.permute.xlu0 %5032
  %v5035 = vmul.f32 %v5020, %v5033
  %5037 = vrot.lane.b32.xlu0 %v5035, 64
  %v5038 = vpop.permute.xlu0 %5037
  %v5040 = vadd.f32 %v5004, %v5038
  %v5041 = vtanh.pop %v5040
  %v5042 = vsub.f32 1.0, %v5031
  %5044 = vrot.lane.b32.xlu0 %v5041, 96
  %v5045 = vpop.permute.xlu0 %5044
  %v5047 = vmul.f32 %v5042, %v5045
  %v5049 = vmul.f32 %v5031, %v4876
  %v5050 = vadd.f32 %v5047, %v5049
  %5051 = vst.msk [vmem:[#allocation4 + $0x4] sm:$0x3] %vm951, %v5050
  %5053 = vrot.lane.b32.xlu0 %v4870, 64
  %v5054 = vpop.permute.xlu0 %5053
  %5056 = vst.msk [vmem:[#allocation4 + $0x4] sm:$0x3] %vm4125, %v5054
  %v5057 = vpack.c.bf16 %v5050, %v5050
  %v5058 = vld [vmem:[%s22] sm:$0xf]
  %v5059 = vld [vmem:[%s22 + $0x4] sm:$0xf]
  %v5060 = vld [vmem:[%s22 + $0x8] sm:$0xf]
  %v5061 = vld [vmem:[%s22 + $0xc] sm:$0xf]
  %v5062 = vld [vmem:[%s23] sm:$0x1]
  %v5064 = vlaneseq
  %v5065 = vshrl.u32 %v5064, 7
  %v5066 = vsub.s32 0, %v5065
  %v5067 = vrot.slane %v5062, %v5066
  %5070 = vrot.lane.b32.xlu0 %v5057, 96
  %v5071 = vpop.permute.xlu0 %5070
  %v5076 = vunpack.c.l.b16 %v5058
  %v5077 = vunpack.c.l.b16 %v5059
  %v5078 = vunpack.c.l.b16 %v5060
  %v5079 = vunpack.c.l.b16 %v5061
  %v5080 = vpack.c.b16 %v5077, %v5076
  %v5081 = vpack.c.b16 %v5079, %v5078
  %v5085 = vsel %vm384, %v5071, 0
  %5087 = vmatprep.subr.bf16.mxu0 0
  %5088 = vmatpush1.bf16.msra.mxu0 0
  %5089 = vmatprep.subr.bf16.mxu0 0
  %5090 = vmatpush1.bf16.msra.mxu0 0
  %5091 = vmatprep.subr.bf16.mxu0 0
  %5092 = vmatpush1.bf16.msra.mxu0 0
  %5093 = vmatprep.subr.bf16.mxu0 0
  %5094 = vmatpush1.bf16.msra.mxu0 0
  %5095 = vmatprep.subr.bf16.mxu0 0
  %5096 = vmatpush1.bf16.msra.mxu0 0
  %5097 = vmatprep.subr.bf16.mxu0 0
  %5098 = vmatpush1.bf16.msra.mxu0 0
  %5099 = vmatprep.subr.bf16.mxu0 0
  %5100 = vmatpush1.bf16.msra.mxu0 %v5081
  %5101 = vmatprep.subr.bf16.mxu0 0
  %5102 = vmatpush1.bf16.msra.mxu0 %v5080
  %5103 = vmatprep.subr.bf16.mxu0 0
  %5104 = vmatpush2.bf16.msra.mxu0 0
  %5105 = vmatprep.subr.bf16.mxu0 0
  %5106 = vmatpush2.bf16.msra.mxu0 0
  %5107 = vmatprep.subr.bf16.mxu0 0
  %5108 = vmatpush2.bf16.msra.mxu0 0
  %5109 = vmatprep.subr.bf16.mxu0 0
  %5110 = vmatpush2.bf16.msra.mxu0 0
  %5111 = vmatprep.subr.bf16.mxu0 0
  %5112 = vmatpush2.bf16.msra.mxu0 0
  %5113 = vmatprep.subr.bf16.mxu0 0
  %5114 = vmatpush2.bf16.msra.mxu0 0
  %5115 = vmatprep.subr.bf16.mxu0 0
  %5116 = vmatpush2.bf16.msra.mxu0 0
  %5117 = vmatprep.subr.bf16.mxu0 0
  %5118 = vmatpush2.bf16.msra.mxu0 0
  %5119 = vmatprep.mubr.bf16.mxu0 0
  %5120 = vmatmul.mubr.bf16.gmra.mxu0 %v5085
  %v5121 = vpop.f32.mrf.mxu0
  %v5122 = vadd.f32 %v5067, %v5121
  %v5123 = vpop.f32.mrf.mxu0
  %v5124 = vpop.f32.mrf.mxu0
  %v5125 = vpop.f32.mrf.mxu0
  %5126 = vdwg.mxu0
  %v5128 = vrot.slane %v5122, 2
  %v5130 = vadd.f32 %v3652, %v5128
  %v5131 = vxor.u32 %v5130, 2147483648
  %v5132 = vmul.f32 %v5131, 1.442695
  %v5133 = vpow.pop %v5132
  %v5134 = vadd.f32 %v5133, 1.0
  %v5135 = vrcp.pop %v5134
  %v5136 = vmul.f32 1.0, %v5135
  %5137 = vrot.lane.b32.xlu0 %v5128, 64
  %v5138 = vpop.permute.xlu0 %5137
  %v5140 = vmul.f32 %v5136, %v5138
  %5142 = vrot.lane.b32.xlu0 %v5140, 64
  %v5143 = vpop.permute.xlu0 %5142
  %v5145 = vadd.f32 %v3652, %v5143
  %v5146 = vtanh.pop %v5145
  %v5147 = vsub.f32 1.0, %v5136
  %5149 = vrot.lane.b32.xlu0 %v5146, 96
  %v5150 = vpop.permute.xlu0 %5149
  %v5152 = vmul.f32 %v5147, %v5150
  %v5154 = vrot.slane %v5050, 2
  %v5156 = vmul.f32 %v5136, %v5154
  %v5157 = vadd.f32 %v5152, %v5156
  %v5158 = vpack.c.bf16 %v5157, %v5157
  %v5159 = vld [vmem:[%s18] sm:$0xf]
  %v5160 = vld [vmem:[%s18 + $0x4] sm:$0xf]
  %v5161 = vld [vmem:[%s18 + $0x8] sm:$0xf]
  %v5162 = vld [vmem:[%s18 + $0xc] sm:$0xf]
  %v5164 = vrot.slane %v5158, 3
  %5165 = vrot.lane.b32.xlu0 %v5164, 96
  %v5166 = vpop.permute.xlu0 %5165
  %v5171 = vunpack.c.l.b16 %v5159
  %v5172 = vunpack.c.l.b16 %v5160
  %v5173 = vunpack.c.l.b16 %v5161
  %v5174 = vunpack.c.l.b16 %v5162
  %v5175 = vpack.c.b16 %v5172, %v5171
  %v5176 = vpack.c.b16 %v5174, %v5173
  %v5180 = vsel %vm384, %v5166, 0
  %5182 = vmatprep.subr.bf16.mxu0 0
  %5183 = vmatpush1.bf16.msra.mxu0 0
  %5184 = vmatprep.subr.bf16.mxu0 0
  %5185 = vmatpush1.bf16.msra.mxu0 0
  %5186 = vmatprep.subr.bf16.mxu0 0
  %5187 = vmatpush1.bf16.msra.mxu0 0
  %5188 = vmatprep.subr.bf16.mxu0 0
  %5189 = vmatpush1.bf16.msra.mxu0 0
  %5190 = vmatprep.subr.bf16.mxu0 0
  %5191 = vmatpush1.bf16.msra.mxu0 0
  %5192 = vmatprep.subr.bf16.mxu0 0
  %5193 = vmatpush1.bf16.msra.mxu0 0
  %5194 = vmatprep.subr.bf16.mxu0 0
  %5195 = vmatpush1.bf16.msra.mxu0 %v5176
  %5196 = vmatprep.subr.bf16.mxu0 0
  %5197 = vmatpush1.bf16.msra.mxu0 %v5175
  %5198 = vmatprep.subr.bf16.mxu0 0
  %5199 = vmatpush2.bf16.msra.mxu0 0
  %5200 = vmatprep.subr.bf16.mxu0 0
  %5201 = vmatpush2.bf16.msra.mxu0 0
  %5202 = vmatprep.subr.bf16.mxu0 0
  %5203 = vmatpush2.bf16.msra.mxu0 0
  %5204 = vmatprep.subr.bf16.mxu0 0
  %5205 = vmatpush2.bf16.msra.mxu0 0
  %5206 = vmatprep.subr.bf16.mxu0 0
  %5207 = vmatpush2.bf16.msra.mxu0 0
  %5208 = vmatprep.subr.bf16.mxu0 0
  %5209 = vmatpush2.bf16.msra.mxu0 0
  %5210 = vmatprep.subr.bf16.mxu0 0
  %5211 = vmatpush2.bf16.msra.mxu0 0
  %5212 = vmatprep.subr.bf16.mxu0 0
  %5213 = vmatpush2.bf16.msra.mxu0 0
  %5214 = vmatprep.mubr.bf16.mxu0 0
  %5215 = vmatmul.mubr.bf16.gmra.mxu0 %v5180
  %v5216 = vpop.f32.mrf.mxu0
  %v5217 = vadd.f32 0.0, %v5216
  %v5218 = vpop.f32.mrf.mxu0
  %v5219 = vpop.f32.mrf.mxu0
  %v5220 = vpop.f32.mrf.mxu0
  %5221 = vdwg.mxu0
  %v5223 = vrot.slane %v5217, 6
  %v5225 = vrot.slane %v5217, 4
  %v5227 = vrot.slane %v5217, 2
  %v5229 = vsel %vm3827, %v5217, %v5223
  %v5230 = vsel %vm3829, %v5229, %v5225
  %v5231 = vsel %vm3831, %v5230, %v5227
  %v5232 = vadd.f32 %v3580, %v5231
  %v5233 = vadd.f32 %v3583, %v5231
  %v5234 = vtanh.pop %v5232
  %v5235 = vtanh.pop %v5233
  %v5236 = vpack.c.bf16 %v5235, %v5234
  %v5238 = vsel %vm384, %v5236, 0
  %5240 = vmatprep.subr.bf16.mxu0 0
  %5241 = vmatpush1.bf16.xpose.msra.mxu0 0
  %5242 = vmatprep.subr.bf16.mxu0 0
  %5243 = vmatpush1.bf16.xpose.msra.mxu0 0
  %5244 = vmatprep.subr.bf16.mxu0 0
  %5245 = vmatpush1.bf16.xpose.msra.mxu0 0
  %5246 = vmatprep.subr.bf16.mxu0 0
  %5247 = vmatpush1.bf16.xpose.msra.mxu0 0
  %5248 = vmatprep.subr.bf16.mxu0 0
  %5249 = vmatpush1.bf16.xpose.msra.mxu0 0
  %5250 = vmatprep.subr.bf16.mxu0 0
  %5251 = vmatpush1.bf16.xpose.msra.mxu0 0
  %5252 = vmatprep.subr.bf16.mxu0 0
  %5253 = vmatpush1.bf16.xpose.msra.mxu0 0
  %5254 = vmatprep.subr.bf16.mxu0 0
  %5255 = vmatpush1.bf16.xpose.msra.mxu0 %v5238
  %5256 = vmatprep.subr.bf16.mxu0 0
  %5257 = vmatpush2.bf16.xpose.msra.mxu0 0
  %5258 = vmatprep.subr.bf16.mxu0 0
  %5259 = vmatpush2.bf16.xpose.msra.mxu0 0
  %5260 = vmatprep.subr.bf16.mxu0 0
  %5261 = vmatpush2.bf16.xpose.msra.mxu0 0
  %5262 = vmatprep.subr.bf16.mxu0 0
  %5263 = vmatpush2.bf16.xpose.msra.mxu0 0
  %5264 = vmatprep.subr.bf16.mxu0 0
  %5265 = vmatpush2.bf16.xpose.msra.mxu0 0
  %5266 = vmatprep.subr.bf16.mxu0 0
  %5267 = vmatpush2.bf16.xpose.msra.mxu0 0
  %5268 = vmatprep.subr.bf16.mxu0 0
  %5269 = vmatpush2.bf16.xpose.msra.mxu0 0
  %5270 = vmatprep.subr.bf16.mxu0 0
  %5271 = vmatpush2.bf16.xpose.msra.mxu0 0
  %5272 = vmatprep.mubr.bf16.mxu0 0
  %5273 = vmatmul.mubr.bf16.gmra.mxu0 %v3839
  %v5274 = vpop.f32.mrf.mxu0
  %v5275 = vadd.f32 0.0, %v5274
  %v5276 = vpop.f32.mrf.mxu0
  %v5277 = vpop.f32.mrf.mxu0
  %v5278 = vpop.f32.mrf.mxu0
  %5279 = vdwg.mxu0
  %v5280 = vlaneseq
  %v5281 = vshrl.u32 %v5280, 7
  %v5282 = vsub.s32 0, %v5281
  %v5283 = vrot.slane %v5275, %v5282
  %v5284 = vadd.f32 %v5283, %v3659
  %v5285 = vsel %vm3889, %v5284, -inf
  %5286 = vmax.xlane.f32.xlu0 %v5285
  %v5287 = vpop.xlane.xlu0 %5286
  %v5288 = vsub.f32 %v5284, %v5287
  %v5289 = vmul.f32 %v5288, 1.442695
  %v5290 = vpow.pop %v5289
  %v5291 = vsel %vm3889, %v5290, 0.0
  %5292 = vadd.xlane.f32.xlu0 %v5291
  %v5293 = vpop.xlane.xlu0 %5292
  %v5294 = vrcp.pop %v5293
  %v5295 = vmul.f32 %v5290, %v5294
  %v5296 = vpack.c.bf16 %v5295, %v5295
  %v5298 = vsel %vm3375, %v5296, 0
  %5300 = vmatprep.subr.bf16.mxu0 0
  %5301 = vmatpush1.bf16.msra.mxu0 0
  %5302 = vmatprep.subr.bf16.mxu0 0
  %5303 = vmatpush1.bf16.msra.mxu0 0
  %5304 = vmatprep.subr.bf16.mxu0 0
  %5305 = vmatpush1.bf16.msra.mxu0 0
  %5306 = vmatprep.subr.bf16.mxu0 0
  %5307 = vmatpush1.bf16.msra.mxu0 0
  %5308 = vmatprep.subr.bf16.mxu0 0
  %5309 = vmatpush1.bf16.msra.mxu0 0
  %5310 = vmatprep.subr.bf16.mxu0 0
  %5311 = vmatpush1.bf16.msra.mxu0 0
  %5312 = vmatprep.subr.bf16.mxu0 0
  %5313 = vmatpush1.bf16.msra.mxu0 0
  %5314 = vmatprep.subr.bf16.mxu0 0
  %5315 = vmatpush1.bf16.msra.mxu0 %v3372
  %5316 = vmatprep.subr.bf16.mxu0 0
  %5317 = vmatpush2.bf16.msra.mxu0 0
  %5318 = vmatprep.subr.bf16.mxu0 0
  %5319 = vmatpush2.bf16.msra.mxu0 0
  %5320 = vmatprep.subr.bf16.mxu0 0
  %5321 = vmatpush2.bf16.msra.mxu0 0
  %5322 = vmatprep.subr.bf16.mxu0 0
  %5323 = vmatpush2.bf16.msra.mxu0 0
  %5324 = vmatprep.subr.bf16.mxu0 0
  %5325 = vmatpush2.bf16.msra.mxu0 0
  %5326 = vmatprep.subr.bf16.mxu0 0
  %5327 = vmatpush2.bf16.msra.mxu0 0
  %5328 = vmatprep.subr.bf16.mxu0 0
  %5329 = vmatpush2.bf16.msra.mxu0 0
  %5330 = vmatprep.subr.bf16.mxu0 0
  %5331 = vmatpush2.bf16.msra.mxu0 0
  %5332 = vmatprep.mubr.bf16.mxu0 0
  %5333 = vmatmul.mubr.bf16.gmra.mxu0 %v5298
  %v5334 = vpop.f32.mrf.mxu0
  %v5335 = vadd.f32 0.0, %v5334
  %v5336 = vpop.f32.mrf.mxu0
  %v5337 = vpop.f32.mrf.mxu0
  %v5338 = vpop.f32.mrf.mxu0
  %5339 = vdwg.mxu0
  %v5341 = vrot.slane %v5157, 6
  %5342 = vrot.lane.b32.xlu0 %v5341, 32
  %v5343 = vpop.permute.xlu0 %5342
  %v5345 = vsel %vm153, %v5335, %v5343
  %v5346 = vpack.c.bf16 %v5345, %v5345
  %v5347 = vld [vmem:[%s24] sm:$0xff]
  %v5348 = vld [vmem:[%s24 + $0x8] sm:$0xff]
  %v5349 = vld [vmem:[%s24 + $0x10] sm:$0xff]
  %v5350 = vld [vmem:[%s24 + $0x18] sm:$0xff]
  %v5351 = vld [vmem:[%s24 + $0x20] sm:$0xff]
  %v5352 = vld [vmem:[%s24 + $0x28] sm:$0xff]
  %v5353 = vld [vmem:[%s24 + $0x30] sm:$0xff]
  %v5354 = vld [vmem:[%s24 + $0x38] sm:$0xff]
  %v5355 = vld [vmem:[%s24 + $0x40] sm:$0xff]
  %v5356 = vld [vmem:[%s24 + $0x48] sm:$0xff]
  %v5357 = vld [vmem:[%s24 + $0x50] sm:$0xff]
  %v5358 = vld [vmem:[%s24 + $0x58] sm:$0xff]
  %v5359 = vld [vmem:[%s25] sm:$0x3]
  %v5361 = vlaneseq
  %v5362 = vshrl.u32 %v5361, 7
  %v5363 = vsub.s32 0, %v5362
  %v5364 = vrot.slane %v5359, %v5363
  %v5365 = vlaneseq
  %v5366 = vshrl.u32 %v5365, 7
  %v5367 = vsub.s32 1, %v5366
  %v5368 = vrot.slane %v5359, %v5367
  %v5383 = vunpack.c.l.b16 %v5347
  %v5384 = vunpack.c.h.b16 %v5347
  %v5385 = vunpack.c.l.b16 %v5348
  %v5386 = vunpack.c.h.b16 %v5348
  %v5387 = vunpack.c.l.b16 %v5349
  %v5388 = vunpack.c.h.b16 %v5349
  %v5389 = vunpack.c.l.b16 %v5350
  %v5390 = vunpack.c.h.b16 %v5350
  %v5391 = vunpack.c.l.b16 %v5351
  %v5392 = vunpack.c.h.b16 %v5351
  %v5393 = vunpack.c.l.b16 %v5352
  %v5394 = vunpack.c.h.b16 %v5352
  %v5395 = vunpack.c.l.b16 %v5353
  %v5396 = vunpack.c.h.b16 %v5353
  %v5397 = vunpack.c.l.b16 %v5354
  %v5398 = vunpack.c.h.b16 %v5354
  %v5399 = vunpack.c.l.b16 %v5355
  %v5400 = vunpack.c.h.b16 %v5355
  %v5401 = vunpack.c.l.b16 %v5356
  %v5402 = vunpack.c.h.b16 %v5356
  %v5403 = vunpack.c.l.b16 %v5357
  %v5404 = vunpack.c.h.b16 %v5357
  %v5405 = vunpack.c.l.b16 %v5358
  %v5406 = vunpack.c.h.b16 %v5358
  %v5407 = vpack.c.b16 %v5385, %v5383
  %v5408 = vpack.c.b16 %v5386, %v5384
  %v5409 = vpack.c.b16 %v5389, %v5387
  %v5410 = vpack.c.b16 %v5390, %v5388
  %v5411 = vpack.c.b16 %v5393, %v5391
  %v5412 = vpack.c.b16 %v5394, %v5392
  %v5413 = vpack.c.b16 %v5397, %v5395
  %v5414 = vpack.c.b16 %v5398, %v5396
  %v5415 = vpack.c.b16 %v5401, %v5399
  %v5416 = vpack.c.b16 %v5402, %v5400
  %v5417 = vpack.c.b16 %v5405, %v5403
  %v5418 = vpack.c.b16 %v5406, %v5404
  %v5432 = vsel %vm4035, %v5346, 0
  %5434 = vmatprep.subr.bf16.mxu0 0
  %5435 = vmatpush1.bf16.msra.mxu0 0
  %5436 = vmatprep.subr.bf16.mxu0 0
  %5437 = vmatpush1.bf16.msra.mxu0 0
  %5438 = vmatprep.subr.bf16.mxu0 %v5418
  %5439 = vmatpush1.bf16.msra.mxu0 %v5417
  %5440 = vmatprep.subr.bf16.mxu0 %v5416
  %5441 = vmatpush1.bf16.msra.mxu0 %v5415
  %5442 = vmatprep.subr.bf16.mxu0 %v5414
  %5443 = vmatpush1.bf16.msra.mxu0 %v5413
  %5444 = vmatprep.subr.bf16.mxu0 %v5412
  %5445 = vmatpush1.bf16.msra.mxu0 %v5411
  %5446 = vmatprep.subr.bf16.mxu0 %v5410
  %5447 = vmatpush1.bf16.msra.mxu0 %v5409
  %5448 = vmatprep.subr.bf16.mxu0 %v5408
  %5449 = vmatpush1.bf16.msra.mxu0 %v5407
  %5450 = vmatprep.subr.bf16.mxu0 0
  %5451 = vmatpush2.bf16.msra.mxu0 0
  %5452 = vmatprep.subr.bf16.mxu0 0
  %5453 = vmatpush2.bf16.msra.mxu0 0
  %5454 = vmatprep.subr.bf16.mxu0 0
  %5455 = vmatpush2.bf16.msra.mxu0 0
  %5456 = vmatprep.subr.bf16.mxu0 0
  %5457 = vmatpush2.bf16.msra.mxu0 0
  %5458 = vmatprep.subr.bf16.mxu0 0
  %5459 = vmatpush2.bf16.msra.mxu0 0
  %5460 = vmatprep.subr.bf16.mxu0 0
  %5461 = vmatpush2.bf16.msra.mxu0 0
  %5462 = vmatprep.subr.bf16.mxu0 0
  %5463 = vmatpush2.bf16.msra.mxu0 0
  %5464 = vmatprep.subr.bf16.mxu0 0
  %5465 = vmatpush2.bf16.msra.mxu0 0
  %5466 = vmatprep.mubr.bf16.mxu0 0
  %5467 = vmatmul.mubr.bf16.gmra.mxu0 %v5432
  %v5468 = vpop.f32.mrf.mxu0
  %v5469 = vadd.f32 %v5364, %v5468
  %v5470 = vpop.f32.mrf.mxu0
  %v5471 = vadd.f32 %v5368, %v5470
  %v5472 = vpop.f32.mrf.mxu0
  %v5473 = vpop.f32.mrf.mxu0
  %5474 = vdwg.mxu0
  %5476 = vrot.lane.b32.xlu0 %v5469, 32
  %v5477 = vpop.permute.xlu0 %5476
  %v5479 = vadd.f32 %v5469, %v5477
  %v5480 = vxor.u32 %v5479, 2147483648
  %v5481 = vmul.f32 %v5480, 1.442695
  %v5482 = vpow.pop %v5481
  %v5483 = vadd.f32 %v5482, 1.0
  %v5484 = vrcp.pop %v5483
  %v5485 = vmul.f32 1.0, %v5484
  %5487 = vrot.lane.b32.xlu0 %v5471, 32
  %v5488 = vpop.permute.xlu0 %5487
  %v5490 = vadd.f32 %v5469, %v5488
  %v5491 = vxor.u32 %v5490, 2147483648
  %v5492 = vmul.f32 %v5491, 1.442695
  %v5493 = vpow.pop %v5492
  %v5494 = vadd.f32 %v5493, 1.0
  %v5495 = vrcp.pop %v5494
  %v5496 = vmul.f32 1.0, %v5495
  %5497 = vrot.lane.b32.xlu0 %v5471, 96
  %v5498 = vpop.permute.xlu0 %5497
  %v5500 = vmul.f32 %v5485, %v5498
  %5502 = vrot.lane.b32.xlu0 %v5500, 64
  %v5503 = vpop.permute.xlu0 %5502
  %v5505 = vadd.f32 %v5469, %v5503
  %v5506 = vtanh.pop %v5505
  %v5507 = vsub.f32 1.0, %v5496
  %5509 = vrot.lane.b32.xlu0 %v5506, 96
  %v5510 = vpop.permute.xlu0 %5509
  %v5512 = vmul.f32 %v5507, %v5510
  %v5514 = vmul.f32 %v5496, %v5341
  %v5515 = vadd.f32 %v5512, %v5514
  %5516 = vst.msk [vmem:[#allocation4 + $0x6] sm:$0x3] %vm951, %v5515
  %5518 = vrot.lane.b32.xlu0 %v5335, 64
  %v5519 = vpop.permute.xlu0 %5518
  %5521 = vst.msk [vmem:[#allocation4 + $0x6] sm:$0x3] %vm4125, %v5519
  %v5522 = vpack.c.bf16 %v5515, %v5515
  %v5523 = vld [vmem:[%s22] sm:$0xf]
  %v5524 = vld [vmem:[%s22 + $0x4] sm:$0xf]
  %v5525 = vld [vmem:[%s22 + $0x8] sm:$0xf]
  %v5526 = vld [vmem:[%s22 + $0xc] sm:$0xf]
  %v5527 = vld [vmem:[%s23] sm:$0x1]
  %v5529 = vlaneseq
  %v5530 = vshrl.u32 %v5529, 7
  %v5531 = vsub.s32 0, %v5530
  %v5532 = vrot.slane %v5527, %v5531
  %5535 = vrot.lane.b32.xlu0 %v5522, 96
  %v5536 = vpop.permute.xlu0 %5535
  %v5541 = vunpack.c.l.b16 %v5523
  %v5542 = vunpack.c.l.b16 %v5524
  %v5543 = vunpack.c.l.b16 %v5525
  %v5544 = vunpack.c.l.b16 %v5526
  %v5545 = vpack.c.b16 %v5542, %v5541
  %v5546 = vpack.c.b16 %v5544, %v5543
  %v5550 = vsel %vm384, %v5536, 0
  %5552 = vmatprep.subr.bf16.mxu0 0
  %5553 = vmatpush1.bf16.msra.mxu0 0
  %5554 = vmatprep.subr.bf16.mxu0 0
  %5555 = vmatpush1.bf16.msra.mxu0 0
  %5556 = vmatprep.subr.bf16.mxu0 0
  %5557 = vmatpush1.bf16.msra.mxu0 0
  %5558 = vmatprep.subr.bf16.mxu0 0
  %5559 = vmatpush1.bf16.msra.mxu0 0
  %5560 = vmatprep.subr.bf16.mxu0 0
  %5561 = vmatpush1.bf16.msra.mxu0 0
  %5562 = vmatprep.subr.bf16.mxu0 0
  %5563 = vmatpush1.bf16.msra.mxu0 0
  %5564 = vmatprep.subr.bf16.mxu0 0
  %5565 = vmatpush1.bf16.msra.mxu0 %v5546
  %5566 = vmatprep.subr.bf16.mxu0 0
  %5567 = vmatpush1.bf16.msra.mxu0 %v5545
  %5568 = vmatprep.subr.bf16.mxu0 0
  %5569 = vmatpush2.bf16.msra.mxu0 0
  %5570 = vmatprep.subr.bf16.mxu0 0
  %5571 = vmatpush2.bf16.msra.mxu0 0
  %5572 = vmatprep.subr.bf16.mxu0 0
  %5573 = vmatpush2.bf16.msra.mxu0 0
  %5574 = vmatprep.subr.bf16.mxu0 0
  %5575 = vmatpush2.bf16.msra.mxu0 0
  %5576 = vmatprep.subr.bf16.mxu0 0
  %5577 = vmatpush2.bf16.msra.mxu0 0
  %5578 = vmatprep.subr.bf16.mxu0 0
  %5579 = vmatpush2.bf16.msra.mxu0 0
  %5580 = vmatprep.subr.bf16.mxu0 0
  %5581 = vmatpush2.bf16.msra.mxu0 0
  %5582 = vmatprep.subr.bf16.mxu0 0
  %5583 = vmatpush2.bf16.msra.mxu0 0
  %5584 = vmatprep.mubr.bf16.mxu0 0
  %5585 = vmatmul.mubr.bf16.gmra.mxu0 %v5550
  %v5586 = vpop.f32.mrf.mxu0
  %v5587 = vadd.f32 %v5532, %v5586
  %v5588 = vpop.f32.mrf.mxu0
  %v5589 = vpop.f32.mrf.mxu0
  %v5590 = vpop.f32.mrf.mxu0
  %5591 = vdwg.mxu0
  %v5592 = vadd.f32 %v3655, %v5587
  %v5593 = vxor.u32 %v5592, 2147483648
  %v5594 = vmul.f32 %v5593, 1.442695
  %v5595 = vpow.pop %v5594
  %v5596 = vadd.f32 %v5595, 1.0
  %v5597 = vrcp.pop %v5596
  %v5598 = vmul.f32 1.0, %v5597
  %5600 = vrot.lane.b32.xlu0 %v5587, 64
  %v5601 = vpop.permute.xlu0 %5600
  %v5603 = vmul.f32 %v5598, %v5601
  %5605 = vrot.lane.b32.xlu0 %v5603, 64
  %v5606 = vpop.permute.xlu0 %5605
  %v5608 = vadd.f32 %v3655, %v5606
  %v5609 = vtanh.pop %v5608
  %v5610 = vsub.f32 1.0, %v5598
  %5612 = vrot.lane.b32.xlu0 %v5609, 96
  %v5613 = vpop.permute.xlu0 %5612
  %v5615 = vmul.f32 %v5610, %v5613
  %v5616 = vmul.f32 %v5598, %v5515
  %v5617 = vadd.f32 %v5615, %v5616
  %v5618 = vpack.c.bf16 %v5617, %v5617
  %v5619 = vld [vmem:[%s18] sm:$0xf]
  %v5620 = vld [vmem:[%s18 + $0x4] sm:$0xf]
  %v5621 = vld [vmem:[%s18 + $0x8] sm:$0xf]
  %v5622 = vld [vmem:[%s18 + $0xc] sm:$0xf]
  %5624 = vrot.lane.b32.xlu0 %v5618, 96
  %v5625 = vpop.permute.xlu0 %5624
  %v5630 = vunpack.c.l.b16 %v5619
  %v5631 = vunpack.c.l.b16 %v5620
  %v5632 = vunpack.c.l.b16 %v5621
  %v5633 = vunpack.c.l.b16 %v5622
  %v5634 = vpack.c.b16 %v5631, %v5630
  %v5635 = vpack.c.b16 %v5633, %v5632
  %v5639 = vsel %vm384, %v5625, 0
  %5641 = vmatprep.subr.bf16.mxu0 0
  %5642 = vmatpush1.bf16.msra.mxu0 0
  %5643 = vmatprep.subr.bf16.mxu0 0
  %5644 = vmatpush1.bf16.msra.mxu0 0
  %5645 = vmatprep.subr.bf16.mxu0 0
  %5646 = vmatpush1.bf16.msra.mxu0 0
  %5647 = vmatprep.subr.bf16.mxu0 0
  %5648 = vmatpush1.bf16.msra.mxu0 0
  %5649 = vmatprep.subr.bf16.mxu0 0
  %5650 = vmatpush1.bf16.msra.mxu0 0
  %5651 = vmatprep.subr.bf16.mxu0 0
  %5652 = vmatpush1.bf16.msra.mxu0 0
  %5653 = vmatprep.subr.bf16.mxu0 0
  %5654 = vmatpush1.bf16.msra.mxu0 %v5635
  %5655 = vmatprep.subr.bf16.mxu0 0
  %5656 = vmatpush1.bf16.msra.mxu0 %v5634
  %5657 = vmatprep.subr.bf16.mxu0 0
  %5658 = vmatpush2.bf16.msra.mxu0 0
  %5659 = vmatprep.subr.bf16.mxu0 0
  %5660 = vmatpush2.bf16.msra.mxu0 0
  %5661 = vmatprep.subr.bf16.mxu0 0
  %5662 = vmatpush2.bf16.msra.mxu0 0
  %5663 = vmatprep.subr.bf16.mxu0 0
  %5664 = vmatpush2.bf16.msra.mxu0 0
  %5665 = vmatprep.subr.bf16.mxu0 0
  %5666 = vmatpush2.bf16.msra.mxu0 0
  %5667 = vmatprep.subr.bf16.mxu0 0
  %5668 = vmatpush2.bf16.msra.mxu0 0
  %5669 = vmatprep.subr.bf16.mxu0 0
  %5670 = vmatpush2.bf16.msra.mxu0 0
  %5671 = vmatprep.subr.bf16.mxu0 0
  %5672 = vmatpush2.bf16.msra.mxu0 0
  %5673 = vmatprep.mubr.bf16.mxu0 0
  %5674 = vmatmul.mubr.bf16.gmra.mxu0 %v5639
  %v5675 = vpop.f32.mrf.mxu0
  %v5676 = vadd.f32 0.0, %v5675
  %v5677 = vpop.f32.mrf.mxu0
  %v5678 = vpop.f32.mrf.mxu0
  %v5679 = vpop.f32.mrf.mxu0
  %5680 = vdwg.mxu0
  %v5682 = vrot.slane %v5676, 6
  %v5684 = vrot.slane %v5676, 4
  %v5686 = vrot.slane %v5676, 2
  %v5688 = vsel %vm3827, %v5676, %v5682
  %v5689 = vsel %vm3829, %v5688, %v5684
  %v5690 = vsel %vm3831, %v5689, %v5686
  %v5691 = vadd.f32 %v3580, %v5690
  %v5692 = vadd.f32 %v3583, %v5690
  %v5693 = vtanh.pop %v5691
  %v5694 = vtanh.pop %v5692
  %v5695 = vpack.c.bf16 %v5694, %v5693
  %v5697 = vsel %vm384, %v5695, 0
  %5699 = vmatprep.subr.bf16.mxu0 0
  %5700 = vmatpush1.bf16.xpose.msra.mxu0 0
  %5701 = vmatprep.subr.bf16.mxu0 0
  %5702 = vmatpush1.bf16.xpose.msra.mxu0 0
  %5703 = vmatprep.subr.bf16.mxu0 0
  %5704 = vmatpush1.bf16.xpose.msra.mxu0 0
  %5705 = vmatprep.subr.bf16.mxu0 0
  %5706 = vmatpush1.bf16.xpose.msra.mxu0 0
  %5707 = vmatprep.subr.bf16.mxu0 0
  %5708 = vmatpush1.bf16.xpose.msra.mxu0 0
  %5709 = vmatprep.subr.bf16.mxu0 0
  %5710 = vmatpush1.bf16.xpose.msra.mxu0 0
  %5711 = vmatprep.subr.bf16.mxu0 0
  %5712 = vmatpush1.bf16.xpose.msra.mxu0 0
  %5713 = vmatprep.subr.bf16.mxu0 0
  %5714 = vmatpush1.bf16.xpose.msra.mxu0 %v5697
  %5715 = vmatprep.subr.bf16.mxu0 0
  %5716 = vmatpush2.bf16.xpose.msra.mxu0 0
  %5717 = vmatprep.subr.bf16.mxu0 0
  %5718 = vmatpush2.bf16.xpose.msra.mxu0 0
  %5719 = vmatprep.subr.bf16.mxu0 0
  %5720 = vmatpush2.bf16.xpose.msra.mxu0 0
  %5721 = vmatprep.subr.bf16.mxu0 0
  %5722 = vmatpush2.bf16.xpose.msra.mxu0 0
  %5723 = vmatprep.subr.bf16.mxu0 0
  %5724 = vmatpush2.bf16.xpose.msra.mxu0 0
  %5725 = vmatprep.subr.bf16.mxu0 0
  %5726 = vmatpush2.bf16.xpose.msra.mxu0 0
  %5727 = vmatprep.subr.bf16.mxu0 0
  %5728 = vmatpush2.bf16.xpose.msra.mxu0 0
  %5729 = vmatprep.subr.bf16.mxu0 0
  %5730 = vmatpush2.bf16.xpose.msra.mxu0 0
  %5731 = vmatprep.mubr.bf16.mxu0 0
  %5732 = vmatmul.mubr.bf16.gmra.mxu0 %v3839
  %v5733 = vpop.f32.mrf.mxu0
  %v5734 = vadd.f32 0.0, %v5733
  %v5735 = vpop.f32.mrf.mxu0
  %v5736 = vpop.f32.mrf.mxu0
  %v5737 = vpop.f32.mrf.mxu0
  %5738 = vdwg.mxu0
  %v5739 = vlaneseq
  %v5740 = vshrl.u32 %v5739, 7
  %v5741 = vsub.s32 0, %v5740
  %v5742 = vrot.slane %v5734, %v5741
  %v5743 = vadd.f32 %v5742, %v3659
  %v5744 = vsel %vm3889, %v5743, -inf
  %5745 = vmax.xlane.f32.xlu0 %v5744
  %v5746 = vpop.xlane.xlu0 %5745
  %v5747 = vsub.f32 %v5743, %v5746
  %v5748 = vmul.f32 %v5747, 1.442695
  %v5749 = vpow.pop %v5748
  %v5750 = vsel %vm3889, %v5749, 0.0
  %5751 = vadd.xlane.f32.xlu0 %v5750
  %v5752 = vpop.xlane.xlu0 %5751
  %v5753 = vrcp.pop %v5752
  %v5754 = vmul.f32 %v5749, %v5753
  %v5755 = vpack.c.bf16 %v5754, %v5754
  %v5757 = vsel %vm3375, %v5755, 0
  %5759 = vmatprep.subr.bf16.mxu0 0
  %5760 = vmatpush1.bf16.msra.mxu0 0
  %5761 = vmatprep.subr.bf16.mxu0 0
  %5762 = vmatpush1.bf16.msra.mxu0 0
  %5763 = vmatprep.subr.bf16.mxu0 0
  %5764 = vmatpush1.bf16.msra.mxu0 0
  %5765 = vmatprep.subr.bf16.mxu0 0
  %5766 = vmatpush1.bf16.msra.mxu0 0
  %5767 = vmatprep.subr.bf16.mxu0 0
  %5768 = vmatpush1.bf16.msra.mxu0 0
  %5769 = vmatprep.subr.bf16.mxu0 0
  %5770 = vmatpush1.bf16.msra.mxu0 0
  %5771 = vmatprep.subr.bf16.mxu0 0
  %5772 = vmatpush1.bf16.msra.mxu0 0
  %5773 = vmatprep.subr.bf16.mxu0 0
  %5774 = vmatpush1.bf16.msra.mxu0 %v3372
  %5775 = vmatprep.subr.bf16.mxu0 0
  %5776 = vmatpush2.bf16.msra.mxu0 0
  %5777 = vmatprep.subr.bf16.mxu0 0
  %5778 = vmatpush2.bf16.msra.mxu0 0
  %5779 = vmatprep.subr.bf16.mxu0 0
  %5780 = vmatpush2.bf16.msra.mxu0 0
  %5781 = vmatprep.subr.bf16.mxu0 0
  %5782 = vmatpush2.bf16.msra.mxu0 0
  %5783 = vmatprep.subr.bf16.mxu0 0
  %5784 = vmatpush2.bf16.msra.mxu0 0
  %5785 = vmatprep.subr.bf16.mxu0 0
  %5786 = vmatpush2.bf16.msra.mxu0 0
  %5787 = vmatprep.subr.bf16.mxu0 0
  %5788 = vmatpush2.bf16.msra.mxu0 0
  %5789 = vmatprep.subr.bf16.mxu0 0
  %5790 = vmatpush2.bf16.msra.mxu0 0
  %5791 = vmatprep.mubr.bf16.mxu0 0
  %5792 = vmatmul.mubr.bf16.gmra.mxu0 %v5757
  %v5793 = vpop.f32.mrf.mxu0
  %v5794 = vadd.f32 0.0, %v5793
  %v5795 = vpop.f32.mrf.mxu0
  %v5796 = vpop.f32.mrf.mxu0
  %v5797 = vpop.f32.mrf.mxu0
  %5798 = vdwg.mxu0
  %5800 = vrot.lane.b32.xlu0 %v5617, 32
  %v5801 = vpop.permute.xlu0 %5800
  %v5803 = vsel %vm153, %v5794, %v5801
  %v5804 = vpack.c.bf16 %v5803, %v5803
  %v5805 = vld [vmem:[%s24] sm:$0xff]
  %v5806 = vld [vmem:[%s24 + $0x8] sm:$0xff]
  %v5807 = vld [vmem:[%s24 + $0x10] sm:$0xff]
  %v5808 = vld [vmem:[%s24 + $0x18] sm:$0xff]
  %v5809 = vld [vmem:[%s24 + $0x20] sm:$0xff]
  %v5810 = vld [vmem:[%s24 + $0x28] sm:$0xff]
  %v5811 = vld [vmem:[%s24 + $0x30] sm:$0xff]
  %v5812 = vld [vmem:[%s24 + $0x38] sm:$0xff]
  %v5813 = vld [vmem:[%s24 + $0x40] sm:$0xff]
  %v5814 = vld [vmem:[%s24 + $0x48] sm:$0xff]
  %v5815 = vld [vmem:[%s24 + $0x50] sm:$0xff]
  %v5816 = vld [vmem:[%s24 + $0x58] sm:$0xff]
  %v5817 = vld [vmem:[%s25] sm:$0x3]
  %v5819 = vlaneseq
  %v5820 = vshrl.u32 %v5819, 7
  %v5821 = vsub.s32 0, %v5820
  %v5822 = vrot.slane %v5817, %v5821
  %v5823 = vlaneseq
  %v5824 = vshrl.u32 %v5823, 7
  %v5825 = vsub.s32 1, %v5824
  %v5826 = vrot.slane %v5817, %v5825
  %v5841 = vunpack.c.l.b16 %v5805
  %v5842 = vunpack.c.h.b16 %v5805
  %v5843 = vunpack.c.l.b16 %v5806
  %v5844 = vunpack.c.h.b16 %v5806
  %v5845 = vunpack.c.l.b16 %v5807
  %v5846 = vunpack.c.h.b16 %v5807
  %v5847 = vunpack.c.l.b16 %v5808
  %v5848 = vunpack.c.h.b16 %v5808
  %v5849 = vunpack.c.l.b16 %v5809
  %v5850 = vunpack.c.h.b16 %v5809
  %v5851 = vunpack.c.l.b16 %v5810
  %v5852 = vunpack.c.h.b16 %v5810
  %v5853 = vunpack.c.l.b16 %v5811
  %v5854 = vunpack.c.h.b16 %v5811
  %v5855 = vunpack.c.l.b16 %v5812
  %v5856 = vunpack.c.h.b16 %v5812
  %v5857 = vunpack.c.l.b16 %v5813
  %v5858 = vunpack.c.h.b16 %v5813
  %v5859 = vunpack.c.l.b16 %v5814
  %v5860 = vunpack.c.h.b16 %v5814
  %v5861 = vunpack.c.l.b16 %v5815
  %v5862 = vunpack.c.h.b16 %v5815
  %v5863 = vunpack.c.l.b16 %v5816
  %v5864 = vunpack.c.h.b16 %v5816
  %v5865 = vpack.c.b16 %v5843, %v5841
  %v5866 = vpack.c.b16 %v5844, %v5842
  %v5867 = vpack.c.b16 %v5847, %v5845
  %v5868 = vpack.c.b16 %v5848, %v5846
  %v5869 = vpack.c.b16 %v5851, %v5849
  %v5870 = vpack.c.b16 %v5852, %v5850
  %v5871 = vpack.c.b16 %v5855, %v5853
  %v5872 = vpack.c.b16 %v5856, %v5854
  %v5873 = vpack.c.b16 %v5859, %v5857
  %v5874 = vpack.c.b16 %v5860, %v5858
  %v5875 = vpack.c.b16 %v5863, %v5861
  %v5876 = vpack.c.b16 %v5864, %v5862
  %v5890 = vsel %vm4035, %v5804, 0
  %5892 = vmatprep.subr.bf16.mxu0 0
  %5893 = vmatpush1.bf16.msra.mxu0 0
  %5894 = vmatprep.subr.bf16.mxu0 0
  %5895 = vmatpush1.bf16.msra.mxu0 0
  %5896 = vmatprep.subr.bf16.mxu0 %v5876
  %5897 = vmatpush1.bf16.msra.mxu0 %v5875
  %5898 = vmatprep.subr.bf16.mxu0 %v5874
  %5899 = vmatpush1.bf16.msra.mxu0 %v5873
  %5900 = vmatprep.subr.bf16.mxu0 %v5872
  %5901 = vmatpush1.bf16.msra.mxu0 %v5871
  %5902 = vmatprep.subr.bf16.mxu0 %v5870
  %5903 = vmatpush1.bf16.msra.mxu0 %v5869
  %5904 = vmatprep.subr.bf16.mxu0 %v5868
  %5905 = vmatpush1.bf16.msra.mxu0 %v5867
  %5906 = vmatprep.subr.bf16.mxu0 %v5866
  %5907 = vmatpush1.bf16.msra.mxu0 %v5865
  %5908 = vmatprep.subr.bf16.mxu0 0
  %5909 = vmatpush2.bf16.msra.mxu0 0
  %5910 = vmatprep.subr.bf16.mxu0 0
  %5911 = vmatpush2.bf16.msra.mxu0 0
  %5912 = vmatprep.subr.bf16.mxu0 0
  %5913 = vmatpush2.bf16.msra.mxu0 0
  %5914 = vmatprep.subr.bf16.mxu0 0
  %5915 = vmatpush2.bf16.msra.mxu0 0
  %5916 = vmatprep.subr.bf16.mxu0 0
  %5917 = vmatpush2.bf16.msra.mxu0 0
  %5918 = vmatprep.subr.bf16.mxu0 0
  %5919 = vmatpush2.bf16.msra.mxu0 0
  %5920 = vmatprep.subr.bf16.mxu0 0
  %5921 = vmatpush2.bf16.msra.mxu0 0
  %5922 = vmatprep.subr.bf16.mxu0 0
  %5923 = vmatpush2.bf16.msra.mxu0 0
  %5924 = vmatprep.mubr.bf16.mxu0 0
  %5925 = vmatmul.mubr.bf16.gmra.mxu0 %v5890
  %v5926 = vpop.f32.mrf.mxu0
  %v5927 = vadd.f32 %v5822, %v5926
  %v5928 = vpop.f32.mrf.mxu0
  %v5929 = vadd.f32 %v5826, %v5928
  %v5930 = vpop.f32.mrf.mxu0
  %v5931 = vpop.f32.mrf.mxu0
  %5932 = vdwg.mxu0
  %5934 = vrot.lane.b32.xlu0 %v5927, 32
  %v5935 = vpop.permute.xlu0 %5934
  %v5937 = vadd.f32 %v5927, %v5935
  %v5938 = vxor.u32 %v5937, 2147483648
  %v5939 = vmul.f32 %v5938, 1.442695
  %v5940 = vpow.pop %v5939
  %v5941 = vadd.f32 %v5940, 1.0
  %v5942 = vrcp.pop %v5941
  %v5943 = vmul.f32 1.0, %v5942
  %5945 = vrot.lane.b32.xlu0 %v5929, 32
  %v5946 = vpop.permute.xlu0 %5945
  %v5948 = vadd.f32 %v5927, %v5946
  %v5949 = vxor.u32 %v5948, 2147483648
  %v5950 = vmul.f32 %v5949, 1.442695
  %v5951 = vpow.pop %v5950
  %v5952 = vadd.f32 %v5951, 1.0
  %v5953 = vrcp.pop %v5952
  %v5954 = vmul.f32 1.0, %v5953
  %5955 = vrot.lane.b32.xlu0 %v5929, 96
  %v5956 = vpop.permute.xlu0 %5955
  %v5958 = vmul.f32 %v5943, %v5956
  %5960 = vrot.lane.b32.xlu0 %v5958, 64
  %v5961 = vpop.permute.xlu0 %5960
  %v5963 = vadd.f32 %v5927, %v5961
  %v5964 = vtanh.pop %v5963
  %v5965 = vsub.f32 1.0, %v5954
  %5967 = vrot.lane.b32.xlu0 %v5964, 96
  %v5968 = vpop.permute.xlu0 %5967
  %v5970 = vmul.f32 %v5965, %v5968
  %v5971 = vmul.f32 %v5954, %v5617
  %v5972 = vadd.f32 %v5970, %v5971
  %5973 = vst.msk [vmem:[#allocation4 + $0x8] sm:$0x3] %vm951, %v5972
  %5975 = vrot.lane.b32.xlu0 %v5794, 64
  %v5976 = vpop.permute.xlu0 %5975
  %5978 = vst.msk [vmem:[#allocation4 + $0x8] sm:$0x3] %vm4125, %v5976
  %v5979 = vpack.c.bf16 %v5972, %v5972
  %v5980 = vld [vmem:[%s22] sm:$0xf]
  %v5981 = vld [vmem:[%s22 + $0x4] sm:$0xf]
  %v5982 = vld [vmem:[%s22 + $0x8] sm:$0xf]
  %v5983 = vld [vmem:[%s22 + $0xc] sm:$0xf]
  %v5984 = vld [vmem:[%s23] sm:$0x1]
  %v5986 = vlaneseq
  %v5987 = vshrl.u32 %v5986, 7
  %v5988 = vsub.s32 0, %v5987
  %v5989 = vrot.slane %v5984, %v5988
  %5992 = vrot.lane.b32.xlu0 %v5979, 96
  %v5993 = vpop.permute.xlu0 %5992
  %v5998 = vunpack.c.l.b16 %v5980
  %v5999 = vunpack.c.l.b16 %v5981
  %v6000 = vunpack.c.l.b16 %v5982
  %v6001 = vunpack.c.l.b16 %v5983
  %v6002 = vpack.c.b16 %v5999, %v5998
  %v6003 = vpack.c.b16 %v6001, %v6000
  %v6007 = vsel %vm384, %v5993, 0
  %6009 = vmatprep.subr.bf16.mxu0 0
  %6010 = vmatpush1.bf16.msra.mxu0 0
  %6011 = vmatprep.subr.bf16.mxu0 0
  %6012 = vmatpush1.bf16.msra.mxu0 0
  %6013 = vmatprep.subr.bf16.mxu0 0
  %6014 = vmatpush1.bf16.msra.mxu0 0
  %6015 = vmatprep.subr.bf16.mxu0 0
  %6016 = vmatpush1.bf16.msra.mxu0 0
  %6017 = vmatprep.subr.bf16.mxu0 0
  %6018 = vmatpush1.bf16.msra.mxu0 0
  %6019 = vmatprep.subr.bf16.mxu0 0
  %6020 = vmatpush1.bf16.msra.mxu0 0
  %6021 = vmatprep.subr.bf16.mxu0 0
  %6022 = vmatpush1.bf16.msra.mxu0 %v6003
  %6023 = vmatprep.subr.bf16.mxu0 0
  %6024 = vmatpush1.bf16.msra.mxu0 %v6002
  %6025 = vmatprep.subr.bf16.mxu0 0
  %6026 = vmatpush2.bf16.msra.mxu0 0
  %6027 = vmatprep.subr.bf16.mxu0 0
  %6028 = vmatpush2.bf16.msra.mxu0 0
  %6029 = vmatprep.subr.bf16.mxu0 0
  %6030 = vmatpush2.bf16.msra.mxu0 0
  %6031 = vmatprep.subr.bf16.mxu0 0
  %6032 = vmatpush2.bf16.msra.mxu0 0
  %6033 = vmatprep.subr.bf16.mxu0 0
  %6034 = vmatpush2.bf16.msra.mxu0 0
  %6035 = vmatprep.subr.bf16.mxu0 0
  %6036 = vmatpush2.bf16.msra.mxu0 0
  %6037 = vmatprep.subr.bf16.mxu0 0
  %6038 = vmatpush2.bf16.msra.mxu0 0
  %6039 = vmatprep.subr.bf16.mxu0 0
  %6040 = vmatpush2.bf16.msra.mxu0 0
  %6041 = vmatprep.mubr.bf16.mxu0 0
  %6042 = vmatmul.mubr.bf16.gmra.mxu0 %v6007
  %v6043 = vpop.f32.mrf.mxu0
  %v6044 = vadd.f32 %v5989, %v6043
  %v6045 = vpop.f32.mrf.mxu0
  %v6046 = vpop.f32.mrf.mxu0
  %v6047 = vpop.f32.mrf.mxu0
  %6048 = vdwg.mxu0
  %v6050 = vrot.slane %v6044, 6
  %v6052 = vadd.f32 %v3655, %v6050
  %v6053 = vxor.u32 %v6052, 2147483648
  %v6054 = vmul.f32 %v6053, 1.442695
  %v6055 = vpow.pop %v6054
  %v6056 = vadd.f32 %v6055, 1.0
  %v6057 = vrcp.pop %v6056
  %v6058 = vmul.f32 1.0, %v6057
  %6059 = vrot.lane.b32.xlu0 %v6050, 64
  %v6060 = vpop.permute.xlu0 %6059
  %v6062 = vmul.f32 %v6058, %v6060
  %6064 = vrot.lane.b32.xlu0 %v6062, 64
  %v6065 = vpop.permute.xlu0 %6064
  %v6067 = vadd.f32 %v3655, %v6065
  %v6068 = vtanh.pop %v6067
  %v6069 = vsub.f32 1.0, %v6058
  %6071 = vrot.lane.b32.xlu0 %v6068, 96
  %v6072 = vpop.permute.xlu0 %6071
  %v6074 = vmul.f32 %v6069, %v6072
  %v6076 = vrot.slane %v5972, 6
  %v6078 = vmul.f32 %v6058, %v6076
  %v6079 = vadd.f32 %v6074, %v6078
  %v6080 = vpack.c.bf16 %v6079, %v6079
  %v6081 = vld [vmem:[%s18] sm:$0xf]
  %v6082 = vld [vmem:[%s18 + $0x4] sm:$0xf]
  %v6083 = vld [vmem:[%s18 + $0x8] sm:$0xf]
  %v6084 = vld [vmem:[%s18 + $0xc] sm:$0xf]
  %v6086 = vrot.slane %v6080, 1
  %6087 = vrot.lane.b32.xlu0 %v6086, 96
  %v6088 = vpop.permute.xlu0 %6087
  %v6093 = vunpack.c.l.b16 %v6081
  %v6094 = vunpack.c.l.b16 %v6082
  %v6095 = vunpack.c.l.b16 %v6083
  %v6096 = vunpack.c.l.b16 %v6084
  %v6097 = vpack.c.b16 %v6094, %v6093
  %v6098 = vpack.c.b16 %v6096, %v6095
  %v6102 = vsel %vm384, %v6088, 0
  %6104 = vmatprep.subr.bf16.mxu0 0
  %6105 = vmatpush1.bf16.msra.mxu0 0
  %6106 = vmatprep.subr.bf16.mxu0 0
  %6107 = vmatpush1.bf16.msra.mxu0 0
  %6108 = vmatprep.subr.bf16.mxu0 0
  %6109 = vmatpush1.bf16.msra.mxu0 0
  %6110 = vmatprep.subr.bf16.mxu0 0
  %6111 = vmatpush1.bf16.msra.mxu0 0
  %6112 = vmatprep.subr.bf16.mxu0 0
  %6113 = vmatpush1.bf16.msra.mxu0 0
  %6114 = vmatprep.subr.bf16.mxu0 0
  %6115 = vmatpush1.bf16.msra.mxu0 0
  %6116 = vmatprep.subr.bf16.mxu0 0
  %6117 = vmatpush1.bf16.msra.mxu0 %v6098
  %6118 = vmatprep.subr.bf16.mxu0 0
  %6119 = vmatpush1.bf16.msra.mxu0 %v6097
  %6120 = vmatprep.subr.bf16.mxu0 0
  %6121 = vmatpush2.bf16.msra.mxu0 0
  %6122 = vmatprep.subr.bf16.mxu0 0
  %6123 = vmatpush2.bf16.msra.mxu0 0
  %6124 = vmatprep.subr.bf16.mxu0 0
  %6125 = vmatpush2.bf16.msra.mxu0 0
  %6126 = vmatprep.subr.bf16.mxu0 0
  %6127 = vmatpush2.bf16.msra.mxu0 0
  %6128 = vmatprep.subr.bf16.mxu0 0
  %6129 = vmatpush2.bf16.msra.mxu0 0
  %6130 = vmatprep.subr.bf16.mxu0 0
  %6131 = vmatpush2.bf16.msra.mxu0 0
  %6132 = vmatprep.subr.bf16.mxu0 0
  %6133 = vmatpush2.bf16.msra.mxu0 0
  %6134 = vmatprep.subr.bf16.mxu0 0
  %6135 = vmatpush2.bf16.msra.mxu0 0
  %6136 = vmatprep.mubr.bf16.mxu0 0
  %6137 = vmatmul.mubr.bf16.gmra.mxu0 %v6102
  %v6138 = vpop.f32.mrf.mxu0
  %v6139 = vadd.f32 0.0, %v6138
  %v6140 = vpop.f32.mrf.mxu0
  %v6141 = vpop.f32.mrf.mxu0
  %v6142 = vpop.f32.mrf.mxu0
  %6143 = vdwg.mxu0
  %v6145 = vrot.slane %v6139, 6
  %v6147 = vrot.slane %v6139, 4
  %v6149 = vrot.slane %v6139, 2
  %v6151 = vsel %vm3827, %v6139, %v6145
  %v6152 = vsel %vm3829, %v6151, %v6147
  %v6153 = vsel %vm3831, %v6152, %v6149
  %v6154 = vadd.f32 %v3580, %v6153
  %v6155 = vadd.f32 %v3583, %v6153
  %v6156 = vtanh.pop %v6154
  %v6157 = vtanh.pop %v6155
  %v6158 = vpack.c.bf16 %v6157, %v6156
  %v6160 = vsel %vm384, %v6158, 0
  %6162 = vmatprep.subr.bf16.mxu0 0
  %6163 = vmatpush1.bf16.xpose.msra.mxu0 0
  %6164 = vmatprep.subr.bf16.mxu0 0
  %6165 = vmatpush1.bf16.xpose.msra.mxu0 0
  %6166 = vmatprep.subr.bf16.mxu0 0
  %6167 = vmatpush1.bf16.xpose.msra.mxu0 0
  %6168 = vmatprep.subr.bf16.mxu0 0
  %6169 = vmatpush1.bf16.xpose.msra.mxu0 0
  %6170 = vmatprep.subr.bf16.mxu0 0
  %6171 = vmatpush1.bf16.xpose.msra.mxu0 0
  %6172 = vmatprep.subr.bf16.mxu0 0
  %6173 = vmatpush1.bf16.xpose.msra.mxu0 0
  %6174 = vmatprep.subr.bf16.mxu0 0
  %6175 = vmatpush1.bf16.xpose.msra.mxu0 0
  %6176 = vmatprep.subr.bf16.mxu0 0
  %6177 = vmatpush1.bf16.xpose.msra.mxu0 %v6160
  %6178 = vmatprep.subr.bf16.mxu0 0
  %6179 = vmatpush2.bf16.xpose.msra.mxu0 0
  %6180 = vmatprep.subr.bf16.mxu0 0
  %6181 = vmatpush2.bf16.xpose.msra.mxu0 0
  %6182 = vmatprep.subr.bf16.mxu0 0
  %6183 = vmatpush2.bf16.xpose.msra.mxu0 0
  %6184 = vmatprep.subr.bf16.mxu0 0
  %6185 = vmatpush2.bf16.xpose.msra.mxu0 0
  %6186 = vmatprep.subr.bf16.mxu0 0
  %6187 = vmatpush2.bf16.xpose.msra.mxu0 0
  %6188 = vmatprep.subr.bf16.mxu0 0
  %6189 = vmatpush2.bf16.xpose.msra.mxu0 0
  %6190 = vmatprep.subr.bf16.mxu0 0
  %6191 = vmatpush2.bf16.xpose.msra.mxu0 0
  %6192 = vmatprep.subr.bf16.mxu0 0
  %6193 = vmatpush2.bf16.xpose.msra.mxu0 0
  %6194 = vmatprep.mubr.bf16.mxu0 0
  %6195 = vmatmul.mubr.bf16.gmra.mxu0 %v3839
  %v6196 = vpop.f32.mrf.mxu0
  %v6197 = vadd.f32 0.0, %v6196
  %v6198 = vpop.f32.mrf.mxu0
  %v6199 = vpop.f32.mrf.mxu0
  %v6200 = vpop.f32.mrf.mxu0
  %6201 = vdwg.mxu0
  %v6202 = vlaneseq
  %v6203 = vshrl.u32 %v6202, 7
  %v6204 = vsub.s32 0, %v6203
  %v6205 = vrot.slane %v6197, %v6204
  %v6206 = vadd.f32 %v6205, %v3659
  %v6207 = vsel %vm3889, %v6206, -inf
  %6208 = vmax.xlane.f32.xlu0 %v6207
  %v6209 = vpop.xlane.xlu0 %6208
  %v6210 = vsub.f32 %v6206, %v6209
  %v6211 = vmul.f32 %v6210, 1.442695
  %v6212 = vpow.pop %v6211
  %v6213 = vsel %vm3889, %v6212, 0.0
  %6214 = vadd.xlane.f32.xlu0 %v6213
  %v6215 = vpop.xlane.xlu0 %6214
  %v6216 = vrcp.pop %v6215
  %v6217 = vmul.f32 %v6212, %v6216
  %v6218 = vpack.c.bf16 %v6217, %v6217
  %v6220 = vsel %vm3375, %v6218, 0
  %6222 = vmatprep.subr.bf16.mxu0 0
  %6223 = vmatpush1.bf16.msra.mxu0 0
  %6224 = vmatprep.subr.bf16.mxu0 0
  %6225 = vmatpush1.bf16.msra.mxu0 0
  %6226 = vmatprep.subr.bf16.mxu0 0
  %6227 = vmatpush1.bf16.msra.mxu0 0
  %6228 = vmatprep.subr.bf16.mxu0 0
  %6229 = vmatpush1.bf16.msra.mxu0 0
  %6230 = vmatprep.subr.bf16.mxu0 0
  %6231 = vmatpush1.bf16.msra.mxu0 0
  %6232 = vmatprep.subr.bf16.mxu0 0
  %6233 = vmatpush1.bf16.msra.mxu0 0
  %6234 = vmatprep.subr.bf16.mxu0 0
  %6235 = vmatpush1.bf16.msra.mxu0 0
  %6236 = vmatprep.subr.bf16.mxu0 0
  %6237 = vmatpush1.bf16.msra.mxu0 %v3372
  %6238 = vmatprep.subr.bf16.mxu0 0
  %6239 = vmatpush2.bf16.msra.mxu0 0
  %6240 = vmatprep.subr.bf16.mxu0 0
  %6241 = vmatpush2.bf16.msra.mxu0 0
  %6242 = vmatprep.subr.bf16.mxu0 0
  %6243 = vmatpush2.bf16.msra.mxu0 0
  %6244 = vmatprep.subr.bf16.mxu0 0
  %6245 = vmatpush2.bf16.msra.mxu0 0
  %6246 = vmatprep.subr.bf16.mxu0 0
  %6247 = vmatpush2.bf16.msra.mxu0 0
  %6248 = vmatprep.subr.bf16.mxu0 0
  %6249 = vmatpush2.bf16.msra.mxu0 0
  %6250 = vmatprep.subr.bf16.mxu0 0
  %6251 = vmatpush2.bf16.msra.mxu0 0
  %6252 = vmatprep.subr.bf16.mxu0 0
  %6253 = vmatpush2.bf16.msra.mxu0 0
  %6254 = vmatprep.mubr.bf16.mxu0 0
  %6255 = vmatmul.mubr.bf16.gmra.mxu0 %v6220
  %v6256 = vpop.f32.mrf.mxu0
  %v6257 = vadd.f32 0.0, %v6256
  %v6258 = vpop.f32.mrf.mxu0
  %v6259 = vpop.f32.mrf.mxu0
  %v6260 = vpop.f32.mrf.mxu0
  %6261 = vdwg.mxu0
  %v6263 = vrot.slane %v6079, 2
  %6264 = vrot.lane.b32.xlu0 %v6263, 32
  %v6265 = vpop.permute.xlu0 %6264
  %v6267 = vsel %vm153, %v6257, %v6265
  %v6268 = vpack.c.bf16 %v6267, %v6267
  %v6269 = vld [vmem:[%s24] sm:$0xff]
  %v6270 = vld [vmem:[%s24 + $0x8] sm:$0xff]
  %v6271 = vld [vmem:[%s24 + $0x10] sm:$0xff]
  %v6272 = vld [vmem:[%s24 + $0x18] sm:$0xff]
  %v6273 = vld [vmem:[%s24 + $0x20] sm:$0xff]
  %v6274 = vld [vmem:[%s24 + $0x28] sm:$0xff]
  %v6275 = vld [vmem:[%s24 + $0x30] sm:$0xff]
  %v6276 = vld [vmem:[%s24 + $0x38] sm:$0xff]
  %v6277 = vld [vmem:[%s24 + $0x40] sm:$0xff]
  %v6278 = vld [vmem:[%s24 + $0x48] sm:$0xff]
  %v6279 = vld [vmem:[%s24 + $0x50] sm:$0xff]
  %v6280 = vld [vmem:[%s24 + $0x58] sm:$0xff]
  %v6281 = vld [vmem:[%s25] sm:$0x3]
  %v6283 = vlaneseq
  %v6284 = vshrl.u32 %v6283, 7
  %v6285 = vsub.s32 0, %v6284
  %v6286 = vrot.slane %v6281, %v6285
  %v6287 = vlaneseq
  %v6288 = vshrl.u32 %v6287, 7
  %v6289 = vsub.s32 1, %v6288
  %v6290 = vrot.slane %v6281, %v6289
  %v6305 = vunpack.c.l.b16 %v6269
  %v6306 = vunpack.c.h.b16 %v6269
  %v6307 = vunpack.c.l.b16 %v6270
  %v6308 = vunpack.c.h.b16 %v6270
  %v6309 = vunpack.c.l.b16 %v6271
  %v6310 = vunpack.c.h.b16 %v6271
  %v6311 = vunpack.c.l.b16 %v6272
  %v6312 = vunpack.c.h.b16 %v6272
  %v6313 = vunpack.c.l.b16 %v6273
  %v6314 = vunpack.c.h.b16 %v6273
  %v6315 = vunpack.c.l.b16 %v6274
  %v6316 = vunpack.c.h.b16 %v6274
  %v6317 = vunpack.c.l.b16 %v6275
  %v6318 = vunpack.c.h.b16 %v6275
  %v6319 = vunpack.c.l.b16 %v6276
  %v6320 = vunpack.c.h.b16 %v6276
  %v6321 = vunpack.c.l.b16 %v6277
  %v6322 = vunpack.c.h.b16 %v6277
  %v6323 = vunpack.c.l.b16 %v6278
  %v6324 = vunpack.c.h.b16 %v6278
  %v6325 = vunpack.c.l.b16 %v6279
  %v6326 = vunpack.c.h.b16 %v6279
  %v6327 = vunpack.c.l.b16 %v6280
  %v6328 = vunpack.c.h.b16 %v6280
  %v6329 = vpack.c.b16 %v6307, %v6305
  %v6330 = vpack.c.b16 %v6308, %v6306
  %v6331 = vpack.c.b16 %v6311, %v6309
  %v6332 = vpack.c.b16 %v6312, %v6310
  %v6333 = vpack.c.b16 %v6315, %v6313
  %v6334 = vpack.c.b16 %v6316, %v6314
  %v6335 = vpack.c.b16 %v6319, %v6317
  %v6336 = vpack.c.b16 %v6320, %v6318
  %v6337 = vpack.c.b16 %v6323, %v6321
  %v6338 = vpack.c.b16 %v6324, %v6322
  %v6339 = vpack.c.b16 %v6327, %v6325
  %v6340 = vpack.c.b16 %v6328, %v6326
  %v6354 = vsel %vm4035, %v6268, 0
  %6356 = vmatprep.subr.bf16.mxu0 0
  %6357 = vmatpush1.bf16.msra.mxu0 0
  %6358 = vmatprep.subr.bf16.mxu0 0
  %6359 = vmatpush1.bf16.msra.mxu0 0
  %6360 = vmatprep.subr.bf16.mxu0 %v6340
  %6361 = vmatpush1.bf16.msra.mxu0 %v6339
  %6362 = vmatprep.subr.bf16.mxu0 %v6338
  %6363 = vmatpush1.bf16.msra.mxu0 %v6337
  %6364 = vmatprep.subr.bf16.mxu0 %v6336
  %6365 = vmatpush1.bf16.msra.mxu0 %v6335
  %6366 = vmatprep.subr.bf16.mxu0 %v6334
  %6367 = vmatpush1.bf16.msra.mxu0 %v6333
  %6368 = vmatprep.subr.bf16.mxu0 %v6332
  %6369 = vmatpush1.bf16.msra.mxu0 %v6331
  %6370 = vmatprep.subr.bf16.mxu0 %v6330
  %6371 = vmatpush1.bf16.msra.mxu0 %v6329
  %6372 = vmatprep.subr.bf16.mxu0 0
  %6373 = vmatpush2.bf16.msra.mxu0 0
  %6374 = vmatprep.subr.bf16.mxu0 0
  %6375 = vmatpush2.bf16.msra.mxu0 0
  %6376 = vmatprep.subr.bf16.mxu0 0
  %6377 = vmatpush2.bf16.msra.mxu0 0
  %6378 = vmatprep.subr.bf16.mxu0 0
  %6379 = vmatpush2.bf16.msra.mxu0 0
  %6380 = vmatprep.subr.bf16.mxu0 0
  %6381 = vmatpush2.bf16.msra.mxu0 0
  %6382 = vmatprep.subr.bf16.mxu0 0
  %6383 = vmatpush2.bf16.msra.mxu0 0
  %6384 = vmatprep.subr.bf16.mxu0 0
  %6385 = vmatpush2.bf16.msra.mxu0 0
  %6386 = vmatprep.subr.bf16.mxu0 0
  %6387 = vmatpush2.bf16.msra.mxu0 0
  %6388 = vmatprep.mubr.bf16.mxu0 0
  %6389 = vmatmul.mubr.bf16.gmra.mxu0 %v6354
  %v6390 = vpop.f32.mrf.mxu0
  %v6391 = vadd.f32 %v6286, %v6390
  %v6392 = vpop.f32.mrf.mxu0
  %v6393 = vadd.f32 %v6290, %v6392
  %v6394 = vpop.f32.mrf.mxu0
  %v6395 = vpop.f32.mrf.mxu0
  %6396 = vdwg.mxu0
  %6398 = vrot.lane.b32.xlu0 %v6391, 32
  %v6399 = vpop.permute.xlu0 %6398
  %v6401 = vadd.f32 %v6391, %v6399
  %v6402 = vxor.u32 %v6401, 2147483648
  %v6403 = vmul.f32 %v6402, 1.442695
  %v6404 = vpow.pop %v6403
  %v6405 = vadd.f32 %v6404, 1.0
  %v6406 = vrcp.pop %v6405
  %v6407 = vmul.f32 1.0, %v6406
  %6409 = vrot.lane.b32.xlu0 %v6393, 32
  %v6410 = vpop.permute.xlu0 %6409
  %v6412 = vadd.f32 %v6391, %v6410
  %v6413 = vxor.u32 %v6412, 2147483648
  %v6414 = vmul.f32 %v6413, 1.442695
  %v6415 = vpow.pop %v6414
  %v6416 = vadd.f32 %v6415, 1.0
  %v6417 = vrcp.pop %v6416
  %v6418 = vmul.f32 1.0, %v6417
  %6419 = vrot.lane.b32.xlu0 %v6393, 96
  %v6420 = vpop.permute.xlu0 %6419
  %v6422 = vmul.f32 %v6407, %v6420
  %6424 = vrot.lane.b32.xlu0 %v6422, 64
  %v6425 = vpop.permute.xlu0 %6424
  %v6427 = vadd.f32 %v6391, %v6425
  %v6428 = vtanh.pop %v6427
  %v6429 = vsub.f32 1.0, %v6418
  %6431 = vrot.lane.b32.xlu0 %v6428, 96
  %v6432 = vpop.permute.xlu0 %6431
  %v6434 = vmul.f32 %v6429, %v6432
  %v6436 = vmul.f32 %v6418, %v6263
  %v6437 = vadd.f32 %v6434, %v6436
  %6438 = vst.msk [vmem:[#allocation4 + $0xa] sm:$0x3] %vm951, %v6437
  %6440 = vrot.lane.b32.xlu0 %v6257, 64
  %v6441 = vpop.permute.xlu0 %6440
  %6443 = vst.msk [vmem:[#allocation4 + $0xa] sm:$0x3] %vm4125, %v6441
  %v6444 = vpack.c.bf16 %v6437, %v6437
  %v6445 = vld [vmem:[%s22] sm:$0xf]
  %v6446 = vld [vmem:[%s22 + $0x4] sm:$0xf]
  %v6447 = vld [vmem:[%s22 + $0x8] sm:$0xf]
  %v6448 = vld [vmem:[%s22 + $0xc] sm:$0xf]
  %v6449 = vld [vmem:[%s23] sm:$0x1]
  %v6451 = vlaneseq
  %v6452 = vshrl.u32 %v6451, 7
  %v6453 = vsub.s32 0, %v6452
  %v6454 = vrot.slane %v6449, %v6453
  %6457 = vrot.lane.b32.xlu0 %v6444, 96
  %v6458 = vpop.permute.xlu0 %6457
  %v6463 = vunpack.c.l.b16 %v6445
  %v6464 = vunpack.c.l.b16 %v6446
  %v6465 = vunpack.c.l.b16 %v6447
  %v6466 = vunpack.c.l.b16 %v6448
  %v6467 = vpack.c.b16 %v6464, %v6463
  %v6468 = vpack.c.b16 %v6466, %v6465
  %v6472 = vsel %vm384, %v6458, 0
  %6474 = vmatprep.subr.bf16.mxu0 0
  %6475 = vmatpush1.bf16.msra.mxu0 0
  %6476 = vmatprep.subr.bf16.mxu0 0
  %6477 = vmatpush1.bf16.msra.mxu0 0
  %6478 = vmatprep.subr.bf16.mxu0 0
  %6479 = vmatpush1.bf16.msra.mxu0 0
  %6480 = vmatprep.subr.bf16.mxu0 0
  %6481 = vmatpush1.bf16.msra.mxu0 0
  %6482 = vmatprep.subr.bf16.mxu0 0
  %6483 = vmatpush1.bf16.msra.mxu0 0
  %6484 = vmatprep.subr.bf16.mxu0 0
  %6485 = vmatpush1.bf16.msra.mxu0 0
  %6486 = vmatprep.subr.bf16.mxu0 0
  %6487 = vmatpush1.bf16.msra.mxu0 %v6468
  %6488 = vmatprep.subr.bf16.mxu0 0
  %6489 = vmatpush1.bf16.msra.mxu0 %v6467
  %6490 = vmatprep.subr.bf16.mxu0 0
  %6491 = vmatpush2.bf16.msra.mxu0 0
  %6492 = vmatprep.subr.bf16.mxu0 0
  %6493 = vmatpush2.bf16.msra.mxu0 0
  %6494 = vmatprep.subr.bf16.mxu0 0
  %6495 = vmatpush2.bf16.msra.mxu0 0
  %6496 = vmatprep.subr.bf16.mxu0 0
  %6497 = vmatpush2.bf16.msra.mxu0 0
  %6498 = vmatprep.subr.bf16.mxu0 0
  %6499 = vmatpush2.bf16.msra.mxu0 0
  %6500 = vmatprep.subr.bf16.mxu0 0
  %6501 = vmatpush2.bf16.msra.mxu0 0
  %6502 = vmatprep.subr.bf16.mxu0 0
  %6503 = vmatpush2.bf16.msra.mxu0 0
  %6504 = vmatprep.subr.bf16.mxu0 0
  %6505 = vmatpush2.bf16.msra.mxu0 0
  %6506 = vmatprep.mubr.bf16.mxu0 0
  %6507 = vmatmul.mubr.bf16.gmra.mxu0 %v6472
  %v6508 = vpop.f32.mrf.mxu0
  %v6509 = vadd.f32 %v6454, %v6508
  %v6510 = vpop.f32.mrf.mxu0
  %v6511 = vpop.f32.mrf.mxu0
  %v6512 = vpop.f32.mrf.mxu0
  %6513 = vdwg.mxu0
  %v6515 = vrot.slane %v6509, 4
  %v6517 = vadd.f32 %v3655, %v6515
  %v6518 = vxor.u32 %v6517, 2147483648
  %v6519 = vmul.f32 %v6518, 1.442695
  %v6520 = vpow.pop %v6519
  %v6521 = vadd.f32 %v6520, 1.0
  %v6522 = vrcp.pop %v6521
  %v6523 = vmul.f32 1.0, %v6522
  %6524 = vrot.lane.b32.xlu0 %v6515, 64
  %v6525 = vpop.permute.xlu0 %6524
  %v6527 = vmul.f32 %v6523, %v6525
  %6529 = vrot.lane.b32.xlu0 %v6527, 64
  %v6530 = vpop.permute.xlu0 %6529
  %v6532 = vadd.f32 %v3655, %v6530
  %v6533 = vtanh.pop %v6532
  %v6534 = vsub.f32 1.0, %v6523
  %6536 = vrot.lane.b32.xlu0 %v6533, 96
  %v6537 = vpop.permute.xlu0 %6536
  %v6539 = vmul.f32 %v6534, %v6537
  %v6541 = vrot.slane %v6437, 4
  %v6543 = vmul.f32 %v6523, %v6541
  %v6544 = vadd.f32 %v6539, %v6543
  %v6545 = vpack.c.bf16 %v6544, %v6544
  %v6546 = vld [vmem:[%s18] sm:$0xf]
  %v6547 = vld [vmem:[%s18 + $0x4] sm:$0xf]
  %v6548 = vld [vmem:[%s18 + $0x8] sm:$0xf]
  %v6549 = vld [vmem:[%s18 + $0xc] sm:$0xf]
  %v6551 = vrot.slane %v6545, 2
  %6552 = vrot.lane.b32.xlu0 %v6551, 96
  %v6553 = vpop.permute.xlu0 %6552
  %v6558 = vunpack.c.l.b16 %v6546
  %v6559 = vunpack.c.l.b16 %v6547
  %v6560 = vunpack.c.l.b16 %v6548
  %v6561 = vunpack.c.l.b16 %v6549
  %v6562 = vpack.c.b16 %v6559, %v6558
  %v6563 = vpack.c.b16 %v6561, %v6560
  %v6567 = vsel %vm384, %v6553, 0
  %6569 = vmatprep.subr.bf16.mxu0 0
  %6570 = vmatpush1.bf16.msra.mxu0 0
  %6571 = vmatprep.subr.bf16.mxu0 0
  %6572 = vmatpush1.bf16.msra.mxu0 0
  %6573 = vmatprep.subr.bf16.mxu0 0
  %6574 = vmatpush1.bf16.msra.mxu0 0
  %6575 = vmatprep.subr.bf16.mxu0 0
  %6576 = vmatpush1.bf16.msra.mxu0 0
  %6577 = vmatprep.subr.bf16.mxu0 0
  %6578 = vmatpush1.bf16.msra.mxu0 0
  %6579 = vmatprep.subr.bf16.mxu0 0
  %6580 = vmatpush1.bf16.msra.mxu0 0
  %6581 = vmatprep.subr.bf16.mxu0 0
  %6582 = vmatpush1.bf16.msra.mxu0 %v6563
  %6583 = vmatprep.subr.bf16.mxu0 0
  %6584 = vmatpush1.bf16.msra.mxu0 %v6562
  %6585 = vmatprep.subr.bf16.mxu0 0
  %6586 = vmatpush2.bf16.msra.mxu0 0
  %6587 = vmatprep.subr.bf16.mxu0 0
  %6588 = vmatpush2.bf16.msra.mxu0 0
  %6589 = vmatprep.subr.bf16.mxu0 0
  %6590 = vmatpush2.bf16.msra.mxu0 0
  %6591 = vmatprep.subr.bf16.mxu0 0
  %6592 = vmatpush2.bf16.msra.mxu0 0
  %6593 = vmatprep.subr.bf16.mxu0 0
  %6594 = vmatpush2.bf16.msra.mxu0 0
  %6595 = vmatprep.subr.bf16.mxu0 0
  %6596 = vmatpush2.bf16.msra.mxu0 0
  %6597 = vmatprep.subr.bf16.mxu0 0
  %6598 = vmatpush2.bf16.msra.mxu0 0
  %6599 = vmatprep.subr.bf16.mxu0 0
  %6600 = vmatpush2.bf16.msra.mxu0 0
  %6601 = vmatprep.mubr.bf16.mxu0 0
  %6602 = vmatmul.mubr.bf16.gmra.mxu0 %v6567
  %v6603 = vpop.f32.mrf.mxu0
  %v6604 = vadd.f32 0.0, %v6603
  %v6605 = vpop.f32.mrf.mxu0
  %v6606 = vpop.f32.mrf.mxu0
  %v6607 = vpop.f32.mrf.mxu0
  %6608 = vdwg.mxu0
  %v6610 = vrot.slane %v6604, 6
  %v6612 = vrot.slane %v6604, 4
  %v6614 = vrot.slane %v6604, 2
  %v6616 = vsel %vm3827, %v6604, %v6610
  %v6617 = vsel %vm3829, %v6616, %v6612
  %v6618 = vsel %vm3831, %v6617, %v6614
  %v6619 = vadd.f32 %v3580, %v6618
  %v6620 = vadd.f32 %v3583, %v6618
  %v6621 = vtanh.pop %v6619
  %v6622 = vtanh.pop %v6620
  %v6623 = vpack.c.bf16 %v6622, %v6621
  %v6625 = vsel %vm384, %v6623, 0
  %6627 = vmatprep.subr.bf16.mxu0 0
  %6628 = vmatpush1.bf16.xpose.msra.mxu0 0
  %6629 = vmatprep.subr.bf16.mxu0 0
  %6630 = vmatpush1.bf16.xpose.msra.mxu0 0
  %6631 = vmatprep.subr.bf16.mxu0 0
  %6632 = vmatpush1.bf16.xpose.msra.mxu0 0
  %6633 = vmatprep.subr.bf16.mxu0 0
  %6634 = vmatpush1.bf16.xpose.msra.mxu0 0
  %6635 = vmatprep.subr.bf16.mxu0 0
  %6636 = vmatpush1.bf16.xpose.msra.mxu0 0
  %6637 = vmatprep.subr.bf16.mxu0 0
  %6638 = vmatpush1.bf16.xpose.msra.mxu0 0
  %6639 = vmatprep.subr.bf16.mxu0 0
  %6640 = vmatpush1.bf16.xpose.msra.mxu0 0
  %6641 = vmatprep.subr.bf16.mxu0 0
  %6642 = vmatpush1.bf16.xpose.msra.mxu0 %v6625
  %6643 = vmatprep.subr.bf16.mxu0 0
  %6644 = vmatpush2.bf16.xpose.msra.mxu0 0
  %6645 = vmatprep.subr.bf16.mxu0 0
  %6646 = vmatpush2.bf16.xpose.msra.mxu0 0
  %6647 = vmatprep.subr.bf16.mxu0 0
  %6648 = vmatpush2.bf16.xpose.msra.mxu0 0
  %6649 = vmatprep.subr.bf16.mxu0 0
  %6650 = vmatpush2.bf16.xpose.msra.mxu0 0
  %6651 = vmatprep.subr.bf16.mxu0 0
  %6652 = vmatpush2.bf16.xpose.msra.mxu0 0
  %6653 = vmatprep.subr.bf16.mxu0 0
  %6654 = vmatpush2.bf16.xpose.msra.mxu0 0
  %6655 = vmatprep.subr.bf16.mxu0 0
  %6656 = vmatpush2.bf16.xpose.msra.mxu0 0
  %6657 = vmatprep.subr.bf16.mxu0 0
  %6658 = vmatpush2.bf16.xpose.msra.mxu0 0
  %6659 = vmatprep.mubr.bf16.mxu0 0
  %6660 = vmatmul.mubr.bf16.gmra.mxu0 %v3839
  %v6661 = vpop.f32.mrf.mxu0
  %v6662 = vadd.f32 0.0, %v6661
  %v6663 = vpop.f32.mrf.mxu0
  %v6664 = vpop.f32.mrf.mxu0
  %v6665 = vpop.f32.mrf.mxu0
  %6666 = vdwg.mxu0
  %v6667 = vlaneseq
  %v6668 = vshrl.u32 %v6667, 7
  %v6669 = vsub.s32 0, %v6668
  %v6670 = vrot.slane %v6662, %v6669
  %v6671 = vadd.f32 %v6670, %v3659
  %v6672 = vsel %vm3889, %v6671, -inf
  %6673 = vmax.xlane.f32.xlu0 %v6672
  %v6674 = vpop.xlane.xlu0 %6673
  %v6675 = vsub.f32 %v6671, %v6674
  %v6676 = vmul.f32 %v6675, 1.442695
  %v6677 = vpow.pop %v6676
  %v6678 = vsel %vm3889, %v6677, 0.0
  %6679 = vadd.xlane.f32.xlu0 %v6678
  %v6680 = vpop.xlane.xlu0 %6679
  %v6681 = vrcp.pop %v6680
  %v6682 = vmul.f32 %v6677, %v6681
  %v6683 = vpack.c.bf16 %v6682, %v6682
  %v6685 = vsel %vm3375, %v6683, 0
  %6687 = vmatprep.subr.bf16.mxu0 0
  %6688 = vmatpush1.bf16.msra.mxu0 0
  %6689 = vmatprep.subr.bf16.mxu0 0
  %6690 = vmatpush1.bf16.msra.mxu0 0
  %6691 = vmatprep.subr.bf16.mxu0 0
  %6692 = vmatpush1.bf16.msra.mxu0 0
  %6693 = vmatprep.subr.bf16.mxu0 0
  %6694 = vmatpush1.bf16.msra.mxu0 0
  %6695 = vmatprep.subr.bf16.mxu0 0
  %6696 = vmatpush1.bf16.msra.mxu0 0
  %6697 = vmatprep.subr.bf16.mxu0 0
  %6698 = vmatpush1.bf16.msra.mxu0 0
  %6699 = vmatprep.subr.bf16.mxu0 0
  %6700 = vmatpush1.bf16.msra.mxu0 0
  %6701 = vmatprep.subr.bf16.mxu0 0
  %6702 = vmatpush1.bf16.msra.mxu0 %v3372
  %6703 = vmatprep.subr.bf16.mxu0 0
  %6704 = vmatpush2.bf16.msra.mxu0 0
  %6705 = vmatprep.subr.bf16.mxu0 0
  %6706 = vmatpush2.bf16.msra.mxu0 0
  %6707 = vmatprep.subr.bf16.mxu0 0
  %6708 = vmatpush2.bf16.msra.mxu0 0
  %6709 = vmatprep.subr.bf16.mxu0 0
  %6710 = vmatpush2.bf16.msra.mxu0 0
  %6711 = vmatprep.subr.bf16.mxu0 0
  %6712 = vmatpush2.bf16.msra.mxu0 0
  %6713 = vmatprep.subr.bf16.mxu0 0
  %6714 = vmatpush2.bf16.msra.mxu0 0
  %6715 = vmatprep.subr.bf16.mxu0 0
  %6716 = vmatpush2.bf16.msra.mxu0 0
  %6717 = vmatprep.subr.bf16.mxu0 0
  %6718 = vmatpush2.bf16.msra.mxu0 0
  %6719 = vmatprep.mubr.bf16.mxu0 0
  %6720 = vmatmul.mubr.bf16.gmra.mxu0 %v6685
  %v6721 = vpop.f32.mrf.mxu0
  %v6722 = vadd.f32 0.0, %v6721
  %v6723 = vpop.f32.mrf.mxu0
  %v6724 = vpop.f32.mrf.mxu0
  %v6725 = vpop.f32.mrf.mxu0
  %6726 = vdwg.mxu0
  %v6728 = vrot.slane %v6544, 4
  %6729 = vrot.lane.b32.xlu0 %v6728, 32
  %v6730 = vpop.permute.xlu0 %6729
  %v6732 = vsel %vm153, %v6722, %v6730
  %v6733 = vpack.c.bf16 %v6732, %v6732
  %v6734 = vld [vmem:[%s24] sm:$0xff]
  %v6735 = vld [vmem:[%s24 + $0x8] sm:$0xff]
  %v6736 = vld [vmem:[%s24 + $0x10] sm:$0xff]
  %v6737 = vld [vmem:[%s24 + $0x18] sm:$0xff]
  %v6738 = vld [vmem:[%s24 + $0x20] sm:$0xff]
  %v6739 = vld [vmem:[%s24 + $0x28] sm:$0xff]
  %v6740 = vld [vmem:[%s24 + $0x30] sm:$0xff]
  %v6741 = vld [vmem:[%s24 + $0x38] sm:$0xff]
  %v6742 = vld [vmem:[%s24 + $0x40] sm:$0xff]
  %v6743 = vld [vmem:[%s24 + $0x48] sm:$0xff]
  %v6744 = vld [vmem:[%s24 + $0x50] sm:$0xff]
  %v6745 = vld [vmem:[%s24 + $0x58] sm:$0xff]
  %v6746 = vld [vmem:[%s25] sm:$0x3]
  %v6748 = vlaneseq
  %v6749 = vshrl.u32 %v6748, 7
  %v6750 = vsub.s32 0, %v6749
  %v6751 = vrot.slane %v6746, %v6750
  %v6752 = vlaneseq
  %v6753 = vshrl.u32 %v6752, 7
  %v6754 = vsub.s32 1, %v6753
  %v6755 = vrot.slane %v6746, %v6754
  %v6770 = vunpack.c.l.b16 %v6734
  %v6771 = vunpack.c.h.b16 %v6734
  %v6772 = vunpack.c.l.b16 %v6735
  %v6773 = vunpack.c.h.b16 %v6735
  %v6774 = vunpack.c.l.b16 %v6736
  %v6775 = vunpack.c.h.b16 %v6736
  %v6776 = vunpack.c.l.b16 %v6737
  %v6777 = vunpack.c.h.b16 %v6737
  %v6778 = vunpack.c.l.b16 %v6738
  %v6779 = vunpack.c.h.b16 %v6738
  %v6780 = vunpack.c.l.b16 %v6739
  %v6781 = vunpack.c.h.b16 %v6739
  %v6782 = vunpack.c.l.b16 %v6740
  %v6783 = vunpack.c.h.b16 %v6740
  %v6784 = vunpack.c.l.b16 %v6741
  %v6785 = vunpack.c.h.b16 %v6741
  %v6786 = vunpack.c.l.b16 %v6742
  %v6787 = vunpack.c.h.b16 %v6742
  %v6788 = vunpack.c.l.b16 %v6743
  %v6789 = vunpack.c.h.b16 %v6743
  %v6790 = vunpack.c.l.b16 %v6744
  %v6791 = vunpack.c.h.b16 %v6744
  %v6792 = vunpack.c.l.b16 %v6745
  %v6793 = vunpack.c.h.b16 %v6745
  %v6794 = vpack.c.b16 %v6772, %v6770
  %v6795 = vpack.c.b16 %v6773, %v6771
  %v6796 = vpack.c.b16 %v6776, %v6774
  %v6797 = vpack.c.b16 %v6777, %v6775
  %v6798 = vpack.c.b16 %v6780, %v6778
  %v6799 = vpack.c.b16 %v6781, %v6779
  %v6800 = vpack.c.b16 %v6784, %v6782
  %v6801 = vpack.c.b16 %v6785, %v6783
  %v6802 = vpack.c.b16 %v6788, %v6786
  %v6803 = vpack.c.b16 %v6789, %v6787
  %v6804 = vpack.c.b16 %v6792, %v6790
  %v6805 = vpack.c.b16 %v6793, %v6791
  %v6819 = vsel %vm4035, %v6733, 0
  %6821 = vmatprep.subr.bf16.mxu0 0
  %6822 = vmatpush1.bf16.msra.mxu0 0
  %6823 = vmatprep.subr.bf16.mxu0 0
  %6824 = vmatpush1.bf16.msra.mxu0 0
  %6825 = vmatprep.subr.bf16.mxu0 %v6805
  %6826 = vmatpush1.bf16.msra.mxu0 %v6804
  %6827 = vmatprep.subr.bf16.mxu0 %v6803
  %6828 = vmatpush1.bf16.msra.mxu0 %v6802
  %6829 = vmatprep.subr.bf16.mxu0 %v6801
  %6830 = vmatpush1.bf16.msra.mxu0 %v6800
  %6831 = vmatprep.subr.bf16.mxu0 %v6799
  %6832 = vmatpush1.bf16.msra.mxu0 %v6798
  %6833 = vmatprep.subr.bf16.mxu0 %v6797
  %6834 = vmatpush1.bf16.msra.mxu0 %v6796
  %6835 = vmatprep.subr.bf16.mxu0 %v6795
  %6836 = vmatpush1.bf16.msra.mxu0 %v6794
  %6837 = vmatprep.subr.bf16.mxu0 0
  %6838 = vmatpush2.bf16.msra.mxu0 0
  %6839 = vmatprep.subr.bf16.mxu0 0
  %6840 = vmatpush2.bf16.msra.mxu0 0
  %6841 = vmatprep.subr.bf16.mxu0 0
  %6842 = vmatpush2.bf16.msra.mxu0 0
  %6843 = vmatprep.subr.bf16.mxu0 0
  %6844 = vmatpush2.bf16.msra.mxu0 0
  %6845 = vmatprep.subr.bf16.mxu0 0
  %6846 = vmatpush2.bf16.msra.mxu0 0
  %6847 = vmatprep.subr.bf16.mxu0 0
  %6848 = vmatpush2.bf16.msra.mxu0 0
  %6849 = vmatprep.subr.bf16.mxu0 0
  %6850 = vmatpush2.bf16.msra.mxu0 0
  %6851 = vmatprep.subr.bf16.mxu0 0
  %6852 = vmatpush2.bf16.msra.mxu0 0
  %6853 = vmatprep.mubr.bf16.mxu0 0
  %6854 = vmatmul.mubr.bf16.gmra.mxu0 %v6819
  %v6855 = vpop.f32.mrf.mxu0
  %v6856 = vadd.f32 %v6751, %v6855
  %v6857 = vpop.f32.mrf.mxu0
  %v6858 = vadd.f32 %v6755, %v6857
  %v6859 = vpop.f32.mrf.mxu0
  %v6860 = vpop.f32.mrf.mxu0
  %6861 = vdwg.mxu0
  %6863 = vrot.lane.b32.xlu0 %v6856, 32
  %v6864 = vpop.permute.xlu0 %6863
  %v6866 = vadd.f32 %v6856, %v6864
  %v6867 = vxor.u32 %v6866, 2147483648
  %v6868 = vmul.f32 %v6867, 1.442695
  %v6869 = vpow.pop %v6868
  %v6870 = vadd.f32 %v6869, 1.0
  %v6871 = vrcp.pop %v6870
  %v6872 = vmul.f32 1.0, %v6871
  %6874 = vrot.lane.b32.xlu0 %v6858, 32
  %v6875 = vpop.permute.xlu0 %6874
  %v6877 = vadd.f32 %v6856, %v6875
  %v6878 = vxor.u32 %v6877, 2147483648
  %v6879 = vmul.f32 %v6878, 1.442695
  %v6880 = vpow.pop %v6879
  %v6881 = vadd.f32 %v6880, 1.0
  %v6882 = vrcp.pop %v6881
  %v6883 = vmul.f32 1.0, %v6882
  %6884 = vrot.lane.b32.xlu0 %v6858, 96
  %v6885 = vpop.permute.xlu0 %6884
  %v6887 = vmul.f32 %v6872, %v6885
  %6889 = vrot.lane.b32.xlu0 %v6887, 64
  %v6890 = vpop.permute.xlu0 %6889
  %v6892 = vadd.f32 %v6856, %v6890
  %v6893 = vtanh.pop %v6892
  %v6894 = vsub.f32 1.0, %v6883
  %6896 = vrot.lane.b32.xlu0 %v6893, 96
  %v6897 = vpop.permute.xlu0 %6896
  %v6899 = vmul.f32 %v6894, %v6897
  %v6901 = vmul.f32 %v6883, %v6728
  %v6902 = vadd.f32 %v6899, %v6901
  %6903 = vst.msk [vmem:[#allocation4 + $0xc] sm:$0x3] %vm951, %v6902
  %6905 = vrot.lane.b32.xlu0 %v6722, 64
  %v6906 = vpop.permute.xlu0 %6905
  %6908 = vst.msk [vmem:[#allocation4 + $0xc] sm:$0x3] %vm4125, %v6906
  %v6909 = vpack.c.bf16 %v6902, %v6902
  %v6910 = vld [vmem:[%s22] sm:$0xf]
  %v6911 = vld [vmem:[%s22 + $0x4] sm:$0xf]
  %v6912 = vld [vmem:[%s22 + $0x8] sm:$0xf]
  %v6913 = vld [vmem:[%s22 + $0xc] sm:$0xf]
  %v6914 = vld [vmem:[%s23] sm:$0x1]
  %v6916 = vlaneseq
  %v6917 = vshrl.u32 %v6916, 7
  %v6918 = vsub.s32 0, %v6917
  %v6919 = vrot.slane %v6914, %v6918
  %6922 = vrot.lane.b32.xlu0 %v6909, 96
  %v6923 = vpop.permute.xlu0 %6922
  %v6928 = vunpack.c.l.b16 %v6910
  %v6929 = vunpack.c.l.b16 %v6911
  %v6930 = vunpack.c.l.b16 %v6912
  %v6931 = vunpack.c.l.b16 %v6913
  %v6932 = vpack.c.b16 %v6929, %v6928
  %v6933 = vpack.c.b16 %v6931, %v6930
  %v6937 = vsel %vm384, %v6923, 0
  %6939 = vmatprep.subr.bf16.mxu0 0
  %6940 = vmatpush1.bf16.msra.mxu0 0
  %6941 = vmatprep.subr.bf16.mxu0 0
  %6942 = vmatpush1.bf16.msra.mxu0 0
  %6943 = vmatprep.subr.bf16.mxu0 0
  %6944 = vmatpush1.bf16.msra.mxu0 0
  %6945 = vmatprep.subr.bf16.mxu0 0
  %6946 = vmatpush1.bf16.msra.mxu0 0
  %6947 = vmatprep.subr.bf16.mxu0 0
  %6948 = vmatpush1.bf16.msra.mxu0 0
  %6949 = vmatprep.subr.bf16.mxu0 0
  %6950 = vmatpush1.bf16.msra.mxu0 0
  %6951 = vmatprep.subr.bf16.mxu0 0
  %6952 = vmatpush1.bf16.msra.mxu0 %v6933
  %6953 = vmatprep.subr.bf16.mxu0 0
  %6954 = vmatpush1.bf16.msra.mxu0 %v6932
  %6955 = vmatprep.subr.bf16.mxu0 0
  %6956 = vmatpush2.bf16.msra.mxu0 0
  %6957 = vmatprep.subr.bf16.mxu0 0
  %6958 = vmatpush2.bf16.msra.mxu0 0
  %6959 = vmatprep.subr.bf16.mxu0 0
  %6960 = vmatpush2.bf16.msra.mxu0 0
  %6961 = vmatprep.subr.bf16.mxu0 0
  %6962 = vmatpush2.bf16.msra.mxu0 0
  %6963 = vmatprep.subr.bf16.mxu0 0
  %6964 = vmatpush2.bf16.msra.mxu0 0
  %6965 = vmatprep.subr.bf16.mxu0 0
  %6966 = vmatpush2.bf16.msra.mxu0 0
  %6967 = vmatprep.subr.bf16.mxu0 0
  %6968 = vmatpush2.bf16.msra.mxu0 0
  %6969 = vmatprep.subr.bf16.mxu0 0
  %6970 = vmatpush2.bf16.msra.mxu0 0
  %6971 = vmatprep.mubr.bf16.mxu0 0
  %6972 = vmatmul.mubr.bf16.gmra.mxu0 %v6937
  %v6973 = vpop.f32.mrf.mxu0
  %v6974 = vadd.f32 %v6919, %v6973
  %v6975 = vpop.f32.mrf.mxu0
  %v6976 = vpop.f32.mrf.mxu0
  %v6977 = vpop.f32.mrf.mxu0
  %6978 = vdwg.mxu0
  %v6980 = vrot.slane %v6974, 2
  %v6982 = vadd.f32 %v3655, %v6980
  %v6983 = vxor.u32 %v6982, 2147483648
  %v6984 = vmul.f32 %v6983, 1.442695
  %v6985 = vpow.pop %v6984
  %v6986 = vadd.f32 %v6985, 1.0
  %v6987 = vrcp.pop %v6986
  %v6988 = vmul.f32 1.0, %v6987
  %6989 = vrot.lane.b32.xlu0 %v6980, 64
  %v6990 = vpop.permute.xlu0 %6989
  %v6992 = vmul.f32 %v6988, %v6990
  %6994 = vrot.lane.b32.xlu0 %v6992, 64
  %v6995 = vpop.permute.xlu0 %6994
  %v6997 = vadd.f32 %v3655, %v6995
  %v6998 = vtanh.pop %v6997
  %v6999 = vsub.f32 1.0, %v6988
  %7001 = vrot.lane.b32.xlu0 %v6998, 96
  %v7002 = vpop.permute.xlu0 %7001
  %v7004 = vmul.f32 %v6999, %v7002
  %v7006 = vrot.slane %v6902, 2
  %v7008 = vmul.f32 %v6988, %v7006
  %v7009 = vadd.f32 %v7004, %v7008
  %v7010 = vpack.c.bf16 %v7009, %v7009
  %v7011 = vld [vmem:[%s18] sm:$0xf]
  %v7012 = vld [vmem:[%s18 + $0x4] sm:$0xf]
  %v7013 = vld [vmem:[%s18 + $0x8] sm:$0xf]
  %v7014 = vld [vmem:[%s18 + $0xc] sm:$0xf]
  %v7016 = vrot.slane %v7010, 3
  %7017 = vrot.lane.b32.xlu0 %v7016, 96
  %v7018 = vpop.permute.xlu0 %7017
  %v7023 = vunpack.c.l.b16 %v7011
  %v7024 = vunpack.c.l.b16 %v7012
  %v7025 = vunpack.c.l.b16 %v7013
  %v7026 = vunpack.c.l.b16 %v7014
  %v7027 = vpack.c.b16 %v7024, %v7023
  %v7028 = vpack.c.b16 %v7026, %v7025
  %v7032 = vsel %vm384, %v7018, 0
  %7034 = vmatprep.subr.bf16.mxu0 0
  %7035 = vmatpush1.bf16.msra.mxu0 0
  %7036 = vmatprep.subr.bf16.mxu0 0
  %7037 = vmatpush1.bf16.msra.mxu0 0
  %7038 = vmatprep.subr.bf16.mxu0 0
  %7039 = vmatpush1.bf16.msra.mxu0 0
  %7040 = vmatprep.subr.bf16.mxu0 0
  %7041 = vmatpush1.bf16.msra.mxu0 0
  %7042 = vmatprep.subr.bf16.mxu0 0
  %7043 = vmatpush1.bf16.msra.mxu0 0
  %7044 = vmatprep.subr.bf16.mxu0 0
  %7045 = vmatpush1.bf16.msra.mxu0 0
  %7046 = vmatprep.subr.bf16.mxu0 0
  %7047 = vmatpush1.bf16.msra.mxu0 %v7028
  %7048 = vmatprep.subr.bf16.mxu0 0
  %7049 = vmatpush1.bf16.msra.mxu0 %v7027
  %7050 = vmatprep.subr.bf16.mxu0 0
  %7051 = vmatpush2.bf16.msra.mxu0 0
  %7052 = vmatprep.subr.bf16.mxu0 0
  %7053 = vmatpush2.bf16.msra.mxu0 0
  %7054 = vmatprep.subr.bf16.mxu0 0
  %7055 = vmatpush2.bf16.msra.mxu0 0
  %7056 = vmatprep.subr.bf16.mxu0 0
  %7057 = vmatpush2.bf16.msra.mxu0 0
  %7058 = vmatprep.subr.bf16.mxu0 0
  %7059 = vmatpush2.bf16.msra.mxu0 0
  %7060 = vmatprep.subr.bf16.mxu0 0
  %7061 = vmatpush2.bf16.msra.mxu0 0
  %7062 = vmatprep.subr.bf16.mxu0 0
  %7063 = vmatpush2.bf16.msra.mxu0 0
  %7064 = vmatprep.subr.bf16.mxu0 0
  %7065 = vmatpush2.bf16.msra.mxu0 0
  %7066 = vmatprep.mubr.bf16.mxu0 0
  %7067 = vmatmul.mubr.bf16.gmra.mxu0 %v7032
  %v7068 = vpop.f32.mrf.mxu0
  %v7069 = vadd.f32 0.0, %v7068
  %v7070 = vpop.f32.mrf.mxu0
  %v7071 = vpop.f32.mrf.mxu0
  %v7072 = vpop.f32.mrf.mxu0
  %7073 = vdwg.mxu0
  %v7075 = vrot.slane %v7069, 6
  %v7077 = vrot.slane %v7069, 4
  %v7079 = vrot.slane %v7069, 2
  %v7081 = vsel %vm3827, %v7069, %v7075
  %v7082 = vsel %vm3829, %v7081, %v7077
  %v7083 = vsel %vm3831, %v7082, %v7079
  %v7084 = vadd.f32 %v3580, %v7083
  %v7085 = vadd.f32 %v3583, %v7083
  %v7086 = vtanh.pop %v7084
  %v7087 = vtanh.pop %v7085
  %v7088 = vpack.c.bf16 %v7087, %v7086
  %v7090 = vsel %vm384, %v7088, 0
  %7092 = vmatprep.subr.bf16.mxu0 0
  %7093 = vmatpush1.bf16.xpose.msra.mxu0 0
  %7094 = vmatprep.subr.bf16.mxu0 0
  %7095 = vmatpush1.bf16.xpose.msra.mxu0 0
  %7096 = vmatprep.subr.bf16.mxu0 0
  %7097 = vmatpush1.bf16.xpose.msra.mxu0 0
  %7098 = vmatprep.subr.bf16.mxu0 0
  %7099 = vmatpush1.bf16.xpose.msra.mxu0 0
  %7100 = vmatprep.subr.bf16.mxu0 0
  %7101 = vmatpush1.bf16.xpose.msra.mxu0 0
  %7102 = vmatprep.subr.bf16.mxu0 0
  %7103 = vmatpush1.bf16.xpose.msra.mxu0 0
  %7104 = vmatprep.subr.bf16.mxu0 0
  %7105 = vmatpush1.bf16.xpose.msra.mxu0 0
  %7106 = vmatprep.subr.bf16.mxu0 0
  %7107 = vmatpush1.bf16.xpose.msra.mxu0 %v7090
  %7108 = vmatprep.subr.bf16.mxu0 0
  %7109 = vmatpush2.bf16.xpose.msra.mxu0 0
  %7110 = vmatprep.subr.bf16.mxu0 0
  %7111 = vmatpush2.bf16.xpose.msra.mxu0 0
  %7112 = vmatprep.subr.bf16.mxu0 0
  %7113 = vmatpush2.bf16.xpose.msra.mxu0 0
  %7114 = vmatprep.subr.bf16.mxu0 0
  %7115 = vmatpush2.bf16.xpose.msra.mxu0 0
  %7116 = vmatprep.subr.bf16.mxu0 0
  %7117 = vmatpush2.bf16.xpose.msra.mxu0 0
  %7118 = vmatprep.subr.bf16.mxu0 0
  %7119 = vmatpush2.bf16.xpose.msra.mxu0 0
  %7120 = vmatprep.subr.bf16.mxu0 0
  %7121 = vmatpush2.bf16.xpose.msra.mxu0 0
  %7122 = vmatprep.subr.bf16.mxu0 0
  %7123 = vmatpush2.bf16.xpose.msra.mxu0 0
  %7124 = vmatprep.mubr.bf16.mxu0 0
  %7125 = vmatmul.mubr.bf16.gmra.mxu0 %v3839
  %v7126 = vpop.f32.mrf.mxu0
  %v7127 = vadd.f32 0.0, %v7126
  %v7128 = vpop.f32.mrf.mxu0
  %v7129 = vpop.f32.mrf.mxu0
  %v7130 = vpop.f32.mrf.mxu0
  %7131 = vdwg.mxu0
  %v7132 = vlaneseq
  %v7133 = vshrl.u32 %v7132, 7
  %v7134 = vsub.s32 0, %v7133
  %v7135 = vrot.slane %v7127, %v7134
  %v7136 = vadd.f32 %v7135, %v3659
  %v7137 = vsel %vm3889, %v7136, -inf
  %7138 = vmax.xlane.f32.xlu0 %v7137
  %v7139 = vpop.xlane.xlu0 %7138
  %v7140 = vsub.f32 %v7136, %v7139
  %v7141 = vmul.f32 %v7140, 1.442695
  %v7142 = vpow.pop %v7141
  %v7143 = vsel %vm3889, %v7142, 0.0
  %7144 = vadd.xlane.f32.xlu0 %v7143
  %v7145 = vpop.xlane.xlu0 %7144
  %v7146 = vrcp.pop %v7145
  %v7147 = vmul.f32 %v7142, %v7146
  %v7148 = vpack.c.bf16 %v7147, %v7147
  %v7150 = vsel %vm3375, %v7148, 0
  %7152 = vmatprep.subr.bf16.mxu0 0
  %7153 = vmatpush1.bf16.msra.mxu0 0
  %7154 = vmatprep.subr.bf16.mxu0 0
  %7155 = vmatpush1.bf16.msra.mxu0 0
  %7156 = vmatprep.subr.bf16.mxu0 0
  %7157 = vmatpush1.bf16.msra.mxu0 0
  %7158 = vmatprep.subr.bf16.mxu0 0
  %7159 = vmatpush1.bf16.msra.mxu0 0
  %7160 = vmatprep.subr.bf16.mxu0 0
  %7161 = vmatpush1.bf16.msra.mxu0 0
  %7162 = vmatprep.subr.bf16.mxu0 0
  %7163 = vmatpush1.bf16.msra.mxu0 0
  %7164 = vmatprep.subr.bf16.mxu0 0
  %7165 = vmatpush1.bf16.msra.mxu0 0
  %7166 = vmatprep.subr.bf16.mxu0 0
  %7167 = vmatpush1.bf16.msra.mxu0 %v3372
  %7168 = vmatprep.subr.bf16.mxu0 0
  %7169 = vmatpush2.bf16.msra.mxu0 0
  %7170 = vmatprep.subr.bf16.mxu0 0
  %7171 = vmatpush2.bf16.msra.mxu0 0
  %7172 = vmatprep.subr.bf16.mxu0 0
  %7173 = vmatpush2.bf16.msra.mxu0 0
  %7174 = vmatprep.subr.bf16.mxu0 0
  %7175 = vmatpush2.bf16.msra.mxu0 0
  %7176 = vmatprep.subr.bf16.mxu0 0
  %7177 = vmatpush2.bf16.msra.mxu0 0
  %7178 = vmatprep.subr.bf16.mxu0 0
  %7179 = vmatpush2.bf16.msra.mxu0 0
  %7180 = vmatprep.subr.bf16.mxu0 0
  %7181 = vmatpush2.bf16.msra.mxu0 0
  %7182 = vmatprep.subr.bf16.mxu0 0
  %7183 = vmatpush2.bf16.msra.mxu0 0
  %7184 = vmatprep.mubr.bf16.mxu0 0
  %7185 = vmatmul.mubr.bf16.gmra.mxu0 %v7150
  %v7186 = vpop.f32.mrf.mxu0
  %v7187 = vadd.f32 0.0, %v7186
  %v7188 = vpop.f32.mrf.mxu0
  %v7189 = vpop.f32.mrf.mxu0
  %v7190 = vpop.f32.mrf.mxu0
  %7191 = vdwg.mxu0
  %v7193 = vrot.slane %v7009, 6
  %7194 = vrot.lane.b32.xlu0 %v7193, 32
  %v7195 = vpop.permute.xlu0 %7194
  %v7197 = vsel %vm153, %v7187, %v7195
  %v7198 = vpack.c.bf16 %v7197, %v7197
  %v7199 = vld [vmem:[%s24] sm:$0xff]
  %v7200 = vld [vmem:[%s24 + $0x8] sm:$0xff]
  %v7201 = vld [vmem:[%s24 + $0x10] sm:$0xff]
  %v7202 = vld [vmem:[%s24 + $0x18] sm:$0xff]
  %v7203 = vld [vmem:[%s24 + $0x20] sm:$0xff]
  %v7204 = vld [vmem:[%s24 + $0x28] sm:$0xff]
  %v7205 = vld [vmem:[%s24 + $0x30] sm:$0xff]
  %v7206 = vld [vmem:[%s24 + $0x38] sm:$0xff]
  %v7207 = vld [vmem:[%s24 + $0x40] sm:$0xff]
  %v7208 = vld [vmem:[%s24 + $0x48] sm:$0xff]
  %v7209 = vld [vmem:[%s24 + $0x50] sm:$0xff]
  %v7210 = vld [vmem:[%s24 + $0x58] sm:$0xff]
  %v7211 = vld [vmem:[%s25] sm:$0x3]
  %v7213 = vlaneseq
  %v7214 = vshrl.u32 %v7213, 7
  %v7215 = vsub.s32 0, %v7214
  %v7216 = vrot.slane %v7211, %v7215
  %v7217 = vlaneseq
  %v7218 = vshrl.u32 %v7217, 7
  %v7219 = vsub.s32 1, %v7218
  %v7220 = vrot.slane %v7211, %v7219
  %v7235 = vunpack.c.l.b16 %v7199
  %v7236 = vunpack.c.h.b16 %v7199
  %v7237 = vunpack.c.l.b16 %v7200
  %v7238 = vunpack.c.h.b16 %v7200
  %v7239 = vunpack.c.l.b16 %v7201
  %v7240 = vunpack.c.h.b16 %v7201
  %v7241 = vunpack.c.l.b16 %v7202
  %v7242 = vunpack.c.h.b16 %v7202
  %v7243 = vunpack.c.l.b16 %v7203
  %v7244 = vunpack.c.h.b16 %v7203
  %v7245 = vunpack.c.l.b16 %v7204
  %v7246 = vunpack.c.h.b16 %v7204
  %v7247 = vunpack.c.l.b16 %v7205
  %v7248 = vunpack.c.h.b16 %v7205
  %v7249 = vunpack.c.l.b16 %v7206
  %v7250 = vunpack.c.h.b16 %v7206
  %v7251 = vunpack.c.l.b16 %v7207
  %v7252 = vunpack.c.h.b16 %v7207
  %v7253 = vunpack.c.l.b16 %v7208
  %v7254 = vunpack.c.h.b16 %v7208
  %v7255 = vunpack.c.l.b16 %v7209
  %v7256 = vunpack.c.h.b16 %v7209
  %v7257 = vunpack.c.l.b16 %v7210
  %v7258 = vunpack.c.h.b16 %v7210
  %v7259 = vpack.c.b16 %v7237, %v7235
  %v7260 = vpack.c.b16 %v7238, %v7236
  %v7261 = vpack.c.b16 %v7241, %v7239
  %v7262 = vpack.c.b16 %v7242, %v7240
  %v7263 = vpack.c.b16 %v7245, %v7243
  %v7264 = vpack.c.b16 %v7246, %v7244
  %v7265 = vpack.c.b16 %v7249, %v7247
  %v7266 = vpack.c.b16 %v7250, %v7248
  %v7267 = vpack.c.b16 %v7253, %v7251
  %v7268 = vpack.c.b16 %v7254, %v7252
  %v7269 = vpack.c.b16 %v7257, %v7255
  %v7270 = vpack.c.b16 %v7258, %v7256
  %v7284 = vsel %vm4035, %v7198, 0
  %7286 = vmatprep.subr.bf16.mxu0 0
  %7287 = vmatpush1.bf16.msra.mxu0 0
  %7288 = vmatprep.subr.bf16.mxu0 0
  %7289 = vmatpush1.bf16.msra.mxu0 0
  %7290 = vmatprep.subr.bf16.mxu0 %v7270
  %7291 = vmatpush1.bf16.msra.mxu0 %v7269
  %7292 = vmatprep.subr.bf16.mxu0 %v7268
  %7293 = vmatpush1.bf16.msra.mxu0 %v7267
  %7294 = vmatprep.subr.bf16.mxu0 %v7266
  %7295 = vmatpush1.bf16.msra.mxu0 %v7265
  %7296 = vmatprep.subr.bf16.mxu0 %v7264
  %7297 = vmatpush1.bf16.msra.mxu0 %v7263
  %7298 = vmatprep.subr.bf16.mxu0 %v7262
  %7299 = vmatpush1.bf16.msra.mxu0 %v7261
  %7300 = vmatprep.subr.bf16.mxu0 %v7260
  %7301 = vmatpush1.bf16.msra.mxu0 %v7259
  %7302 = vmatprep.subr.bf16.mxu0 0
  %7303 = vmatpush2.bf16.msra.mxu0 0
  %7304 = vmatprep.subr.bf16.mxu0 0
  %7305 = vmatpush2.bf16.msra.mxu0 0
  %7306 = vmatprep.subr.bf16.mxu0 0
  %7307 = vmatpush2.bf16.msra.mxu0 0
  %7308 = vmatprep.subr.bf16.mxu0 0
  %7309 = vmatpush2.bf16.msra.mxu0 0
  %7310 = vmatprep.subr.bf16.mxu0 0
  %7311 = vmatpush2.bf16.msra.mxu0 0
  %7312 = vmatprep.subr.bf16.mxu0 0
  %7313 = vmatpush2.bf16.msra.mxu0 0
  %7314 = vmatprep.subr.bf16.mxu0 0
  %7315 = vmatpush2.bf16.msra.mxu0 0
  %7316 = vmatprep.subr.bf16.mxu0 0
  %7317 = vmatpush2.bf16.msra.mxu0 0
  %7318 = vmatprep.mubr.bf16.mxu0 0
  %7319 = vmatmul.mubr.bf16.gmra.mxu0 %v7284
  %v7320 = vpop.f32.mrf.mxu0
  %v7321 = vadd.f32 %v7216, %v7320
  %v7322 = vpop.f32.mrf.mxu0
  %v7323 = vadd.f32 %v7220, %v7322
  %v7324 = vpop.f32.mrf.mxu0
  %v7325 = vpop.f32.mrf.mxu0
  %7326 = vdwg.mxu0
  %7328 = vrot.lane.b32.xlu0 %v7321, 32
  %v7329 = vpop.permute.xlu0 %7328
  %v7331 = vadd.f32 %v7321, %v7329
  %v7332 = vxor.u32 %v7331, 2147483648
  %v7333 = vmul.f32 %v7332, 1.442695
  %v7334 = vpow.pop %v7333
  %v7335 = vadd.f32 %v7334, 1.0
  %v7336 = vrcp.pop %v7335
  %v7337 = vmul.f32 1.0, %v7336
  %7339 = vrot.lane.b32.xlu0 %v7323, 32
  %v7340 = vpop.permute.xlu0 %7339
  %v7342 = vadd.f32 %v7321, %v7340
  %v7343 = vxor.u32 %v7342, 2147483648
  %v7344 = vmul.f32 %v7343, 1.442695
  %v7345 = vpow.pop %v7344
  %v7346 = vadd.f32 %v7345, 1.0
  %v7347 = vrcp.pop %v7346
  %v7348 = vmul.f32 1.0, %v7347
  %7349 = vrot.lane.b32.xlu0 %v7323, 96
  %v7350 = vpop.permute.xlu0 %7349
  %v7352 = vmul.f32 %v7337, %v7350
  %7354 = vrot.lane.b32.xlu0 %v7352, 64
  %v7355 = vpop.permute.xlu0 %7354
  %v7357 = vadd.f32 %v7321, %v7355
  %v7358 = vtanh.pop %v7357
  %v7359 = vsub.f32 1.0, %v7348
  %7361 = vrot.lane.b32.xlu0 %v7358, 96
  %v7362 = vpop.permute.xlu0 %7361
  %v7364 = vmul.f32 %v7359, %v7362
  %v7366 = vmul.f32 %v7348, %v7193
  %v7367 = vadd.f32 %v7364, %v7366
  %7368 = vst.msk [vmem:[#allocation4 + $0xe] sm:$0x3] %vm951, %v7367
  %7370 = vrot.lane.b32.xlu0 %v7187, 64
  %v7371 = vpop.permute.xlu0 %7370
  %7373 = vst.msk [vmem:[#allocation4 + $0xe] sm:$0x3] %vm4125, %v7371
  %v7374 = vld [vmem:[#allocation4] sm:$0xff]
  %v7375 = vld [vmem:[#allocation4 + $0x8] sm:$0xff]
  %v7376 = vpack.c.bf16 %v7375, %v7374
  %v7377 = vld [vmem:[%s26] sm:$0xf]
  %v7378 = vld [vmem:[%s26 + $0x4] sm:$0xf]
  %v7379 = vld [vmem:[%s26 + $0x8] sm:$0xf]
  %v7380 = vld [vmem:[%s26 + $0xc] sm:$0xf]
  %v7381 = vld [vmem:[%s26 + $0x10] sm:$0xf]
  %v7382 = vld [vmem:[%s26 + $0x14] sm:$0xf]
  %v7383 = vld [vmem:[%s26 + $0x18] sm:$0xf]
  %v7384 = vld [vmem:[%s26 + $0x1c] sm:$0xf]
  %v7385 = vld [vmem:[%s26 + $0x20] sm:$0xf]
  %v7386 = vld [vmem:[%s26 + $0x24] sm:$0xf]
  %v7387 = vld [vmem:[%s26 + $0x28] sm:$0xf]
  %v7388 = vld [vmem:[%s26 + $0x2c] sm:$0xf]
  %v7389 = vld [vmem:[%s26 + $0x30] sm:$0xf]
  %v7390 = vld [vmem:[%s26 + $0x34] sm:$0xf]
  %v7391 = vld [vmem:[%s26 + $0x38] sm:$0xf]
  %v7392 = vld [vmem:[%s26 + $0x3c] sm:$0xf]
  %v7393 = vld [vmem:[%s27] sm:$0x1]
  %v7395 = vlaneseq
  %v7396 = vshrl.u32 %v7395, 7
  %v7397 = vsub.s32 0, %v7396
  %v7398 = vrot.slane %v7393, %v7397
  %v7416 = vunpack.c.l.b16 %v7377
  %v7417 = vunpack.c.l.b16 %v7378
  %v7418 = vunpack.c.l.b16 %v7379
  %v7419 = vunpack.c.l.b16 %v7380
  %v7420 = vunpack.c.l.b16 %v7381
  %v7421 = vunpack.c.l.b16 %v7382
  %v7422 = vunpack.c.l.b16 %v7383
  %v7423 = vunpack.c.l.b16 %v7384
  %v7424 = vunpack.c.l.b16 %v7385
  %v7425 = vunpack.c.l.b16 %v7386
  %v7426 = vunpack.c.l.b16 %v7387
  %v7427 = vunpack.c.l.b16 %v7388
  %v7428 = vunpack.c.l.b16 %v7389
  %v7429 = vunpack.c.l.b16 %v7390
  %v7430 = vunpack.c.l.b16 %v7391
  %v7431 = vunpack.c.l.b16 %v7392
  %v7432 = vpack.c.b16 %v7417, %v7416
  %v7433 = vpack.c.b16 %v7419, %v7418
  %v7434 = vpack.c.b16 %v7421, %v7420
  %v7435 = vpack.c.b16 %v7423, %v7422
  %v7436 = vpack.c.b16 %v7425, %v7424
  %v7437 = vpack.c.b16 %v7427, %v7426
  %v7438 = vpack.c.b16 %v7429, %v7428
  %v7439 = vpack.c.b16 %v7431, %v7430
  %7448 = vmatprep.subr.bf16.mxu0 0
  %7449 = vmatpush1.bf16.msra.mxu0 %v7439
  %7450 = vmatprep.subr.bf16.mxu0 0
  %7451 = vmatpush1.bf16.msra.mxu0 %v7438
  %7452 = vmatprep.subr.bf16.mxu0 0
  %7453 = vmatpush1.bf16.msra.mxu0 %v7437
  %7454 = vmatprep.subr.bf16.mxu0 0
  %7455 = vmatpush1.bf16.msra.mxu0 %v7436
  %7456 = vmatprep.subr.bf16.mxu0 0
  %7457 = vmatpush1.bf16.msra.mxu0 %v7435
  %7458 = vmatprep.subr.bf16.mxu0 0
  %7459 = vmatpush1.bf16.msra.mxu0 %v7434
  %7460 = vmatprep.subr.bf16.mxu0 0
  %7461 = vmatpush1.bf16.msra.mxu0 %v7433
  %7462 = vmatprep.subr.bf16.mxu0 0
  %7463 = vmatpush1.bf16.msra.mxu0 %v7432
  %7464 = vmatprep.subr.bf16.mxu0 0
  %7465 = vmatpush2.bf16.msra.mxu0 0
  %7466 = vmatprep.subr.bf16.mxu0 0
  %7467 = vmatpush2.bf16.msra.mxu0 0
  %7468 = vmatprep.subr.bf16.mxu0 0
  %7469 = vmatpush2.bf16.msra.mxu0 0
  %7470 = vmatprep.subr.bf16.mxu0 0
  %7471 = vmatpush2.bf16.msra.mxu0 0
  %7472 = vmatprep.subr.bf16.mxu0 0
  %7473 = vmatpush2.bf16.msra.mxu0 0
  %7474 = vmatprep.subr.bf16.mxu0 0
  %7475 = vmatpush2.bf16.msra.mxu0 0
  %7476 = vmatprep.subr.bf16.mxu0 0
  %7477 = vmatpush2.bf16.msra.mxu0 0
  %7478 = vmatprep.subr.bf16.mxu0 0
  %7479 = vmatpush2.bf16.msra.mxu0 0
  %7480 = vmatprep.mubr.bf16.mxu0 0
  %7481 = vmatmul.mubr.bf16.gmra.mxu0 %v7376
  %v7482 = vpop.f32.mrf.mxu0
  %v7483 = vadd.f32 %v7398, %v7482
  %v7484 = vpop.f32.mrf.mxu0
  %v7485 = vpop.f32.mrf.mxu0
  %v7486 = vadd.f32 %v7398, %v7485
  %v7487 = vpop.f32.mrf.mxu0
  %7488 = vdwg.mxu0
  %v7489 = vtanh.pop %v7483
  %v7490 = vtanh.pop %v7486
  %7491 = vst.msk [vmem:[%s28] sm:$0xff] %vm384, %v7489
  %7492 = vst.msk [vmem:[%s28 + $0x8] sm:$0xff] %vm384, %v7490
  // Predicated region
  $region114: #{dl4mt_train_forward.1} parent=0 // pred_check
    _
  $region115: #{dl4mt_train_forward.1} parent=0 // pred_check_branch
    %7494 = sbr.rel (0) target = $region117
  $region116: #{dl4mt_train_forward.1} parent=0 // pred_region
    _
  $region117: #{dl4mt_train_forward.1} parent=0 // pred_fallthru
    _
  // Predicated region
  $region118: #{dl4mt_train_forward.1} parent=0 // pred_check
    _
  $region119: #{dl4mt_train_forward.1} parent=0 // pred_check_branch
    %7496 = sbr.rel (0) target = $region121
  $region120: #{dl4mt_train_forward.1} parent=0 // pred_region
    _
  $region121: #{dl4mt_train_forward.1} parent=0 // pred_fallthru
    _

</llo_original>
